<compile_context>
chip_gen: v7x
topology: tpu7x:2x2x1
jax: 0.10.0
libtpu: 0.0.40
codegen_flags: <defaults>
</compile_context>

<pallas_src>
import functools

import jax
import jax.numpy as jnp
from jax.experimental import pallas as pl
from jax.experimental.pallas import tpu as pltpu


def _window_attn_kernel(x_ref, wqkv_ref, bqkv_ref, wproj_ref, bproj_ref,
                        o_ref, attn_ref, *, num_heads, scale, windows, seq):
    # x_ref: (bB*N, C); wqkv_ref: (3C, C) torch layout; bqkv_ref: (1, 3C) f32;
    # wproj_ref: (C, C) torch layout; bproj_ref: (1, C) f32;
    # o_ref: (bB*N, C); attn_ref: (bB*N, C) VMEM scratch.
    dim = x_ref.shape[-1]
    hd = dim // num_heads
    in_dtype = x_ref.dtype

    x = x_ref[...]                                           # (bB*N, C)

    # qkv = x @ Wqkv^T + b : contract last axes of both operands (native
    # dtype straight to the MXU, f32 accumulation).
    qkv = jax.lax.dot_general(x, wqkv_ref[...],
                              (((1,), (1,)), ((), ())),
                              preferred_element_type=jnp.float32)
    qkv = (qkv + bqkv_ref[...]).astype(in_dtype)             # (bB*N, 3C)

    # Per-window, per-head attention; heads are static lane slices matching
    # the PyTorch reshape(B, N, 3, num_heads, head_dim) column ordering.
    for w in range(windows):
        row0 = w * seq
        qkv_w = qkv[row0:row0 + seq]                         # (N, 3C)
        for h in range(num_heads):
            q = qkv_w[:, h * hd:(h + 1) * hd] * scale
            k = qkv_w[:, dim + h * hd:dim + (h + 1) * hd]
            v = qkv_w[:, 2 * dim + h * hd:2 * dim + (h + 1) * hd]

            # s = (q*scale) @ k^T  -> (N, N), f32 accumulation.
            s = jax.lax.dot_general(q, k, (((1,), (1,)), ((), ())),
                                    preferred_element_type=jnp.float32)
            s = s - jnp.max(s, axis=-1, keepdims=True)
            p = jnp.exp(s)                                   # un-normalized
            denom = jnp.sum(p, axis=-1, keepdims=True)       # (N, 1)

            # Normalize AFTER p@v: (N, hd) work instead of (N, N), and the
            # approximate reciprocal runs on the EUP slot.
            o_h = jnp.dot(p.astype(in_dtype), v,
                          preferred_element_type=jnp.float32)
            o_h = o_h * pl.reciprocal(denom, approx=True)
            attn_ref[row0:row0 + seq, h * hd:(h + 1) * hd] = o_h.astype(in_dtype)

    # Output projection from the lane-dense scratch slab: y = a @ Wproj^T + b.
    y = jax.lax.dot_general(attn_ref[...], wproj_ref[...],
                            (((1,), (1,)), ((), ())),
                            preferred_element_type=jnp.float32)
    o_ref[...] = (y + bproj_ref[...]).astype(o_ref.dtype)


def _pick_windows_per_step(B, N, dim, itemsize):
    """Largest divisor of B whose token slabs fit a modest VMEM budget,
    preferably giving >=256 matmul rows (fills the v6e/v7x MXU M dim)."""
    slab_budget = 24 * 1024 * 1024
    best = 1
    for bB in range(1, B + 1):
        if B % bB != 0:
            continue
        rows = bB * N
        # (8,128) rule on the second-to-last block dim.
        if rows % 8 != 0 and bB != B:
            continue
        # x + out double-buffered, f32 qkv intermediate, attn scratch.
        vmem = (rows * dim * itemsize * 4          # x + out, double-buffered
                + rows * 3 * dim * 4               # f32 qkv
                + rows * dim * itemsize)           # attn scratch
        if vmem > slab_budget:
            break
        best = bB
        if rows >= 256:
            break
    return best


def _build_call(B, N, dim, dtype, num_heads, scale, bB, single_buffer_weights):
    # Constant (weight/bias) blocks: constant index_map keeps them resident;
    # pl.Buffered(1) single-buffers them so they don't double their VMEM cost.
    wkw = dict(pipeline_mode=pl.Buffered(1)) if single_buffer_weights else {}
    kernel = functools.partial(_window_attn_kernel, num_heads=num_heads,
                               scale=scale, windows=bB, seq=N)
    return pl.pallas_call(
        kernel,
        out_shape=jax.ShapeDtypeStruct((B * N, dim), dtype),
        grid_spec=pltpu.PrefetchScalarGridSpec(
            num_scalar_prefetch=0,
            grid=(B // bB,),
            in_specs=[
                pl.BlockSpec((bB * N, dim), lambda b: (b, 0)),          # x slab
                pl.BlockSpec((3 * dim, dim), lambda b: (0, 0), **wkw),  # Wqkv
                pl.BlockSpec((1, 3 * dim), lambda b: (0, 0), **wkw),    # b_qkv
                pl.BlockSpec((dim, dim), lambda b: (0, 0), **wkw),      # Wproj
                pl.BlockSpec((1, dim), lambda b: (0, 0), **wkw),        # b_proj
            ],
            out_specs=pl.BlockSpec((bB * N, dim), lambda b: (b, 0)),
            scratch_shapes=[pltpu.VMEM((bB * N, dim), dtype)],          # head slab
        ),
        compiler_params=pltpu.CompilerParams(
            dimension_semantics=("parallel",),      # megacore split over windows
            vmem_limit_bytes=48 * 1024 * 1024,      # safe on v5e/v6e/v7x
        ),
    )


def window_attention(x, w_qkv, b_qkv, w_proj, b_proj, num_heads):
    """Forward pass of the ViT window Attention module (use_rel_pos=False).

    Args:
      x:      (B, H, W, C) input.
      w_qkv:  (3C, C)  PyTorch-layout qkv weight (used as-is, no transpose).
      b_qkv:  (3C,)    qkv bias.
      w_proj: (C, C)   PyTorch-layout proj weight (used as-is, no transpose).
      b_proj: (C,)     proj bias.
    """
    B, H, W, dim = x.shape
    assert dim % num_heads == 0
    N = H * W
    head_dim = dim // num_heads
    scale = head_dim ** (-0.5)

    x2 = x.reshape(B * N, dim)                      # free reshape, no transpose
    bqkv2 = b_qkv.reshape(1, 3 * dim).astype(jnp.float32)   # tiny, one-time
    bproj2 = b_proj.reshape(1, dim).astype(jnp.float32)

    bB = _pick_windows_per_step(B, N, dim, x.dtype.itemsize)
    args = (x2, w_qkv, bqkv2, w_proj, bproj2)
    try:
        out = _build_call(B, N, dim, x.dtype, num_heads, scale, bB, True)(*args)
    except Exception:
        # Fallback for jax builds where BlockSpec(pipeline_mode=...) is not
        # supported; identical semantics, default double-buffered weights.
        out = _build_call(B, N, dim, x.dtype, num_heads, scale, bB, False)(*args)
    return out.reshape(B, H, W, dim)


def window_attention_ref(x, w_qkv, b_qkv, w_proj, b_proj, num_heads):
    """Pure-JAX reference mirroring the PyTorch forward (use_rel_pos=False)."""
    B, H, W, dim = x.shape
    N = H * W
    head_dim = dim // num_heads
    scale = head_dim ** (-0.5)

    qkv = x.reshape(B, N, dim) @ w_qkv.T + b_qkv                    # (B,N,3C)
    qkv = qkv.reshape(B, N, 3, num_heads, head_dim)
    qkv = jnp.transpose(qkv, (2, 0, 3, 1, 4)).reshape(3, B * num_heads, N,
                                                      head_dim)
    q, k, v = qkv[0], qkv[1], qkv[2]
    attn = (q * scale) @ jnp.swapaxes(k, -2, -1)
    attn = jax.nn.softmax(attn, axis=-1)
    out = (attn @ v).reshape(B, num_heads, H, W, head_dim)
    out = jnp.transpose(out, (0, 2, 3, 1, 4)).reshape(B, H, W, dim)
    return out @ w_proj.T + b_proj


if __name__ == "__main__":
    B, H, W, dim = 2, 8, 8, 32
    num_heads = 4

    key = jax.random.PRNGKey(0)
    kx, k1, k2, k3, k4 = jax.random.split(key, 5)

    x = jax.random.normal(kx, (B, H, W, dim), dtype=jnp.float32)
    w_qkv = 0.2 * jax.random.normal(k1, (3 * dim, dim), dtype=jnp.float32)
    b_qkv = 0.1 * jax.random.normal(k2, (3 * dim,), dtype=jnp.float32)
    w_proj = 0.2 * jax.random.normal(k3, (dim, dim), dtype=jnp.float32)
    b_proj = 0.1 * jax.random.normal(k4, (dim,), dtype=jnp.float32)

    out = window_attention(x, w_qkv, b_qkv, w_proj, b_proj, num_heads)
    out = jax.block_until_ready(out)

    ref = window_attention_ref(x, w_qkv, b_qkv, w_proj, b_proj, num_heads)
    assert out.shape == (B, H, W, dim)
    assert jnp.allclose(out, ref, atol=2e-2, rtol=2e-2), "mismatch vs reference"

    print("KERNEL_OK")
</pallas_src>

<mosaic_0001>
module attributes {stable_mosaic.version = 11 : i64} {
  func.func @_window_attn_kernel(%arg0: i32, %arg1: memref<128x32xf32, #tpu.memory_space<vmem>>, %arg2: memref<96x32xf32, #tpu.memory_space<vmem>>, %arg3: memref<1x96xf32, #tpu.memory_space<vmem>>, %arg4: memref<32x32xf32, #tpu.memory_space<vmem>>, %arg5: memref<1x32xf32, #tpu.memory_space<vmem>>, %arg6: memref<128x32xf32, #tpu.memory_space<vmem>>, %arg7: memref<128x32xf32, #tpu.memory_space<vmem>>) attributes {dimension_semantics = [#tpu.dimension_semantics<parallel>], iteration_bounds = array<i64: 1>, scalar_prefetch = 0 : i64, scratch_operands = 1 : i64, tpu.core_type = #tpu.core_type<tc>, window_params = [{transform_indices = @transform_0, window_bounds = array<i64: 128, 32>}, {pipeline_mode = #tpu.pipeline_mode<synchronous>, transform_indices = @transform_1, window_bounds = array<i64: 96, 32>}, {pipeline_mode = #tpu.pipeline_mode<synchronous>, transform_indices = @transform_2, window_bounds = array<i64: 1, 96>}, {pipeline_mode = #tpu.pipeline_mode<synchronous>, transform_indices = @transform_3, window_bounds = array<i64: 32, 32>}, {pipeline_mode = #tpu.pipeline_mode<synchronous>, transform_indices = @transform_4, window_bounds = array<i64: 1, 32>}, {transform_indices = @transform_5, window_bounds = array<i64: 128, 32>}]} {
    %c0 = arith.constant 0 : index
    %c0_0 = arith.constant 0 : index
    %0 = vector.load %arg1[%c0, %c0_0] : memref<128x32xf32, #tpu.memory_space<vmem>>, vector<128x32xf32>
    %c0_1 = arith.constant 0 : index
    %c0_2 = arith.constant 0 : index
    %1 = vector.load %arg2[%c0_1, %c0_2] : memref<96x32xf32, #tpu.memory_space<vmem>>, vector<96x32xf32>
    %cst = arith.constant dense<0.000000e+00> : vector<128x96xf32>
    %2 = tpu.matmul %0, %1, %cst {dimension_numbers = #tpu.dot_dimension_numbers<[1], [1], [0], [0], [0, 0, 1, 0], [], []>} : vector<128x32xf32>, vector<96x32xf32>, vector<128x96xf32> -> vector<128x96xf32>
    %c0_3 = arith.constant 0 : index
    %c0_4 = arith.constant 0 : index
    %3 = vector.load %arg3[%c0_3, %c0_4] : memref<1x96xf32, #tpu.memory_space<vmem>>, vector<1x96xf32>
    %4 = vector.broadcast %3 : vector<1x96xf32> to vector<128x96xf32>
    %5 = arith.addf %2, %4 : vector<128x96xf32>
    %6 = vector.extract_strided_slice %5 {offsets = [0, 0], sizes = [64, 96], strides = [1, 1]} : vector<128x96xf32> to vector<64x96xf32>
    %7 = vector.extract_strided_slice %6 {offsets = [0, 0], sizes = [64, 8], strides = [1, 1]} : vector<64x96xf32> to vector<64x8xf32>
    %cst_5 = arith.constant 0.353553385 : f32
    %8 = vector.broadcast %cst_5 : f32 to vector<64x8xf32>
    %9 = arith.mulf %7, %8 : vector<64x8xf32>
    %10 = vector.extract_strided_slice %6 {offsets = [0, 32], sizes = [64, 8], strides = [1, 1]} : vector<64x96xf32> to vector<64x8xf32>
    %11 = vector.extract_strided_slice %6 {offsets = [0, 64], sizes = [64, 8], strides = [1, 1]} : vector<64x96xf32> to vector<64x8xf32>
    %cst_6 = arith.constant dense<0.000000e+00> : vector<64x64xf32>
    %12 = tpu.matmul %9, %10, %cst_6 {dimension_numbers = #tpu.dot_dimension_numbers<[1], [1], [0], [0], [0, 0, 1, 0], [], []>} : vector<64x8xf32>, vector<64x8xf32>, vector<64x64xf32> -> vector<64x64xf32>
    %cst_7 = arith.constant dense<0xFF800000> : vector<64xf32>
    %13 = vector.multi_reduction <maximumf>, %12, %cst_7 [1] : vector<64x64xf32> to vector<64xf32>
    %14 = vector.shape_cast %13 : vector<64xf32> to vector<64x1xf32>
    %15 = vector.broadcast %14 : vector<64x1xf32> to vector<64x64xf32>
    %16 = arith.subf %12, %15 : vector<64x64xf32>
    %17 = math.exp %16 : vector<64x64xf32>
    %cst_8 = arith.constant dense<0.000000e+00> : vector<64xf32>
    %18 = vector.multi_reduction <add>, %17, %cst_8 [1] : vector<64x64xf32> to vector<64xf32>
    %19 = vector.shape_cast %18 : vector<64xf32> to vector<64x1xf32>
    %cst_9 = arith.constant dense<0.000000e+00> : vector<64x8xf32>
    %20 = tpu.matmul %17, %11, %cst_9 {dimension_numbers = #tpu.dot_dimension_numbers<[1], [0], [0], [1], [0, 0, 1, 1], [], []>} : vector<64x64xf32>, vector<64x8xf32>, vector<64x8xf32> -> vector<64x8xf32>
    %21 = tpu.reciprocal %19 {approx = true} : vector<64x1xf32> -> vector<64x1xf32>
    %22 = vector.broadcast %21 : vector<64x1xf32> to vector<64x8xf32>
    %23 = arith.mulf %20, %22 : vector<64x8xf32>
    %c0_10 = arith.constant 0 : index
    %c0_11 = arith.constant 0 : index
    %24 = vector.load %arg7[%c0_10, %c0_11] : memref<128x32xf32, #tpu.memory_space<vmem>>, vector<64x8xf32>
    tpu.vector_store %arg7[%c0_10, %c0_11], %23 {strides = array<i32>} : memref<128x32xf32, #tpu.memory_space<vmem>>, vector<64x8xf32>,
    %25 = vector.extract_strided_slice %6 {offsets = [0, 8], sizes = [64, 8], strides = [1, 1]} : vector<64x96xf32> to vector<64x8xf32>
    %cst_12 = arith.constant 0.353553385 : f32
    %26 = vector.broadcast %cst_12 : f32 to vector<64x8xf32>
    %27 = arith.mulf %25, %26 : vector<64x8xf32>
    %28 = vector.extract_strided_slice %6 {offsets = [0, 40], sizes = [64, 8], strides = [1, 1]} : vector<64x96xf32> to vector<64x8xf32>
    %29 = vector.extract_strided_slice %6 {offsets = [0, 72], sizes = [64, 8], strides = [1, 1]} : vector<64x96xf32> to vector<64x8xf32>
    %cst_13 = arith.constant dense<0.000000e+00> : vector<64x64xf32>
    %30 = tpu.matmul %27, %28, %cst_13 {dimension_numbers = #tpu.dot_dimension_numbers<[1], [1], [0], [0], [0, 0, 1, 0], [], []>} : vector<64x8xf32>, vector<64x8xf32>, vector<64x64xf32> -> vector<64x64xf32>
    %cst_14 = arith.constant dense<0xFF800000> : vector<64xf32>
    %31 = vector.multi_reduction <maximumf>, %30, %cst_14 [1] : vector<64x64xf32> to vector<64xf32>
    %32 = vector.shape_cast %31 : vector<64xf32> to vector<64x1xf32>
    %33 = vector.broadcast %32 : vector<64x1xf32> to vector<64x64xf32>
    %34 = arith.subf %30, %33 : vector<64x64xf32>
    %35 = math.exp %34 : vector<64x64xf32>
    %cst_15 = arith.constant dense<0.000000e+00> : vector<64xf32>
    %36 = vector.multi_reduction <add>, %35, %cst_15 [1] : vector<64x64xf32> to vector<64xf32>
    %37 = vector.shape_cast %36 : vector<64xf32> to vector<64x1xf32>
    %cst_16 = arith.constant dense<0.000000e+00> : vector<64x8xf32>
    %38 = tpu.matmul %35, %29, %cst_16 {dimension_numbers = #tpu.dot_dimension_numbers<[1], [0], [0], [1], [0, 0, 1, 1], [], []>} : vector<64x64xf32>, vector<64x8xf32>, vector<64x8xf32> -> vector<64x8xf32>
    %39 = tpu.reciprocal %37 {approx = true} : vector<64x1xf32> -> vector<64x1xf32>
    %40 = vector.broadcast %39 : vector<64x1xf32> to vector<64x8xf32>
    %41 = arith.mulf %38, %40 : vector<64x8xf32>
    %c0_17 = arith.constant 0 : index
    %c8 = arith.constant 8 : index
    %42 = vector.load %arg7[%c0_17, %c8] : memref<128x32xf32, #tpu.memory_space<vmem>>, vector<64x8xf32>
    tpu.vector_store %arg7[%c0_17, %c8], %41 {strides = array<i32>} : memref<128x32xf32, #tpu.memory_space<vmem>>, vector<64x8xf32>,
    %43 = vector.extract_strided_slice %6 {offsets = [0, 16], sizes = [64, 8], strides = [1, 1]} : vector<64x96xf32> to vector<64x8xf32>
    %cst_18 = arith.constant 0.353553385 : f32
    %44 = vector.broadcast %cst_18 : f32 to vector<64x8xf32>
    %45 = arith.mulf %43, %44 : vector<64x8xf32>
    %46 = vector.extract_strided_slice %6 {offsets = [0, 48], sizes = [64, 8], strides = [1, 1]} : vector<64x96xf32> to vector<64x8xf32>
    %47 = vector.extract_strided_slice %6 {offsets = [0, 80], sizes = [64, 8], strides = [1, 1]} : vector<64x96xf32> to vector<64x8xf32>
    %cst_19 = arith.constant dense<0.000000e+00> : vector<64x64xf32>
    %48 = tpu.matmul %45, %46, %cst_19 {dimension_numbers = #tpu.dot_dimension_numbers<[1], [1], [0], [0], [0, 0, 1, 0], [], []>} : vector<64x8xf32>, vector<64x8xf32>, vector<64x64xf32> -> vector<64x64xf32>
    %cst_20 = arith.constant dense<0xFF800000> : vector<64xf32>
    %49 = vector.multi_reduction <maximumf>, %48, %cst_20 [1] : vector<64x64xf32> to vector<64xf32>
    %50 = vector.shape_cast %49 : vector<64xf32> to vector<64x1xf32>
    %51 = vector.broadcast %50 : vector<64x1xf32> to vector<64x64xf32>
    %52 = arith.subf %48, %51 : vector<64x64xf32>
    %53 = math.exp %52 : vector<64x64xf32>
    %cst_21 = arith.constant dense<0.000000e+00> : vector<64xf32>
    %54 = vector.multi_reduction <add>, %53, %cst_21 [1] : vector<64x64xf32> to vector<64xf32>
    %55 = vector.shape_cast %54 : vector<64xf32> to vector<64x1xf32>
    %cst_22 = arith.constant dense<0.000000e+00> : vector<64x8xf32>
    %56 = tpu.matmul %53, %47, %cst_22 {dimension_numbers = #tpu.dot_dimension_numbers<[1], [0], [0], [1], [0, 0, 1, 1], [], []>} : vector<64x64xf32>, vector<64x8xf32>, vector<64x8xf32> -> vector<64x8xf32>
    %57 = tpu.reciprocal %55 {approx = true} : vector<64x1xf32> -> vector<64x1xf32>
    %58 = vector.broadcast %57 : vector<64x1xf32> to vector<64x8xf32>
    %59 = arith.mulf %56, %58 : vector<64x8xf32>
    %c0_23 = arith.constant 0 : index
    %c16 = arith.constant 16 : index
    %60 = vector.load %arg7[%c0_23, %c16] : memref<128x32xf32, #tpu.memory_space<vmem>>, vector<64x8xf32>
    tpu.vector_store %arg7[%c0_23, %c16], %59 {strides = array<i32>} : memref<128x32xf32, #tpu.memory_space<vmem>>, vector<64x8xf32>,
    %61 = vector.extract_strided_slice %6 {offsets = [0, 24], sizes = [64, 8], strides = [1, 1]} : vector<64x96xf32> to vector<64x8xf32>
    %cst_24 = arith.constant 0.353553385 : f32
    %62 = vector.broadcast %cst_24 : f32 to vector<64x8xf32>
    %63 = arith.mulf %61, %62 : vector<64x8xf32>
    %64 = vector.extract_strided_slice %6 {offsets = [0, 56], sizes = [64, 8], strides = [1, 1]} : vector<64x96xf32> to vector<64x8xf32>
    %65 = vector.extract_strided_slice %6 {offsets = [0, 88], sizes = [64, 8], strides = [1, 1]} : vector<64x96xf32> to vector<64x8xf32>
    %cst_25 = arith.constant dense<0.000000e+00> : vector<64x64xf32>
    %66 = tpu.matmul %63, %64, %cst_25 {dimension_numbers = #tpu.dot_dimension_numbers<[1], [1], [0], [0], [0, 0, 1, 0], [], []>} : vector<64x8xf32>, vector<64x8xf32>, vector<64x64xf32> -> vector<64x64xf32>
    %cst_26 = arith.constant dense<0xFF800000> : vector<64xf32>
    %67 = vector.multi_reduction <maximumf>, %66, %cst_26 [1] : vector<64x64xf32> to vector<64xf32>
    %68 = vector.shape_cast %67 : vector<64xf32> to vector<64x1xf32>
    %69 = vector.broadcast %68 : vector<64x1xf32> to vector<64x64xf32>
    %70 = arith.subf %66, %69 : vector<64x64xf32>
    %71 = math.exp %70 : vector<64x64xf32>
    %cst_27 = arith.constant dense<0.000000e+00> : vector<64xf32>
    %72 = vector.multi_reduction <add>, %71, %cst_27 [1] : vector<64x64xf32> to vector<64xf32>
    %73 = vector.shape_cast %72 : vector<64xf32> to vector<64x1xf32>
    %cst_28 = arith.constant dense<0.000000e+00> : vector<64x8xf32>
    %74 = tpu.matmul %71, %65, %cst_28 {dimension_numbers = #tpu.dot_dimension_numbers<[1], [0], [0], [1], [0, 0, 1, 1], [], []>} : vector<64x64xf32>, vector<64x8xf32>, vector<64x8xf32> -> vector<64x8xf32>
    %75 = tpu.reciprocal %73 {approx = true} : vector<64x1xf32> -> vector<64x1xf32>
    %76 = vector.broadcast %75 : vector<64x1xf32> to vector<64x8xf32>
    %77 = arith.mulf %74, %76 : vector<64x8xf32>
    %c0_29 = arith.constant 0 : index
    %c24 = arith.constant 24 : index
    %78 = vector.load %arg7[%c0_29, %c24] : memref<128x32xf32, #tpu.memory_space<vmem>>, vector<64x8xf32>
    tpu.vector_store %arg7[%c0_29, %c24], %77 {strides = array<i32>} : memref<128x32xf32, #tpu.memory_space<vmem>>, vector<64x8xf32>,
    %79 = vector.extract_strided_slice %5 {offsets = [64, 0], sizes = [64, 96], strides = [1, 1]} : vector<128x96xf32> to vector<64x96xf32>
    %80 = vector.extract_strided_slice %79 {offsets = [0, 0], sizes = [64, 8], strides = [1, 1]} : vector<64x96xf32> to vector<64x8xf32>
    %cst_30 = arith.constant 0.353553385 : f32
    %81 = vector.broadcast %cst_30 : f32 to vector<64x8xf32>
    %82 = arith.mulf %80, %81 : vector<64x8xf32>
    %83 = vector.extract_strided_slice %79 {offsets = [0, 32], sizes = [64, 8], strides = [1, 1]} : vector<64x96xf32> to vector<64x8xf32>
    %84 = vector.extract_strided_slice %79 {offsets = [0, 64], sizes = [64, 8], strides = [1, 1]} : vector<64x96xf32> to vector<64x8xf32>
    %cst_31 = arith.constant dense<0.000000e+00> : vector<64x64xf32>
    %85 = tpu.matmul %82, %83, %cst_31 {dimension_numbers = #tpu.dot_dimension_numbers<[1], [1], [0], [0], [0, 0, 1, 0], [], []>} : vector<64x8xf32>, vector<64x8xf32>, vector<64x64xf32> -> vector<64x64xf32>
    %cst_32 = arith.constant dense<0xFF800000> : vector<64xf32>
    %86 = vector.multi_reduction <maximumf>, %85, %cst_32 [1] : vector<64x64xf32> to vector<64xf32>
    %87 = vector.shape_cast %86 : vector<64xf32> to vector<64x1xf32>
    %88 = vector.broadcast %87 : vector<64x1xf32> to vector<64x64xf32>
    %89 = arith.subf %85, %88 : vector<64x64xf32>
    %90 = math.exp %89 : vector<64x64xf32>
    %cst_33 = arith.constant dense<0.000000e+00> : vector<64xf32>
    %91 = vector.multi_reduction <add>, %90, %cst_33 [1] : vector<64x64xf32> to vector<64xf32>
    %92 = vector.shape_cast %91 : vector<64xf32> to vector<64x1xf32>
    %cst_34 = arith.constant dense<0.000000e+00> : vector<64x8xf32>
    %93 = tpu.matmul %90, %84, %cst_34 {dimension_numbers = #tpu.dot_dimension_numbers<[1], [0], [0], [1], [0, 0, 1, 1], [], []>} : vector<64x64xf32>, vector<64x8xf32>, vector<64x8xf32> -> vector<64x8xf32>
    %94 = tpu.reciprocal %92 {approx = true} : vector<64x1xf32> -> vector<64x1xf32>
    %95 = vector.broadcast %94 : vector<64x1xf32> to vector<64x8xf32>
    %96 = arith.mulf %93, %95 : vector<64x8xf32>
    %c64 = arith.constant 64 : index
    %c0_35 = arith.constant 0 : index
    %97 = vector.load %arg7[%c64, %c0_35] : memref<128x32xf32, #tpu.memory_space<vmem>>, vector<64x8xf32>
    tpu.vector_store %arg7[%c64, %c0_35], %96 {strides = array<i32>} : memref<128x32xf32, #tpu.memory_space<vmem>>, vector<64x8xf32>,
    %98 = vector.extract_strided_slice %79 {offsets = [0, 8], sizes = [64, 8], strides = [1, 1]} : vector<64x96xf32> to vector<64x8xf32>
    %cst_36 = arith.constant 0.353553385 : f32
    %99 = vector.broadcast %cst_36 : f32 to vector<64x8xf32>
    %100 = arith.mulf %98, %99 : vector<64x8xf32>
    %101 = vector.extract_strided_slice %79 {offsets = [0, 40], sizes = [64, 8], strides = [1, 1]} : vector<64x96xf32> to vector<64x8xf32>
    %102 = vector.extract_strided_slice %79 {offsets = [0, 72], sizes = [64, 8], strides = [1, 1]} : vector<64x96xf32> to vector<64x8xf32>
    %cst_37 = arith.constant dense<0.000000e+00> : vector<64x64xf32>
    %103 = tpu.matmul %100, %101, %cst_37 {dimension_numbers = #tpu.dot_dimension_numbers<[1], [1], [0], [0], [0, 0, 1, 0], [], []>} : vector<64x8xf32>, vector<64x8xf32>, vector<64x64xf32> -> vector<64x64xf32>
    %cst_38 = arith.constant dense<0xFF800000> : vector<64xf32>
    %104 = vector.multi_reduction <maximumf>, %103, %cst_38 [1] : vector<64x64xf32> to vector<64xf32>
    %105 = vector.shape_cast %104 : vector<64xf32> to vector<64x1xf32>
    %106 = vector.broadcast %105 : vector<64x1xf32> to vector<64x64xf32>
    %107 = arith.subf %103, %106 : vector<64x64xf32>
    %108 = math.exp %107 : vector<64x64xf32>
    %cst_39 = arith.constant dense<0.000000e+00> : vector<64xf32>
    %109 = vector.multi_reduction <add>, %108, %cst_39 [1] : vector<64x64xf32> to vector<64xf32>
    %110 = vector.shape_cast %109 : vector<64xf32> to vector<64x1xf32>
    %cst_40 = arith.constant dense<0.000000e+00> : vector<64x8xf32>
    %111 = tpu.matmul %108, %102, %cst_40 {dimension_numbers = #tpu.dot_dimension_numbers<[1], [0], [0], [1], [0, 0, 1, 1], [], []>} : vector<64x64xf32>, vector<64x8xf32>, vector<64x8xf32> -> vector<64x8xf32>
    %112 = tpu.reciprocal %110 {approx = true} : vector<64x1xf32> -> vector<64x1xf32>
    %113 = vector.broadcast %112 : vector<64x1xf32> to vector<64x8xf32>
    %114 = arith.mulf %111, %113 : vector<64x8xf32>
    %c64_41 = arith.constant 64 : index
    %c8_42 = arith.constant 8 : index
    %115 = vector.load %arg7[%c64_41, %c8_42] : memref<128x32xf32, #tpu.memory_space<vmem>>, vector<64x8xf32>
    tpu.vector_store %arg7[%c64_41, %c8_42], %114 {strides = array<i32>} : memref<128x32xf32, #tpu.memory_space<vmem>>, vector<64x8xf32>,
    %116 = vector.extract_strided_slice %79 {offsets = [0, 16], sizes = [64, 8], strides = [1, 1]} : vector<64x96xf32> to vector<64x8xf32>
    %cst_43 = arith.constant 0.353553385 : f32
    %117 = vector.broadcast %cst_43 : f32 to vector<64x8xf32>
    %118 = arith.mulf %116, %117 : vector<64x8xf32>
    %119 = vector.extract_strided_slice %79 {offsets = [0, 48], sizes = [64, 8], strides = [1, 1]} : vector<64x96xf32> to vector<64x8xf32>
    %120 = vector.extract_strided_slice %79 {offsets = [0, 80], sizes = [64, 8], strides = [1, 1]} : vector<64x96xf32> to vector<64x8xf32>
    %cst_44 = arith.constant dense<0.000000e+00> : vector<64x64xf32>
    %121 = tpu.matmul %118, %119, %cst_44 {dimension_numbers = #tpu.dot_dimension_numbers<[1], [1], [0], [0], [0, 0, 1, 0], [], []>} : vector<64x8xf32>, vector<64x8xf32>, vector<64x64xf32> -> vector<64x64xf32>
    %cst_45 = arith.constant dense<0xFF800000> : vector<64xf32>
    %122 = vector.multi_reduction <maximumf>, %121, %cst_45 [1] : vector<64x64xf32> to vector<64xf32>
    %123 = vector.shape_cast %122 : vector<64xf32> to vector<64x1xf32>
    %124 = vector.broadcast %123 : vector<64x1xf32> to vector<64x64xf32>
    %125 = arith.subf %121, %124 : vector<64x64xf32>
    %126 = math.exp %125 : vector<64x64xf32>
    %cst_46 = arith.constant dense<0.000000e+00> : vector<64xf32>
    %127 = vector.multi_reduction <add>, %126, %cst_46 [1] : vector<64x64xf32> to vector<64xf32>
    %128 = vector.shape_cast %127 : vector<64xf32> to vector<64x1xf32>
    %cst_47 = arith.constant dense<0.000000e+00> : vector<64x8xf32>
    %129 = tpu.matmul %126, %120, %cst_47 {dimension_numbers = #tpu.dot_dimension_numbers<[1], [0], [0], [1], [0, 0, 1, 1], [], []>} : vector<64x64xf32>, vector<64x8xf32>, vector<64x8xf32> -> vector<64x8xf32>
    %130 = tpu.reciprocal %128 {approx = true} : vector<64x1xf32> -> vector<64x1xf32>
    %131 = vector.broadcast %130 : vector<64x1xf32> to vector<64x8xf32>
    %132 = arith.mulf %129, %131 : vector<64x8xf32>
    %c64_48 = arith.constant 64 : index
    %c16_49 = arith.constant 16 : index
    %133 = vector.load %arg7[%c64_48, %c16_49] : memref<128x32xf32, #tpu.memory_space<vmem>>, vector<64x8xf32>
    tpu.vector_store %arg7[%c64_48, %c16_49], %132 {strides = array<i32>} : memref<128x32xf32, #tpu.memory_space<vmem>>, vector<64x8xf32>,
    %134 = vector.extract_strided_slice %79 {offsets = [0, 24], sizes = [64, 8], strides = [1, 1]} : vector<64x96xf32> to vector<64x8xf32>
    %cst_50 = arith.constant 0.353553385 : f32
    %135 = vector.broadcast %cst_50 : f32 to vector<64x8xf32>
    %136 = arith.mulf %134, %135 : vector<64x8xf32>
    %137 = vector.extract_strided_slice %79 {offsets = [0, 56], sizes = [64, 8], strides = [1, 1]} : vector<64x96xf32> to vector<64x8xf32>
    %138 = vector.extract_strided_slice %79 {offsets = [0, 88], sizes = [64, 8], strides = [1, 1]} : vector<64x96xf32> to vector<64x8xf32>
    %cst_51 = arith.constant dense<0.000000e+00> : vector<64x64xf32>
    %139 = tpu.matmul %136, %137, %cst_51 {dimension_numbers = #tpu.dot_dimension_numbers<[1], [1], [0], [0], [0, 0, 1, 0], [], []>} : vector<64x8xf32>, vector<64x8xf32>, vector<64x64xf32> -> vector<64x64xf32>
    %cst_52 = arith.constant dense<0xFF800000> : vector<64xf32>
    %140 = vector.multi_reduction <maximumf>, %139, %cst_52 [1] : vector<64x64xf32> to vector<64xf32>
    %141 = vector.shape_cast %140 : vector<64xf32> to vector<64x1xf32>
    %142 = vector.broadcast %141 : vector<64x1xf32> to vector<64x64xf32>
    %143 = arith.subf %139, %142 : vector<64x64xf32>
    %144 = math.exp %143 : vector<64x64xf32>
    %cst_53 = arith.constant dense<0.000000e+00> : vector<64xf32>
    %145 = vector.multi_reduction <add>, %144, %cst_53 [1] : vector<64x64xf32> to vector<64xf32>
    %146 = vector.shape_cast %145 : vector<64xf32> to vector<64x1xf32>
    %cst_54 = arith.constant dense<0.000000e+00> : vector<64x8xf32>
    %147 = tpu.matmul %144, %138, %cst_54 {dimension_numbers = #tpu.dot_dimension_numbers<[1], [0], [0], [1], [0, 0, 1, 1], [], []>} : vector<64x64xf32>, vector<64x8xf32>, vector<64x8xf32> -> vector<64x8xf32>
    %148 = tpu.reciprocal %146 {approx = true} : vector<64x1xf32> -> vector<64x1xf32>
    %149 = vector.broadcast %148 : vector<64x1xf32> to vector<64x8xf32>
    %150 = arith.mulf %147, %149 : vector<64x8xf32>
    %c64_55 = arith.constant 64 : index
    %c24_56 = arith.constant 24 : index
    %151 = vector.load %arg7[%c64_55, %c24_56] : memref<128x32xf32, #tpu.memory_space<vmem>>, vector<64x8xf32>
    tpu.vector_store %arg7[%c64_55, %c24_56], %150 {strides = array<i32>} : memref<128x32xf32, #tpu.memory_space<vmem>>, vector<64x8xf32>,
    %c0_57 = arith.constant 0 : index
    %c0_58 = arith.constant 0 : index
    %152 = vector.load %arg7[%c0_57, %c0_58] : memref<128x32xf32, #tpu.memory_space<vmem>>, vector<128x32xf32>
    %c0_59 = arith.constant 0 : index
    %c0_60 = arith.constant 0 : index
    %153 = vector.load %arg4[%c0_59, %c0_60] : memref<32x32xf32, #tpu.memory_space<vmem>>, vector<32x32xf32>
    %cst_61 = arith.constant dense<0.000000e+00> : vector<128x32xf32>
    %154 = tpu.matmul %152, %153, %cst_61 {dimension_numbers = #tpu.dot_dimension_numbers<[1], [1], [0], [0], [0, 0, 1, 0], [], []>} : vector<128x32xf32>, vector<32x32xf32>, vector<128x32xf32> -> vector<128x32xf32>
    %c0_62 = arith.constant 0 : index
    %c0_63 = arith.constant 0 : index
    %155 = vector.load %arg5[%c0_62, %c0_63] : memref<1x32xf32, #tpu.memory_space<vmem>>, vector<1x32xf32>
    %156 = vector.broadcast %155 : vector<1x32xf32> to vector<128x32xf32>
    %157 = arith.addf %154, %156 : vector<128x32xf32>
    %c0_64 = arith.constant 0 : index
    %c0_65 = arith.constant 0 : index
    %158 = vector.load %arg6[%c0_64, %c0_65] : memref<128x32xf32, #tpu.memory_space<vmem>>, vector<128x32xf32>
    tpu.vector_store %arg6[%c0_64, %c0_65], %157 {strides = array<i32>} : memref<128x32xf32, #tpu.memory_space<vmem>>, vector<128x32xf32>,
    return
  }
  func.func @transform_0(%arg0: i32) -> (i32, i32) {
    %c0_i32 = arith.constant 0 : i32
    %c0_i32_0 = arith.constant 0 : i32
    return %arg0, %c0_i32 : i32, i32
  }
  func.func @transform_1(%arg0: i32) -> (i32, i32) {
    %c0_i32 = arith.constant 0 : i32
    %c0_i32_0 = arith.constant 0 : i32
    %c0_i32_1 = arith.constant 0 : i32
    return %c0_i32, %c0_i32_0 : i32, i32
  }
  func.func @transform_2(%arg0: i32) -> (i32, i32) {
    %c0_i32 = arith.constant 0 : i32
    %c0_i32_0 = arith.constant 0 : i32
    %c0_i32_1 = arith.constant 0 : i32
    return %c0_i32, %c0_i32_0 : i32, i32
  }
  func.func @transform_3(%arg0: i32) -> (i32, i32) {
    %c0_i32 = arith.constant 0 : i32
    %c0_i32_0 = arith.constant 0 : i32
    %c0_i32_1 = arith.constant 0 : i32
    return %c0_i32, %c0_i32_0 : i32, i32
  }
  func.func @transform_4(%arg0: i32) -> (i32, i32) {
    %c0_i32 = arith.constant 0 : i32
    %c0_i32_0 = arith.constant 0 : i32
    %c0_i32_1 = arith.constant 0 : i32
    return %c0_i32, %c0_i32_0 : i32, i32
  }
  func.func @transform_5(%arg0: i32) -> (i32, i32) {
    %c0_i32 = arith.constant 0 : i32
    %c0_i32_0 = arith.constant 0 : i32
    return %arg0, %c0_i32 : i32, i32
  }
}

module attributes {stable_mosaic.version = 11 : i64} {
  func.func @_window_attn_kernel(%arg0: i32, %arg1: memref<128x32xf32, #tpu.memory_space<vmem>>, %arg2: memref<96x32xf32, #tpu.memory_space<vmem>>, %arg3: memref<1x96xf32, #tpu.memory_space<vmem>>, %arg4: memref<32x32xf32, #tpu.memory_space<vmem>>, %arg5: memref<1x32xf32, #tpu.memory_space<vmem>>, %arg6: memref<128x32xf32, #tpu.memory_space<vmem>>, %arg7: memref<128x32xf32, #tpu.memory_space<vmem>>) attributes {dimension_semantics = [#tpu.dimension_semantics<parallel>], iteration_bounds = array<i64: 1>, scalar_prefetch = 0 : i64, scratch_operands = 1 : i64, tpu.core_type = #tpu.core_type<tc>, window_params = [{transform_indices = @transform_0, window_bounds = array<i64: 128, 32>}, {pipeline_mode = #tpu.pipeline_mode<synchronous>, transform_indices = @transform_1, window_bounds = array<i64: 96, 32>}, {pipeline_mode = #tpu.pipeline_mode<synchronous>, transform_indices = @transform_2, window_bounds = array<i64: 1, 96>}, {pipeline_mode = #tpu.pipeline_mode<synchronous>, transform_indices = @transform_3, window_bounds = array<i64: 32, 32>}, {pipeline_mode = #tpu.pipeline_mode<synchronous>, transform_indices = @transform_4, window_bounds = array<i64: 1, 32>}, {transform_indices = @transform_5, window_bounds = array<i64: 128, 32>}]} {
    %c0 = arith.constant 0 : index
    %c0_0 = arith.constant 0 : index
    %0 = vector.load %arg1[%c0, %c0_0] : memref<128x32xf32, #tpu.memory_space<vmem>>, vector<128x32xf32>
    %c0_1 = arith.constant 0 : index
    %c0_2 = arith.constant 0 : index
    %1 = vector.load %arg2[%c0_1, %c0_2] : memref<96x32xf32, #tpu.memory_space<vmem>>, vector<96x32xf32>
    %cst = arith.constant dense<0.000000e+00> : vector<128x96xf32>
    %2 = tpu.matmul %0, %1, %cst {dimension_numbers = #tpu.dot_dimension_numbers<[1], [1], [0], [0], [0, 0, 1, 0], [], []>} : vector<128x32xf32>, vector<96x32xf32>, vector<128x96xf32> -> vector<128x96xf32>
    %c0_3 = arith.constant 0 : index
    %c0_4 = arith.constant 0 : index
    %3 = vector.load %arg3[%c0_3, %c0_4] : memref<1x96xf32, #tpu.memory_space<vmem>>, vector<1x96xf32>
    %4 = vector.broadcast %3 : vector<1x96xf32> to vector<128x96xf32>
    %5 = arith.addf %2, %4 : vector<128x96xf32>
    %6 = vector.extract_strided_slice %5 {offsets = [0, 0], sizes = [64, 96], strides = [1, 1]} : vector<128x96xf32> to vector<64x96xf32>
    %7 = vector.extract_strided_slice %6 {offsets = [0, 0], sizes = [64, 8], strides = [1, 1]} : vector<64x96xf32> to vector<64x8xf32>
    %cst_5 = arith.constant 0.353553385 : f32
    %8 = vector.broadcast %cst_5 : f32 to vector<64x8xf32>
    %9 = arith.mulf %7, %8 : vector<64x8xf32>
    %10 = vector.extract_strided_slice %6 {offsets = [0, 32], sizes = [64, 8], strides = [1, 1]} : vector<64x96xf32> to vector<64x8xf32>
    %11 = vector.extract_strided_slice %6 {offsets = [0, 64], sizes = [64, 8], strides = [1, 1]} : vector<64x96xf32> to vector<64x8xf32>
    %cst_6 = arith.constant dense<0.000000e+00> : vector<64x64xf32>
    %12 = tpu.matmul %9, %10, %cst_6 {dimension_numbers = #tpu.dot_dimension_numbers<[1], [1], [0], [0], [0, 0, 1, 0], [], []>} : vector<64x8xf32>, vector<64x8xf32>, vector<64x64xf32> -> vector<64x64xf32>
    %cst_7 = arith.constant dense<0xFF800000> : vector<64xf32>
    %13 = vector.multi_reduction <maximumf>, %12, %cst_7 [1] : vector<64x64xf32> to vector<64xf32>
    %14 = vector.shape_cast %13 : vector<64xf32> to vector<64x1xf32>
    %15 = vector.broadcast %14 : vector<64x1xf32> to vector<64x64xf32>
    %16 = arith.subf %12, %15 : vector<64x64xf32>
    %17 = math.exp %16 : vector<64x64xf32>
    %cst_8 = arith.constant dense<0.000000e+00> : vector<64xf32>
    %18 = vector.multi_reduction <add>, %17, %cst_8 [1] : vector<64x64xf32> to vector<64xf32>
    %19 = vector.shape_cast %18 : vector<64xf32> to vector<64x1xf32>
    %cst_9 = arith.constant dense<0.000000e+00> : vector<64x8xf32>
    %20 = tpu.matmul %17, %11, %cst_9 {dimension_numbers = #tpu.dot_dimension_numbers<[1], [0], [0], [1], [0, 0, 1, 1], [], []>} : vector<64x64xf32>, vector<64x8xf32>, vector<64x8xf32> -> vector<64x8xf32>
    %21 = tpu.reciprocal %19 {approx = true} : vector<64x1xf32> -> vector<64x1xf32>
    %22 = vector.broadcast %21 : vector<64x1xf32> to vector<64x8xf32>
    %23 = arith.mulf %20, %22 : vector<64x8xf32>
    %c0_10 = arith.constant 0 : index
    %c0_11 = arith.constant 0 : index
    %24 = vector.load %arg7[%c0_10, %c0_11] : memref<128x32xf32, #tpu.memory_space<vmem>>, vector<64x8xf32>
    tpu.vector_store %arg7[%c0_10, %c0_11], %23 {strides = array<i32>} : memref<128x32xf32, #tpu.memory_space<vmem>>, vector<64x8xf32>,
    %25 = vector.extract_strided_slice %6 {offsets = [0, 8], sizes = [64, 8], strides = [1, 1]} : vector<64x96xf32> to vector<64x8xf32>
    %cst_12 = arith.constant 0.353553385 : f32
    %26 = vector.broadcast %cst_12 : f32 to vector<64x8xf32>
    %27 = arith.mulf %25, %26 : vector<64x8xf32>
    %28 = vector.extract_strided_slice %6 {offsets = [0, 40], sizes = [64, 8], strides = [1, 1]} : vector<64x96xf32> to vector<64x8xf32>
    %29 = vector.extract_strided_slice %6 {offsets = [0, 72], sizes = [64, 8], strides = [1, 1]} : vector<64x96xf32> to vector<64x8xf32>
    %cst_13 = arith.constant dense<0.000000e+00> : vector<64x64xf32>
    %30 = tpu.matmul %27, %28, %cst_13 {dimension_numbers = #tpu.dot_dimension_numbers<[1], [1], [0], [0], [0, 0, 1, 0], [], []>} : vector<64x8xf32>, vector<64x8xf32>, vector<64x64xf32> -> vector<64x64xf32>
    %cst_14 = arith.constant dense<0xFF800000> : vector<64xf32>
    %31 = vector.multi_reduction <maximumf>, %30, %cst_14 [1] : vector<64x64xf32> to vector<64xf32>
    %32 = vector.shape_cast %31 : vector<64xf32> to vector<64x1xf32>
    %33 = vector.broadcast %32 : vector<64x1xf32> to vector<64x64xf32>
    %34 = arith.subf %30, %33 : vector<64x64xf32>
    %35 = math.exp %34 : vector<64x64xf32>
    %cst_15 = arith.constant dense<0.000000e+00> : vector<64xf32>
    %36 = vector.multi_reduction <add>, %35, %cst_15 [1] : vector<64x64xf32> to vector<64xf32>
    %37 = vector.shape_cast %36 : vector<64xf32> to vector<64x1xf32>
    %cst_16 = arith.constant dense<0.000000e+00> : vector<64x8xf32>
    %38 = tpu.matmul %35, %29, %cst_16 {dimension_numbers = #tpu.dot_dimension_numbers<[1], [0], [0], [1], [0, 0, 1, 1], [], []>} : vector<64x64xf32>, vector<64x8xf32>, vector<64x8xf32> -> vector<64x8xf32>
    %39 = tpu.reciprocal %37 {approx = true} : vector<64x1xf32> -> vector<64x1xf32>
    %40 = vector.broadcast %39 : vector<64x1xf32> to vector<64x8xf32>
    %41 = arith.mulf %38, %40 : vector<64x8xf32>
    %c0_17 = arith.constant 0 : index
    %c8 = arith.constant 8 : index
    %42 = vector.load %arg7[%c0_17, %c8] : memref<128x32xf32, #tpu.memory_space<vmem>>, vector<64x8xf32>
    tpu.vector_store %arg7[%c0_17, %c8], %41 {strides = array<i32>} : memref<128x32xf32, #tpu.memory_space<vmem>>, vector<64x8xf32>,
    %43 = vector.extract_strided_slice %6 {offsets = [0, 16], sizes = [64, 8], strides = [1, 1]} : vector<64x96xf32> to vector<64x8xf32>
    %cst_18 = arith.constant 0.353553385 : f32
    %44 = vector.broadcast %cst_18 : f32 to vector<64x8xf32>
    %45 = arith.mulf %43, %44 : vector<64x8xf32>
    %46 = vector.extract_strided_slice %6 {offsets = [0, 48], sizes = [64, 8], strides = [1, 1]} : vector<64x96xf32> to vector<64x8xf32>
    %47 = vector.extract_strided_slice %6 {offsets = [0, 80], sizes = [64, 8], strides = [1, 1]} : vector<64x96xf32> to vector<64x8xf32>
    %cst_19 = arith.constant dense<0.000000e+00> : vector<64x64xf32>
    %48 = tpu.matmul %45, %46, %cst_19 {dimension_numbers = #tpu.dot_dimension_numbers<[1], [1], [0], [0], [0, 0, 1, 0], [], []>} : vector<64x8xf32>, vector<64x8xf32>, vector<64x64xf32> -> vector<64x64xf32>
    %cst_20 = arith.constant dense<0xFF800000> : vector<64xf32>
    %49 = vector.multi_reduction <maximumf>, %48, %cst_20 [1] : vector<64x64xf32> to vector<64xf32>
    %50 = vector.shape_cast %49 : vector<64xf32> to vector<64x1xf32>
    %51 = vector.broadcast %50 : vector<64x1xf32> to vector<64x64xf32>
    %52 = arith.subf %48, %51 : vector<64x64xf32>
    %53 = math.exp %52 : vector<64x64xf32>
    %cst_21 = arith.constant dense<0.000000e+00> : vector<64xf32>
    %54 = vector.multi_reduction <add>, %53, %cst_21 [1] : vector<64x64xf32> to vector<64xf32>
    %55 = vector.shape_cast %54 : vector<64xf32> to vector<64x1xf32>
    %cst_22 = arith.constant dense<0.000000e+00> : vector<64x8xf32>
    %56 = tpu.matmul %53, %47, %cst_22 {dimension_numbers = #tpu.dot_dimension_numbers<[1], [0], [0], [1], [0, 0, 1, 1], [], []>} : vector<64x64xf32>, vector<64x8xf32>, vector<64x8xf32> -> vector<64x8xf32>
    %57 = tpu.reciprocal %55 {approx = true} : vector<64x1xf32> -> vector<64x1xf32>
    %58 = vector.broadcast %57 : vector<64x1xf32> to vector<64x8xf32>
    %59 = arith.mulf %56, %58 : vector<64x8xf32>
    %c0_23 = arith.constant 0 : index
    %c16 = arith.constant 16 : index
    %60 = vector.load %arg7[%c0_23, %c16] : memref<128x32xf32, #tpu.memory_space<vmem>>, vector<64x8xf32>
    tpu.vector_store %arg7[%c0_23, %c16], %59 {strides = array<i32>} : memref<128x32xf32, #tpu.memory_space<vmem>>, vector<64x8xf32>,
    %61 = vector.extract_strided_slice %6 {offsets = [0, 24], sizes = [64, 8], strides = [1, 1]} : vector<64x96xf32> to vector<64x8xf32>
    %cst_24 = arith.constant 0.353553385 : f32
    %62 = vector.broadcast %cst_24 : f32 to vector<64x8xf32>
    %63 = arith.mulf %61, %62 : vector<64x8xf32>
    %64 = vector.extract_strided_slice %6 {offsets = [0, 56], sizes = [64, 8], strides = [1, 1]} : vector<64x96xf32> to vector<64x8xf32>
    %65 = vector.extract_strided_slice %6 {offsets = [0, 88], sizes = [64, 8], strides = [1, 1]} : vector<64x96xf32> to vector<64x8xf32>
    %cst_25 = arith.constant dense<0.000000e+00> : vector<64x64xf32>
    %66 = tpu.matmul %63, %64, %cst_25 {dimension_numbers = #tpu.dot_dimension_numbers<[1], [1], [0], [0], [0, 0, 1, 0], [], []>} : vector<64x8xf32>, vector<64x8xf32>, vector<64x64xf32> -> vector<64x64xf32>
    %cst_26 = arith.constant dense<0xFF800000> : vector<64xf32>
    %67 = vector.multi_reduction <maximumf>, %66, %cst_26 [1] : vector<64x64xf32> to vector<64xf32>
    %68 = vector.shape_cast %67 : vector<64xf32> to vector<64x1xf32>
    %69 = vector.broadcast %68 : vector<64x1xf32> to vector<64x64xf32>
    %70 = arith.subf %66, %69 : vector<64x64xf32>
    %71 = math.exp %70 : vector<64x64xf32>
    %cst_27 = arith.constant dense<0.000000e+00> : vector<64xf32>
    %72 = vector.multi_reduction <add>, %71, %cst_27 [1] : vector<64x64xf32> to vector<64xf32>
    %73 = vector.shape_cast %72 : vector<64xf32> to vector<64x1xf32>
    %cst_28 = arith.constant dense<0.000000e+00> : vector<64x8xf32>
    %74 = tpu.matmul %71, %65, %cst_28 {dimension_numbers = #tpu.dot_dimension_numbers<[1], [0], [0], [1], [0, 0, 1, 1], [], []>} : vector<64x64xf32>, vector<64x8xf32>, vector<64x8xf32> -> vector<64x8xf32>
    %75 = tpu.reciprocal %73 {approx = true} : vector<64x1xf32> -> vector<64x1xf32>
    %76 = vector.broadcast %75 : vector<64x1xf32> to vector<64x8xf32>
    %77 = arith.mulf %74, %76 : vector<64x8xf32>
    %c0_29 = arith.constant 0 : index
    %c24 = arith.constant 24 : index
    %78 = vector.load %arg7[%c0_29, %c24] : memref<128x32xf32, #tpu.memory_space<vmem>>, vector<64x8xf32>
    tpu.vector_store %arg7[%c0_29, %c24], %77 {strides = array<i32>} : memref<128x32xf32, #tpu.memory_space<vmem>>, vector<64x8xf32>,
    %79 = vector.extract_strided_slice %5 {offsets = [64, 0], sizes = [64, 96], strides = [1, 1]} : vector<128x96xf32> to vector<64x96xf32>
    %80 = vector.extract_strided_slice %79 {offsets = [0, 0], sizes = [64, 8], strides = [1, 1]} : vector<64x96xf32> to vector<64x8xf32>
    %cst_30 = arith.constant 0.353553385 : f32
    %81 = vector.broadcast %cst_30 : f32 to vector<64x8xf32>
    %82 = arith.mulf %80, %81 : vector<64x8xf32>
    %83 = vector.extract_strided_slice %79 {offsets = [0, 32], sizes = [64, 8], strides = [1, 1]} : vector<64x96xf32> to vector<64x8xf32>
    %84 = vector.extract_strided_slice %79 {offsets = [0, 64], sizes = [64, 8], strides = [1, 1]} : vector<64x96xf32> to vector<64x8xf32>
    %cst_31 = arith.constant dense<0.000000e+00> : vector<64x64xf32>
    %85 = tpu.matmul %82, %83, %cst_31 {dimension_numbers = #tpu.dot_dimension_numbers<[1], [1], [0], [0], [0, 0, 1, 0], [], []>} : vector<64x8xf32>, vector<64x8xf32>, vector<64x64xf32> -> vector<64x64xf32>
    %cst_32 = arith.constant dense<0xFF800000> : vector<64xf32>
    %86 = vector.multi_reduction <maximumf>, %85, %cst_32 [1] : vector<64x64xf32> to vector<64xf32>
    %87 = vector.shape_cast %86 : vector<64xf32> to vector<64x1xf32>
    %88 = vector.broadcast %87 : vector<64x1xf32> to vector<64x64xf32>
    %89 = arith.subf %85, %88 : vector<64x64xf32>
    %90 = math.exp %89 : vector<64x64xf32>
    %cst_33 = arith.constant dense<0.000000e+00> : vector<64xf32>
    %91 = vector.multi_reduction <add>, %90, %cst_33 [1] : vector<64x64xf32> to vector<64xf32>
    %92 = vector.shape_cast %91 : vector<64xf32> to vector<64x1xf32>
    %cst_34 = arith.constant dense<0.000000e+00> : vector<64x8xf32>
    %93 = tpu.matmul %90, %84, %cst_34 {dimension_numbers = #tpu.dot_dimension_numbers<[1], [0], [0], [1], [0, 0, 1, 1], [], []>} : vector<64x64xf32>, vector<64x8xf32>, vector<64x8xf32> -> vector<64x8xf32>
    %94 = tpu.reciprocal %92 {approx = true} : vector<64x1xf32> -> vector<64x1xf32>
    %95 = vector.broadcast %94 : vector<64x1xf32> to vector<64x8xf32>
    %96 = arith.mulf %93, %95 : vector<64x8xf32>
    %c64 = arith.constant 64 : index
    %c0_35 = arith.constant 0 : index
    %97 = vector.load %arg7[%c64, %c0_35] : memref<128x32xf32, #tpu.memory_space<vmem>>, vector<64x8xf32>
    tpu.vector_store %arg7[%c64, %c0_35], %96 {strides = array<i32>} : memref<128x32xf32, #tpu.memory_space<vmem>>, vector<64x8xf32>,
    %98 = vector.extract_strided_slice %79 {offsets = [0, 8], sizes = [64, 8], strides = [1, 1]} : vector<64x96xf32> to vector<64x8xf32>
    %cst_36 = arith.constant 0.353553385 : f32
    %99 = vector.broadcast %cst_36 : f32 to vector<64x8xf32>
    %100 = arith.mulf %98, %99 : vector<64x8xf32>
    %101 = vector.extract_strided_slice %79 {offsets = [0, 40], sizes = [64, 8], strides = [1, 1]} : vector<64x96xf32> to vector<64x8xf32>
    %102 = vector.extract_strided_slice %79 {offsets = [0, 72], sizes = [64, 8], strides = [1, 1]} : vector<64x96xf32> to vector<64x8xf32>
    %cst_37 = arith.constant dense<0.000000e+00> : vector<64x64xf32>
    %103 = tpu.matmul %100, %101, %cst_37 {dimension_numbers = #tpu.dot_dimension_numbers<[1], [1], [0], [0], [0, 0, 1, 0], [], []>} : vector<64x8xf32>, vector<64x8xf32>, vector<64x64xf32> -> vector<64x64xf32>
    %cst_38 = arith.constant dense<0xFF800000> : vector<64xf32>
    %104 = vector.multi_reduction <maximumf>, %103, %cst_38 [1] : vector<64x64xf32> to vector<64xf32>
    %105 = vector.shape_cast %104 : vector<64xf32> to vector<64x1xf32>
    %106 = vector.broadcast %105 : vector<64x1xf32> to vector<64x64xf32>
    %107 = arith.subf %103, %106 : vector<64x64xf32>
    %108 = math.exp %107 : vector<64x64xf32>
    %cst_39 = arith.constant dense<0.000000e+00> : vector<64xf32>
    %109 = vector.multi_reduction <add>, %108, %cst_39 [1] : vector<64x64xf32> to vector<64xf32>
    %110 = vector.shape_cast %109 : vector<64xf32> to vector<64x1xf32>
    %cst_40 = arith.constant dense<0.000000e+00> : vector<64x8xf32>
    %111 = tpu.matmul %108, %102, %cst_40 {dimension_numbers = #tpu.dot_dimension_numbers<[1], [0], [0], [1], [0, 0, 1, 1], [], []>} : vector<64x64xf32>, vector<64x8xf32>, vector<64x8xf32> -> vector<64x8xf32>
    %112 = tpu.reciprocal %110 {approx = true} : vector<64x1xf32> -> vector<64x1xf32>
    %113 = vector.broadcast %112 : vector<64x1xf32> to vector<64x8xf32>
    %114 = arith.mulf %111, %113 : vector<64x8xf32>
    %c64_41 = arith.constant 64 : index
    %c8_42 = arith.constant 8 : index
    %115 = vector.load %arg7[%c64_41, %c8_42] : memref<128x32xf32, #tpu.memory_space<vmem>>, vector<64x8xf32>
    tpu.vector_store %arg7[%c64_41, %c8_42], %114 {strides = array<i32>} : memref<128x32xf32, #tpu.memory_space<vmem>>, vector<64x8xf32>,
    %116 = vector.extract_strided_slice %79 {offsets = [0, 16], sizes = [64, 8], strides = [1, 1]} : vector<64x96xf32> to vector<64x8xf32>
    %cst_43 = arith.constant 0.353553385 : f32
    %117 = vector.broadcast %cst_43 : f32 to vector<64x8xf32>
    %118 = arith.mulf %116, %117 : vector<64x8xf32>
    %119 = vector.extract_strided_slice %79 {offsets = [0, 48], sizes = [64, 8], strides = [1, 1]} : vector<64x96xf32> to vector<64x8xf32>
    %120 = vector.extract_strided_slice %79 {offsets = [0, 80], sizes = [64, 8], strides = [1, 1]} : vector<64x96xf32> to vector<64x8xf32>
    %cst_44 = arith.constant dense<0.000000e+00> : vector<64x64xf32>
    %121 = tpu.matmul %118, %119, %cst_44 {dimension_numbers = #tpu.dot_dimension_numbers<[1], [1], [0], [0], [0, 0, 1, 0], [], []>} : vector<64x8xf32>, vector<64x8xf32>, vector<64x64xf32> -> vector<64x64xf32>
    %cst_45 = arith.constant dense<0xFF800000> : vector<64xf32>
    %122 = vector.multi_reduction <maximumf>, %121, %cst_45 [1] : vector<64x64xf32> to vector<64xf32>
    %123 = vector.shape_cast %122 : vector<64xf32> to vector<64x1xf32>
    %124 = vector.broadcast %123 : vector<64x1xf32> to vector<64x64xf32>
    %125 = arith.subf %121, %124 : vector<64x64xf32>
    %126 = math.exp %125 : vector<64x64xf32>
    %cst_46 = arith.constant dense<0.000000e+00> : vector<64xf32>
    %127 = vector.multi_reduction <add>, %126, %cst_46 [1] : vector<64x64xf32> to vector<64xf32>
    %128 = vector.shape_cast %127 : vector<64xf32> to vector<64x1xf32>
    %cst_47 = arith.constant dense<0.000000e+00> : vector<64x8xf32>
    %129 = tpu.matmul %126, %120, %cst_47 {dimension_numbers = #tpu.dot_dimension_numbers<[1], [0], [0], [1], [0, 0, 1, 1], [], []>} : vector<64x64xf32>, vector<64x8xf32>, vector<64x8xf32> -> vector<64x8xf32>
    %130 = tpu.reciprocal %128 {approx = true} : vector<64x1xf32> -> vector<64x1xf32>
    %131 = vector.broadcast %130 : vector<64x1xf32> to vector<64x8xf32>
    %132 = arith.mulf %129, %131 : vector<64x8xf32>
    %c64_48 = arith.constant 64 : index
    %c16_49 = arith.constant 16 : index
    %133 = vector.load %arg7[%c64_48, %c16_49] : memref<128x32xf32, #tpu.memory_space<vmem>>, vector<64x8xf32>
    tpu.vector_store %arg7[%c64_48, %c16_49], %132 {strides = array<i32>} : memref<128x32xf32, #tpu.memory_space<vmem>>, vector<64x8xf32>,
    %134 = vector.extract_strided_slice %79 {offsets = [0, 24], sizes = [64, 8], strides = [1, 1]} : vector<64x96xf32> to vector<64x8xf32>
    %cst_50 = arith.constant 0.353553385 : f32
    %135 = vector.broadcast %cst_50 : f32 to vector<64x8xf32>
    %136 = arith.mulf %134, %135 : vector<64x8xf32>
    %137 = vector.extract_strided_slice %79 {offsets = [0, 56], sizes = [64, 8], strides = [1, 1]} : vector<64x96xf32> to vector<64x8xf32>
    %138 = vector.extract_strided_slice %79 {offsets = [0, 88], sizes = [64, 8], strides = [1, 1]} : vector<64x96xf32> to vector<64x8xf32>
    %cst_51 = arith.constant dense<0.000000e+00> : vector<64x64xf32>
    %139 = tpu.matmul %136, %137, %cst_51 {dimension_numbers = #tpu.dot_dimension_numbers<[1], [1], [0], [0], [0, 0, 1, 0], [], []>} : vector<64x8xf32>, vector<64x8xf32>, vector<64x64xf32> -> vector<64x64xf32>
    %cst_52 = arith.constant dense<0xFF800000> : vector<64xf32>
    %140 = vector.multi_reduction <maximumf>, %139, %cst_52 [1] : vector<64x64xf32> to vector<64xf32>
    %141 = vector.shape_cast %140 : vector<64xf32> to vector<64x1xf32>
    %142 = vector.broadcast %141 : vector<64x1xf32> to vector<64x64xf32>
    %143 = arith.subf %139, %142 : vector<64x64xf32>
    %144 = math.exp %143 : vector<64x64xf32>
    %cst_53 = arith.constant dense<0.000000e+00> : vector<64xf32>
    %145 = vector.multi_reduction <add>, %144, %cst_53 [1] : vector<64x64xf32> to vector<64xf32>
    %146 = vector.shape_cast %145 : vector<64xf32> to vector<64x1xf32>
    %cst_54 = arith.constant dense<0.000000e+00> : vector<64x8xf32>
    %147 = tpu.matmul %144, %138, %cst_54 {dimension_numbers = #tpu.dot_dimension_numbers<[1], [0], [0], [1], [0, 0, 1, 1], [], []>} : vector<64x64xf32>, vector<64x8xf32>, vector<64x8xf32> -> vector<64x8xf32>
    %148 = tpu.reciprocal %146 {approx = true} : vector<64x1xf32> -> vector<64x1xf32>
    %149 = vector.broadcast %148 : vector<64x1xf32> to vector<64x8xf32>
    %150 = arith.mulf %147, %149 : vector<64x8xf32>
    %c64_55 = arith.constant 64 : index
    %c24_56 = arith.constant 24 : index
    %151 = vector.load %arg7[%c64_55, %c24_56] : memref<128x32xf32, #tpu.memory_space<vmem>>, vector<64x8xf32>
    tpu.vector_store %arg7[%c64_55, %c24_56], %150 {strides = array<i32>} : memref<128x32xf32, #tpu.memory_space<vmem>>, vector<64x8xf32>,
    %c0_57 = arith.constant 0 : index
    %c0_58 = arith.constant 0 : index
    %152 = vector.load %arg7[%c0_57, %c0_58] : memref<128x32xf32, #tpu.memory_space<vmem>>, vector<128x32xf32>
    %c0_59 = arith.constant 0 : index
    %c0_60 = arith.constant 0 : index
    %153 = vector.load %arg4[%c0_59, %c0_60] : memref<32x32xf32, #tpu.memory_space<vmem>>, vector<32x32xf32>
    %cst_61 = arith.constant dense<0.000000e+00> : vector<128x32xf32>
    %154 = tpu.matmul %152, %153, %cst_61 {dimension_numbers = #tpu.dot_dimension_numbers<[1], [1], [0], [0], [0, 0, 1, 0], [], []>} : vector<128x32xf32>, vector<32x32xf32>, vector<128x32xf32> -> vector<128x32xf32>
    %c0_62 = arith.constant 0 : index
    %c0_63 = arith.constant 0 : index
    %155 = vector.load %arg5[%c0_62, %c0_63] : memref<1x32xf32, #tpu.memory_space<vmem>>, vector<1x32xf32>
    %156 = vector.broadcast %155 : vector<1x32xf32> to vector<128x32xf32>
    %157 = arith.addf %154, %156 : vector<128x32xf32>
    %c0_64 = arith.constant 0 : index
    %c0_65 = arith.constant 0 : index
    %158 = vector.load %arg6[%c0_64, %c0_65] : memref<128x32xf32, #tpu.memory_space<vmem>>, vector<128x32xf32>
    tpu.vector_store %arg6[%c0_64, %c0_65], %157 {strides = array<i32>} : memref<128x32xf32, #tpu.memory_space<vmem>>, vector<128x32xf32>,
    return
  }
  func.func @transform_0(%arg0: i32) -> (i32, i32) {
    %c0_i32 = arith.constant 0 : i32
    %c0_i32_0 = arith.constant 0 : i32
    return %arg0, %c0_i32 : i32, i32
  }
  func.func @transform_1(%arg0: i32) -> (i32, i32) {
    %c0_i32 = arith.constant 0 : i32
    %c0_i32_0 = arith.constant 0 : i32
    %c0_i32_1 = arith.constant 0 : i32
    return %c0_i32, %c0_i32_0 : i32, i32
  }
  func.func @transform_2(%arg0: i32) -> (i32, i32) {
    %c0_i32 = arith.constant 0 : i32
    %c0_i32_0 = arith.constant 0 : i32
    %c0_i32_1 = arith.constant 0 : i32
    return %c0_i32, %c0_i32_0 : i32, i32
  }
  func.func @transform_3(%arg0: i32) -> (i32, i32) {
    %c0_i32 = arith.constant 0 : i32
    %c0_i32_0 = arith.constant 0 : i32
    %c0_i32_1 = arith.constant 0 : i32
    return %c0_i32, %c0_i32_0 : i32, i32
  }
  func.func @transform_4(%arg0: i32) -> (i32, i32) {
    %c0_i32 = arith.constant 0 : i32
    %c0_i32_0 = arith.constant 0 : i32
    %c0_i32_1 = arith.constant 0 : i32
    return %c0_i32, %c0_i32_0 : i32, i32
  }
  func.func @transform_5(%arg0: i32) -> (i32, i32) {
    %c0_i32 = arith.constant 0 : i32
    %c0_i32_0 = arith.constant 0 : i32
    return %arg0, %c0_i32 : i32, i32
  }
}

</mosaic_0001>

<llo_original>
// kernel: tpu_custom_call.1
$region0: #{tpu_custom_call.1}
  #allocation0 [shape = 'u32[]', space=smem, size = 0x4, offset = 0x4, fixed_abs, tag = 'smem constant byte address 0x4 - core index']
  #allocation1 [shape = 'u32[144,128]{1,0:T(1,128)}', space=vmem, size = 0x12000, scoped, tag = 'internal scratch']
  #allocation2 [shape = 'f32[128,32]{1,0:T(8,128)}', space=vmem, size = 0x10000, scoped, tag = 'scratch operand']
  %s0 = inlined_call_operand.vmem [shape: f32[128,32], index: 0, kind: input, shape index: {}]
  %s1 = inlined_call_operand.vmem [shape: f32[96,32], index: 1, kind: input, shape index: {}]
  %s2 = inlined_call_operand.vmem [shape: f32[1,96], index: 2, kind: input, shape index: {}]
  %s3 = inlined_call_operand.vmem [shape: f32[32,32], index: 3, kind: input, shape index: {}]
  %s4 = inlined_call_operand.vmem [shape: f32[1,32], index: 4, kind: input, shape index: {}]
  %s5 = inlined_call_operand.vmem [shape: f32[128,32], index: 5, kind: output, shape index: {}]
  %s6 = sld [smem:[#allocation0]]
  $region30: #{tpu_custom_call.1} parent=0
    _
  %s8 = ssub.s32 1, %s6
  %s9 = scalar_select 0, %s8, %s6
  // Predicated region
  $region2: #{tpu_custom_call.1} parent=0 // pred_check
    _
  $region3: #{tpu_custom_call.1} parent=0 // pred_check_branch
    %11 = sbr.rel (0) target = $region5
  $region4: #{tpu_custom_call.1} parent=0 // pred_region
    _
  $region5: #{tpu_custom_call.1} parent=0 // pred_fallthru
    _
  // Predicated region
  $region6: #{tpu_custom_call.1} parent=0 // pred_check
    _
  $region7: #{tpu_custom_call.1} parent=0 // pred_check_branch
    %13 = sbr.rel (0) target = $region9
  $region8: #{tpu_custom_call.1} parent=0 // pred_region
    _
  $region9: #{tpu_custom_call.1} parent=0 // pred_fallthru
    _
  // Predicated region
  $region10: #{tpu_custom_call.1} parent=0 // pred_check
    _
  $region11: #{tpu_custom_call.1} parent=0 // pred_check_branch
    %15 = sbr.rel (0) target = $region13
  $region12: #{tpu_custom_call.1} parent=0 // pred_region
    _
  $region13: #{tpu_custom_call.1} parent=0 // pred_fallthru
    _
  // Predicated region
  $region14: #{tpu_custom_call.1} parent=0 // pred_check
    _
  $region15: #{tpu_custom_call.1} parent=0 // pred_check_branch
    %17 = sbr.rel (0) target = $region17
  $region16: #{tpu_custom_call.1} parent=0 // pred_region
    _
  $region17: #{tpu_custom_call.1} parent=0 // pred_fallthru
    _
  // Predicated region
  $region18: #{tpu_custom_call.1} parent=0 // pred_check
    _
  $region19: #{tpu_custom_call.1} parent=0 // pred_check_branch
    %19 = sbr.rel (0) target = $region21
  $region20: #{tpu_custom_call.1} parent=0 // pred_region
    _
  $region21: #{tpu_custom_call.1} parent=0 // pred_fallthru
    _
  %v20 = vld [vmem:[%s0] sm:$0xff]
  %v21 = vld [vmem:[%s0 + $0x8] sm:$0xff]
  %v22 = vld [vmem:[%s0 + $0x10] sm:$0xff]
  %v23 = vld [vmem:[%s0 + $0x18] sm:$0xff]
  %v24 = vld [vmem:[%s0 + $0x20] sm:$0xff]
  %v25 = vld [vmem:[%s0 + $0x28] sm:$0xff]
  %v26 = vld [vmem:[%s0 + $0x30] sm:$0xff]
  %v27 = vld [vmem:[%s0 + $0x38] sm:$0xff]
  %v28 = vld [vmem:[%s0 + $0x40] sm:$0xff]
  %v29 = vld [vmem:[%s0 + $0x48] sm:$0xff]
  %v30 = vld [vmem:[%s0 + $0x50] sm:$0xff]
  %v31 = vld [vmem:[%s0 + $0x58] sm:$0xff]
  %v32 = vld [vmem:[%s0 + $0x60] sm:$0xff]
  %v33 = vld [vmem:[%s0 + $0x68] sm:$0xff]
  %v34 = vld [vmem:[%s0 + $0x70] sm:$0xff]
  %v35 = vld [vmem:[%s0 + $0x78] sm:$0xff]
  %v36 = vld [vmem:[%s1] sm:$0xff]
  %v37 = vld [vmem:[%s1 + $0x8] sm:$0xff]
  %v38 = vld [vmem:[%s1 + $0x10] sm:$0xff]
  %v39 = vld [vmem:[%s1 + $0x18] sm:$0xff]
  %v40 = vld [vmem:[%s1 + $0x20] sm:$0xff]
  %v41 = vld [vmem:[%s1 + $0x28] sm:$0xff]
  %v42 = vld [vmem:[%s1 + $0x30] sm:$0xff]
  %v43 = vld [vmem:[%s1 + $0x38] sm:$0xff]
  %v44 = vld [vmem:[%s1 + $0x40] sm:$0xff]
  %v45 = vld [vmem:[%s1 + $0x48] sm:$0xff]
  %v46 = vld [vmem:[%s1 + $0x50] sm:$0xff]
  %v47 = vld [vmem:[%s1 + $0x58] sm:$0xff]
  %v48 = vld [vmem:[%s2] sm:$0x1]
  %v50 = vlaneseq
  %v51 = vshrl.u32 %v50, 7
  %v52 = vsub.s32 0, %v51
  %v53 = vrot.slane %v48, %v52
  %vm55 = vcmask 261120
  %v57 = vsel %vm55, %v20, 0
  %v60 = vsel %vm55, %v21, 0
  %v63 = vsel %vm55, %v22, 0
  %v66 = vsel %vm55, %v23, 0
  %v69 = vsel %vm55, %v24, 0
  %v72 = vsel %vm55, %v25, 0
  %v75 = vsel %vm55, %v26, 0
  %v78 = vsel %vm55, %v27, 0
  %v81 = vsel %vm55, %v28, 0
  %v84 = vsel %vm55, %v29, 0
  %v87 = vsel %vm55, %v30, 0
  %v90 = vsel %vm55, %v31, 0
  %v93 = vsel %vm55, %v32, 0
  %v96 = vsel %vm55, %v33, 0
  %v99 = vsel %vm55, %v34, 0
  %v102 = vsel %vm55, %v35, 0
  %v105 = vsel %vm55, %v36, 0
  %v108 = vsel %vm55, %v37, 0
  %v111 = vsel %vm55, %v38, 0
  %v114 = vsel %vm55, %v39, 0
  %v117 = vsel %vm55, %v40, 0
  %v120 = vsel %vm55, %v41, 0
  %v123 = vsel %vm55, %v42, 0
  %v126 = vsel %vm55, %v43, 0
  %v129 = vsel %vm55, %v44, 0
  %v132 = vsel %vm55, %v45, 0
  %v135 = vsel %vm55, %v46, 0
  %v138 = vsel %vm55, %v47, 0
  %140 = vmatprep.subr.mxu0 0.0
  %141 = vmatpush1.xpose.msra.mxu0 %v105
  %142 = vmatprep.subr.mxu0 0.0
  %143 = vmatpush1.xpose.msra.mxu0 %v108
  %144 = vmatprep.subr.mxu0 0.0
  %145 = vmatpush1.xpose.msra.mxu0 %v111
  %146 = vmatprep.subr.mxu0 0.0
  %147 = vmatpush1.xpose.msra.mxu0 %v114
  %148 = vmatprep.subr.mxu0 0.0
  %149 = vmatpush1.xpose.msra.mxu0 %v117
  %150 = vmatprep.subr.mxu0 0.0
  %151 = vmatpush1.xpose.msra.mxu0 %v120
  %152 = vmatprep.subr.mxu0 0.0
  %153 = vmatpush1.xpose.msra.mxu0 %v123
  %154 = vmatprep.subr.mxu0 0.0
  %155 = vmatpush1.xpose.msra.mxu0 %v126
  %156 = vmatprep.subr.mxu0 0.0
  %157 = vmatpush1.xpose.msra.mxu0 %v129
  %158 = vmatprep.subr.mxu0 0.0
  %159 = vmatpush1.xpose.msra.mxu0 %v132
  %160 = vmatprep.subr.mxu0 0.0
  %161 = vmatpush1.xpose.msra.mxu0 %v135
  %162 = vmatprep.subr.mxu0 0.0
  %163 = vmatpush1.xpose.msra.mxu0 %v138
  %164 = vmatprep.subr.mxu0 0.0
  %165 = vmatpush1.xpose.msra.mxu0 0.0
  %166 = vmatprep.subr.mxu0 0.0
  %167 = vmatpush1.xpose.msra.mxu0 0.0
  %168 = vmatprep.subr.mxu0 0.0
  %169 = vmatpush1.xpose.msra.mxu0 0.0
  %170 = vmatprep.subr.mxu0 0.0
  %171 = vmatpush1.xpose.msra.mxu0 0.0
  %172 = vmatprep.subr.mxu0 0.0
  %173 = vmatpush1.xpose.msra.mxu0 0.0
  %174 = vmatprep.subr.mxu0 0.0
  %175 = vmatpush1.xpose.msra.mxu0 0.0
  %176 = vmatprep.subr.mxu0 0.0
  %177 = vmatpush1.xpose.msra.mxu0 0.0
  %178 = vmatprep.subr.mxu0 0.0
  %179 = vmatpush1.xpose.msra.mxu0 0.0
  %180 = vmatprep.subr.mxu0 0.0
  %181 = vmatpush1.xpose.msra.mxu0 0.0
  %182 = vmatprep.subr.mxu0 0.0
  %183 = vmatpush1.xpose.msra.mxu0 0.0
  %184 = vmatprep.subr.mxu0 0.0
  %185 = vmatpush1.xpose.msra.mxu0 0.0
  %186 = vmatprep.subr.mxu0 0.0
  %187 = vmatpush1.xpose.msra.mxu0 0.0
  %188 = vmatprep.subr.mxu0 0.0
  %189 = vmatpush1.xpose.msra.mxu0 0.0
  %190 = vmatprep.subr.mxu0 0.0
  %191 = vmatpush1.xpose.msra.mxu0 0.0
  %192 = vmatprep.subr.mxu0 0.0
  %193 = vmatpush1.xpose.msra.mxu0 0.0
  %194 = vmatprep.subr.mxu0 0.0
  %195 = vmatpush1.xpose.msra.mxu0 0.0
  %196 = vmatprep.subr.mxu0 0.0
  %197 = vmatpush1.xpose.msra.mxu0 0.0
  %198 = vmatprep.subr.mxu0 0.0
  %199 = vmatpush1.xpose.msra.mxu0 0.0
  %200 = vmatprep.subr.mxu0 0.0
  %201 = vmatpush1.xpose.msra.mxu0 0.0
  %202 = vmatprep.subr.mxu0 0.0
  %203 = vmatpush1.xpose.msra.mxu0 0.0
  %204 = vmatprep.mubr.f32.mxu0 0.0
  %205 = vmatmul.mubr.f32.gmra.mrb[0].mxu0 %v57
  %v206 = vpop.f32.mrb[0].mxu0
  %v207 = vadd.f32 %v53, %v206
  %v208 = vpop.f32.mrb[0].mxu0
  %209 = vmatprep.mubr.f32.mxu0 0.0
  %210 = vmatmul.mubr.f32.gmra.mrb[0].mxu0 %v60
  %v211 = vpop.f32.mrb[0].mxu0
  %v212 = vadd.f32 %v53, %v211
  %v213 = vpop.f32.mrb[0].mxu0
  %214 = vmatprep.mubr.f32.mxu0 0.0
  %215 = vmatmul.mubr.f32.gmra.mrb[0].mxu0 %v63
  %v216 = vpop.f32.mrb[0].mxu0
  %v217 = vadd.f32 %v53, %v216
  %v218 = vpop.f32.mrb[0].mxu0
  %219 = vmatprep.mubr.f32.mxu0 0.0
  %220 = vmatmul.mubr.f32.gmra.mrb[0].mxu0 %v66
  %v221 = vpop.f32.mrb[0].mxu0
  %v222 = vadd.f32 %v53, %v221
  %v223 = vpop.f32.mrb[0].mxu0
  %224 = vmatprep.mubr.f32.mxu0 0.0
  %225 = vmatmul.mubr.f32.gmra.mrb[0].mxu0 %v69
  %v226 = vpop.f32.mrb[0].mxu0
  %v227 = vadd.f32 %v53, %v226
  %v228 = vpop.f32.mrb[0].mxu0
  %229 = vmatprep.mubr.f32.mxu0 0.0
  %230 = vmatmul.mubr.f32.gmra.mrb[0].mxu0 %v72
  %v231 = vpop.f32.mrb[0].mxu0
  %v232 = vadd.f32 %v53, %v231
  %v233 = vpop.f32.mrb[0].mxu0
  %234 = vmatprep.mubr.f32.mxu0 0.0
  %235 = vmatmul.mubr.f32.gmra.mrb[0].mxu0 %v75
  %v236 = vpop.f32.mrb[0].mxu0
  %v237 = vadd.f32 %v53, %v236
  %v238 = vpop.f32.mrb[0].mxu0
  %239 = vmatprep.mubr.f32.mxu0 0.0
  %240 = vmatmul.mubr.f32.gmra.mrb[0].mxu0 %v78
  %v241 = vpop.f32.mrb[0].mxu0
  %v242 = vadd.f32 %v53, %v241
  %v243 = vpop.f32.mrb[0].mxu0
  %244 = vmatprep.mubr.f32.mxu0 0.0
  %245 = vmatmul.mubr.f32.gmra.mrb[0].mxu0 %v81
  %v246 = vpop.f32.mrb[0].mxu0
  %v247 = vadd.f32 %v53, %v246
  %v248 = vpop.f32.mrb[0].mxu0
  %249 = vmatprep.mubr.f32.mxu0 0.0
  %250 = vmatmul.mubr.f32.gmra.mrb[0].mxu0 %v84
  %v251 = vpop.f32.mrb[0].mxu0
  %v252 = vadd.f32 %v53, %v251
  %v253 = vpop.f32.mrb[0].mxu0
  %254 = vmatprep.mubr.f32.mxu0 0.0
  %255 = vmatmul.mubr.f32.gmra.mrb[0].mxu0 %v87
  %v256 = vpop.f32.mrb[0].mxu0
  %v257 = vadd.f32 %v53, %v256
  %v258 = vpop.f32.mrb[0].mxu0
  %259 = vmatprep.mubr.f32.mxu0 0.0
  %260 = vmatmul.mubr.f32.gmra.mrb[0].mxu0 %v90
  %v261 = vpop.f32.mrb[0].mxu0
  %v262 = vadd.f32 %v53, %v261
  %v263 = vpop.f32.mrb[0].mxu0
  %264 = vmatprep.mubr.f32.mxu0 0.0
  %265 = vmatmul.mubr.f32.gmra.mrb[0].mxu0 %v93
  %v266 = vpop.f32.mrb[0].mxu0
  %v267 = vadd.f32 %v53, %v266
  %v268 = vpop.f32.mrb[0].mxu0
  %269 = vmatprep.mubr.f32.mxu0 0.0
  %270 = vmatmul.mubr.f32.gmra.mrb[0].mxu0 %v96
  %v271 = vpop.f32.mrb[0].mxu0
  %v272 = vadd.f32 %v53, %v271
  %v273 = vpop.f32.mrb[0].mxu0
  %274 = vmatprep.mubr.f32.mxu0 0.0
  %275 = vmatmul.mubr.f32.gmra.mrb[0].mxu0 %v99
  %v276 = vpop.f32.mrb[0].mxu0
  %v277 = vadd.f32 %v53, %v276
  %v278 = vpop.f32.mrb[0].mxu0
  %279 = vmatprep.mubr.f32.mxu0 0.0
  %280 = vmatmul.mubr.f32.gmra.mrb[0].mxu0 %v102
  %v281 = vpop.f32.mrb[0].mxu0
  %v282 = vadd.f32 %v53, %v281
  %v283 = vpop.f32.mrb[0].mxu0
  %284 = vdwg.mxu0
  %v285 = vmul.f32 %v207, 0.35355338
  %v286 = vmul.f32 %v212, 0.35355338
  %v287 = vmul.f32 %v217, 0.35355338
  %v288 = vmul.f32 %v222, 0.35355338
  %v289 = vmul.f32 %v227, 0.35355338
  %v290 = vmul.f32 %v232, 0.35355338
  %v291 = vmul.f32 %v237, 0.35355338
  %v292 = vmul.f32 %v242, 0.35355338
  %301 = vrot.lane.b32.xlu0 %v207, 96
  %v302 = vpop.permute.xlu0 %301
  %303 = vrot.lane.b32.xlu0 %v212, 96
  %v304 = vpop.permute.xlu0 %303
  %305 = vrot.lane.b32.xlu0 %v217, 96
  %v306 = vpop.permute.xlu0 %305
  %307 = vrot.lane.b32.xlu0 %v222, 96
  %v308 = vpop.permute.xlu0 %307
  %309 = vrot.lane.b32.xlu0 %v227, 96
  %v310 = vpop.permute.xlu0 %309
  %311 = vrot.lane.b32.xlu0 %v232, 96
  %v312 = vpop.permute.xlu0 %311
  %313 = vrot.lane.b32.xlu0 %v237, 96
  %v314 = vpop.permute.xlu0 %313
  %315 = vrot.lane.b32.xlu0 %v242, 96
  %v316 = vpop.permute.xlu0 %315
  %vm317 = vcmask 64512
  %v319 = vsel %vm317, %v285, 0
  %v322 = vsel %vm317, %v286, 0
  %v325 = vsel %vm317, %v287, 0
  %v328 = vsel %vm317, %v288, 0
  %v331 = vsel %vm317, %v289, 0
  %v334 = vsel %vm317, %v290, 0
  %v337 = vsel %vm317, %v291, 0
  %v340 = vsel %vm317, %v292, 0
  %v342 = vsel %vm317, %v302, 0
  %v344 = vsel %vm317, %v304, 0
  %v346 = vsel %vm317, %v306, 0
  %v348 = vsel %vm317, %v308, 0
  %v350 = vsel %vm317, %v310, 0
  %v352 = vsel %vm317, %v312, 0
  %v354 = vsel %vm317, %v314, 0
  %v356 = vsel %vm317, %v316, 0
  %358 = vmatprep.subr.mxu0 0.0
  %359 = vmatpush1.xpose.msra.mxu0 %v342
  %360 = vmatprep.subr.mxu0 0.0
  %361 = vmatpush1.xpose.msra.mxu0 %v344
  %362 = vmatprep.subr.mxu0 0.0
  %363 = vmatpush1.xpose.msra.mxu0 %v346
  %364 = vmatprep.subr.mxu0 0.0
  %365 = vmatpush1.xpose.msra.mxu0 %v348
  %366 = vmatprep.subr.mxu0 0.0
  %367 = vmatpush1.xpose.msra.mxu0 %v350
  %368 = vmatprep.subr.mxu0 0.0
  %369 = vmatpush1.xpose.msra.mxu0 %v352
  %370 = vmatprep.subr.mxu0 0.0
  %371 = vmatpush1.xpose.msra.mxu0 %v354
  %372 = vmatprep.subr.mxu0 0.0
  %373 = vmatpush1.xpose.msra.mxu0 %v356
  %374 = vmatprep.subr.mxu0 0.0
  %375 = vmatpush1.xpose.msra.mxu0 0.0
  %376 = vmatprep.subr.mxu0 0.0
  %377 = vmatpush1.xpose.msra.mxu0 0.0
  %378 = vmatprep.subr.mxu0 0.0
  %379 = vmatpush1.xpose.msra.mxu0 0.0
  %380 = vmatprep.subr.mxu0 0.0
  %381 = vmatpush1.xpose.msra.mxu0 0.0
  %382 = vmatprep.subr.mxu0 0.0
  %383 = vmatpush1.xpose.msra.mxu0 0.0
  %384 = vmatprep.subr.mxu0 0.0
  %385 = vmatpush1.xpose.msra.mxu0 0.0
  %386 = vmatprep.subr.mxu0 0.0
  %387 = vmatpush1.xpose.msra.mxu0 0.0
  %388 = vmatprep.subr.mxu0 0.0
  %389 = vmatpush1.xpose.msra.mxu0 0.0
  %390 = vmatprep.subr.mxu0 0.0
  %391 = vmatpush1.xpose.msra.mxu0 0.0
  %392 = vmatprep.subr.mxu0 0.0
  %393 = vmatpush1.xpose.msra.mxu0 0.0
  %394 = vmatprep.subr.mxu0 0.0
  %395 = vmatpush1.xpose.msra.mxu0 0.0
  %396 = vmatprep.subr.mxu0 0.0
  %397 = vmatpush1.xpose.msra.mxu0 0.0
  %398 = vmatprep.subr.mxu0 0.0
  %399 = vmatpush1.xpose.msra.mxu0 0.0
  %400 = vmatprep.subr.mxu0 0.0
  %401 = vmatpush1.xpose.msra.mxu0 0.0
  %402 = vmatprep.subr.mxu0 0.0
  %403 = vmatpush1.xpose.msra.mxu0 0.0
  %404 = vmatprep.subr.mxu0 0.0
  %405 = vmatpush1.xpose.msra.mxu0 0.0
  %406 = vmatprep.subr.mxu0 0.0
  %407 = vmatpush1.xpose.msra.mxu0 0.0
  %408 = vmatprep.subr.mxu0 0.0
  %409 = vmatpush1.xpose.msra.mxu0 0.0
  %410 = vmatprep.subr.mxu0 0.0
  %411 = vmatpush1.xpose.msra.mxu0 0.0
  %412 = vmatprep.subr.mxu0 0.0
  %413 = vmatpush1.xpose.msra.mxu0 0.0
  %414 = vmatprep.subr.mxu0 0.0
  %415 = vmatpush1.xpose.msra.mxu0 0.0
  %416 = vmatprep.subr.mxu0 0.0
  %417 = vmatpush1.xpose.msra.mxu0 0.0
  %418 = vmatprep.subr.mxu0 0.0
  %419 = vmatpush1.xpose.msra.mxu0 0.0
  %420 = vmatprep.subr.mxu0 0.0
  %421 = vmatpush1.xpose.msra.mxu0 0.0
  %422 = vmatprep.mubr.f32.mxu0 0.0
  %423 = vmatmul.mubr.f32.gmra.mrb[0].mxu0 %v319
  %v424 = vpop.f32.mrb[0].mxu0
  %v425 = vadd.f32 0.0, %v424
  %v426 = vpop.f32.mrb[0].mxu0
  %427 = vmatprep.mubr.f32.mxu0 0.0
  %428 = vmatmul.mubr.f32.gmra.mrb[0].mxu0 %v322
  %v429 = vpop.f32.mrb[0].mxu0
  %v430 = vadd.f32 0.0, %v429
  %v431 = vpop.f32.mrb[0].mxu0
  %432 = vmatprep.mubr.f32.mxu0 0.0
  %433 = vmatmul.mubr.f32.gmra.mrb[0].mxu0 %v325
  %v434 = vpop.f32.mrb[0].mxu0
  %v435 = vadd.f32 0.0, %v434
  %v436 = vpop.f32.mrb[0].mxu0
  %437 = vmatprep.mubr.f32.mxu0 0.0
  %438 = vmatmul.mubr.f32.gmra.mrb[0].mxu0 %v328
  %v439 = vpop.f32.mrb[0].mxu0
  %v440 = vadd.f32 0.0, %v439
  %v441 = vpop.f32.mrb[0].mxu0
  %442 = vmatprep.mubr.f32.mxu0 0.0
  %443 = vmatmul.mubr.f32.gmra.mrb[0].mxu0 %v331
  %v444 = vpop.f32.mrb[0].mxu0
  %v445 = vadd.f32 0.0, %v444
  %v446 = vpop.f32.mrb[0].mxu0
  %447 = vmatprep.mubr.f32.mxu0 0.0
  %448 = vmatmul.mubr.f32.gmra.mrb[0].mxu0 %v334
  %v449 = vpop.f32.mrb[0].mxu0
  %v450 = vadd.f32 0.0, %v449
  %v451 = vpop.f32.mrb[0].mxu0
  %452 = vmatprep.mubr.f32.mxu0 0.0
  %453 = vmatmul.mubr.f32.gmra.mrb[0].mxu0 %v337
  %v454 = vpop.f32.mrb[0].mxu0
  %v455 = vadd.f32 0.0, %v454
  %v456 = vpop.f32.mrb[0].mxu0
  %457 = vmatprep.mubr.f32.mxu0 0.0
  %458 = vmatmul.mubr.f32.gmra.mrb[0].mxu0 %v340
  %v459 = vpop.f32.mrb[0].mxu0
  %v460 = vadd.f32 0.0, %v459
  %v461 = vpop.f32.mrb[0].mxu0
  %462 = vdwg.mxu0
  %vm463 = vcmask 523264
  %v464 = vsel %vm463, %v425, -inf
  %465 = vmax.xlane.f32.xlu0 %v464
  %v466 = vpop.xlane.xlu0 %465
  %v467 = vsel %vm463, %v430, -inf
  %468 = vmax.xlane.f32.xlu0 %v467
  %v469 = vpop.xlane.xlu0 %468
  %v470 = vsel %vm463, %v435, -inf
  %471 = vmax.xlane.f32.xlu0 %v470
  %v472 = vpop.xlane.xlu0 %471
  %v473 = vsel %vm463, %v440, -inf
  %474 = vmax.xlane.f32.xlu0 %v473
  %v475 = vpop.xlane.xlu0 %474
  %v476 = vsel %vm463, %v445, -inf
  %477 = vmax.xlane.f32.xlu0 %v476
  %v478 = vpop.xlane.xlu0 %477
  %v479 = vsel %vm463, %v450, -inf
  %480 = vmax.xlane.f32.xlu0 %v479
  %v481 = vpop.xlane.xlu0 %480
  %v482 = vsel %vm463, %v455, -inf
  %483 = vmax.xlane.f32.xlu0 %v482
  %v484 = vpop.xlane.xlu0 %483
  %v485 = vsel %vm463, %v460, -inf
  %486 = vmax.xlane.f32.xlu0 %v485
  %v487 = vpop.xlane.xlu0 %486
  %v488 = vsub.f32 %v425, %v466
  %v489 = vsub.f32 %v430, %v469
  %v490 = vsub.f32 %v435, %v472
  %v491 = vsub.f32 %v440, %v475
  %v492 = vsub.f32 %v445, %v478
  %v493 = vsub.f32 %v450, %v481
  %v494 = vsub.f32 %v455, %v484
  %v495 = vsub.f32 %v460, %v487
  %v496 = vmul.f32 %v488, 1.442695
  %v497 = vpow.pop %v496
  %v498 = vmul.f32 %v489, 1.442695
  %v499 = vpow.pop %v498
  %v500 = vmul.f32 %v490, 1.442695
  %v501 = vpow.pop %v500
  %v502 = vmul.f32 %v491, 1.442695
  %v503 = vpow.pop %v502
  %v504 = vmul.f32 %v492, 1.442695
  %v505 = vpow.pop %v504
  %v506 = vmul.f32 %v493, 1.442695
  %v507 = vpow.pop %v506
  %v508 = vmul.f32 %v494, 1.442695
  %v509 = vpow.pop %v508
  %v510 = vmul.f32 %v495, 1.442695
  %v511 = vpow.pop %v510
  %v512 = vsel %vm463, %v497, 0.0
  %513 = vadd.xlane.f32.xlu0 %v512
  %v514 = vpop.xlane.xlu0 %513
  %v515 = vsel %vm463, %v499, 0.0
  %516 = vadd.xlane.f32.xlu0 %v515
  %v517 = vpop.xlane.xlu0 %516
  %v518 = vsel %vm463, %v501, 0.0
  %519 = vadd.xlane.f32.xlu0 %v518
  %v520 = vpop.xlane.xlu0 %519
  %v521 = vsel %vm463, %v503, 0.0
  %522 = vadd.xlane.f32.xlu0 %v521
  %v523 = vpop.xlane.xlu0 %522
  %v524 = vsel %vm463, %v505, 0.0
  %525 = vadd.xlane.f32.xlu0 %v524
  %v526 = vpop.xlane.xlu0 %525
  %v527 = vsel %vm463, %v507, 0.0
  %528 = vadd.xlane.f32.xlu0 %v527
  %v529 = vpop.xlane.xlu0 %528
  %v530 = vsel %vm463, %v509, 0.0
  %531 = vadd.xlane.f32.xlu0 %v530
  %v532 = vpop.xlane.xlu0 %531
  %v533 = vsel %vm463, %v511, 0.0
  %534 = vadd.xlane.f32.xlu0 %v533
  %v535 = vpop.xlane.xlu0 %534
  %536 = vrot.lane.b32.xlu0 %v207, 64
  %v537 = vpop.permute.xlu0 %536
  %538 = vrot.lane.b32.xlu0 %v212, 64
  %v539 = vpop.permute.xlu0 %538
  %540 = vrot.lane.b32.xlu0 %v217, 64
  %v541 = vpop.permute.xlu0 %540
  %542 = vrot.lane.b32.xlu0 %v222, 64
  %v543 = vpop.permute.xlu0 %542
  %544 = vrot.lane.b32.xlu0 %v227, 64
  %v545 = vpop.permute.xlu0 %544
  %546 = vrot.lane.b32.xlu0 %v232, 64
  %v547 = vpop.permute.xlu0 %546
  %548 = vrot.lane.b32.xlu0 %v237, 64
  %v549 = vpop.permute.xlu0 %548
  %550 = vrot.lane.b32.xlu0 %v242, 64
  %v551 = vpop.permute.xlu0 %550
  %v561 = vsel %vm463, %v497, 0
  %v564 = vsel %vm463, %v499, 0
  %v567 = vsel %vm463, %v501, 0
  %v570 = vsel %vm463, %v503, 0
  %v573 = vsel %vm463, %v505, 0
  %v576 = vsel %vm463, %v507, 0
  %v579 = vsel %vm463, %v509, 0
  %v582 = vsel %vm463, %v511, 0
  %584 = vmatprep.subr.mxu0 0.0
  %585 = vmatpush1.msra.mxu0 %v537
  %586 = vmatprep.subr.mxu0 0.0
  %587 = vmatpush1.msra.mxu0 %v539
  %588 = vmatprep.subr.mxu0 0.0
  %589 = vmatpush1.msra.mxu0 %v541
  %590 = vmatprep.subr.mxu0 0.0
  %591 = vmatpush1.msra.mxu0 %v543
  %592 = vmatprep.subr.mxu0 0.0
  %593 = vmatpush1.msra.mxu0 %v545
  %594 = vmatprep.subr.mxu0 0.0
  %595 = vmatpush1.msra.mxu0 %v547
  %596 = vmatprep.subr.mxu0 0.0
  %597 = vmatpush1.msra.mxu0 %v549
  %598 = vmatprep.subr.mxu0 0.0
  %599 = vmatpush1.msra.mxu0 %v551
  %600 = vmatprep.subr.mxu0 0.0
  %601 = vmatpush1.msra.mxu0 0.0
  %602 = vmatprep.subr.mxu0 0.0
  %603 = vmatpush1.msra.mxu0 0.0
  %604 = vmatprep.subr.mxu0 0.0
  %605 = vmatpush1.msra.mxu0 0.0
  %606 = vmatprep.subr.mxu0 0.0
  %607 = vmatpush1.msra.mxu0 0.0
  %608 = vmatprep.subr.mxu0 0.0
  %609 = vmatpush1.msra.mxu0 0.0
  %610 = vmatprep.subr.mxu0 0.0
  %611 = vmatpush1.msra.mxu0 0.0
  %612 = vmatprep.subr.mxu0 0.0
  %613 = vmatpush1.msra.mxu0 0.0
  %614 = vmatprep.subr.mxu0 0.0
  %615 = vmatpush1.msra.mxu0 0.0
  %616 = vmatprep.subr.mxu0 0.0
  %617 = vmatpush1.msra.mxu0 0.0
  %618 = vmatprep.subr.mxu0 0.0
  %619 = vmatpush1.msra.mxu0 0.0
  %620 = vmatprep.subr.mxu0 0.0
  %621 = vmatpush1.msra.mxu0 0.0
  %622 = vmatprep.subr.mxu0 0.0
  %623 = vmatpush1.msra.mxu0 0.0
  %624 = vmatprep.subr.mxu0 0.0
  %625 = vmatpush1.msra.mxu0 0.0
  %626 = vmatprep.subr.mxu0 0.0
  %627 = vmatpush1.msra.mxu0 0.0
  %628 = vmatprep.subr.mxu0 0.0
  %629 = vmatpush1.msra.mxu0 0.0
  %630 = vmatprep.subr.mxu0 0.0
  %631 = vmatpush1.msra.mxu0 0.0
  %632 = vmatprep.subr.mxu0 0.0
  %633 = vmatpush1.msra.mxu0 0.0
  %634 = vmatprep.subr.mxu0 0.0
  %635 = vmatpush1.msra.mxu0 0.0
  %636 = vmatprep.subr.mxu0 0.0
  %637 = vmatpush1.msra.mxu0 0.0
  %638 = vmatprep.subr.mxu0 0.0
  %639 = vmatpush1.msra.mxu0 0.0
  %640 = vmatprep.subr.mxu0 0.0
  %641 = vmatpush1.msra.mxu0 0.0
  %642 = vmatprep.subr.mxu0 0.0
  %643 = vmatpush1.msra.mxu0 0.0
  %644 = vmatprep.subr.mxu0 0.0
  %645 = vmatpush1.msra.mxu0 0.0
  %646 = vmatprep.subr.mxu0 0.0
  %647 = vmatpush1.msra.mxu0 0.0
  %648 = vmatprep.mubr.f32.mxu0 0.0
  %649 = vmatmul.mubr.f32.gmra.mrb[0].mxu0 %v561
  %v650 = vpop.f32.mrb[0].mxu0
  %v651 = vadd.f32 0.0, %v650
  %v652 = vpop.f32.mrb[0].mxu0
  %653 = vmatprep.mubr.f32.mxu0 0.0
  %654 = vmatmul.mubr.f32.gmra.mrb[0].mxu0 %v564
  %v655 = vpop.f32.mrb[0].mxu0
  %v656 = vadd.f32 0.0, %v655
  %v657 = vpop.f32.mrb[0].mxu0
  %658 = vmatprep.mubr.f32.mxu0 0.0
  %659 = vmatmul.mubr.f32.gmra.mrb[0].mxu0 %v567
  %v660 = vpop.f32.mrb[0].mxu0
  %v661 = vadd.f32 0.0, %v660
  %v662 = vpop.f32.mrb[0].mxu0
  %663 = vmatprep.mubr.f32.mxu0 0.0
  %664 = vmatmul.mubr.f32.gmra.mrb[0].mxu0 %v570
  %v665 = vpop.f32.mrb[0].mxu0
  %v666 = vadd.f32 0.0, %v665
  %v667 = vpop.f32.mrb[0].mxu0
  %668 = vmatprep.mubr.f32.mxu0 0.0
  %669 = vmatmul.mubr.f32.gmra.mrb[0].mxu0 %v573
  %v670 = vpop.f32.mrb[0].mxu0
  %v671 = vadd.f32 0.0, %v670
  %v672 = vpop.f32.mrb[0].mxu0
  %673 = vmatprep.mubr.f32.mxu0 0.0
  %674 = vmatmul.mubr.f32.gmra.mrb[0].mxu0 %v576
  %v675 = vpop.f32.mrb[0].mxu0
  %v676 = vadd.f32 0.0, %v675
  %v677 = vpop.f32.mrb[0].mxu0
  %678 = vmatprep.mubr.f32.mxu0 0.0
  %679 = vmatmul.mubr.f32.gmra.mrb[0].mxu0 %v579
  %v680 = vpop.f32.mrb[0].mxu0
  %v681 = vadd.f32 0.0, %v680
  %v682 = vpop.f32.mrb[0].mxu0
  %683 = vmatprep.mubr.f32.mxu0 0.0
  %684 = vmatmul.mubr.f32.gmra.mrb[0].mxu0 %v582
  %v685 = vpop.f32.mrb[0].mxu0
  %v686 = vadd.f32 0.0, %v685
  %v687 = vpop.f32.mrb[0].mxu0
  %688 = vdwg.mxu0
  %v689 = vrcp.pop %v514
  %v690 = vrcp.pop %v517
  %v691 = vrcp.pop %v520
  %v692 = vrcp.pop %v523
  %v693 = vrcp.pop %v526
  %v694 = vrcp.pop %v529
  %v695 = vrcp.pop %v532
  %v696 = vrcp.pop %v535
  %v697 = vmul.f32 %v651, %v689
  %v698 = vmul.f32 %v656, %v690
  %v699 = vmul.f32 %v661, %v691
  %v700 = vmul.f32 %v666, %v692
  %v701 = vmul.f32 %v671, %v693
  %v702 = vmul.f32 %v676, %v694
  %v703 = vmul.f32 %v681, %v695
  %v704 = vmul.f32 %v686, %v696
  %705 = vst.msk [vmem:[#allocation2] sm:$0xff] %vm317, %v697
  %706 = vst.msk [vmem:[#allocation2 + $0x8] sm:$0xff] %vm317, %v698
  %707 = vst.msk [vmem:[#allocation2 + $0x10] sm:$0xff] %vm317, %v699
  %708 = vst.msk [vmem:[#allocation2 + $0x18] sm:$0xff] %vm317, %v700
  %709 = vst.msk [vmem:[#allocation2 + $0x20] sm:$0xff] %vm317, %v701
  %710 = vst.msk [vmem:[#allocation2 + $0x28] sm:$0xff] %vm317, %v702
  %711 = vst.msk [vmem:[#allocation2 + $0x30] sm:$0xff] %vm317, %v703
  %712 = vst.msk [vmem:[#allocation2 + $0x38] sm:$0xff] %vm317, %v704
  %713 = vrot.lane.b32.xlu0 %v285, 120
  %v714 = vpop.permute.xlu0 %713
  %715 = vrot.lane.b32.xlu0 %v286, 120
  %v716 = vpop.permute.xlu0 %715
  %717 = vrot.lane.b32.xlu0 %v287, 120
  %v718 = vpop.permute.xlu0 %717
  %719 = vrot.lane.b32.xlu0 %v288, 120
  %v720 = vpop.permute.xlu0 %719
  %721 = vrot.lane.b32.xlu0 %v289, 120
  %v722 = vpop.permute.xlu0 %721
  %723 = vrot.lane.b32.xlu0 %v290, 120
  %v724 = vpop.permute.xlu0 %723
  %725 = vrot.lane.b32.xlu0 %v291, 120
  %v726 = vpop.permute.xlu0 %725
  %727 = vrot.lane.b32.xlu0 %v292, 120
  %v728 = vpop.permute.xlu0 %727
  %729 = vrot.lane.b32.xlu0 %v207, 88
  %v730 = vpop.permute.xlu0 %729
  %731 = vrot.lane.b32.xlu0 %v212, 88
  %v732 = vpop.permute.xlu0 %731
  %733 = vrot.lane.b32.xlu0 %v217, 88
  %v734 = vpop.permute.xlu0 %733
  %735 = vrot.lane.b32.xlu0 %v222, 88
  %v736 = vpop.permute.xlu0 %735
  %737 = vrot.lane.b32.xlu0 %v227, 88
  %v738 = vpop.permute.xlu0 %737
  %739 = vrot.lane.b32.xlu0 %v232, 88
  %v740 = vpop.permute.xlu0 %739
  %741 = vrot.lane.b32.xlu0 %v237, 88
  %v742 = vpop.permute.xlu0 %741
  %743 = vrot.lane.b32.xlu0 %v242, 88
  %v744 = vpop.permute.xlu0 %743
  %v745 = vsel %vm317, %v714, 0
  %v747 = vsel %vm317, %v716, 0
  %v749 = vsel %vm317, %v718, 0
  %v751 = vsel %vm317, %v720, 0
  %v753 = vsel %vm317, %v722, 0
  %v755 = vsel %vm317, %v724, 0
  %v757 = vsel %vm317, %v726, 0
  %v759 = vsel %vm317, %v728, 0
  %v761 = vsel %vm317, %v730, 0
  %v763 = vsel %vm317, %v732, 0
  %v765 = vsel %vm317, %v734, 0
  %v767 = vsel %vm317, %v736, 0
  %v769 = vsel %vm317, %v738, 0
  %v771 = vsel %vm317, %v740, 0
  %v773 = vsel %vm317, %v742, 0
  %v775 = vsel %vm317, %v744, 0
  %777 = vmatprep.subr.mxu0 0.0
  %778 = vmatpush1.xpose.msra.mxu0 %v761
  %779 = vmatprep.subr.mxu0 0.0
  %780 = vmatpush1.xpose.msra.mxu0 %v763
  %781 = vmatprep.subr.mxu0 0.0
  %782 = vmatpush1.xpose.msra.mxu0 %v765
  %783 = vmatprep.subr.mxu0 0.0
  %784 = vmatpush1.xpose.msra.mxu0 %v767
  %785 = vmatprep.subr.mxu0 0.0
  %786 = vmatpush1.xpose.msra.mxu0 %v769
  %787 = vmatprep.subr.mxu0 0.0
  %788 = vmatpush1.xpose.msra.mxu0 %v771
  %789 = vmatprep.subr.mxu0 0.0
  %790 = vmatpush1.xpose.msra.mxu0 %v773
  %791 = vmatprep.subr.mxu0 0.0
  %792 = vmatpush1.xpose.msra.mxu0 %v775
  %793 = vmatprep.subr.mxu0 0.0
  %794 = vmatpush1.xpose.msra.mxu0 0.0
  %795 = vmatprep.subr.mxu0 0.0
  %796 = vmatpush1.xpose.msra.mxu0 0.0
  %797 = vmatprep.subr.mxu0 0.0
  %798 = vmatpush1.xpose.msra.mxu0 0.0
  %799 = vmatprep.subr.mxu0 0.0
  %800 = vmatpush1.xpose.msra.mxu0 0.0
  %801 = vmatprep.subr.mxu0 0.0
  %802 = vmatpush1.xpose.msra.mxu0 0.0
  %803 = vmatprep.subr.mxu0 0.0
  %804 = vmatpush1.xpose.msra.mxu0 0.0
  %805 = vmatprep.subr.mxu0 0.0
  %806 = vmatpush1.xpose.msra.mxu0 0.0
  %807 = vmatprep.subr.mxu0 0.0
  %808 = vmatpush1.xpose.msra.mxu0 0.0
  %809 = vmatprep.subr.mxu0 0.0
  %810 = vmatpush1.xpose.msra.mxu0 0.0
  %811 = vmatprep.subr.mxu0 0.0
  %812 = vmatpush1.xpose.msra.mxu0 0.0
  %813 = vmatprep.subr.mxu0 0.0
  %814 = vmatpush1.xpose.msra.mxu0 0.0
  %815 = vmatprep.subr.mxu0 0.0
  %816 = vmatpush1.xpose.msra.mxu0 0.0
  %817 = vmatprep.subr.mxu0 0.0
  %818 = vmatpush1.xpose.msra.mxu0 0.0
  %819 = vmatprep.subr.mxu0 0.0
  %820 = vmatpush1.xpose.msra.mxu0 0.0
  %821 = vmatprep.subr.mxu0 0.0
  %822 = vmatpush1.xpose.msra.mxu0 0.0
  %823 = vmatprep.subr.mxu0 0.0
  %824 = vmatpush1.xpose.msra.mxu0 0.0
  %825 = vmatprep.subr.mxu0 0.0
  %826 = vmatpush1.xpose.msra.mxu0 0.0
  %827 = vmatprep.subr.mxu0 0.0
  %828 = vmatpush1.xpose.msra.mxu0 0.0
  %829 = vmatprep.subr.mxu0 0.0
  %830 = vmatpush1.xpose.msra.mxu0 0.0
  %831 = vmatprep.subr.mxu0 0.0
  %832 = vmatpush1.xpose.msra.mxu0 0.0
  %833 = vmatprep.subr.mxu0 0.0
  %834 = vmatpush1.xpose.msra.mxu0 0.0
  %835 = vmatprep.subr.mxu0 0.0
  %836 = vmatpush1.xpose.msra.mxu0 0.0
  %837 = vmatprep.subr.mxu0 0.0
  %838 = vmatpush1.xpose.msra.mxu0 0.0
  %839 = vmatprep.subr.mxu0 0.0
  %840 = vmatpush1.xpose.msra.mxu0 0.0
  %841 = vmatprep.mubr.f32.mxu0 0.0
  %842 = vmatmul.mubr.f32.gmra.mrb[0].mxu0 %v745
  %v843 = vpop.f32.mrb[0].mxu0
  %v844 = vadd.f32 0.0, %v843
  %v845 = vpop.f32.mrb[0].mxu0
  %846 = vmatprep.mubr.f32.mxu0 0.0
  %847 = vmatmul.mubr.f32.gmra.mrb[0].mxu0 %v747
  %v848 = vpop.f32.mrb[0].mxu0
  %v849 = vadd.f32 0.0, %v848
  %v850 = vpop.f32.mrb[0].mxu0
  %851 = vmatprep.mubr.f32.mxu0 0.0
  %852 = vmatmul.mubr.f32.gmra.mrb[0].mxu0 %v749
  %v853 = vpop.f32.mrb[0].mxu0
  %v854 = vadd.f32 0.0, %v853
  %v855 = vpop.f32.mrb[0].mxu0
  %856 = vmatprep.mubr.f32.mxu0 0.0
  %857 = vmatmul.mubr.f32.gmra.mrb[0].mxu0 %v751
  %v858 = vpop.f32.mrb[0].mxu0
  %v859 = vadd.f32 0.0, %v858
  %v860 = vpop.f32.mrb[0].mxu0
  %861 = vmatprep.mubr.f32.mxu0 0.0
  %862 = vmatmul.mubr.f32.gmra.mrb[0].mxu0 %v753
  %v863 = vpop.f32.mrb[0].mxu0
  %v864 = vadd.f32 0.0, %v863
  %v865 = vpop.f32.mrb[0].mxu0
  %866 = vmatprep.mubr.f32.mxu0 0.0
  %867 = vmatmul.mubr.f32.gmra.mrb[0].mxu0 %v755
  %v868 = vpop.f32.mrb[0].mxu0
  %v869 = vadd.f32 0.0, %v868
  %v870 = vpop.f32.mrb[0].mxu0
  %871 = vmatprep.mubr.f32.mxu0 0.0
  %872 = vmatmul.mubr.f32.gmra.mrb[0].mxu0 %v757
  %v873 = vpop.f32.mrb[0].mxu0
  %v874 = vadd.f32 0.0, %v873
  %v875 = vpop.f32.mrb[0].mxu0
  %876 = vmatprep.mubr.f32.mxu0 0.0
  %877 = vmatmul.mubr.f32.gmra.mrb[0].mxu0 %v759
  %v878 = vpop.f32.mrb[0].mxu0
  %v879 = vadd.f32 0.0, %v878
  %v880 = vpop.f32.mrb[0].mxu0
  %881 = vdwg.mxu0
  %v882 = vsel %vm463, %v844, -inf
  %883 = vmax.xlane.f32.xlu0 %v882
  %v884 = vpop.xlane.xlu0 %883
  %v885 = vsel %vm463, %v849, -inf
  %886 = vmax.xlane.f32.xlu0 %v885
  %v887 = vpop.xlane.xlu0 %886
  %v888 = vsel %vm463, %v854, -inf
  %889 = vmax.xlane.f32.xlu0 %v888
  %v890 = vpop.xlane.xlu0 %889
  %v891 = vsel %vm463, %v859, -inf
  %892 = vmax.xlane.f32.xlu0 %v891
  %v893 = vpop.xlane.xlu0 %892
  %v894 = vsel %vm463, %v864, -inf
  %895 = vmax.xlane.f32.xlu0 %v894
  %v896 = vpop.xlane.xlu0 %895
  %v897 = vsel %vm463, %v869, -inf
  %898 = vmax.xlane.f32.xlu0 %v897
  %v899 = vpop.xlane.xlu0 %898
  %v900 = vsel %vm463, %v874, -inf
  %901 = vmax.xlane.f32.xlu0 %v900
  %v902 = vpop.xlane.xlu0 %901
  %v903 = vsel %vm463, %v879, -inf
  %904 = vmax.xlane.f32.xlu0 %v903
  %v905 = vpop.xlane.xlu0 %904
  %v906 = vsub.f32 %v844, %v884
  %v907 = vsub.f32 %v849, %v887
  %v908 = vsub.f32 %v854, %v890
  %v909 = vsub.f32 %v859, %v893
  %v910 = vsub.f32 %v864, %v896
  %v911 = vsub.f32 %v869, %v899
  %v912 = vsub.f32 %v874, %v902
  %v913 = vsub.f32 %v879, %v905
  %v914 = vmul.f32 %v906, 1.442695
  %v915 = vpow.pop %v914
  %v916 = vmul.f32 %v907, 1.442695
  %v917 = vpow.pop %v916
  %v918 = vmul.f32 %v908, 1.442695
  %v919 = vpow.pop %v918
  %v920 = vmul.f32 %v909, 1.442695
  %v921 = vpow.pop %v920
  %v922 = vmul.f32 %v910, 1.442695
  %v923 = vpow.pop %v922
  %v924 = vmul.f32 %v911, 1.442695
  %v925 = vpow.pop %v924
  %v926 = vmul.f32 %v912, 1.442695
  %v927 = vpow.pop %v926
  %v928 = vmul.f32 %v913, 1.442695
  %v929 = vpow.pop %v928
  %v930 = vsel %vm463, %v915, 0.0
  %931 = vadd.xlane.f32.xlu0 %v930
  %v932 = vpop.xlane.xlu0 %931
  %v933 = vsel %vm463, %v917, 0.0
  %934 = vadd.xlane.f32.xlu0 %v933
  %v935 = vpop.xlane.xlu0 %934
  %v936 = vsel %vm463, %v919, 0.0
  %937 = vadd.xlane.f32.xlu0 %v936
  %v938 = vpop.xlane.xlu0 %937
  %v939 = vsel %vm463, %v921, 0.0
  %940 = vadd.xlane.f32.xlu0 %v939
  %v941 = vpop.xlane.xlu0 %940
  %v942 = vsel %vm463, %v923, 0.0
  %943 = vadd.xlane.f32.xlu0 %v942
  %v944 = vpop.xlane.xlu0 %943
  %v945 = vsel %vm463, %v925, 0.0
  %946 = vadd.xlane.f32.xlu0 %v945
  %v947 = vpop.xlane.xlu0 %946
  %v948 = vsel %vm463, %v927, 0.0
  %949 = vadd.xlane.f32.xlu0 %v948
  %v950 = vpop.xlane.xlu0 %949
  %v951 = vsel %vm463, %v929, 0.0
  %952 = vadd.xlane.f32.xlu0 %v951
  %v953 = vpop.xlane.xlu0 %952
  %954 = vrot.lane.b32.xlu0 %v207, 56
  %v955 = vpop.permute.xlu0 %954
  %956 = vrot.lane.b32.xlu0 %v212, 56
  %v957 = vpop.permute.xlu0 %956
  %958 = vrot.lane.b32.xlu0 %v217, 56
  %v959 = vpop.permute.xlu0 %958
  %960 = vrot.lane.b32.xlu0 %v222, 56
  %v961 = vpop.permute.xlu0 %960
  %962 = vrot.lane.b32.xlu0 %v227, 56
  %v963 = vpop.permute.xlu0 %962
  %964 = vrot.lane.b32.xlu0 %v232, 56
  %v965 = vpop.permute.xlu0 %964
  %966 = vrot.lane.b32.xlu0 %v237, 56
  %v967 = vpop.permute.xlu0 %966
  %968 = vrot.lane.b32.xlu0 %v242, 56
  %v969 = vpop.permute.xlu0 %968
  %v979 = vsel %vm463, %v915, 0
  %v982 = vsel %vm463, %v917, 0
  %v985 = vsel %vm463, %v919, 0
  %v988 = vsel %vm463, %v921, 0
  %v991 = vsel %vm463, %v923, 0
  %v994 = vsel %vm463, %v925, 0
  %v997 = vsel %vm463, %v927, 0
  %v1000 = vsel %vm463, %v929, 0
  %1002 = vmatprep.subr.mxu0 0.0
  %1003 = vmatpush1.msra.mxu0 %v955
  %1004 = vmatprep.subr.mxu0 0.0
  %1005 = vmatpush1.msra.mxu0 %v957
  %1006 = vmatprep.subr.mxu0 0.0
  %1007 = vmatpush1.msra.mxu0 %v959
  %1008 = vmatprep.subr.mxu0 0.0
  %1009 = vmatpush1.msra.mxu0 %v961
  %1010 = vmatprep.subr.mxu0 0.0
  %1011 = vmatpush1.msra.mxu0 %v963
  %1012 = vmatprep.subr.mxu0 0.0
  %1013 = vmatpush1.msra.mxu0 %v965
  %1014 = vmatprep.subr.mxu0 0.0
  %1015 = vmatpush1.msra.mxu0 %v967
  %1016 = vmatprep.subr.mxu0 0.0
  %1017 = vmatpush1.msra.mxu0 %v969
  %1018 = vmatprep.subr.mxu0 0.0
  %1019 = vmatpush1.msra.mxu0 0.0
  %1020 = vmatprep.subr.mxu0 0.0
  %1021 = vmatpush1.msra.mxu0 0.0
  %1022 = vmatprep.subr.mxu0 0.0
  %1023 = vmatpush1.msra.mxu0 0.0
  %1024 = vmatprep.subr.mxu0 0.0
  %1025 = vmatpush1.msra.mxu0 0.0
  %1026 = vmatprep.subr.mxu0 0.0
  %1027 = vmatpush1.msra.mxu0 0.0
  %1028 = vmatprep.subr.mxu0 0.0
  %1029 = vmatpush1.msra.mxu0 0.0
  %1030 = vmatprep.subr.mxu0 0.0
  %1031 = vmatpush1.msra.mxu0 0.0
  %1032 = vmatprep.subr.mxu0 0.0
  %1033 = vmatpush1.msra.mxu0 0.0
  %1034 = vmatprep.subr.mxu0 0.0
  %1035 = vmatpush1.msra.mxu0 0.0
  %1036 = vmatprep.subr.mxu0 0.0
  %1037 = vmatpush1.msra.mxu0 0.0
  %1038 = vmatprep.subr.mxu0 0.0
  %1039 = vmatpush1.msra.mxu0 0.0
  %1040 = vmatprep.subr.mxu0 0.0
  %1041 = vmatpush1.msra.mxu0 0.0
  %1042 = vmatprep.subr.mxu0 0.0
  %1043 = vmatpush1.msra.mxu0 0.0
  %1044 = vmatprep.subr.mxu0 0.0
  %1045 = vmatpush1.msra.mxu0 0.0
  %1046 = vmatprep.subr.mxu0 0.0
  %1047 = vmatpush1.msra.mxu0 0.0
  %1048 = vmatprep.subr.mxu0 0.0
  %1049 = vmatpush1.msra.mxu0 0.0
  %1050 = vmatprep.subr.mxu0 0.0
  %1051 = vmatpush1.msra.mxu0 0.0
  %1052 = vmatprep.subr.mxu0 0.0
  %1053 = vmatpush1.msra.mxu0 0.0
  %1054 = vmatprep.subr.mxu0 0.0
  %1055 = vmatpush1.msra.mxu0 0.0
  %1056 = vmatprep.subr.mxu0 0.0
  %1057 = vmatpush1.msra.mxu0 0.0
  %1058 = vmatprep.subr.mxu0 0.0
  %1059 = vmatpush1.msra.mxu0 0.0
  %1060 = vmatprep.subr.mxu0 0.0
  %1061 = vmatpush1.msra.mxu0 0.0
  %1062 = vmatprep.subr.mxu0 0.0
  %1063 = vmatpush1.msra.mxu0 0.0
  %1064 = vmatprep.subr.mxu0 0.0
  %1065 = vmatpush1.msra.mxu0 0.0
  %1066 = vmatprep.mubr.f32.mxu0 0.0
  %1067 = vmatmul.mubr.f32.gmra.mrb[0].mxu0 %v979
  %v1068 = vpop.f32.mrb[0].mxu0
  %v1069 = vadd.f32 0.0, %v1068
  %v1070 = vpop.f32.mrb[0].mxu0
  %1071 = vmatprep.mubr.f32.mxu0 0.0
  %1072 = vmatmul.mubr.f32.gmra.mrb[0].mxu0 %v982
  %v1073 = vpop.f32.mrb[0].mxu0
  %v1074 = vadd.f32 0.0, %v1073
  %v1075 = vpop.f32.mrb[0].mxu0
  %1076 = vmatprep.mubr.f32.mxu0 0.0
  %1077 = vmatmul.mubr.f32.gmra.mrb[0].mxu0 %v985
  %v1078 = vpop.f32.mrb[0].mxu0
  %v1079 = vadd.f32 0.0, %v1078
  %v1080 = vpop.f32.mrb[0].mxu0
  %1081 = vmatprep.mubr.f32.mxu0 0.0
  %1082 = vmatmul.mubr.f32.gmra.mrb[0].mxu0 %v988
  %v1083 = vpop.f32.mrb[0].mxu0
  %v1084 = vadd.f32 0.0, %v1083
  %v1085 = vpop.f32.mrb[0].mxu0
  %1086 = vmatprep.mubr.f32.mxu0 0.0
  %1087 = vmatmul.mubr.f32.gmra.mrb[0].mxu0 %v991
  %v1088 = vpop.f32.mrb[0].mxu0
  %v1089 = vadd.f32 0.0, %v1088
  %v1090 = vpop.f32.mrb[0].mxu0
  %1091 = vmatprep.mubr.f32.mxu0 0.0
  %1092 = vmatmul.mubr.f32.gmra.mrb[0].mxu0 %v994
  %v1093 = vpop.f32.mrb[0].mxu0
  %v1094 = vadd.f32 0.0, %v1093
  %v1095 = vpop.f32.mrb[0].mxu0
  %1096 = vmatprep.mubr.f32.mxu0 0.0
  %1097 = vmatmul.mubr.f32.gmra.mrb[0].mxu0 %v997
  %v1098 = vpop.f32.mrb[0].mxu0
  %v1099 = vadd.f32 0.0, %v1098
  %v1100 = vpop.f32.mrb[0].mxu0
  %1101 = vmatprep.mubr.f32.mxu0 0.0
  %1102 = vmatmul.mubr.f32.gmra.mrb[0].mxu0 %v1000
  %v1103 = vpop.f32.mrb[0].mxu0
  %v1104 = vadd.f32 0.0, %v1103
  %v1105 = vpop.f32.mrb[0].mxu0
  %1106 = vdwg.mxu0
  %v1107 = vrcp.pop %v932
  %v1108 = vrcp.pop %v935
  %v1109 = vrcp.pop %v938
  %v1110 = vrcp.pop %v941
  %v1111 = vrcp.pop %v944
  %v1112 = vrcp.pop %v947
  %v1113 = vrcp.pop %v950
  %v1114 = vrcp.pop %v953
  %v1115 = vmul.f32 %v1069, %v1107
  %v1116 = vmul.f32 %v1074, %v1108
  %v1117 = vmul.f32 %v1079, %v1109
  %v1118 = vmul.f32 %v1084, %v1110
  %v1119 = vmul.f32 %v1089, %v1111
  %v1120 = vmul.f32 %v1094, %v1112
  %v1121 = vmul.f32 %v1099, %v1113
  %v1122 = vmul.f32 %v1104, %v1114
  %1131 = vrot.lane.b32.xlu0 %v1115, 8
  %v1132 = vpop.permute.xlu0 %1131
  %1133 = vrot.lane.b32.xlu0 %v1116, 8
  %v1134 = vpop.permute.xlu0 %1133
  %1135 = vrot.lane.b32.xlu0 %v1117, 8
  %v1136 = vpop.permute.xlu0 %1135
  %1137 = vrot.lane.b32.xlu0 %v1118, 8
  %v1138 = vpop.permute.xlu0 %1137
  %1139 = vrot.lane.b32.xlu0 %v1119, 8
  %v1140 = vpop.permute.xlu0 %1139
  %1141 = vrot.lane.b32.xlu0 %v1120, 8
  %v1142 = vpop.permute.xlu0 %1141
  %1143 = vrot.lane.b32.xlu0 %v1121, 8
  %v1144 = vpop.permute.xlu0 %1143
  %1145 = vrot.lane.b32.xlu0 %v1122, 8
  %v1146 = vpop.permute.xlu0 %1145
  %vm1155 = vcmask 130112
  %1156 = vst.msk [vmem:[#allocation2] sm:$0xff] %vm1155, %v1132
  %1157 = vst.msk [vmem:[#allocation2 + $0x8] sm:$0xff] %vm1155, %v1134
  %1158 = vst.msk [vmem:[#allocation2 + $0x10] sm:$0xff] %vm1155, %v1136
  %1159 = vst.msk [vmem:[#allocation2 + $0x18] sm:$0xff] %vm1155, %v1138
  %1160 = vst.msk [vmem:[#allocation2 + $0x20] sm:$0xff] %vm1155, %v1140
  %1161 = vst.msk [vmem:[#allocation2 + $0x28] sm:$0xff] %vm1155, %v1142
  %1162 = vst.msk [vmem:[#allocation2 + $0x30] sm:$0xff] %vm1155, %v1144
  %1163 = vst.msk [vmem:[#allocation2 + $0x38] sm:$0xff] %vm1155, %v1146
  %1164 = vrot.lane.b32.xlu0 %v285, 112
  %v1165 = vpop.permute.xlu0 %1164
  %1166 = vrot.lane.b32.xlu0 %v286, 112
  %v1167 = vpop.permute.xlu0 %1166
  %1168 = vrot.lane.b32.xlu0 %v287, 112
  %v1169 = vpop.permute.xlu0 %1168
  %1170 = vrot.lane.b32.xlu0 %v288, 112
  %v1171 = vpop.permute.xlu0 %1170
  %1172 = vrot.lane.b32.xlu0 %v289, 112
  %v1173 = vpop.permute.xlu0 %1172
  %1174 = vrot.lane.b32.xlu0 %v290, 112
  %v1175 = vpop.permute.xlu0 %1174
  %1176 = vrot.lane.b32.xlu0 %v291, 112
  %v1177 = vpop.permute.xlu0 %1176
  %1178 = vrot.lane.b32.xlu0 %v292, 112
  %v1179 = vpop.permute.xlu0 %1178
  %1180 = vrot.lane.b32.xlu0 %v207, 80
  %v1181 = vpop.permute.xlu0 %1180
  %1182 = vrot.lane.b32.xlu0 %v212, 80
  %v1183 = vpop.permute.xlu0 %1182
  %1184 = vrot.lane.b32.xlu0 %v217, 80
  %v1185 = vpop.permute.xlu0 %1184
  %1186 = vrot.lane.b32.xlu0 %v222, 80
  %v1187 = vpop.permute.xlu0 %1186
  %1188 = vrot.lane.b32.xlu0 %v227, 80
  %v1189 = vpop.permute.xlu0 %1188
  %1190 = vrot.lane.b32.xlu0 %v232, 80
  %v1191 = vpop.permute.xlu0 %1190
  %1192 = vrot.lane.b32.xlu0 %v237, 80
  %v1193 = vpop.permute.xlu0 %1192
  %1194 = vrot.lane.b32.xlu0 %v242, 80
  %v1195 = vpop.permute.xlu0 %1194
  %v1196 = vsel %vm317, %v1165, 0
  %v1198 = vsel %vm317, %v1167, 0
  %v1200 = vsel %vm317, %v1169, 0
  %v1202 = vsel %vm317, %v1171, 0
  %v1204 = vsel %vm317, %v1173, 0
  %v1206 = vsel %vm317, %v1175, 0
  %v1208 = vsel %vm317, %v1177, 0
  %v1210 = vsel %vm317, %v1179, 0
  %v1212 = vsel %vm317, %v1181, 0
  %v1214 = vsel %vm317, %v1183, 0
  %v1216 = vsel %vm317, %v1185, 0
  %v1218 = vsel %vm317, %v1187, 0
  %v1220 = vsel %vm317, %v1189, 0
  %v1222 = vsel %vm317, %v1191, 0
  %v1224 = vsel %vm317, %v1193, 0
  %v1226 = vsel %vm317, %v1195, 0
  %1228 = vmatprep.subr.mxu0 0.0
  %1229 = vmatpush1.xpose.msra.mxu0 %v1212
  %1230 = vmatprep.subr.mxu0 0.0
  %1231 = vmatpush1.xpose.msra.mxu0 %v1214
  %1232 = vmatprep.subr.mxu0 0.0
  %1233 = vmatpush1.xpose.msra.mxu0 %v1216
  %1234 = vmatprep.subr.mxu0 0.0
  %1235 = vmatpush1.xpose.msra.mxu0 %v1218
  %1236 = vmatprep.subr.mxu0 0.0
  %1237 = vmatpush1.xpose.msra.mxu0 %v1220
  %1238 = vmatprep.subr.mxu0 0.0
  %1239 = vmatpush1.xpose.msra.mxu0 %v1222
  %1240 = vmatprep.subr.mxu0 0.0
  %1241 = vmatpush1.xpose.msra.mxu0 %v1224
  %1242 = vmatprep.subr.mxu0 0.0
  %1243 = vmatpush1.xpose.msra.mxu0 %v1226
  %1244 = vmatprep.subr.mxu0 0.0
  %1245 = vmatpush1.xpose.msra.mxu0 0.0
  %1246 = vmatprep.subr.mxu0 0.0
  %1247 = vmatpush1.xpose.msra.mxu0 0.0
  %1248 = vmatprep.subr.mxu0 0.0
  %1249 = vmatpush1.xpose.msra.mxu0 0.0
  %1250 = vmatprep.subr.mxu0 0.0
  %1251 = vmatpush1.xpose.msra.mxu0 0.0
  %1252 = vmatprep.subr.mxu0 0.0
  %1253 = vmatpush1.xpose.msra.mxu0 0.0
  %1254 = vmatprep.subr.mxu0 0.0
  %1255 = vmatpush1.xpose.msra.mxu0 0.0
  %1256 = vmatprep.subr.mxu0 0.0
  %1257 = vmatpush1.xpose.msra.mxu0 0.0
  %1258 = vmatprep.subr.mxu0 0.0
  %1259 = vmatpush1.xpose.msra.mxu0 0.0
  %1260 = vmatprep.subr.mxu0 0.0
  %1261 = vmatpush1.xpose.msra.mxu0 0.0
  %1262 = vmatprep.subr.mxu0 0.0
  %1263 = vmatpush1.xpose.msra.mxu0 0.0
  %1264 = vmatprep.subr.mxu0 0.0
  %1265 = vmatpush1.xpose.msra.mxu0 0.0
  %1266 = vmatprep.subr.mxu0 0.0
  %1267 = vmatpush1.xpose.msra.mxu0 0.0
  %1268 = vmatprep.subr.mxu0 0.0
  %1269 = vmatpush1.xpose.msra.mxu0 0.0
  %1270 = vmatprep.subr.mxu0 0.0
  %1271 = vmatpush1.xpose.msra.mxu0 0.0
  %1272 = vmatprep.subr.mxu0 0.0
  %1273 = vmatpush1.xpose.msra.mxu0 0.0
  %1274 = vmatprep.subr.mxu0 0.0
  %1275 = vmatpush1.xpose.msra.mxu0 0.0
  %1276 = vmatprep.subr.mxu0 0.0
  %1277 = vmatpush1.xpose.msra.mxu0 0.0
  %1278 = vmatprep.subr.mxu0 0.0
  %1279 = vmatpush1.xpose.msra.mxu0 0.0
  %1280 = vmatprep.subr.mxu0 0.0
  %1281 = vmatpush1.xpose.msra.mxu0 0.0
  %1282 = vmatprep.subr.mxu0 0.0
  %1283 = vmatpush1.xpose.msra.mxu0 0.0
  %1284 = vmatprep.subr.mxu0 0.0
  %1285 = vmatpush1.xpose.msra.mxu0 0.0
  %1286 = vmatprep.subr.mxu0 0.0
  %1287 = vmatpush1.xpose.msra.mxu0 0.0
  %1288 = vmatprep.subr.mxu0 0.0
  %1289 = vmatpush1.xpose.msra.mxu0 0.0
  %1290 = vmatprep.subr.mxu0 0.0
  %1291 = vmatpush1.xpose.msra.mxu0 0.0
  %1292 = vmatprep.mubr.f32.mxu0 0.0
  %1293 = vmatmul.mubr.f32.gmra.mrb[0].mxu0 %v1196
  %v1294 = vpop.f32.mrb[0].mxu0
  %v1295 = vadd.f32 0.0, %v1294
  %v1296 = vpop.f32.mrb[0].mxu0
  %1297 = vmatprep.mubr.f32.mxu0 0.0
  %1298 = vmatmul.mubr.f32.gmra.mrb[0].mxu0 %v1198
  %v1299 = vpop.f32.mrb[0].mxu0
  %v1300 = vadd.f32 0.0, %v1299
  %v1301 = vpop.f32.mrb[0].mxu0
  %1302 = vmatprep.mubr.f32.mxu0 0.0
  %1303 = vmatmul.mubr.f32.gmra.mrb[0].mxu0 %v1200
  %v1304 = vpop.f32.mrb[0].mxu0
  %v1305 = vadd.f32 0.0, %v1304
  %v1306 = vpop.f32.mrb[0].mxu0
  %1307 = vmatprep.mubr.f32.mxu0 0.0
  %1308 = vmatmul.mubr.f32.gmra.mrb[0].mxu0 %v1202
  %v1309 = vpop.f32.mrb[0].mxu0
  %v1310 = vadd.f32 0.0, %v1309
  %v1311 = vpop.f32.mrb[0].mxu0
  %1312 = vmatprep.mubr.f32.mxu0 0.0
  %1313 = vmatmul.mubr.f32.gmra.mrb[0].mxu0 %v1204
  %v1314 = vpop.f32.mrb[0].mxu0
  %v1315 = vadd.f32 0.0, %v1314
  %v1316 = vpop.f32.mrb[0].mxu0
  %1317 = vmatprep.mubr.f32.mxu0 0.0
  %1318 = vmatmul.mubr.f32.gmra.mrb[0].mxu0 %v1206
  %v1319 = vpop.f32.mrb[0].mxu0
  %v1320 = vadd.f32 0.0, %v1319
  %v1321 = vpop.f32.mrb[0].mxu0
  %1322 = vmatprep.mubr.f32.mxu0 0.0
  %1323 = vmatmul.mubr.f32.gmra.mrb[0].mxu0 %v1208
  %v1324 = vpop.f32.mrb[0].mxu0
  %v1325 = vadd.f32 0.0, %v1324
  %v1326 = vpop.f32.mrb[0].mxu0
  %1327 = vmatprep.mubr.f32.mxu0 0.0
  %1328 = vmatmul.mubr.f32.gmra.mrb[0].mxu0 %v1210
  %v1329 = vpop.f32.mrb[0].mxu0
  %v1330 = vadd.f32 0.0, %v1329
  %v1331 = vpop.f32.mrb[0].mxu0
  %1332 = vdwg.mxu0
  %v1333 = vsel %vm463, %v1295, -inf
  %1334 = vmax.xlane.f32.xlu0 %v1333
  %v1335 = vpop.xlane.xlu0 %1334
  %v1336 = vsel %vm463, %v1300, -inf
  %1337 = vmax.xlane.f32.xlu0 %v1336
  %v1338 = vpop.xlane.xlu0 %1337
  %v1339 = vsel %vm463, %v1305, -inf
  %1340 = vmax.xlane.f32.xlu0 %v1339
  %v1341 = vpop.xlane.xlu0 %1340
  %v1342 = vsel %vm463, %v1310, -inf
  %1343 = vmax.xlane.f32.xlu0 %v1342
  %v1344 = vpop.xlane.xlu0 %1343
  %v1345 = vsel %vm463, %v1315, -inf
  %1346 = vmax.xlane.f32.xlu0 %v1345
  %v1347 = vpop.xlane.xlu0 %1346
  %v1348 = vsel %vm463, %v1320, -inf
  %1349 = vmax.xlane.f32.xlu0 %v1348
  %v1350 = vpop.xlane.xlu0 %1349
  %v1351 = vsel %vm463, %v1325, -inf
  %1352 = vmax.xlane.f32.xlu0 %v1351
  %v1353 = vpop.xlane.xlu0 %1352
  %v1354 = vsel %vm463, %v1330, -inf
  %1355 = vmax.xlane.f32.xlu0 %v1354
  %v1356 = vpop.xlane.xlu0 %1355
  %v1357 = vsub.f32 %v1295, %v1335
  %v1358 = vsub.f32 %v1300, %v1338
  %v1359 = vsub.f32 %v1305, %v1341
  %v1360 = vsub.f32 %v1310, %v1344
  %v1361 = vsub.f32 %v1315, %v1347
  %v1362 = vsub.f32 %v1320, %v1350
  %v1363 = vsub.f32 %v1325, %v1353
  %v1364 = vsub.f32 %v1330, %v1356
  %v1365 = vmul.f32 %v1357, 1.442695
  %v1366 = vpow.pop %v1365
  %v1367 = vmul.f32 %v1358, 1.442695
  %v1368 = vpow.pop %v1367
  %v1369 = vmul.f32 %v1359, 1.442695
  %v1370 = vpow.pop %v1369
  %v1371 = vmul.f32 %v1360, 1.442695
  %v1372 = vpow.pop %v1371
  %v1373 = vmul.f32 %v1361, 1.442695
  %v1374 = vpow.pop %v1373
  %v1375 = vmul.f32 %v1362, 1.442695
  %v1376 = vpow.pop %v1375
  %v1377 = vmul.f32 %v1363, 1.442695
  %v1378 = vpow.pop %v1377
  %v1379 = vmul.f32 %v1364, 1.442695
  %v1380 = vpow.pop %v1379
  %v1381 = vsel %vm463, %v1366, 0.0
  %1382 = vadd.xlane.f32.xlu0 %v1381
  %v1383 = vpop.xlane.xlu0 %1382
  %v1384 = vsel %vm463, %v1368, 0.0
  %1385 = vadd.xlane.f32.xlu0 %v1384
  %v1386 = vpop.xlane.xlu0 %1385
  %v1387 = vsel %vm463, %v1370, 0.0
  %1388 = vadd.xlane.f32.xlu0 %v1387
  %v1389 = vpop.xlane.xlu0 %1388
  %v1390 = vsel %vm463, %v1372, 0.0
  %1391 = vadd.xlane.f32.xlu0 %v1390
  %v1392 = vpop.xlane.xlu0 %1391
  %v1393 = vsel %vm463, %v1374, 0.0
  %1394 = vadd.xlane.f32.xlu0 %v1393
  %v1395 = vpop.xlane.xlu0 %1394
  %v1396 = vsel %vm463, %v1376, 0.0
  %1397 = vadd.xlane.f32.xlu0 %v1396
  %v1398 = vpop.xlane.xlu0 %1397
  %v1399 = vsel %vm463, %v1378, 0.0
  %1400 = vadd.xlane.f32.xlu0 %v1399
  %v1401 = vpop.xlane.xlu0 %1400
  %v1402 = vsel %vm463, %v1380, 0.0
  %1403 = vadd.xlane.f32.xlu0 %v1402
  %v1404 = vpop.xlane.xlu0 %1403
  %1405 = vrot.lane.b32.xlu0 %v207, 48
  %v1406 = vpop.permute.xlu0 %1405
  %1407 = vrot.lane.b32.xlu0 %v212, 48
  %v1408 = vpop.permute.xlu0 %1407
  %1409 = vrot.lane.b32.xlu0 %v217, 48
  %v1410 = vpop.permute.xlu0 %1409
  %1411 = vrot.lane.b32.xlu0 %v222, 48
  %v1412 = vpop.permute.xlu0 %1411
  %1413 = vrot.lane.b32.xlu0 %v227, 48
  %v1414 = vpop.permute.xlu0 %1413
  %1415 = vrot.lane.b32.xlu0 %v232, 48
  %v1416 = vpop.permute.xlu0 %1415
  %1417 = vrot.lane.b32.xlu0 %v237, 48
  %v1418 = vpop.permute.xlu0 %1417
  %1419 = vrot.lane.b32.xlu0 %v242, 48
  %v1420 = vpop.permute.xlu0 %1419
  %v1430 = vsel %vm463, %v1366, 0
  %v1433 = vsel %vm463, %v1368, 0
  %v1436 = vsel %vm463, %v1370, 0
  %v1439 = vsel %vm463, %v1372, 0
  %v1442 = vsel %vm463, %v1374, 0
  %v1445 = vsel %vm463, %v1376, 0
  %v1448 = vsel %vm463, %v1378, 0
  %v1451 = vsel %vm463, %v1380, 0
  %1453 = vmatprep.subr.mxu0 0.0
  %1454 = vmatpush1.msra.mxu0 %v1406
  %1455 = vmatprep.subr.mxu0 0.0
  %1456 = vmatpush1.msra.mxu0 %v1408
  %1457 = vmatprep.subr.mxu0 0.0
  %1458 = vmatpush1.msra.mxu0 %v1410
  %1459 = vmatprep.subr.mxu0 0.0
  %1460 = vmatpush1.msra.mxu0 %v1412
  %1461 = vmatprep.subr.mxu0 0.0
  %1462 = vmatpush1.msra.mxu0 %v1414
  %1463 = vmatprep.subr.mxu0 0.0
  %1464 = vmatpush1.msra.mxu0 %v1416
  %1465 = vmatprep.subr.mxu0 0.0
  %1466 = vmatpush1.msra.mxu0 %v1418
  %1467 = vmatprep.subr.mxu0 0.0
  %1468 = vmatpush1.msra.mxu0 %v1420
  %1469 = vmatprep.subr.mxu0 0.0
  %1470 = vmatpush1.msra.mxu0 0.0
  %1471 = vmatprep.subr.mxu0 0.0
  %1472 = vmatpush1.msra.mxu0 0.0
  %1473 = vmatprep.subr.mxu0 0.0
  %1474 = vmatpush1.msra.mxu0 0.0
  %1475 = vmatprep.subr.mxu0 0.0
  %1476 = vmatpush1.msra.mxu0 0.0
  %1477 = vmatprep.subr.mxu0 0.0
  %1478 = vmatpush1.msra.mxu0 0.0
  %1479 = vmatprep.subr.mxu0 0.0
  %1480 = vmatpush1.msra.mxu0 0.0
  %1481 = vmatprep.subr.mxu0 0.0
  %1482 = vmatpush1.msra.mxu0 0.0
  %1483 = vmatprep.subr.mxu0 0.0
  %1484 = vmatpush1.msra.mxu0 0.0
  %1485 = vmatprep.subr.mxu0 0.0
  %1486 = vmatpush1.msra.mxu0 0.0
  %1487 = vmatprep.subr.mxu0 0.0
  %1488 = vmatpush1.msra.mxu0 0.0
  %1489 = vmatprep.subr.mxu0 0.0
  %1490 = vmatpush1.msra.mxu0 0.0
  %1491 = vmatprep.subr.mxu0 0.0
  %1492 = vmatpush1.msra.mxu0 0.0
  %1493 = vmatprep.subr.mxu0 0.0
  %1494 = vmatpush1.msra.mxu0 0.0
  %1495 = vmatprep.subr.mxu0 0.0
  %1496 = vmatpush1.msra.mxu0 0.0
  %1497 = vmatprep.subr.mxu0 0.0
  %1498 = vmatpush1.msra.mxu0 0.0
  %1499 = vmatprep.subr.mxu0 0.0
  %1500 = vmatpush1.msra.mxu0 0.0
  %1501 = vmatprep.subr.mxu0 0.0
  %1502 = vmatpush1.msra.mxu0 0.0
  %1503 = vmatprep.subr.mxu0 0.0
  %1504 = vmatpush1.msra.mxu0 0.0
  %1505 = vmatprep.subr.mxu0 0.0
  %1506 = vmatpush1.msra.mxu0 0.0
  %1507 = vmatprep.subr.mxu0 0.0
  %1508 = vmatpush1.msra.mxu0 0.0
  %1509 = vmatprep.subr.mxu0 0.0
  %1510 = vmatpush1.msra.mxu0 0.0
  %1511 = vmatprep.subr.mxu0 0.0
  %1512 = vmatpush1.msra.mxu0 0.0
  %1513 = vmatprep.subr.mxu0 0.0
  %1514 = vmatpush1.msra.mxu0 0.0
  %1515 = vmatprep.subr.mxu0 0.0
  %1516 = vmatpush1.msra.mxu0 0.0
  %1517 = vmatprep.mubr.f32.mxu0 0.0
  %1518 = vmatmul.mubr.f32.gmra.mrb[0].mxu0 %v1430
  %v1519 = vpop.f32.mrb[0].mxu0
  %v1520 = vadd.f32 0.0, %v1519
  %v1521 = vpop.f32.mrb[0].mxu0
  %1522 = vmatprep.mubr.f32.mxu0 0.0
  %1523 = vmatmul.mubr.f32.gmra.mrb[0].mxu0 %v1433
  %v1524 = vpop.f32.mrb[0].mxu0
  %v1525 = vadd.f32 0.0, %v1524
  %v1526 = vpop.f32.mrb[0].mxu0
  %1527 = vmatprep.mubr.f32.mxu0 0.0
  %1528 = vmatmul.mubr.f32.gmra.mrb[0].mxu0 %v1436
  %v1529 = vpop.f32.mrb[0].mxu0
  %v1530 = vadd.f32 0.0, %v1529
  %v1531 = vpop.f32.mrb[0].mxu0
  %1532 = vmatprep.mubr.f32.mxu0 0.0
  %1533 = vmatmul.mubr.f32.gmra.mrb[0].mxu0 %v1439
  %v1534 = vpop.f32.mrb[0].mxu0
  %v1535 = vadd.f32 0.0, %v1534
  %v1536 = vpop.f32.mrb[0].mxu0
  %1537 = vmatprep.mubr.f32.mxu0 0.0
  %1538 = vmatmul.mubr.f32.gmra.mrb[0].mxu0 %v1442
  %v1539 = vpop.f32.mrb[0].mxu0
  %v1540 = vadd.f32 0.0, %v1539
  %v1541 = vpop.f32.mrb[0].mxu0
  %1542 = vmatprep.mubr.f32.mxu0 0.0
  %1543 = vmatmul.mubr.f32.gmra.mrb[0].mxu0 %v1445
  %v1544 = vpop.f32.mrb[0].mxu0
  %v1545 = vadd.f32 0.0, %v1544
  %v1546 = vpop.f32.mrb[0].mxu0
  %1547 = vmatprep.mubr.f32.mxu0 0.0
  %1548 = vmatmul.mubr.f32.gmra.mrb[0].mxu0 %v1448
  %v1549 = vpop.f32.mrb[0].mxu0
  %v1550 = vadd.f32 0.0, %v1549
  %v1551 = vpop.f32.mrb[0].mxu0
  %1552 = vmatprep.mubr.f32.mxu0 0.0
  %1553 = vmatmul.mubr.f32.gmra.mrb[0].mxu0 %v1451
  %v1554 = vpop.f32.mrb[0].mxu0
  %v1555 = vadd.f32 0.0, %v1554
  %v1556 = vpop.f32.mrb[0].mxu0
  %1557 = vdwg.mxu0
  %v1558 = vrcp.pop %v1383
  %v1559 = vrcp.pop %v1386
  %v1560 = vrcp.pop %v1389
  %v1561 = vrcp.pop %v1392
  %v1562 = vrcp.pop %v1395
  %v1563 = vrcp.pop %v1398
  %v1564 = vrcp.pop %v1401
  %v1565 = vrcp.pop %v1404
  %v1566 = vmul.f32 %v1520, %v1558
  %v1567 = vmul.f32 %v1525, %v1559
  %v1568 = vmul.f32 %v1530, %v1560
  %v1569 = vmul.f32 %v1535, %v1561
  %v1570 = vmul.f32 %v1540, %v1562
  %v1571 = vmul.f32 %v1545, %v1563
  %v1572 = vmul.f32 %v1550, %v1564
  %v1573 = vmul.f32 %v1555, %v1565
  %1582 = vrot.lane.b32.xlu0 %v1566, 16
  %v1583 = vpop.permute.xlu0 %1582
  %1584 = vrot.lane.b32.xlu0 %v1567, 16
  %v1585 = vpop.permute.xlu0 %1584
  %1586 = vrot.lane.b32.xlu0 %v1568, 16
  %v1587 = vpop.permute.xlu0 %1586
  %1588 = vrot.lane.b32.xlu0 %v1569, 16
  %v1589 = vpop.permute.xlu0 %1588
  %1590 = vrot.lane.b32.xlu0 %v1570, 16
  %v1591 = vpop.permute.xlu0 %1590
  %1592 = vrot.lane.b32.xlu0 %v1571, 16
  %v1593 = vpop.permute.xlu0 %1592
  %1594 = vrot.lane.b32.xlu0 %v1572, 16
  %v1595 = vpop.permute.xlu0 %1594
  %1596 = vrot.lane.b32.xlu0 %v1573, 16
  %v1597 = vpop.permute.xlu0 %1596
  %vm1606 = vcmask 195712
  %1607 = vst.msk [vmem:[#allocation2] sm:$0xff] %vm1606, %v1583
  %1608 = vst.msk [vmem:[#allocation2 + $0x8] sm:$0xff] %vm1606, %v1585
  %1609 = vst.msk [vmem:[#allocation2 + $0x10] sm:$0xff] %vm1606, %v1587
  %1610 = vst.msk [vmem:[#allocation2 + $0x18] sm:$0xff] %vm1606, %v1589
  %1611 = vst.msk [vmem:[#allocation2 + $0x20] sm:$0xff] %vm1606, %v1591
  %1612 = vst.msk [vmem:[#allocation2 + $0x28] sm:$0xff] %vm1606, %v1593
  %1613 = vst.msk [vmem:[#allocation2 + $0x30] sm:$0xff] %vm1606, %v1595
  %1614 = vst.msk [vmem:[#allocation2 + $0x38] sm:$0xff] %vm1606, %v1597
  %1615 = vrot.lane.b32.xlu0 %v285, 104
  %v1616 = vpop.permute.xlu0 %1615
  %1617 = vrot.lane.b32.xlu0 %v286, 104
  %v1618 = vpop.permute.xlu0 %1617
  %1619 = vrot.lane.b32.xlu0 %v287, 104
  %v1620 = vpop.permute.xlu0 %1619
  %1621 = vrot.lane.b32.xlu0 %v288, 104
  %v1622 = vpop.permute.xlu0 %1621
  %1623 = vrot.lane.b32.xlu0 %v289, 104
  %v1624 = vpop.permute.xlu0 %1623
  %1625 = vrot.lane.b32.xlu0 %v290, 104
  %v1626 = vpop.permute.xlu0 %1625
  %1627 = vrot.lane.b32.xlu0 %v291, 104
  %v1628 = vpop.permute.xlu0 %1627
  %1629 = vrot.lane.b32.xlu0 %v292, 104
  %v1630 = vpop.permute.xlu0 %1629
  %1631 = vrot.lane.b32.xlu0 %v207, 72
  %v1632 = vpop.permute.xlu0 %1631
  %1633 = vrot.lane.b32.xlu0 %v212, 72
  %v1634 = vpop.permute.xlu0 %1633
  %1635 = vrot.lane.b32.xlu0 %v217, 72
  %v1636 = vpop.permute.xlu0 %1635
  %1637 = vrot.lane.b32.xlu0 %v222, 72
  %v1638 = vpop.permute.xlu0 %1637
  %1639 = vrot.lane.b32.xlu0 %v227, 72
  %v1640 = vpop.permute.xlu0 %1639
  %1641 = vrot.lane.b32.xlu0 %v232, 72
  %v1642 = vpop.permute.xlu0 %1641
  %1643 = vrot.lane.b32.xlu0 %v237, 72
  %v1644 = vpop.permute.xlu0 %1643
  %1645 = vrot.lane.b32.xlu0 %v242, 72
  %v1646 = vpop.permute.xlu0 %1645
  %v1647 = vsel %vm317, %v1616, 0
  %v1649 = vsel %vm317, %v1618, 0
  %v1651 = vsel %vm317, %v1620, 0
  %v1653 = vsel %vm317, %v1622, 0
  %v1655 = vsel %vm317, %v1624, 0
  %v1657 = vsel %vm317, %v1626, 0
  %v1659 = vsel %vm317, %v1628, 0
  %v1661 = vsel %vm317, %v1630, 0
  %v1663 = vsel %vm317, %v1632, 0
  %v1665 = vsel %vm317, %v1634, 0
  %v1667 = vsel %vm317, %v1636, 0
  %v1669 = vsel %vm317, %v1638, 0
  %v1671 = vsel %vm317, %v1640, 0
  %v1673 = vsel %vm317, %v1642, 0
  %v1675 = vsel %vm317, %v1644, 0
  %v1677 = vsel %vm317, %v1646, 0
  %1679 = vmatprep.subr.mxu0 0.0
  %1680 = vmatpush1.xpose.msra.mxu0 %v1663
  %1681 = vmatprep.subr.mxu0 0.0
  %1682 = vmatpush1.xpose.msra.mxu0 %v1665
  %1683 = vmatprep.subr.mxu0 0.0
  %1684 = vmatpush1.xpose.msra.mxu0 %v1667
  %1685 = vmatprep.subr.mxu0 0.0
  %1686 = vmatpush1.xpose.msra.mxu0 %v1669
  %1687 = vmatprep.subr.mxu0 0.0
  %1688 = vmatpush1.xpose.msra.mxu0 %v1671
  %1689 = vmatprep.subr.mxu0 0.0
  %1690 = vmatpush1.xpose.msra.mxu0 %v1673
  %1691 = vmatprep.subr.mxu0 0.0
  %1692 = vmatpush1.xpose.msra.mxu0 %v1675
  %1693 = vmatprep.subr.mxu0 0.0
  %1694 = vmatpush1.xpose.msra.mxu0 %v1677
  %1695 = vmatprep.subr.mxu0 0.0
  %1696 = vmatpush1.xpose.msra.mxu0 0.0
  %1697 = vmatprep.subr.mxu0 0.0
  %1698 = vmatpush1.xpose.msra.mxu0 0.0
  %1699 = vmatprep.subr.mxu0 0.0
  %1700 = vmatpush1.xpose.msra.mxu0 0.0
  %1701 = vmatprep.subr.mxu0 0.0
  %1702 = vmatpush1.xpose.msra.mxu0 0.0
  %1703 = vmatprep.subr.mxu0 0.0
  %1704 = vmatpush1.xpose.msra.mxu0 0.0
  %1705 = vmatprep.subr.mxu0 0.0
  %1706 = vmatpush1.xpose.msra.mxu0 0.0
  %1707 = vmatprep.subr.mxu0 0.0
  %1708 = vmatpush1.xpose.msra.mxu0 0.0
  %1709 = vmatprep.subr.mxu0 0.0
  %1710 = vmatpush1.xpose.msra.mxu0 0.0
  %1711 = vmatprep.subr.mxu0 0.0
  %1712 = vmatpush1.xpose.msra.mxu0 0.0
  %1713 = vmatprep.subr.mxu0 0.0
  %1714 = vmatpush1.xpose.msra.mxu0 0.0
  %1715 = vmatprep.subr.mxu0 0.0
  %1716 = vmatpush1.xpose.msra.mxu0 0.0
  %1717 = vmatprep.subr.mxu0 0.0
  %1718 = vmatpush1.xpose.msra.mxu0 0.0
  %1719 = vmatprep.subr.mxu0 0.0
  %1720 = vmatpush1.xpose.msra.mxu0 0.0
  %1721 = vmatprep.subr.mxu0 0.0
  %1722 = vmatpush1.xpose.msra.mxu0 0.0
  %1723 = vmatprep.subr.mxu0 0.0
  %1724 = vmatpush1.xpose.msra.mxu0 0.0
  %1725 = vmatprep.subr.mxu0 0.0
  %1726 = vmatpush1.xpose.msra.mxu0 0.0
  %1727 = vmatprep.subr.mxu0 0.0
  %1728 = vmatpush1.xpose.msra.mxu0 0.0
  %1729 = vmatprep.subr.mxu0 0.0
  %1730 = vmatpush1.xpose.msra.mxu0 0.0
  %1731 = vmatprep.subr.mxu0 0.0
  %1732 = vmatpush1.xpose.msra.mxu0 0.0
  %1733 = vmatprep.subr.mxu0 0.0
  %1734 = vmatpush1.xpose.msra.mxu0 0.0
  %1735 = vmatprep.subr.mxu0 0.0
  %1736 = vmatpush1.xpose.msra.mxu0 0.0
  %1737 = vmatprep.subr.mxu0 0.0
  %1738 = vmatpush1.xpose.msra.mxu0 0.0
  %1739 = vmatprep.subr.mxu0 0.0
  %1740 = vmatpush1.xpose.msra.mxu0 0.0
  %1741 = vmatprep.subr.mxu0 0.0
  %1742 = vmatpush1.xpose.msra.mxu0 0.0
  %1743 = vmatprep.mubr.f32.mxu0 0.0
  %1744 = vmatmul.mubr.f32.gmra.mrb[0].mxu0 %v1647
  %v1745 = vpop.f32.mrb[0].mxu0
  %v1746 = vadd.f32 0.0, %v1745
  %v1747 = vpop.f32.mrb[0].mxu0
  %1748 = vmatprep.mubr.f32.mxu0 0.0
  %1749 = vmatmul.mubr.f32.gmra.mrb[0].mxu0 %v1649
  %v1750 = vpop.f32.mrb[0].mxu0
  %v1751 = vadd.f32 0.0, %v1750
  %v1752 = vpop.f32.mrb[0].mxu0
  %1753 = vmatprep.mubr.f32.mxu0 0.0
  %1754 = vmatmul.mubr.f32.gmra.mrb[0].mxu0 %v1651
  %v1755 = vpop.f32.mrb[0].mxu0
  %v1756 = vadd.f32 0.0, %v1755
  %v1757 = vpop.f32.mrb[0].mxu0
  %1758 = vmatprep.mubr.f32.mxu0 0.0
  %1759 = vmatmul.mubr.f32.gmra.mrb[0].mxu0 %v1653
  %v1760 = vpop.f32.mrb[0].mxu0
  %v1761 = vadd.f32 0.0, %v1760
  %v1762 = vpop.f32.mrb[0].mxu0
  %1763 = vmatprep.mubr.f32.mxu0 0.0
  %1764 = vmatmul.mubr.f32.gmra.mrb[0].mxu0 %v1655
  %v1765 = vpop.f32.mrb[0].mxu0
  %v1766 = vadd.f32 0.0, %v1765
  %v1767 = vpop.f32.mrb[0].mxu0
  %1768 = vmatprep.mubr.f32.mxu0 0.0
  %1769 = vmatmul.mubr.f32.gmra.mrb[0].mxu0 %v1657
  %v1770 = vpop.f32.mrb[0].mxu0
  %v1771 = vadd.f32 0.0, %v1770
  %v1772 = vpop.f32.mrb[0].mxu0
  %1773 = vmatprep.mubr.f32.mxu0 0.0
  %1774 = vmatmul.mubr.f32.gmra.mrb[0].mxu0 %v1659
  %v1775 = vpop.f32.mrb[0].mxu0
  %v1776 = vadd.f32 0.0, %v1775
  %v1777 = vpop.f32.mrb[0].mxu0
  %1778 = vmatprep.mubr.f32.mxu0 0.0
  %1779 = vmatmul.mubr.f32.gmra.mrb[0].mxu0 %v1661
  %v1780 = vpop.f32.mrb[0].mxu0
  %v1781 = vadd.f32 0.0, %v1780
  %v1782 = vpop.f32.mrb[0].mxu0
  %1783 = vdwg.mxu0
  %v1784 = vsel %vm463, %v1746, -inf
  %1785 = vmax.xlane.f32.xlu0 %v1784
  %v1786 = vpop.xlane.xlu0 %1785
  %v1787 = vsel %vm463, %v1751, -inf
  %1788 = vmax.xlane.f32.xlu0 %v1787
  %v1789 = vpop.xlane.xlu0 %1788
  %v1790 = vsel %vm463, %v1756, -inf
  %1791 = vmax.xlane.f32.xlu0 %v1790
  %v1792 = vpop.xlane.xlu0 %1791
  %v1793 = vsel %vm463, %v1761, -inf
  %1794 = vmax.xlane.f32.xlu0 %v1793
  %v1795 = vpop.xlane.xlu0 %1794
  %v1796 = vsel %vm463, %v1766, -inf
  %1797 = vmax.xlane.f32.xlu0 %v1796
  %v1798 = vpop.xlane.xlu0 %1797
  %v1799 = vsel %vm463, %v1771, -inf
  %1800 = vmax.xlane.f32.xlu0 %v1799
  %v1801 = vpop.xlane.xlu0 %1800
  %v1802 = vsel %vm463, %v1776, -inf
  %1803 = vmax.xlane.f32.xlu0 %v1802
  %v1804 = vpop.xlane.xlu0 %1803
  %v1805 = vsel %vm463, %v1781, -inf
  %1806 = vmax.xlane.f32.xlu0 %v1805
  %v1807 = vpop.xlane.xlu0 %1806
  %v1808 = vsub.f32 %v1746, %v1786
  %v1809 = vsub.f32 %v1751, %v1789
  %v1810 = vsub.f32 %v1756, %v1792
  %v1811 = vsub.f32 %v1761, %v1795
  %v1812 = vsub.f32 %v1766, %v1798
  %v1813 = vsub.f32 %v1771, %v1801
  %v1814 = vsub.f32 %v1776, %v1804
  %v1815 = vsub.f32 %v1781, %v1807
  %v1816 = vmul.f32 %v1808, 1.442695
  %v1817 = vpow.pop %v1816
  %v1818 = vmul.f32 %v1809, 1.442695
  %v1819 = vpow.pop %v1818
  %v1820 = vmul.f32 %v1810, 1.442695
  %v1821 = vpow.pop %v1820
  %v1822 = vmul.f32 %v1811, 1.442695
  %v1823 = vpow.pop %v1822
  %v1824 = vmul.f32 %v1812, 1.442695
  %v1825 = vpow.pop %v1824
  %v1826 = vmul.f32 %v1813, 1.442695
  %v1827 = vpow.pop %v1826
  %v1828 = vmul.f32 %v1814, 1.442695
  %v1829 = vpow.pop %v1828
  %v1830 = vmul.f32 %v1815, 1.442695
  %v1831 = vpow.pop %v1830
  %v1832 = vsel %vm463, %v1817, 0.0
  %1833 = vadd.xlane.f32.xlu0 %v1832
  %v1834 = vpop.xlane.xlu0 %1833
  %v1835 = vsel %vm463, %v1819, 0.0
  %1836 = vadd.xlane.f32.xlu0 %v1835
  %v1837 = vpop.xlane.xlu0 %1836
  %v1838 = vsel %vm463, %v1821, 0.0
  %1839 = vadd.xlane.f32.xlu0 %v1838
  %v1840 = vpop.xlane.xlu0 %1839
  %v1841 = vsel %vm463, %v1823, 0.0
  %1842 = vadd.xlane.f32.xlu0 %v1841
  %v1843 = vpop.xlane.xlu0 %1842
  %v1844 = vsel %vm463, %v1825, 0.0
  %1845 = vadd.xlane.f32.xlu0 %v1844
  %v1846 = vpop.xlane.xlu0 %1845
  %v1847 = vsel %vm463, %v1827, 0.0
  %1848 = vadd.xlane.f32.xlu0 %v1847
  %v1849 = vpop.xlane.xlu0 %1848
  %v1850 = vsel %vm463, %v1829, 0.0
  %1851 = vadd.xlane.f32.xlu0 %v1850
  %v1852 = vpop.xlane.xlu0 %1851
  %v1853 = vsel %vm463, %v1831, 0.0
  %1854 = vadd.xlane.f32.xlu0 %v1853
  %v1855 = vpop.xlane.xlu0 %1854
  %1856 = vrot.lane.b32.xlu0 %v207, 40
  %v1857 = vpop.permute.xlu0 %1856
  %1858 = vrot.lane.b32.xlu0 %v212, 40
  %v1859 = vpop.permute.xlu0 %1858
  %1860 = vrot.lane.b32.xlu0 %v217, 40
  %v1861 = vpop.permute.xlu0 %1860
  %1862 = vrot.lane.b32.xlu0 %v222, 40
  %v1863 = vpop.permute.xlu0 %1862
  %1864 = vrot.lane.b32.xlu0 %v227, 40
  %v1865 = vpop.permute.xlu0 %1864
  %1866 = vrot.lane.b32.xlu0 %v232, 40
  %v1867 = vpop.permute.xlu0 %1866
  %1868 = vrot.lane.b32.xlu0 %v237, 40
  %v1869 = vpop.permute.xlu0 %1868
  %1870 = vrot.lane.b32.xlu0 %v242, 40
  %v1871 = vpop.permute.xlu0 %1870
  %v1881 = vsel %vm463, %v1817, 0
  %v1884 = vsel %vm463, %v1819, 0
  %v1887 = vsel %vm463, %v1821, 0
  %v1890 = vsel %vm463, %v1823, 0
  %v1893 = vsel %vm463, %v1825, 0
  %v1896 = vsel %vm463, %v1827, 0
  %v1899 = vsel %vm463, %v1829, 0
  %v1902 = vsel %vm463, %v1831, 0
  %1904 = vmatprep.subr.mxu0 0.0
  %1905 = vmatpush1.msra.mxu0 %v1857
  %1906 = vmatprep.subr.mxu0 0.0
  %1907 = vmatpush1.msra.mxu0 %v1859
  %1908 = vmatprep.subr.mxu0 0.0
  %1909 = vmatpush1.msra.mxu0 %v1861
  %1910 = vmatprep.subr.mxu0 0.0
  %1911 = vmatpush1.msra.mxu0 %v1863
  %1912 = vmatprep.subr.mxu0 0.0
  %1913 = vmatpush1.msra.mxu0 %v1865
  %1914 = vmatprep.subr.mxu0 0.0
  %1915 = vmatpush1.msra.mxu0 %v1867
  %1916 = vmatprep.subr.mxu0 0.0
  %1917 = vmatpush1.msra.mxu0 %v1869
  %1918 = vmatprep.subr.mxu0 0.0
  %1919 = vmatpush1.msra.mxu0 %v1871
  %1920 = vmatprep.subr.mxu0 0.0
  %1921 = vmatpush1.msra.mxu0 0.0
  %1922 = vmatprep.subr.mxu0 0.0
  %1923 = vmatpush1.msra.mxu0 0.0
  %1924 = vmatprep.subr.mxu0 0.0
  %1925 = vmatpush1.msra.mxu0 0.0
  %1926 = vmatprep.subr.mxu0 0.0
  %1927 = vmatpush1.msra.mxu0 0.0
  %1928 = vmatprep.subr.mxu0 0.0
  %1929 = vmatpush1.msra.mxu0 0.0
  %1930 = vmatprep.subr.mxu0 0.0
  %1931 = vmatpush1.msra.mxu0 0.0
  %1932 = vmatprep.subr.mxu0 0.0
  %1933 = vmatpush1.msra.mxu0 0.0
  %1934 = vmatprep.subr.mxu0 0.0
  %1935 = vmatpush1.msra.mxu0 0.0
  %1936 = vmatprep.subr.mxu0 0.0
  %1937 = vmatpush1.msra.mxu0 0.0
  %1938 = vmatprep.subr.mxu0 0.0
  %1939 = vmatpush1.msra.mxu0 0.0
  %1940 = vmatprep.subr.mxu0 0.0
  %1941 = vmatpush1.msra.mxu0 0.0
  %1942 = vmatprep.subr.mxu0 0.0
  %1943 = vmatpush1.msra.mxu0 0.0
  %1944 = vmatprep.subr.mxu0 0.0
  %1945 = vmatpush1.msra.mxu0 0.0
  %1946 = vmatprep.subr.mxu0 0.0
  %1947 = vmatpush1.msra.mxu0 0.0
  %1948 = vmatprep.subr.mxu0 0.0
  %1949 = vmatpush1.msra.mxu0 0.0
  %1950 = vmatprep.subr.mxu0 0.0
  %1951 = vmatpush1.msra.mxu0 0.0
  %1952 = vmatprep.subr.mxu0 0.0
  %1953 = vmatpush1.msra.mxu0 0.0
  %1954 = vmatprep.subr.mxu0 0.0
  %1955 = vmatpush1.msra.mxu0 0.0
  %1956 = vmatprep.subr.mxu0 0.0
  %1957 = vmatpush1.msra.mxu0 0.0
  %1958 = vmatprep.subr.mxu0 0.0
  %1959 = vmatpush1.msra.mxu0 0.0
  %1960 = vmatprep.subr.mxu0 0.0
  %1961 = vmatpush1.msra.mxu0 0.0
  %1962 = vmatprep.subr.mxu0 0.0
  %1963 = vmatpush1.msra.mxu0 0.0
  %1964 = vmatprep.subr.mxu0 0.0
  %1965 = vmatpush1.msra.mxu0 0.0
  %1966 = vmatprep.subr.mxu0 0.0
  %1967 = vmatpush1.msra.mxu0 0.0
  %1968 = vmatprep.mubr.f32.mxu0 0.0
  %1969 = vmatmul.mubr.f32.gmra.mrb[0].mxu0 %v1881
  %v1970 = vpop.f32.mrb[0].mxu0
  %v1971 = vadd.f32 0.0, %v1970
  %v1972 = vpop.f32.mrb[0].mxu0
  %1973 = vmatprep.mubr.f32.mxu0 0.0
  %1974 = vmatmul.mubr.f32.gmra.mrb[0].mxu0 %v1884
  %v1975 = vpop.f32.mrb[0].mxu0
  %v1976 = vadd.f32 0.0, %v1975
  %v1977 = vpop.f32.mrb[0].mxu0
  %1978 = vmatprep.mubr.f32.mxu0 0.0
  %1979 = vmatmul.mubr.f32.gmra.mrb[0].mxu0 %v1887
  %v1980 = vpop.f32.mrb[0].mxu0
  %v1981 = vadd.f32 0.0, %v1980
  %v1982 = vpop.f32.mrb[0].mxu0
  %1983 = vmatprep.mubr.f32.mxu0 0.0
  %1984 = vmatmul.mubr.f32.gmra.mrb[0].mxu0 %v1890
  %v1985 = vpop.f32.mrb[0].mxu0
  %v1986 = vadd.f32 0.0, %v1985
  %v1987 = vpop.f32.mrb[0].mxu0
  %1988 = vmatprep.mubr.f32.mxu0 0.0
  %1989 = vmatmul.mubr.f32.gmra.mrb[0].mxu0 %v1893
  %v1990 = vpop.f32.mrb[0].mxu0
  %v1991 = vadd.f32 0.0, %v1990
  %v1992 = vpop.f32.mrb[0].mxu0
  %1993 = vmatprep.mubr.f32.mxu0 0.0
  %1994 = vmatmul.mubr.f32.gmra.mrb[0].mxu0 %v1896
  %v1995 = vpop.f32.mrb[0].mxu0
  %v1996 = vadd.f32 0.0, %v1995
  %v1997 = vpop.f32.mrb[0].mxu0
  %1998 = vmatprep.mubr.f32.mxu0 0.0
  %1999 = vmatmul.mubr.f32.gmra.mrb[0].mxu0 %v1899
  %v2000 = vpop.f32.mrb[0].mxu0
  %v2001 = vadd.f32 0.0, %v2000
  %v2002 = vpop.f32.mrb[0].mxu0
  %2003 = vmatprep.mubr.f32.mxu0 0.0
  %2004 = vmatmul.mubr.f32.gmra.mrb[0].mxu0 %v1902
  %v2005 = vpop.f32.mrb[0].mxu0
  %v2006 = vadd.f32 0.0, %v2005
  %v2007 = vpop.f32.mrb[0].mxu0
  %2008 = vdwg.mxu0
  %v2009 = vrcp.pop %v1834
  %v2010 = vrcp.pop %v1837
  %v2011 = vrcp.pop %v1840
  %v2012 = vrcp.pop %v1843
  %v2013 = vrcp.pop %v1846
  %v2014 = vrcp.pop %v1849
  %v2015 = vrcp.pop %v1852
  %v2016 = vrcp.pop %v1855
  %v2017 = vmul.f32 %v1971, %v2009
  %v2018 = vmul.f32 %v1976, %v2010
  %v2019 = vmul.f32 %v1981, %v2011
  %v2020 = vmul.f32 %v1986, %v2012
  %v2021 = vmul.f32 %v1991, %v2013
  %v2022 = vmul.f32 %v1996, %v2014
  %v2023 = vmul.f32 %v2001, %v2015
  %v2024 = vmul.f32 %v2006, %v2016
  %2033 = vrot.lane.b32.xlu0 %v2017, 24
  %v2034 = vpop.permute.xlu0 %2033
  %2035 = vrot.lane.b32.xlu0 %v2018, 24
  %v2036 = vpop.permute.xlu0 %2035
  %2037 = vrot.lane.b32.xlu0 %v2019, 24
  %v2038 = vpop.permute.xlu0 %2037
  %2039 = vrot.lane.b32.xlu0 %v2020, 24
  %v2040 = vpop.permute.xlu0 %2039
  %2041 = vrot.lane.b32.xlu0 %v2021, 24
  %v2042 = vpop.permute.xlu0 %2041
  %2043 = vrot.lane.b32.xlu0 %v2022, 24
  %v2044 = vpop.permute.xlu0 %2043
  %2045 = vrot.lane.b32.xlu0 %v2023, 24
  %v2046 = vpop.permute.xlu0 %2045
  %2047 = vrot.lane.b32.xlu0 %v2024, 24
  %v2048 = vpop.permute.xlu0 %2047
  %vm2057 = vcmask 261312
  %2058 = vst.msk [vmem:[#allocation2] sm:$0xff] %vm2057, %v2034
  %2059 = vst.msk [vmem:[#allocation2 + $0x8] sm:$0xff] %vm2057, %v2036
  %2060 = vst.msk [vmem:[#allocation2 + $0x10] sm:$0xff] %vm2057, %v2038
  %2061 = vst.msk [vmem:[#allocation2 + $0x18] sm:$0xff] %vm2057, %v2040
  %2062 = vst.msk [vmem:[#allocation2 + $0x20] sm:$0xff] %vm2057, %v2042
  %2063 = vst.msk [vmem:[#allocation2 + $0x28] sm:$0xff] %vm2057, %v2044
  %2064 = vst.msk [vmem:[#allocation2 + $0x30] sm:$0xff] %vm2057, %v2046
  %2065 = vst.msk [vmem:[#allocation2 + $0x38] sm:$0xff] %vm2057, %v2048
  %v2066 = vmul.f32 %v247, 0.35355338
  %v2067 = vmul.f32 %v252, 0.35355338
  %v2068 = vmul.f32 %v257, 0.35355338
  %v2069 = vmul.f32 %v262, 0.35355338
  %v2070 = vmul.f32 %v267, 0.35355338
  %v2071 = vmul.f32 %v272, 0.35355338
  %v2072 = vmul.f32 %v277, 0.35355338
  %v2073 = vmul.f32 %v282, 0.35355338
  %2082 = vrot.lane.b32.xlu0 %v247, 96
  %v2083 = vpop.permute.xlu0 %2082
  %2084 = vrot.lane.b32.xlu0 %v252, 96
  %v2085 = vpop.permute.xlu0 %2084
  %2086 = vrot.lane.b32.xlu0 %v257, 96
  %v2087 = vpop.permute.xlu0 %2086
  %2088 = vrot.lane.b32.xlu0 %v262, 96
  %v2089 = vpop.permute.xlu0 %2088
  %2090 = vrot.lane.b32.xlu0 %v267, 96
  %v2091 = vpop.permute.xlu0 %2090
  %2092 = vrot.lane.b32.xlu0 %v272, 96
  %v2093 = vpop.permute.xlu0 %2092
  %2094 = vrot.lane.b32.xlu0 %v277, 96
  %v2095 = vpop.permute.xlu0 %2094
  %2096 = vrot.lane.b32.xlu0 %v282, 96
  %v2097 = vpop.permute.xlu0 %2096
  %v2099 = vsel %vm317, %v2066, 0
  %v2102 = vsel %vm317, %v2067, 0
  %v2105 = vsel %vm317, %v2068, 0
  %v2108 = vsel %vm317, %v2069, 0
  %v2111 = vsel %vm317, %v2070, 0
  %v2114 = vsel %vm317, %v2071, 0
  %v2117 = vsel %vm317, %v2072, 0
  %v2120 = vsel %vm317, %v2073, 0
  %v2122 = vsel %vm317, %v2083, 0
  %v2124 = vsel %vm317, %v2085, 0
  %v2126 = vsel %vm317, %v2087, 0
  %v2128 = vsel %vm317, %v2089, 0
  %v2130 = vsel %vm317, %v2091, 0
  %v2132 = vsel %vm317, %v2093, 0
  %v2134 = vsel %vm317, %v2095, 0
  %v2136 = vsel %vm317, %v2097, 0
  %2138 = vmatprep.subr.mxu0 0.0
  %2139 = vmatpush1.xpose.msra.mxu0 %v2122
  %2140 = vmatprep.subr.mxu0 0.0
  %2141 = vmatpush1.xpose.msra.mxu0 %v2124
  %2142 = vmatprep.subr.mxu0 0.0
  %2143 = vmatpush1.xpose.msra.mxu0 %v2126
  %2144 = vmatprep.subr.mxu0 0.0
  %2145 = vmatpush1.xpose.msra.mxu0 %v2128
  %2146 = vmatprep.subr.mxu0 0.0
  %2147 = vmatpush1.xpose.msra.mxu0 %v2130
  %2148 = vmatprep.subr.mxu0 0.0
  %2149 = vmatpush1.xpose.msra.mxu0 %v2132
  %2150 = vmatprep.subr.mxu0 0.0
  %2151 = vmatpush1.xpose.msra.mxu0 %v2134
  %2152 = vmatprep.subr.mxu0 0.0
  %2153 = vmatpush1.xpose.msra.mxu0 %v2136
  %2154 = vmatprep.subr.mxu0 0.0
  %2155 = vmatpush1.xpose.msra.mxu0 0.0
  %2156 = vmatprep.subr.mxu0 0.0
  %2157 = vmatpush1.xpose.msra.mxu0 0.0
  %2158 = vmatprep.subr.mxu0 0.0
  %2159 = vmatpush1.xpose.msra.mxu0 0.0
  %2160 = vmatprep.subr.mxu0 0.0
  %2161 = vmatpush1.xpose.msra.mxu0 0.0
  %2162 = vmatprep.subr.mxu0 0.0
  %2163 = vmatpush1.xpose.msra.mxu0 0.0
  %2164 = vmatprep.subr.mxu0 0.0
  %2165 = vmatpush1.xpose.msra.mxu0 0.0
  %2166 = vmatprep.subr.mxu0 0.0
  %2167 = vmatpush1.xpose.msra.mxu0 0.0
  %2168 = vmatprep.subr.mxu0 0.0
  %2169 = vmatpush1.xpose.msra.mxu0 0.0
  %2170 = vmatprep.subr.mxu0 0.0
  %2171 = vmatpush1.xpose.msra.mxu0 0.0
  %2172 = vmatprep.subr.mxu0 0.0
  %2173 = vmatpush1.xpose.msra.mxu0 0.0
  %2174 = vmatprep.subr.mxu0 0.0
  %2175 = vmatpush1.xpose.msra.mxu0 0.0
  %2176 = vmatprep.subr.mxu0 0.0
  %2177 = vmatpush1.xpose.msra.mxu0 0.0
  %2178 = vmatprep.subr.mxu0 0.0
  %2179 = vmatpush1.xpose.msra.mxu0 0.0
  %2180 = vmatprep.subr.mxu0 0.0
  %2181 = vmatpush1.xpose.msra.mxu0 0.0
  %2182 = vmatprep.subr.mxu0 0.0
  %2183 = vmatpush1.xpose.msra.mxu0 0.0
  %2184 = vmatprep.subr.mxu0 0.0
  %2185 = vmatpush1.xpose.msra.mxu0 0.0
  %2186 = vmatprep.subr.mxu0 0.0
  %2187 = vmatpush1.xpose.msra.mxu0 0.0
  %2188 = vmatprep.subr.mxu0 0.0
  %2189 = vmatpush1.xpose.msra.mxu0 0.0
  %2190 = vmatprep.subr.mxu0 0.0
  %2191 = vmatpush1.xpose.msra.mxu0 0.0
  %2192 = vmatprep.subr.mxu0 0.0
  %2193 = vmatpush1.xpose.msra.mxu0 0.0
  %2194 = vmatprep.subr.mxu0 0.0
  %2195 = vmatpush1.xpose.msra.mxu0 0.0
  %2196 = vmatprep.subr.mxu0 0.0
  %2197 = vmatpush1.xpose.msra.mxu0 0.0
  %2198 = vmatprep.subr.mxu0 0.0
  %2199 = vmatpush1.xpose.msra.mxu0 0.0
  %2200 = vmatprep.subr.mxu0 0.0
  %2201 = vmatpush1.xpose.msra.mxu0 0.0
  %2202 = vmatprep.mubr.f32.mxu0 0.0
  %2203 = vmatmul.mubr.f32.gmra.mrb[0].mxu0 %v2099
  %v2204 = vpop.f32.mrb[0].mxu0
  %v2205 = vadd.f32 0.0, %v2204
  %v2206 = vpop.f32.mrb[0].mxu0
  %2207 = vmatprep.mubr.f32.mxu0 0.0
  %2208 = vmatmul.mubr.f32.gmra.mrb[0].mxu0 %v2102
  %v2209 = vpop.f32.mrb[0].mxu0
  %v2210 = vadd.f32 0.0, %v2209
  %v2211 = vpop.f32.mrb[0].mxu0
  %2212 = vmatprep.mubr.f32.mxu0 0.0
  %2213 = vmatmul.mubr.f32.gmra.mrb[0].mxu0 %v2105
  %v2214 = vpop.f32.mrb[0].mxu0
  %v2215 = vadd.f32 0.0, %v2214
  %v2216 = vpop.f32.mrb[0].mxu0
  %2217 = vmatprep.mubr.f32.mxu0 0.0
  %2218 = vmatmul.mubr.f32.gmra.mrb[0].mxu0 %v2108
  %v2219 = vpop.f32.mrb[0].mxu0
  %v2220 = vadd.f32 0.0, %v2219
  %v2221 = vpop.f32.mrb[0].mxu0
  %2222 = vmatprep.mubr.f32.mxu0 0.0
  %2223 = vmatmul.mubr.f32.gmra.mrb[0].mxu0 %v2111
  %v2224 = vpop.f32.mrb[0].mxu0
  %v2225 = vadd.f32 0.0, %v2224
  %v2226 = vpop.f32.mrb[0].mxu0
  %2227 = vmatprep.mubr.f32.mxu0 0.0
  %2228 = vmatmul.mubr.f32.gmra.mrb[0].mxu0 %v2114
  %v2229 = vpop.f32.mrb[0].mxu0
  %v2230 = vadd.f32 0.0, %v2229
  %v2231 = vpop.f32.mrb[0].mxu0
  %2232 = vmatprep.mubr.f32.mxu0 0.0
  %2233 = vmatmul.mubr.f32.gmra.mrb[0].mxu0 %v2117
  %v2234 = vpop.f32.mrb[0].mxu0
  %v2235 = vadd.f32 0.0, %v2234
  %v2236 = vpop.f32.mrb[0].mxu0
  %2237 = vmatprep.mubr.f32.mxu0 0.0
  %2238 = vmatmul.mubr.f32.gmra.mrb[0].mxu0 %v2120
  %v2239 = vpop.f32.mrb[0].mxu0
  %v2240 = vadd.f32 0.0, %v2239
  %v2241 = vpop.f32.mrb[0].mxu0
  %2242 = vdwg.mxu0
  %v2243 = vsel %vm463, %v2205, -inf
  %2244 = vmax.xlane.f32.xlu0 %v2243
  %v2245 = vpop.xlane.xlu0 %2244
  %v2246 = vsel %vm463, %v2210, -inf
  %2247 = vmax.xlane.f32.xlu0 %v2246
  %v2248 = vpop.xlane.xlu0 %2247
  %v2249 = vsel %vm463, %v2215, -inf
  %2250 = vmax.xlane.f32.xlu0 %v2249
  %v2251 = vpop.xlane.xlu0 %2250
  %v2252 = vsel %vm463, %v2220, -inf
  %2253 = vmax.xlane.f32.xlu0 %v2252
  %v2254 = vpop.xlane.xlu0 %2253
  %v2255 = vsel %vm463, %v2225, -inf
  %2256 = vmax.xlane.f32.xlu0 %v2255
  %v2257 = vpop.xlane.xlu0 %2256
  %v2258 = vsel %vm463, %v2230, -inf
  %2259 = vmax.xlane.f32.xlu0 %v2258
  %v2260 = vpop.xlane.xlu0 %2259
  %v2261 = vsel %vm463, %v2235, -inf
  %2262 = vmax.xlane.f32.xlu0 %v2261
  %v2263 = vpop.xlane.xlu0 %2262
  %v2264 = vsel %vm463, %v2240, -inf
  %2265 = vmax.xlane.f32.xlu0 %v2264
  %v2266 = vpop.xlane.xlu0 %2265
  %v2267 = vsub.f32 %v2205, %v2245
  %v2268 = vsub.f32 %v2210, %v2248
  %v2269 = vsub.f32 %v2215, %v2251
  %v2270 = vsub.f32 %v2220, %v2254
  %v2271 = vsub.f32 %v2225, %v2257
  %v2272 = vsub.f32 %v2230, %v2260
  %v2273 = vsub.f32 %v2235, %v2263
  %v2274 = vsub.f32 %v2240, %v2266
  %v2275 = vmul.f32 %v2267, 1.442695
  %v2276 = vpow.pop %v2275
  %v2277 = vmul.f32 %v2268, 1.442695
  %v2278 = vpow.pop %v2277
  %v2279 = vmul.f32 %v2269, 1.442695
  %v2280 = vpow.pop %v2279
  %v2281 = vmul.f32 %v2270, 1.442695
  %v2282 = vpow.pop %v2281
  %v2283 = vmul.f32 %v2271, 1.442695
  %v2284 = vpow.pop %v2283
  %v2285 = vmul.f32 %v2272, 1.442695
  %v2286 = vpow.pop %v2285
  %v2287 = vmul.f32 %v2273, 1.442695
  %v2288 = vpow.pop %v2287
  %v2289 = vmul.f32 %v2274, 1.442695
  %v2290 = vpow.pop %v2289
  %v2291 = vsel %vm463, %v2276, 0.0
  %2292 = vadd.xlane.f32.xlu0 %v2291
  %v2293 = vpop.xlane.xlu0 %2292
  %v2294 = vsel %vm463, %v2278, 0.0
  %2295 = vadd.xlane.f32.xlu0 %v2294
  %v2296 = vpop.xlane.xlu0 %2295
  %v2297 = vsel %vm463, %v2280, 0.0
  %2298 = vadd.xlane.f32.xlu0 %v2297
  %v2299 = vpop.xlane.xlu0 %2298
  %v2300 = vsel %vm463, %v2282, 0.0
  %2301 = vadd.xlane.f32.xlu0 %v2300
  %v2302 = vpop.xlane.xlu0 %2301
  %v2303 = vsel %vm463, %v2284, 0.0
  %2304 = vadd.xlane.f32.xlu0 %v2303
  %v2305 = vpop.xlane.xlu0 %2304
  %v2306 = vsel %vm463, %v2286, 0.0
  %2307 = vadd.xlane.f32.xlu0 %v2306
  %v2308 = vpop.xlane.xlu0 %2307
  %v2309 = vsel %vm463, %v2288, 0.0
  %2310 = vadd.xlane.f32.xlu0 %v2309
  %v2311 = vpop.xlane.xlu0 %2310
  %v2312 = vsel %vm463, %v2290, 0.0
  %2313 = vadd.xlane.f32.xlu0 %v2312
  %v2314 = vpop.xlane.xlu0 %2313
  %2315 = vrot.lane.b32.xlu0 %v247, 64
  %v2316 = vpop.permute.xlu0 %2315
  %2317 = vrot.lane.b32.xlu0 %v252, 64
  %v2318 = vpop.permute.xlu0 %2317
  %2319 = vrot.lane.b32.xlu0 %v257, 64
  %v2320 = vpop.permute.xlu0 %2319
  %2321 = vrot.lane.b32.xlu0 %v262, 64
  %v2322 = vpop.permute.xlu0 %2321
  %2323 = vrot.lane.b32.xlu0 %v267, 64
  %v2324 = vpop.permute.xlu0 %2323
  %2325 = vrot.lane.b32.xlu0 %v272, 64
  %v2326 = vpop.permute.xlu0 %2325
  %2327 = vrot.lane.b32.xlu0 %v277, 64
  %v2328 = vpop.permute.xlu0 %2327
  %2329 = vrot.lane.b32.xlu0 %v282, 64
  %v2330 = vpop.permute.xlu0 %2329
  %v2340 = vsel %vm463, %v2276, 0
  %v2343 = vsel %vm463, %v2278, 0
  %v2346 = vsel %vm463, %v2280, 0
  %v2349 = vsel %vm463, %v2282, 0
  %v2352 = vsel %vm463, %v2284, 0
  %v2355 = vsel %vm463, %v2286, 0
  %v2358 = vsel %vm463, %v2288, 0
  %v2361 = vsel %vm463, %v2290, 0
  %2363 = vmatprep.subr.mxu0 0.0
  %2364 = vmatpush1.msra.mxu0 %v2316
  %2365 = vmatprep.subr.mxu0 0.0
  %2366 = vmatpush1.msra.mxu0 %v2318
  %2367 = vmatprep.subr.mxu0 0.0
  %2368 = vmatpush1.msra.mxu0 %v2320
  %2369 = vmatprep.subr.mxu0 0.0
  %2370 = vmatpush1.msra.mxu0 %v2322
  %2371 = vmatprep.subr.mxu0 0.0
  %2372 = vmatpush1.msra.mxu0 %v2324
  %2373 = vmatprep.subr.mxu0 0.0
  %2374 = vmatpush1.msra.mxu0 %v2326
  %2375 = vmatprep.subr.mxu0 0.0
  %2376 = vmatpush1.msra.mxu0 %v2328
  %2377 = vmatprep.subr.mxu0 0.0
  %2378 = vmatpush1.msra.mxu0 %v2330
  %2379 = vmatprep.subr.mxu0 0.0
  %2380 = vmatpush1.msra.mxu0 0.0
  %2381 = vmatprep.subr.mxu0 0.0
  %2382 = vmatpush1.msra.mxu0 0.0
  %2383 = vmatprep.subr.mxu0 0.0
  %2384 = vmatpush1.msra.mxu0 0.0
  %2385 = vmatprep.subr.mxu0 0.0
  %2386 = vmatpush1.msra.mxu0 0.0
  %2387 = vmatprep.subr.mxu0 0.0
  %2388 = vmatpush1.msra.mxu0 0.0
  %2389 = vmatprep.subr.mxu0 0.0
  %2390 = vmatpush1.msra.mxu0 0.0
  %2391 = vmatprep.subr.mxu0 0.0
  %2392 = vmatpush1.msra.mxu0 0.0
  %2393 = vmatprep.subr.mxu0 0.0
  %2394 = vmatpush1.msra.mxu0 0.0
  %2395 = vmatprep.subr.mxu0 0.0
  %2396 = vmatpush1.msra.mxu0 0.0
  %2397 = vmatprep.subr.mxu0 0.0
  %2398 = vmatpush1.msra.mxu0 0.0
  %2399 = vmatprep.subr.mxu0 0.0
  %2400 = vmatpush1.msra.mxu0 0.0
  %2401 = vmatprep.subr.mxu0 0.0
  %2402 = vmatpush1.msra.mxu0 0.0
  %2403 = vmatprep.subr.mxu0 0.0
  %2404 = vmatpush1.msra.mxu0 0.0
  %2405 = vmatprep.subr.mxu0 0.0
  %2406 = vmatpush1.msra.mxu0 0.0
  %2407 = vmatprep.subr.mxu0 0.0
  %2408 = vmatpush1.msra.mxu0 0.0
  %2409 = vmatprep.subr.mxu0 0.0
  %2410 = vmatpush1.msra.mxu0 0.0
  %2411 = vmatprep.subr.mxu0 0.0
  %2412 = vmatpush1.msra.mxu0 0.0
  %2413 = vmatprep.subr.mxu0 0.0
  %2414 = vmatpush1.msra.mxu0 0.0
  %2415 = vmatprep.subr.mxu0 0.0
  %2416 = vmatpush1.msra.mxu0 0.0
  %2417 = vmatprep.subr.mxu0 0.0
  %2418 = vmatpush1.msra.mxu0 0.0
  %2419 = vmatprep.subr.mxu0 0.0
  %2420 = vmatpush1.msra.mxu0 0.0
  %2421 = vmatprep.subr.mxu0 0.0
  %2422 = vmatpush1.msra.mxu0 0.0
  %2423 = vmatprep.subr.mxu0 0.0
  %2424 = vmatpush1.msra.mxu0 0.0
  %2425 = vmatprep.subr.mxu0 0.0
  %2426 = vmatpush1.msra.mxu0 0.0
  %2427 = vmatprep.mubr.f32.mxu0 0.0
  %2428 = vmatmul.mubr.f32.gmra.mrb[0].mxu0 %v2340
  %v2429 = vpop.f32.mrb[0].mxu0
  %v2430 = vadd.f32 0.0, %v2429
  %v2431 = vpop.f32.mrb[0].mxu0
  %2432 = vmatprep.mubr.f32.mxu0 0.0
  %2433 = vmatmul.mubr.f32.gmra.mrb[0].mxu0 %v2343
  %v2434 = vpop.f32.mrb[0].mxu0
  %v2435 = vadd.f32 0.0, %v2434
  %v2436 = vpop.f32.mrb[0].mxu0
  %2437 = vmatprep.mubr.f32.mxu0 0.0
  %2438 = vmatmul.mubr.f32.gmra.mrb[0].mxu0 %v2346
  %v2439 = vpop.f32.mrb[0].mxu0
  %v2440 = vadd.f32 0.0, %v2439
  %v2441 = vpop.f32.mrb[0].mxu0
  %2442 = vmatprep.mubr.f32.mxu0 0.0
  %2443 = vmatmul.mubr.f32.gmra.mrb[0].mxu0 %v2349
  %v2444 = vpop.f32.mrb[0].mxu0
  %v2445 = vadd.f32 0.0, %v2444
  %v2446 = vpop.f32.mrb[0].mxu0
  %2447 = vmatprep.mubr.f32.mxu0 0.0
  %2448 = vmatmul.mubr.f32.gmra.mrb[0].mxu0 %v2352
  %v2449 = vpop.f32.mrb[0].mxu0
  %v2450 = vadd.f32 0.0, %v2449
  %v2451 = vpop.f32.mrb[0].mxu0
  %2452 = vmatprep.mubr.f32.mxu0 0.0
  %2453 = vmatmul.mubr.f32.gmra.mrb[0].mxu0 %v2355
  %v2454 = vpop.f32.mrb[0].mxu0
  %v2455 = vadd.f32 0.0, %v2454
  %v2456 = vpop.f32.mrb[0].mxu0
  %2457 = vmatprep.mubr.f32.mxu0 0.0
  %2458 = vmatmul.mubr.f32.gmra.mrb[0].mxu0 %v2358
  %v2459 = vpop.f32.mrb[0].mxu0
  %v2460 = vadd.f32 0.0, %v2459
  %v2461 = vpop.f32.mrb[0].mxu0
  %2462 = vmatprep.mubr.f32.mxu0 0.0
  %2463 = vmatmul.mubr.f32.gmra.mrb[0].mxu0 %v2361
  %v2464 = vpop.f32.mrb[0].mxu0
  %v2465 = vadd.f32 0.0, %v2464
  %v2466 = vpop.f32.mrb[0].mxu0
  %2467 = vdwg.mxu0
  %v2468 = vrcp.pop %v2293
  %v2469 = vrcp.pop %v2296
  %v2470 = vrcp.pop %v2299
  %v2471 = vrcp.pop %v2302
  %v2472 = vrcp.pop %v2305
  %v2473 = vrcp.pop %v2308
  %v2474 = vrcp.pop %v2311
  %v2475 = vrcp.pop %v2314
  %v2476 = vmul.f32 %v2430, %v2468
  %v2477 = vmul.f32 %v2435, %v2469
  %v2478 = vmul.f32 %v2440, %v2470
  %v2479 = vmul.f32 %v2445, %v2471
  %v2480 = vmul.f32 %v2450, %v2472
  %v2481 = vmul.f32 %v2455, %v2473
  %v2482 = vmul.f32 %v2460, %v2474
  %v2483 = vmul.f32 %v2465, %v2475
  %2484 = vst.msk [vmem:[#allocation2 + $0x40] sm:$0xff] %vm317, %v2476
  %2485 = vst.msk [vmem:[#allocation2 + $0x48] sm:$0xff] %vm317, %v2477
  %2486 = vst.msk [vmem:[#allocation2 + $0x50] sm:$0xff] %vm317, %v2478
  %2487 = vst.msk [vmem:[#allocation2 + $0x58] sm:$0xff] %vm317, %v2479
  %2488 = vst.msk [vmem:[#allocation2 + $0x60] sm:$0xff] %vm317, %v2480
  %2489 = vst.msk [vmem:[#allocation2 + $0x68] sm:$0xff] %vm317, %v2481
  %2490 = vst.msk [vmem:[#allocation2 + $0x70] sm:$0xff] %vm317, %v2482
  %2491 = vst.msk [vmem:[#allocation2 + $0x78] sm:$0xff] %vm317, %v2483
  %2492 = vrot.lane.b32.xlu0 %v2066, 120
  %v2493 = vpop.permute.xlu0 %2492
  %2494 = vrot.lane.b32.xlu0 %v2067, 120
  %v2495 = vpop.permute.xlu0 %2494
  %2496 = vrot.lane.b32.xlu0 %v2068, 120
  %v2497 = vpop.permute.xlu0 %2496
  %2498 = vrot.lane.b32.xlu0 %v2069, 120
  %v2499 = vpop.permute.xlu0 %2498
  %2500 = vrot.lane.b32.xlu0 %v2070, 120
  %v2501 = vpop.permute.xlu0 %2500
  %2502 = vrot.lane.b32.xlu0 %v2071, 120
  %v2503 = vpop.permute.xlu0 %2502
  %2504 = vrot.lane.b32.xlu0 %v2072, 120
  %v2505 = vpop.permute.xlu0 %2504
  %2506 = vrot.lane.b32.xlu0 %v2073, 120
  %v2507 = vpop.permute.xlu0 %2506
  %2508 = vrot.lane.b32.xlu0 %v247, 88
  %v2509 = vpop.permute.xlu0 %2508
  %2510 = vrot.lane.b32.xlu0 %v252, 88
  %v2511 = vpop.permute.xlu0 %2510
  %2512 = vrot.lane.b32.xlu0 %v257, 88
  %v2513 = vpop.permute.xlu0 %2512
  %2514 = vrot.lane.b32.xlu0 %v262, 88
  %v2515 = vpop.permute.xlu0 %2514
  %2516 = vrot.lane.b32.xlu0 %v267, 88
  %v2517 = vpop.permute.xlu0 %2516
  %2518 = vrot.lane.b32.xlu0 %v272, 88
  %v2519 = vpop.permute.xlu0 %2518
  %2520 = vrot.lane.b32.xlu0 %v277, 88
  %v2521 = vpop.permute.xlu0 %2520
  %2522 = vrot.lane.b32.xlu0 %v282, 88
  %v2523 = vpop.permute.xlu0 %2522
  %v2524 = vsel %vm317, %v2493, 0
  %v2526 = vsel %vm317, %v2495, 0
  %v2528 = vsel %vm317, %v2497, 0
  %v2530 = vsel %vm317, %v2499, 0
  %v2532 = vsel %vm317, %v2501, 0
  %v2534 = vsel %vm317, %v2503, 0
  %v2536 = vsel %vm317, %v2505, 0
  %v2538 = vsel %vm317, %v2507, 0
  %v2540 = vsel %vm317, %v2509, 0
  %v2542 = vsel %vm317, %v2511, 0
  %v2544 = vsel %vm317, %v2513, 0
  %v2546 = vsel %vm317, %v2515, 0
  %v2548 = vsel %vm317, %v2517, 0
  %v2550 = vsel %vm317, %v2519, 0
  %v2552 = vsel %vm317, %v2521, 0
  %v2554 = vsel %vm317, %v2523, 0
  %2556 = vmatprep.subr.mxu0 0.0
  %2557 = vmatpush1.xpose.msra.mxu0 %v2540
  %2558 = vmatprep.subr.mxu0 0.0
  %2559 = vmatpush1.xpose.msra.mxu0 %v2542
  %2560 = vmatprep.subr.mxu0 0.0
  %2561 = vmatpush1.xpose.msra.mxu0 %v2544
  %2562 = vmatprep.subr.mxu0 0.0
  %2563 = vmatpush1.xpose.msra.mxu0 %v2546
  %2564 = vmatprep.subr.mxu0 0.0
  %2565 = vmatpush1.xpose.msra.mxu0 %v2548
  %2566 = vmatprep.subr.mxu0 0.0
  %2567 = vmatpush1.xpose.msra.mxu0 %v2550
  %2568 = vmatprep.subr.mxu0 0.0
  %2569 = vmatpush1.xpose.msra.mxu0 %v2552
  %2570 = vmatprep.subr.mxu0 0.0
  %2571 = vmatpush1.xpose.msra.mxu0 %v2554
  %2572 = vmatprep.subr.mxu0 0.0
  %2573 = vmatpush1.xpose.msra.mxu0 0.0
  %2574 = vmatprep.subr.mxu0 0.0
  %2575 = vmatpush1.xpose.msra.mxu0 0.0
  %2576 = vmatprep.subr.mxu0 0.0
  %2577 = vmatpush1.xpose.msra.mxu0 0.0
  %2578 = vmatprep.subr.mxu0 0.0
  %2579 = vmatpush1.xpose.msra.mxu0 0.0
  %2580 = vmatprep.subr.mxu0 0.0
  %2581 = vmatpush1.xpose.msra.mxu0 0.0
  %2582 = vmatprep.subr.mxu0 0.0
  %2583 = vmatpush1.xpose.msra.mxu0 0.0
  %2584 = vmatprep.subr.mxu0 0.0
  %2585 = vmatpush1.xpose.msra.mxu0 0.0
  %2586 = vmatprep.subr.mxu0 0.0
  %2587 = vmatpush1.xpose.msra.mxu0 0.0
  %2588 = vmatprep.subr.mxu0 0.0
  %2589 = vmatpush1.xpose.msra.mxu0 0.0
  %2590 = vmatprep.subr.mxu0 0.0
  %2591 = vmatpush1.xpose.msra.mxu0 0.0
  %2592 = vmatprep.subr.mxu0 0.0
  %2593 = vmatpush1.xpose.msra.mxu0 0.0
  %2594 = vmatprep.subr.mxu0 0.0
  %2595 = vmatpush1.xpose.msra.mxu0 0.0
  %2596 = vmatprep.subr.mxu0 0.0
  %2597 = vmatpush1.xpose.msra.mxu0 0.0
  %2598 = vmatprep.subr.mxu0 0.0
  %2599 = vmatpush1.xpose.msra.mxu0 0.0
  %2600 = vmatprep.subr.mxu0 0.0
  %2601 = vmatpush1.xpose.msra.mxu0 0.0
  %2602 = vmatprep.subr.mxu0 0.0
  %2603 = vmatpush1.xpose.msra.mxu0 0.0
  %2604 = vmatprep.subr.mxu0 0.0
  %2605 = vmatpush1.xpose.msra.mxu0 0.0
  %2606 = vmatprep.subr.mxu0 0.0
  %2607 = vmatpush1.xpose.msra.mxu0 0.0
  %2608 = vmatprep.subr.mxu0 0.0
  %2609 = vmatpush1.xpose.msra.mxu0 0.0
  %2610 = vmatprep.subr.mxu0 0.0
  %2611 = vmatpush1.xpose.msra.mxu0 0.0
  %2612 = vmatprep.subr.mxu0 0.0
  %2613 = vmatpush1.xpose.msra.mxu0 0.0
  %2614 = vmatprep.subr.mxu0 0.0
  %2615 = vmatpush1.xpose.msra.mxu0 0.0
  %2616 = vmatprep.subr.mxu0 0.0
  %2617 = vmatpush1.xpose.msra.mxu0 0.0
  %2618 = vmatprep.subr.mxu0 0.0
  %2619 = vmatpush1.xpose.msra.mxu0 0.0
  %2620 = vmatprep.mubr.f32.mxu0 0.0
  %2621 = vmatmul.mubr.f32.gmra.mrb[0].mxu0 %v2524
  %v2622 = vpop.f32.mrb[0].mxu0
  %v2623 = vadd.f32 0.0, %v2622
  %v2624 = vpop.f32.mrb[0].mxu0
  %2625 = vmatprep.mubr.f32.mxu0 0.0
  %2626 = vmatmul.mubr.f32.gmra.mrb[0].mxu0 %v2526
  %v2627 = vpop.f32.mrb[0].mxu0
  %v2628 = vadd.f32 0.0, %v2627
  %v2629 = vpop.f32.mrb[0].mxu0
  %2630 = vmatprep.mubr.f32.mxu0 0.0
  %2631 = vmatmul.mubr.f32.gmra.mrb[0].mxu0 %v2528
  %v2632 = vpop.f32.mrb[0].mxu0
  %v2633 = vadd.f32 0.0, %v2632
  %v2634 = vpop.f32.mrb[0].mxu0
  %2635 = vmatprep.mubr.f32.mxu0 0.0
  %2636 = vmatmul.mubr.f32.gmra.mrb[0].mxu0 %v2530
  %v2637 = vpop.f32.mrb[0].mxu0
  %v2638 = vadd.f32 0.0, %v2637
  %v2639 = vpop.f32.mrb[0].mxu0
  %2640 = vmatprep.mubr.f32.mxu0 0.0
  %2641 = vmatmul.mubr.f32.gmra.mrb[0].mxu0 %v2532
  %v2642 = vpop.f32.mrb[0].mxu0
  %v2643 = vadd.f32 0.0, %v2642
  %v2644 = vpop.f32.mrb[0].mxu0
  %2645 = vmatprep.mubr.f32.mxu0 0.0
  %2646 = vmatmul.mubr.f32.gmra.mrb[0].mxu0 %v2534
  %v2647 = vpop.f32.mrb[0].mxu0
  %v2648 = vadd.f32 0.0, %v2647
  %v2649 = vpop.f32.mrb[0].mxu0
  %2650 = vmatprep.mubr.f32.mxu0 0.0
  %2651 = vmatmul.mubr.f32.gmra.mrb[0].mxu0 %v2536
  %v2652 = vpop.f32.mrb[0].mxu0
  %v2653 = vadd.f32 0.0, %v2652
  %v2654 = vpop.f32.mrb[0].mxu0
  %2655 = vmatprep.mubr.f32.mxu0 0.0
  %2656 = vmatmul.mubr.f32.gmra.mrb[0].mxu0 %v2538
  %v2657 = vpop.f32.mrb[0].mxu0
  %v2658 = vadd.f32 0.0, %v2657
  %v2659 = vpop.f32.mrb[0].mxu0
  %2660 = vdwg.mxu0
  %v2661 = vsel %vm463, %v2623, -inf
  %2662 = vmax.xlane.f32.xlu0 %v2661
  %v2663 = vpop.xlane.xlu0 %2662
  %v2664 = vsel %vm463, %v2628, -inf
  %2665 = vmax.xlane.f32.xlu0 %v2664
  %v2666 = vpop.xlane.xlu0 %2665
  %v2667 = vsel %vm463, %v2633, -inf
  %2668 = vmax.xlane.f32.xlu0 %v2667
  %v2669 = vpop.xlane.xlu0 %2668
  %v2670 = vsel %vm463, %v2638, -inf
  %2671 = vmax.xlane.f32.xlu0 %v2670
  %v2672 = vpop.xlane.xlu0 %2671
  %v2673 = vsel %vm463, %v2643, -inf
  %2674 = vmax.xlane.f32.xlu0 %v2673
  %v2675 = vpop.xlane.xlu0 %2674
  %v2676 = vsel %vm463, %v2648, -inf
  %2677 = vmax.xlane.f32.xlu0 %v2676
  %v2678 = vpop.xlane.xlu0 %2677
  %v2679 = vsel %vm463, %v2653, -inf
  %2680 = vmax.xlane.f32.xlu0 %v2679
  %v2681 = vpop.xlane.xlu0 %2680
  %v2682 = vsel %vm463, %v2658, -inf
  %2683 = vmax.xlane.f32.xlu0 %v2682
  %v2684 = vpop.xlane.xlu0 %2683
  %v2685 = vsub.f32 %v2623, %v2663
  %v2686 = vsub.f32 %v2628, %v2666
  %v2687 = vsub.f32 %v2633, %v2669
  %v2688 = vsub.f32 %v2638, %v2672
  %v2689 = vsub.f32 %v2643, %v2675
  %v2690 = vsub.f32 %v2648, %v2678
  %v2691 = vsub.f32 %v2653, %v2681
  %v2692 = vsub.f32 %v2658, %v2684
  %v2693 = vmul.f32 %v2685, 1.442695
  %v2694 = vpow.pop %v2693
  %v2695 = vmul.f32 %v2686, 1.442695
  %v2696 = vpow.pop %v2695
  %v2697 = vmul.f32 %v2687, 1.442695
  %v2698 = vpow.pop %v2697
  %v2699 = vmul.f32 %v2688, 1.442695
  %v2700 = vpow.pop %v2699
  %v2701 = vmul.f32 %v2689, 1.442695
  %v2702 = vpow.pop %v2701
  %v2703 = vmul.f32 %v2690, 1.442695
  %v2704 = vpow.pop %v2703
  %v2705 = vmul.f32 %v2691, 1.442695
  %v2706 = vpow.pop %v2705
  %v2707 = vmul.f32 %v2692, 1.442695
  %v2708 = vpow.pop %v2707
  %v2709 = vsel %vm463, %v2694, 0.0
  %2710 = vadd.xlane.f32.xlu0 %v2709
  %v2711 = vpop.xlane.xlu0 %2710
  %v2712 = vsel %vm463, %v2696, 0.0
  %2713 = vadd.xlane.f32.xlu0 %v2712
  %v2714 = vpop.xlane.xlu0 %2713
  %v2715 = vsel %vm463, %v2698, 0.0
  %2716 = vadd.xlane.f32.xlu0 %v2715
  %v2717 = vpop.xlane.xlu0 %2716
  %v2718 = vsel %vm463, %v2700, 0.0
  %2719 = vadd.xlane.f32.xlu0 %v2718
  %v2720 = vpop.xlane.xlu0 %2719
  %v2721 = vsel %vm463, %v2702, 0.0
  %2722 = vadd.xlane.f32.xlu0 %v2721
  %v2723 = vpop.xlane.xlu0 %2722
  %v2724 = vsel %vm463, %v2704, 0.0
  %2725 = vadd.xlane.f32.xlu0 %v2724
  %v2726 = vpop.xlane.xlu0 %2725
  %v2727 = vsel %vm463, %v2706, 0.0
  %2728 = vadd.xlane.f32.xlu0 %v2727
  %v2729 = vpop.xlane.xlu0 %2728
  %v2730 = vsel %vm463, %v2708, 0.0
  %2731 = vadd.xlane.f32.xlu0 %v2730
  %v2732 = vpop.xlane.xlu0 %2731
  %2733 = vrot.lane.b32.xlu0 %v247, 56
  %v2734 = vpop.permute.xlu0 %2733
  %2735 = vrot.lane.b32.xlu0 %v252, 56
  %v2736 = vpop.permute.xlu0 %2735
  %2737 = vrot.lane.b32.xlu0 %v257, 56
  %v2738 = vpop.permute.xlu0 %2737
  %2739 = vrot.lane.b32.xlu0 %v262, 56
  %v2740 = vpop.permute.xlu0 %2739
  %2741 = vrot.lane.b32.xlu0 %v267, 56
  %v2742 = vpop.permute.xlu0 %2741
  %2743 = vrot.lane.b32.xlu0 %v272, 56
  %v2744 = vpop.permute.xlu0 %2743
  %2745 = vrot.lane.b32.xlu0 %v277, 56
  %v2746 = vpop.permute.xlu0 %2745
  %2747 = vrot.lane.b32.xlu0 %v282, 56
  %v2748 = vpop.permute.xlu0 %2747
  %v2758 = vsel %vm463, %v2694, 0
  %v2761 = vsel %vm463, %v2696, 0
  %v2764 = vsel %vm463, %v2698, 0
  %v2767 = vsel %vm463, %v2700, 0
  %v2770 = vsel %vm463, %v2702, 0
  %v2773 = vsel %vm463, %v2704, 0
  %v2776 = vsel %vm463, %v2706, 0
  %v2779 = vsel %vm463, %v2708, 0
  %2781 = vmatprep.subr.mxu0 0.0
  %2782 = vmatpush1.msra.mxu0 %v2734
  %2783 = vmatprep.subr.mxu0 0.0
  %2784 = vmatpush1.msra.mxu0 %v2736
  %2785 = vmatprep.subr.mxu0 0.0
  %2786 = vmatpush1.msra.mxu0 %v2738
  %2787 = vmatprep.subr.mxu0 0.0
  %2788 = vmatpush1.msra.mxu0 %v2740
  %2789 = vmatprep.subr.mxu0 0.0
  %2790 = vmatpush1.msra.mxu0 %v2742
  %2791 = vmatprep.subr.mxu0 0.0
  %2792 = vmatpush1.msra.mxu0 %v2744
  %2793 = vmatprep.subr.mxu0 0.0
  %2794 = vmatpush1.msra.mxu0 %v2746
  %2795 = vmatprep.subr.mxu0 0.0
  %2796 = vmatpush1.msra.mxu0 %v2748
  %2797 = vmatprep.subr.mxu0 0.0
  %2798 = vmatpush1.msra.mxu0 0.0
  %2799 = vmatprep.subr.mxu0 0.0
  %2800 = vmatpush1.msra.mxu0 0.0
  %2801 = vmatprep.subr.mxu0 0.0
  %2802 = vmatpush1.msra.mxu0 0.0
  %2803 = vmatprep.subr.mxu0 0.0
  %2804 = vmatpush1.msra.mxu0 0.0
  %2805 = vmatprep.subr.mxu0 0.0
  %2806 = vmatpush1.msra.mxu0 0.0
  %2807 = vmatprep.subr.mxu0 0.0
  %2808 = vmatpush1.msra.mxu0 0.0
  %2809 = vmatprep.subr.mxu0 0.0
  %2810 = vmatpush1.msra.mxu0 0.0
  %2811 = vmatprep.subr.mxu0 0.0
  %2812 = vmatpush1.msra.mxu0 0.0
  %2813 = vmatprep.subr.mxu0 0.0
  %2814 = vmatpush1.msra.mxu0 0.0
  %2815 = vmatprep.subr.mxu0 0.0
  %2816 = vmatpush1.msra.mxu0 0.0
  %2817 = vmatprep.subr.mxu0 0.0
  %2818 = vmatpush1.msra.mxu0 0.0
  %2819 = vmatprep.subr.mxu0 0.0
  %2820 = vmatpush1.msra.mxu0 0.0
  %2821 = vmatprep.subr.mxu0 0.0
  %2822 = vmatpush1.msra.mxu0 0.0
  %2823 = vmatprep.subr.mxu0 0.0
  %2824 = vmatpush1.msra.mxu0 0.0
  %2825 = vmatprep.subr.mxu0 0.0
  %2826 = vmatpush1.msra.mxu0 0.0
  %2827 = vmatprep.subr.mxu0 0.0
  %2828 = vmatpush1.msra.mxu0 0.0
  %2829 = vmatprep.subr.mxu0 0.0
  %2830 = vmatpush1.msra.mxu0 0.0
  %2831 = vmatprep.subr.mxu0 0.0
  %2832 = vmatpush1.msra.mxu0 0.0
  %2833 = vmatprep.subr.mxu0 0.0
  %2834 = vmatpush1.msra.mxu0 0.0
  %2835 = vmatprep.subr.mxu0 0.0
  %2836 = vmatpush1.msra.mxu0 0.0
  %2837 = vmatprep.subr.mxu0 0.0
  %2838 = vmatpush1.msra.mxu0 0.0
  %2839 = vmatprep.subr.mxu0 0.0
  %2840 = vmatpush1.msra.mxu0 0.0
  %2841 = vmatprep.subr.mxu0 0.0
  %2842 = vmatpush1.msra.mxu0 0.0
  %2843 = vmatprep.subr.mxu0 0.0
  %2844 = vmatpush1.msra.mxu0 0.0
  %2845 = vmatprep.mubr.f32.mxu0 0.0
  %2846 = vmatmul.mubr.f32.gmra.mrb[0].mxu0 %v2758
  %v2847 = vpop.f32.mrb[0].mxu0
  %v2848 = vadd.f32 0.0, %v2847
  %v2849 = vpop.f32.mrb[0].mxu0
  %2850 = vmatprep.mubr.f32.mxu0 0.0
  %2851 = vmatmul.mubr.f32.gmra.mrb[0].mxu0 %v2761
  %v2852 = vpop.f32.mrb[0].mxu0
  %v2853 = vadd.f32 0.0, %v2852
  %v2854 = vpop.f32.mrb[0].mxu0
  %2855 = vmatprep.mubr.f32.mxu0 0.0
  %2856 = vmatmul.mubr.f32.gmra.mrb[0].mxu0 %v2764
  %v2857 = vpop.f32.mrb[0].mxu0
  %v2858 = vadd.f32 0.0, %v2857
  %v2859 = vpop.f32.mrb[0].mxu0
  %2860 = vmatprep.mubr.f32.mxu0 0.0
  %2861 = vmatmul.mubr.f32.gmra.mrb[0].mxu0 %v2767
  %v2862 = vpop.f32.mrb[0].mxu0
  %v2863 = vadd.f32 0.0, %v2862
  %v2864 = vpop.f32.mrb[0].mxu0
  %2865 = vmatprep.mubr.f32.mxu0 0.0
  %2866 = vmatmul.mubr.f32.gmra.mrb[0].mxu0 %v2770
  %v2867 = vpop.f32.mrb[0].mxu0
  %v2868 = vadd.f32 0.0, %v2867
  %v2869 = vpop.f32.mrb[0].mxu0
  %2870 = vmatprep.mubr.f32.mxu0 0.0
  %2871 = vmatmul.mubr.f32.gmra.mrb[0].mxu0 %v2773
  %v2872 = vpop.f32.mrb[0].mxu0
  %v2873 = vadd.f32 0.0, %v2872
  %v2874 = vpop.f32.mrb[0].mxu0
  %2875 = vmatprep.mubr.f32.mxu0 0.0
  %2876 = vmatmul.mubr.f32.gmra.mrb[0].mxu0 %v2776
  %v2877 = vpop.f32.mrb[0].mxu0
  %v2878 = vadd.f32 0.0, %v2877
  %v2879 = vpop.f32.mrb[0].mxu0
  %2880 = vmatprep.mubr.f32.mxu0 0.0
  %2881 = vmatmul.mubr.f32.gmra.mrb[0].mxu0 %v2779
  %v2882 = vpop.f32.mrb[0].mxu0
  %v2883 = vadd.f32 0.0, %v2882
  %v2884 = vpop.f32.mrb[0].mxu0
  %2885 = vdwg.mxu0
  %v2886 = vrcp.pop %v2711
  %v2887 = vrcp.pop %v2714
  %v2888 = vrcp.pop %v2717
  %v2889 = vrcp.pop %v2720
  %v2890 = vrcp.pop %v2723
  %v2891 = vrcp.pop %v2726
  %v2892 = vrcp.pop %v2729
  %v2893 = vrcp.pop %v2732
  %v2894 = vmul.f32 %v2848, %v2886
  %v2895 = vmul.f32 %v2853, %v2887
  %v2896 = vmul.f32 %v2858, %v2888
  %v2897 = vmul.f32 %v2863, %v2889
  %v2898 = vmul.f32 %v2868, %v2890
  %v2899 = vmul.f32 %v2873, %v2891
  %v2900 = vmul.f32 %v2878, %v2892
  %v2901 = vmul.f32 %v2883, %v2893
  %2910 = vrot.lane.b32.xlu0 %v2894, 8
  %v2911 = vpop.permute.xlu0 %2910
  %2912 = vrot.lane.b32.xlu0 %v2895, 8
  %v2913 = vpop.permute.xlu0 %2912
  %2914 = vrot.lane.b32.xlu0 %v2896, 8
  %v2915 = vpop.permute.xlu0 %2914
  %2916 = vrot.lane.b32.xlu0 %v2897, 8
  %v2917 = vpop.permute.xlu0 %2916
  %2918 = vrot.lane.b32.xlu0 %v2898, 8
  %v2919 = vpop.permute.xlu0 %2918
  %2920 = vrot.lane.b32.xlu0 %v2899, 8
  %v2921 = vpop.permute.xlu0 %2920
  %2922 = vrot.lane.b32.xlu0 %v2900, 8
  %v2923 = vpop.permute.xlu0 %2922
  %2924 = vrot.lane.b32.xlu0 %v2901, 8
  %v2925 = vpop.permute.xlu0 %2924
  %2934 = vst.msk [vmem:[#allocation2 + $0x40] sm:$0xff] %vm1155, %v2911
  %2935 = vst.msk [vmem:[#allocation2 + $0x48] sm:$0xff] %vm1155, %v2913
  %2936 = vst.msk [vmem:[#allocation2 + $0x50] sm:$0xff] %vm1155, %v2915
  %2937 = vst.msk [vmem:[#allocation2 + $0x58] sm:$0xff] %vm1155, %v2917
  %2938 = vst.msk [vmem:[#allocation2 + $0x60] sm:$0xff] %vm1155, %v2919
  %2939 = vst.msk [vmem:[#allocation2 + $0x68] sm:$0xff] %vm1155, %v2921
  %2940 = vst.msk [vmem:[#allocation2 + $0x70] sm:$0xff] %vm1155, %v2923
  %2941 = vst.msk [vmem:[#allocation2 + $0x78] sm:$0xff] %vm1155, %v2925
  %2942 = vrot.lane.b32.xlu0 %v2066, 112
  %v2943 = vpop.permute.xlu0 %2942
  %2944 = vrot.lane.b32.xlu0 %v2067, 112
  %v2945 = vpop.permute.xlu0 %2944
  %2946 = vrot.lane.b32.xlu0 %v2068, 112
  %v2947 = vpop.permute.xlu0 %2946
  %2948 = vrot.lane.b32.xlu0 %v2069, 112
  %v2949 = vpop.permute.xlu0 %2948
  %2950 = vrot.lane.b32.xlu0 %v2070, 112
  %v2951 = vpop.permute.xlu0 %2950
  %2952 = vrot.lane.b32.xlu0 %v2071, 112
  %v2953 = vpop.permute.xlu0 %2952
  %2954 = vrot.lane.b32.xlu0 %v2072, 112
  %v2955 = vpop.permute.xlu0 %2954
  %2956 = vrot.lane.b32.xlu0 %v2073, 112
  %v2957 = vpop.permute.xlu0 %2956
  %2958 = vrot.lane.b32.xlu0 %v247, 80
  %v2959 = vpop.permute.xlu0 %2958
  %2960 = vrot.lane.b32.xlu0 %v252, 80
  %v2961 = vpop.permute.xlu0 %2960
  %2962 = vrot.lane.b32.xlu0 %v257, 80
  %v2963 = vpop.permute.xlu0 %2962
  %2964 = vrot.lane.b32.xlu0 %v262, 80
  %v2965 = vpop.permute.xlu0 %2964
  %2966 = vrot.lane.b32.xlu0 %v267, 80
  %v2967 = vpop.permute.xlu0 %2966
  %2968 = vrot.lane.b32.xlu0 %v272, 80
  %v2969 = vpop.permute.xlu0 %2968
  %2970 = vrot.lane.b32.xlu0 %v277, 80
  %v2971 = vpop.permute.xlu0 %2970
  %2972 = vrot.lane.b32.xlu0 %v282, 80
  %v2973 = vpop.permute.xlu0 %2972
  %v2974 = vsel %vm317, %v2943, 0
  %v2976 = vsel %vm317, %v2945, 0
  %v2978 = vsel %vm317, %v2947, 0
  %v2980 = vsel %vm317, %v2949, 0
  %v2982 = vsel %vm317, %v2951, 0
  %v2984 = vsel %vm317, %v2953, 0
  %v2986 = vsel %vm317, %v2955, 0
  %v2988 = vsel %vm317, %v2957, 0
  %v2990 = vsel %vm317, %v2959, 0
  %v2992 = vsel %vm317, %v2961, 0
  %v2994 = vsel %vm317, %v2963, 0
  %v2996 = vsel %vm317, %v2965, 0
  %v2998 = vsel %vm317, %v2967, 0
  %v3000 = vsel %vm317, %v2969, 0
  %v3002 = vsel %vm317, %v2971, 0
  %v3004 = vsel %vm317, %v2973, 0
  %3006 = vmatprep.subr.mxu0 0.0
  %3007 = vmatpush1.xpose.msra.mxu0 %v2990
  %3008 = vmatprep.subr.mxu0 0.0
  %3009 = vmatpush1.xpose.msra.mxu0 %v2992
  %3010 = vmatprep.subr.mxu0 0.0
  %3011 = vmatpush1.xpose.msra.mxu0 %v2994
  %3012 = vmatprep.subr.mxu0 0.0
  %3013 = vmatpush1.xpose.msra.mxu0 %v2996
  %3014 = vmatprep.subr.mxu0 0.0
  %3015 = vmatpush1.xpose.msra.mxu0 %v2998
  %3016 = vmatprep.subr.mxu0 0.0
  %3017 = vmatpush1.xpose.msra.mxu0 %v3000
  %3018 = vmatprep.subr.mxu0 0.0
  %3019 = vmatpush1.xpose.msra.mxu0 %v3002
  %3020 = vmatprep.subr.mxu0 0.0
  %3021 = vmatpush1.xpose.msra.mxu0 %v3004
  %3022 = vmatprep.subr.mxu0 0.0
  %3023 = vmatpush1.xpose.msra.mxu0 0.0
  %3024 = vmatprep.subr.mxu0 0.0
  %3025 = vmatpush1.xpose.msra.mxu0 0.0
  %3026 = vmatprep.subr.mxu0 0.0
  %3027 = vmatpush1.xpose.msra.mxu0 0.0
  %3028 = vmatprep.subr.mxu0 0.0
  %3029 = vmatpush1.xpose.msra.mxu0 0.0
  %3030 = vmatprep.subr.mxu0 0.0
  %3031 = vmatpush1.xpose.msra.mxu0 0.0
  %3032 = vmatprep.subr.mxu0 0.0
  %3033 = vmatpush1.xpose.msra.mxu0 0.0
  %3034 = vmatprep.subr.mxu0 0.0
  %3035 = vmatpush1.xpose.msra.mxu0 0.0
  %3036 = vmatprep.subr.mxu0 0.0
  %3037 = vmatpush1.xpose.msra.mxu0 0.0
  %3038 = vmatprep.subr.mxu0 0.0
  %3039 = vmatpush1.xpose.msra.mxu0 0.0
  %3040 = vmatprep.subr.mxu0 0.0
  %3041 = vmatpush1.xpose.msra.mxu0 0.0
  %3042 = vmatprep.subr.mxu0 0.0
  %3043 = vmatpush1.xpose.msra.mxu0 0.0
  %3044 = vmatprep.subr.mxu0 0.0
  %3045 = vmatpush1.xpose.msra.mxu0 0.0
  %3046 = vmatprep.subr.mxu0 0.0
  %3047 = vmatpush1.xpose.msra.mxu0 0.0
  %3048 = vmatprep.subr.mxu0 0.0
  %3049 = vmatpush1.xpose.msra.mxu0 0.0
  %3050 = vmatprep.subr.mxu0 0.0
  %3051 = vmatpush1.xpose.msra.mxu0 0.0
  %3052 = vmatprep.subr.mxu0 0.0
  %3053 = vmatpush1.xpose.msra.mxu0 0.0
  %3054 = vmatprep.subr.mxu0 0.0
  %3055 = vmatpush1.xpose.msra.mxu0 0.0
  %3056 = vmatprep.subr.mxu0 0.0
  %3057 = vmatpush1.xpose.msra.mxu0 0.0
  %3058 = vmatprep.subr.mxu0 0.0
  %3059 = vmatpush1.xpose.msra.mxu0 0.0
  %3060 = vmatprep.subr.mxu0 0.0
  %3061 = vmatpush1.xpose.msra.mxu0 0.0
  %3062 = vmatprep.subr.mxu0 0.0
  %3063 = vmatpush1.xpose.msra.mxu0 0.0
  %3064 = vmatprep.subr.mxu0 0.0
  %3065 = vmatpush1.xpose.msra.mxu0 0.0
  %3066 = vmatprep.subr.mxu0 0.0
  %3067 = vmatpush1.xpose.msra.mxu0 0.0
  %3068 = vmatprep.subr.mxu0 0.0
  %3069 = vmatpush1.xpose.msra.mxu0 0.0
  %3070 = vmatprep.mubr.f32.mxu0 0.0
  %3071 = vmatmul.mubr.f32.gmra.mrb[0].mxu0 %v2974
  %v3072 = vpop.f32.mrb[0].mxu0
  %v3073 = vadd.f32 0.0, %v3072
  %v3074 = vpop.f32.mrb[0].mxu0
  %3075 = vmatprep.mubr.f32.mxu0 0.0
  %3076 = vmatmul.mubr.f32.gmra.mrb[0].mxu0 %v2976
  %v3077 = vpop.f32.mrb[0].mxu0
  %v3078 = vadd.f32 0.0, %v3077
  %v3079 = vpop.f32.mrb[0].mxu0
  %3080 = vmatprep.mubr.f32.mxu0 0.0
  %3081 = vmatmul.mubr.f32.gmra.mrb[0].mxu0 %v2978
  %v3082 = vpop.f32.mrb[0].mxu0
  %v3083 = vadd.f32 0.0, %v3082
  %v3084 = vpop.f32.mrb[0].mxu0
  %3085 = vmatprep.mubr.f32.mxu0 0.0
  %3086 = vmatmul.mubr.f32.gmra.mrb[0].mxu0 %v2980
  %v3087 = vpop.f32.mrb[0].mxu0
  %v3088 = vadd.f32 0.0, %v3087
  %v3089 = vpop.f32.mrb[0].mxu0
  %3090 = vmatprep.mubr.f32.mxu0 0.0
  %3091 = vmatmul.mubr.f32.gmra.mrb[0].mxu0 %v2982
  %v3092 = vpop.f32.mrb[0].mxu0
  %v3093 = vadd.f32 0.0, %v3092
  %v3094 = vpop.f32.mrb[0].mxu0
  %3095 = vmatprep.mubr.f32.mxu0 0.0
  %3096 = vmatmul.mubr.f32.gmra.mrb[0].mxu0 %v2984
  %v3097 = vpop.f32.mrb[0].mxu0
  %v3098 = vadd.f32 0.0, %v3097
  %v3099 = vpop.f32.mrb[0].mxu0
  %3100 = vmatprep.mubr.f32.mxu0 0.0
  %3101 = vmatmul.mubr.f32.gmra.mrb[0].mxu0 %v2986
  %v3102 = vpop.f32.mrb[0].mxu0
  %v3103 = vadd.f32 0.0, %v3102
  %v3104 = vpop.f32.mrb[0].mxu0
  %3105 = vmatprep.mubr.f32.mxu0 0.0
  %3106 = vmatmul.mubr.f32.gmra.mrb[0].mxu0 %v2988
  %v3107 = vpop.f32.mrb[0].mxu0
  %v3108 = vadd.f32 0.0, %v3107
  %v3109 = vpop.f32.mrb[0].mxu0
  %3110 = vdwg.mxu0
  %v3111 = vsel %vm463, %v3073, -inf
  %3112 = vmax.xlane.f32.xlu0 %v3111
  %v3113 = vpop.xlane.xlu0 %3112
  %v3114 = vsel %vm463, %v3078, -inf
  %3115 = vmax.xlane.f32.xlu0 %v3114
  %v3116 = vpop.xlane.xlu0 %3115
  %v3117 = vsel %vm463, %v3083, -inf
  %3118 = vmax.xlane.f32.xlu0 %v3117
  %v3119 = vpop.xlane.xlu0 %3118
  %v3120 = vsel %vm463, %v3088, -inf
  %3121 = vmax.xlane.f32.xlu0 %v3120
  %v3122 = vpop.xlane.xlu0 %3121
  %v3123 = vsel %vm463, %v3093, -inf
  %3124 = vmax.xlane.f32.xlu0 %v3123
  %v3125 = vpop.xlane.xlu0 %3124
  %v3126 = vsel %vm463, %v3098, -inf
  %3127 = vmax.xlane.f32.xlu0 %v3126
  %v3128 = vpop.xlane.xlu0 %3127
  %v3129 = vsel %vm463, %v3103, -inf
  %3130 = vmax.xlane.f32.xlu0 %v3129
  %v3131 = vpop.xlane.xlu0 %3130
  %v3132 = vsel %vm463, %v3108, -inf
  %3133 = vmax.xlane.f32.xlu0 %v3132
  %v3134 = vpop.xlane.xlu0 %3133
  %v3135 = vsub.f32 %v3073, %v3113
  %v3136 = vsub.f32 %v3078, %v3116
  %v3137 = vsub.f32 %v3083, %v3119
  %v3138 = vsub.f32 %v3088, %v3122
  %v3139 = vsub.f32 %v3093, %v3125
  %v3140 = vsub.f32 %v3098, %v3128
  %v3141 = vsub.f32 %v3103, %v3131
  %v3142 = vsub.f32 %v3108, %v3134
  %v3143 = vmul.f32 %v3135, 1.442695
  %v3144 = vpow.pop %v3143
  %v3145 = vmul.f32 %v3136, 1.442695
  %v3146 = vpow.pop %v3145
  %v3147 = vmul.f32 %v3137, 1.442695
  %v3148 = vpow.pop %v3147
  %v3149 = vmul.f32 %v3138, 1.442695
  %v3150 = vpow.pop %v3149
  %v3151 = vmul.f32 %v3139, 1.442695
  %v3152 = vpow.pop %v3151
  %v3153 = vmul.f32 %v3140, 1.442695
  %v3154 = vpow.pop %v3153
  %v3155 = vmul.f32 %v3141, 1.442695
  %v3156 = vpow.pop %v3155
  %v3157 = vmul.f32 %v3142, 1.442695
  %v3158 = vpow.pop %v3157
  %v3159 = vsel %vm463, %v3144, 0.0
  %3160 = vadd.xlane.f32.xlu0 %v3159
  %v3161 = vpop.xlane.xlu0 %3160
  %v3162 = vsel %vm463, %v3146, 0.0
  %3163 = vadd.xlane.f32.xlu0 %v3162
  %v3164 = vpop.xlane.xlu0 %3163
  %v3165 = vsel %vm463, %v3148, 0.0
  %3166 = vadd.xlane.f32.xlu0 %v3165
  %v3167 = vpop.xlane.xlu0 %3166
  %v3168 = vsel %vm463, %v3150, 0.0
  %3169 = vadd.xlane.f32.xlu0 %v3168
  %v3170 = vpop.xlane.xlu0 %3169
  %v3171 = vsel %vm463, %v3152, 0.0
  %3172 = vadd.xlane.f32.xlu0 %v3171
  %v3173 = vpop.xlane.xlu0 %3172
  %v3174 = vsel %vm463, %v3154, 0.0
  %3175 = vadd.xlane.f32.xlu0 %v3174
  %v3176 = vpop.xlane.xlu0 %3175
  %v3177 = vsel %vm463, %v3156, 0.0
  %3178 = vadd.xlane.f32.xlu0 %v3177
  %v3179 = vpop.xlane.xlu0 %3178
  %v3180 = vsel %vm463, %v3158, 0.0
  %3181 = vadd.xlane.f32.xlu0 %v3180
  %v3182 = vpop.xlane.xlu0 %3181
  %3183 = vrot.lane.b32.xlu0 %v247, 48
  %v3184 = vpop.permute.xlu0 %3183
  %3185 = vrot.lane.b32.xlu0 %v252, 48
  %v3186 = vpop.permute.xlu0 %3185
  %3187 = vrot.lane.b32.xlu0 %v257, 48
  %v3188 = vpop.permute.xlu0 %3187
  %3189 = vrot.lane.b32.xlu0 %v262, 48
  %v3190 = vpop.permute.xlu0 %3189
  %3191 = vrot.lane.b32.xlu0 %v267, 48
  %v3192 = vpop.permute.xlu0 %3191
  %3193 = vrot.lane.b32.xlu0 %v272, 48
  %v3194 = vpop.permute.xlu0 %3193
  %3195 = vrot.lane.b32.xlu0 %v277, 48
  %v3196 = vpop.permute.xlu0 %3195
  %3197 = vrot.lane.b32.xlu0 %v282, 48
  %v3198 = vpop.permute.xlu0 %3197
  %v3208 = vsel %vm463, %v3144, 0
  %v3211 = vsel %vm463, %v3146, 0
  %v3214 = vsel %vm463, %v3148, 0
  %v3217 = vsel %vm463, %v3150, 0
  %v3220 = vsel %vm463, %v3152, 0
  %v3223 = vsel %vm463, %v3154, 0
  %v3226 = vsel %vm463, %v3156, 0
  %v3229 = vsel %vm463, %v3158, 0
  %3231 = vmatprep.subr.mxu0 0.0
  %3232 = vmatpush1.msra.mxu0 %v3184
  %3233 = vmatprep.subr.mxu0 0.0
  %3234 = vmatpush1.msra.mxu0 %v3186
  %3235 = vmatprep.subr.mxu0 0.0
  %3236 = vmatpush1.msra.mxu0 %v3188
  %3237 = vmatprep.subr.mxu0 0.0
  %3238 = vmatpush1.msra.mxu0 %v3190
  %3239 = vmatprep.subr.mxu0 0.0
  %3240 = vmatpush1.msra.mxu0 %v3192
  %3241 = vmatprep.subr.mxu0 0.0
  %3242 = vmatpush1.msra.mxu0 %v3194
  %3243 = vmatprep.subr.mxu0 0.0
  %3244 = vmatpush1.msra.mxu0 %v3196
  %3245 = vmatprep.subr.mxu0 0.0
  %3246 = vmatpush1.msra.mxu0 %v3198
  %3247 = vmatprep.subr.mxu0 0.0
  %3248 = vmatpush1.msra.mxu0 0.0
  %3249 = vmatprep.subr.mxu0 0.0
  %3250 = vmatpush1.msra.mxu0 0.0
  %3251 = vmatprep.subr.mxu0 0.0
  %3252 = vmatpush1.msra.mxu0 0.0
  %3253 = vmatprep.subr.mxu0 0.0
  %3254 = vmatpush1.msra.mxu0 0.0
  %3255 = vmatprep.subr.mxu0 0.0
  %3256 = vmatpush1.msra.mxu0 0.0
  %3257 = vmatprep.subr.mxu0 0.0
  %3258 = vmatpush1.msra.mxu0 0.0
  %3259 = vmatprep.subr.mxu0 0.0
  %3260 = vmatpush1.msra.mxu0 0.0
  %3261 = vmatprep.subr.mxu0 0.0
  %3262 = vmatpush1.msra.mxu0 0.0
  %3263 = vmatprep.subr.mxu0 0.0
  %3264 = vmatpush1.msra.mxu0 0.0
  %3265 = vmatprep.subr.mxu0 0.0
  %3266 = vmatpush1.msra.mxu0 0.0
  %3267 = vmatprep.subr.mxu0 0.0
  %3268 = vmatpush1.msra.mxu0 0.0
  %3269 = vmatprep.subr.mxu0 0.0
  %3270 = vmatpush1.msra.mxu0 0.0
  %3271 = vmatprep.subr.mxu0 0.0
  %3272 = vmatpush1.msra.mxu0 0.0
  %3273 = vmatprep.subr.mxu0 0.0
  %3274 = vmatpush1.msra.mxu0 0.0
  %3275 = vmatprep.subr.mxu0 0.0
  %3276 = vmatpush1.msra.mxu0 0.0
  %3277 = vmatprep.subr.mxu0 0.0
  %3278 = vmatpush1.msra.mxu0 0.0
  %3279 = vmatprep.subr.mxu0 0.0
  %3280 = vmatpush1.msra.mxu0 0.0
  %3281 = vmatprep.subr.mxu0 0.0
  %3282 = vmatpush1.msra.mxu0 0.0
  %3283 = vmatprep.subr.mxu0 0.0
  %3284 = vmatpush1.msra.mxu0 0.0
  %3285 = vmatprep.subr.mxu0 0.0
  %3286 = vmatpush1.msra.mxu0 0.0
  %3287 = vmatprep.subr.mxu0 0.0
  %3288 = vmatpush1.msra.mxu0 0.0
  %3289 = vmatprep.subr.mxu0 0.0
  %3290 = vmatpush1.msra.mxu0 0.0
  %3291 = vmatprep.subr.mxu0 0.0
  %3292 = vmatpush1.msra.mxu0 0.0
  %3293 = vmatprep.subr.mxu0 0.0
  %3294 = vmatpush1.msra.mxu0 0.0
  %3295 = vmatprep.mubr.f32.mxu0 0.0
  %3296 = vmatmul.mubr.f32.gmra.mrb[0].mxu0 %v3208
  %v3297 = vpop.f32.mrb[0].mxu0
  %v3298 = vadd.f32 0.0, %v3297
  %v3299 = vpop.f32.mrb[0].mxu0
  %3300 = vmatprep.mubr.f32.mxu0 0.0
  %3301 = vmatmul.mubr.f32.gmra.mrb[0].mxu0 %v3211
  %v3302 = vpop.f32.mrb[0].mxu0
  %v3303 = vadd.f32 0.0, %v3302
  %v3304 = vpop.f32.mrb[0].mxu0
  %3305 = vmatprep.mubr.f32.mxu0 0.0
  %3306 = vmatmul.mubr.f32.gmra.mrb[0].mxu0 %v3214
  %v3307 = vpop.f32.mrb[0].mxu0
  %v3308 = vadd.f32 0.0, %v3307
  %v3309 = vpop.f32.mrb[0].mxu0
  %3310 = vmatprep.mubr.f32.mxu0 0.0
  %3311 = vmatmul.mubr.f32.gmra.mrb[0].mxu0 %v3217
  %v3312 = vpop.f32.mrb[0].mxu0
  %v3313 = vadd.f32 0.0, %v3312
  %v3314 = vpop.f32.mrb[0].mxu0
  %3315 = vmatprep.mubr.f32.mxu0 0.0
  %3316 = vmatmul.mubr.f32.gmra.mrb[0].mxu0 %v3220
  %v3317 = vpop.f32.mrb[0].mxu0
  %v3318 = vadd.f32 0.0, %v3317
  %v3319 = vpop.f32.mrb[0].mxu0
  %3320 = vmatprep.mubr.f32.mxu0 0.0
  %3321 = vmatmul.mubr.f32.gmra.mrb[0].mxu0 %v3223
  %v3322 = vpop.f32.mrb[0].mxu0
  %v3323 = vadd.f32 0.0, %v3322
  %v3324 = vpop.f32.mrb[0].mxu0
  %3325 = vmatprep.mubr.f32.mxu0 0.0
  %3326 = vmatmul.mubr.f32.gmra.mrb[0].mxu0 %v3226
  %v3327 = vpop.f32.mrb[0].mxu0
  %v3328 = vadd.f32 0.0, %v3327
  %v3329 = vpop.f32.mrb[0].mxu0
  %3330 = vmatprep.mubr.f32.mxu0 0.0
  %3331 = vmatmul.mubr.f32.gmra.mrb[0].mxu0 %v3229
  %v3332 = vpop.f32.mrb[0].mxu0
  %v3333 = vadd.f32 0.0, %v3332
  %v3334 = vpop.f32.mrb[0].mxu0
  %3335 = vdwg.mxu0
  %v3336 = vrcp.pop %v3161
  %v3337 = vrcp.pop %v3164
  %v3338 = vrcp.pop %v3167
  %v3339 = vrcp.pop %v3170
  %v3340 = vrcp.pop %v3173
  %v3341 = vrcp.pop %v3176
  %v3342 = vrcp.pop %v3179
  %v3343 = vrcp.pop %v3182
  %v3344 = vmul.f32 %v3298, %v3336
  %v3345 = vmul.f32 %v3303, %v3337
  %v3346 = vmul.f32 %v3308, %v3338
  %v3347 = vmul.f32 %v3313, %v3339
  %v3348 = vmul.f32 %v3318, %v3340
  %v3349 = vmul.f32 %v3323, %v3341
  %v3350 = vmul.f32 %v3328, %v3342
  %v3351 = vmul.f32 %v3333, %v3343
  %3360 = vrot.lane.b32.xlu0 %v3344, 16
  %v3361 = vpop.permute.xlu0 %3360
  %3362 = vrot.lane.b32.xlu0 %v3345, 16
  %v3363 = vpop.permute.xlu0 %3362
  %3364 = vrot.lane.b32.xlu0 %v3346, 16
  %v3365 = vpop.permute.xlu0 %3364
  %3366 = vrot.lane.b32.xlu0 %v3347, 16
  %v3367 = vpop.permute.xlu0 %3366
  %3368 = vrot.lane.b32.xlu0 %v3348, 16
  %v3369 = vpop.permute.xlu0 %3368
  %3370 = vrot.lane.b32.xlu0 %v3349, 16
  %v3371 = vpop.permute.xlu0 %3370
  %3372 = vrot.lane.b32.xlu0 %v3350, 16
  %v3373 = vpop.permute.xlu0 %3372
  %3374 = vrot.lane.b32.xlu0 %v3351, 16
  %v3375 = vpop.permute.xlu0 %3374
  %3384 = vst.msk [vmem:[#allocation2 + $0x40] sm:$0xff] %vm1606, %v3361
  %3385 = vst.msk [vmem:[#allocation2 + $0x48] sm:$0xff] %vm1606, %v3363
  %3386 = vst.msk [vmem:[#allocation2 + $0x50] sm:$0xff] %vm1606, %v3365
  %3387 = vst.msk [vmem:[#allocation2 + $0x58] sm:$0xff] %vm1606, %v3367
  %3388 = vst.msk [vmem:[#allocation2 + $0x60] sm:$0xff] %vm1606, %v3369
  %3389 = vst.msk [vmem:[#allocation2 + $0x68] sm:$0xff] %vm1606, %v3371
  %3390 = vst.msk [vmem:[#allocation2 + $0x70] sm:$0xff] %vm1606, %v3373
  %3391 = vst.msk [vmem:[#allocation2 + $0x78] sm:$0xff] %vm1606, %v3375
  %3392 = vrot.lane.b32.xlu0 %v2066, 104
  %v3393 = vpop.permute.xlu0 %3392
  %3394 = vrot.lane.b32.xlu0 %v2067, 104
  %v3395 = vpop.permute.xlu0 %3394
  %3396 = vrot.lane.b32.xlu0 %v2068, 104
  %v3397 = vpop.permute.xlu0 %3396
  %3398 = vrot.lane.b32.xlu0 %v2069, 104
  %v3399 = vpop.permute.xlu0 %3398
  %3400 = vrot.lane.b32.xlu0 %v2070, 104
  %v3401 = vpop.permute.xlu0 %3400
  %3402 = vrot.lane.b32.xlu0 %v2071, 104
  %v3403 = vpop.permute.xlu0 %3402
  %3404 = vrot.lane.b32.xlu0 %v2072, 104
  %v3405 = vpop.permute.xlu0 %3404
  %3406 = vrot.lane.b32.xlu0 %v2073, 104
  %v3407 = vpop.permute.xlu0 %3406
  %3408 = vrot.lane.b32.xlu0 %v247, 72
  %v3409 = vpop.permute.xlu0 %3408
  %3410 = vrot.lane.b32.xlu0 %v252, 72
  %v3411 = vpop.permute.xlu0 %3410
  %3412 = vrot.lane.b32.xlu0 %v257, 72
  %v3413 = vpop.permute.xlu0 %3412
  %3414 = vrot.lane.b32.xlu0 %v262, 72
  %v3415 = vpop.permute.xlu0 %3414
  %3416 = vrot.lane.b32.xlu0 %v267, 72
  %v3417 = vpop.permute.xlu0 %3416
  %3418 = vrot.lane.b32.xlu0 %v272, 72
  %v3419 = vpop.permute.xlu0 %3418
  %3420 = vrot.lane.b32.xlu0 %v277, 72
  %v3421 = vpop.permute.xlu0 %3420
  %3422 = vrot.lane.b32.xlu0 %v282, 72
  %v3423 = vpop.permute.xlu0 %3422
  %v3424 = vsel %vm317, %v3393, 0
  %v3426 = vsel %vm317, %v3395, 0
  %v3428 = vsel %vm317, %v3397, 0
  %v3430 = vsel %vm317, %v3399, 0
  %v3432 = vsel %vm317, %v3401, 0
  %v3434 = vsel %vm317, %v3403, 0
  %v3436 = vsel %vm317, %v3405, 0
  %v3438 = vsel %vm317, %v3407, 0
  %v3440 = vsel %vm317, %v3409, 0
  %v3442 = vsel %vm317, %v3411, 0
  %v3444 = vsel %vm317, %v3413, 0
  %v3446 = vsel %vm317, %v3415, 0
  %v3448 = vsel %vm317, %v3417, 0
  %v3450 = vsel %vm317, %v3419, 0
  %v3452 = vsel %vm317, %v3421, 0
  %v3454 = vsel %vm317, %v3423, 0
  %3456 = vmatprep.subr.mxu0 0.0
  %3457 = vmatpush1.xpose.msra.mxu0 %v3440
  %3458 = vmatprep.subr.mxu0 0.0
  %3459 = vmatpush1.xpose.msra.mxu0 %v3442
  %3460 = vmatprep.subr.mxu0 0.0
  %3461 = vmatpush1.xpose.msra.mxu0 %v3444
  %3462 = vmatprep.subr.mxu0 0.0
  %3463 = vmatpush1.xpose.msra.mxu0 %v3446
  %3464 = vmatprep.subr.mxu0 0.0
  %3465 = vmatpush1.xpose.msra.mxu0 %v3448
  %3466 = vmatprep.subr.mxu0 0.0
  %3467 = vmatpush1.xpose.msra.mxu0 %v3450
  %3468 = vmatprep.subr.mxu0 0.0
  %3469 = vmatpush1.xpose.msra.mxu0 %v3452
  %3470 = vmatprep.subr.mxu0 0.0
  %3471 = vmatpush1.xpose.msra.mxu0 %v3454
  %3472 = vmatprep.subr.mxu0 0.0
  %3473 = vmatpush1.xpose.msra.mxu0 0.0
  %3474 = vmatprep.subr.mxu0 0.0
  %3475 = vmatpush1.xpose.msra.mxu0 0.0
  %3476 = vmatprep.subr.mxu0 0.0
  %3477 = vmatpush1.xpose.msra.mxu0 0.0
  %3478 = vmatprep.subr.mxu0 0.0
  %3479 = vmatpush1.xpose.msra.mxu0 0.0
  %3480 = vmatprep.subr.mxu0 0.0
  %3481 = vmatpush1.xpose.msra.mxu0 0.0
  %3482 = vmatprep.subr.mxu0 0.0
  %3483 = vmatpush1.xpose.msra.mxu0 0.0
  %3484 = vmatprep.subr.mxu0 0.0
  %3485 = vmatpush1.xpose.msra.mxu0 0.0
  %3486 = vmatprep.subr.mxu0 0.0
  %3487 = vmatpush1.xpose.msra.mxu0 0.0
  %3488 = vmatprep.subr.mxu0 0.0
  %3489 = vmatpush1.xpose.msra.mxu0 0.0
  %3490 = vmatprep.subr.mxu0 0.0
  %3491 = vmatpush1.xpose.msra.mxu0 0.0
  %3492 = vmatprep.subr.mxu0 0.0
  %3493 = vmatpush1.xpose.msra.mxu0 0.0
  %3494 = vmatprep.subr.mxu0 0.0
  %3495 = vmatpush1.xpose.msra.mxu0 0.0
  %3496 = vmatprep.subr.mxu0 0.0
  %3497 = vmatpush1.xpose.msra.mxu0 0.0
  %3498 = vmatprep.subr.mxu0 0.0
  %3499 = vmatpush1.xpose.msra.mxu0 0.0
  %3500 = vmatprep.subr.mxu0 0.0
  %3501 = vmatpush1.xpose.msra.mxu0 0.0
  %3502 = vmatprep.subr.mxu0 0.0
  %3503 = vmatpush1.xpose.msra.mxu0 0.0
  %3504 = vmatprep.subr.mxu0 0.0
  %3505 = vmatpush1.xpose.msra.mxu0 0.0
  %3506 = vmatprep.subr.mxu0 0.0
  %3507 = vmatpush1.xpose.msra.mxu0 0.0
  %3508 = vmatprep.subr.mxu0 0.0
  %3509 = vmatpush1.xpose.msra.mxu0 0.0
  %3510 = vmatprep.subr.mxu0 0.0
  %3511 = vmatpush1.xpose.msra.mxu0 0.0
  %3512 = vmatprep.subr.mxu0 0.0
  %3513 = vmatpush1.xpose.msra.mxu0 0.0
  %3514 = vmatprep.subr.mxu0 0.0
  %3515 = vmatpush1.xpose.msra.mxu0 0.0
  %3516 = vmatprep.subr.mxu0 0.0
  %3517 = vmatpush1.xpose.msra.mxu0 0.0
  %3518 = vmatprep.subr.mxu0 0.0
  %3519 = vmatpush1.xpose.msra.mxu0 0.0
  %3520 = vmatprep.mubr.f32.mxu0 0.0
  %3521 = vmatmul.mubr.f32.gmra.mrb[0].mxu0 %v3424
  %v3522 = vpop.f32.mrb[0].mxu0
  %v3523 = vadd.f32 0.0, %v3522
  %v3524 = vpop.f32.mrb[0].mxu0
  %3525 = vmatprep.mubr.f32.mxu0 0.0
  %3526 = vmatmul.mubr.f32.gmra.mrb[0].mxu0 %v3426
  %v3527 = vpop.f32.mrb[0].mxu0
  %v3528 = vadd.f32 0.0, %v3527
  %v3529 = vpop.f32.mrb[0].mxu0
  %3530 = vmatprep.mubr.f32.mxu0 0.0
  %3531 = vmatmul.mubr.f32.gmra.mrb[0].mxu0 %v3428
  %v3532 = vpop.f32.mrb[0].mxu0
  %v3533 = vadd.f32 0.0, %v3532
  %v3534 = vpop.f32.mrb[0].mxu0
  %3535 = vmatprep.mubr.f32.mxu0 0.0
  %3536 = vmatmul.mubr.f32.gmra.mrb[0].mxu0 %v3430
  %v3537 = vpop.f32.mrb[0].mxu0
  %v3538 = vadd.f32 0.0, %v3537
  %v3539 = vpop.f32.mrb[0].mxu0
  %3540 = vmatprep.mubr.f32.mxu0 0.0
  %3541 = vmatmul.mubr.f32.gmra.mrb[0].mxu0 %v3432
  %v3542 = vpop.f32.mrb[0].mxu0
  %v3543 = vadd.f32 0.0, %v3542
  %v3544 = vpop.f32.mrb[0].mxu0
  %3545 = vmatprep.mubr.f32.mxu0 0.0
  %3546 = vmatmul.mubr.f32.gmra.mrb[0].mxu0 %v3434
  %v3547 = vpop.f32.mrb[0].mxu0
  %v3548 = vadd.f32 0.0, %v3547
  %v3549 = vpop.f32.mrb[0].mxu0
  %3550 = vmatprep.mubr.f32.mxu0 0.0
  %3551 = vmatmul.mubr.f32.gmra.mrb[0].mxu0 %v3436
  %v3552 = vpop.f32.mrb[0].mxu0
  %v3553 = vadd.f32 0.0, %v3552
  %v3554 = vpop.f32.mrb[0].mxu0
  %3555 = vmatprep.mubr.f32.mxu0 0.0
  %3556 = vmatmul.mubr.f32.gmra.mrb[0].mxu0 %v3438
  %v3557 = vpop.f32.mrb[0].mxu0
  %v3558 = vadd.f32 0.0, %v3557
  %v3559 = vpop.f32.mrb[0].mxu0
  %3560 = vdwg.mxu0
  %v3561 = vsel %vm463, %v3523, -inf
  %3562 = vmax.xlane.f32.xlu0 %v3561
  %v3563 = vpop.xlane.xlu0 %3562
  %v3564 = vsel %vm463, %v3528, -inf
  %3565 = vmax.xlane.f32.xlu0 %v3564
  %v3566 = vpop.xlane.xlu0 %3565
  %v3567 = vsel %vm463, %v3533, -inf
  %3568 = vmax.xlane.f32.xlu0 %v3567
  %v3569 = vpop.xlane.xlu0 %3568
  %v3570 = vsel %vm463, %v3538, -inf
  %3571 = vmax.xlane.f32.xlu0 %v3570
  %v3572 = vpop.xlane.xlu0 %3571
  %v3573 = vsel %vm463, %v3543, -inf
  %3574 = vmax.xlane.f32.xlu0 %v3573
  %v3575 = vpop.xlane.xlu0 %3574
  %v3576 = vsel %vm463, %v3548, -inf
  %3577 = vmax.xlane.f32.xlu0 %v3576
  %v3578 = vpop.xlane.xlu0 %3577
  %v3579 = vsel %vm463, %v3553, -inf
  %3580 = vmax.xlane.f32.xlu0 %v3579
  %v3581 = vpop.xlane.xlu0 %3580
  %v3582 = vsel %vm463, %v3558, -inf
  %3583 = vmax.xlane.f32.xlu0 %v3582
  %v3584 = vpop.xlane.xlu0 %3583
  %v3585 = vsub.f32 %v3523, %v3563
  %v3586 = vsub.f32 %v3528, %v3566
  %v3587 = vsub.f32 %v3533, %v3569
  %v3588 = vsub.f32 %v3538, %v3572
  %v3589 = vsub.f32 %v3543, %v3575
  %v3590 = vsub.f32 %v3548, %v3578
  %v3591 = vsub.f32 %v3553, %v3581
  %v3592 = vsub.f32 %v3558, %v3584
  %v3593 = vmul.f32 %v3585, 1.442695
  %v3594 = vpow.pop %v3593
  %v3595 = vmul.f32 %v3586, 1.442695
  %v3596 = vpow.pop %v3595
  %v3597 = vmul.f32 %v3587, 1.442695
  %v3598 = vpow.pop %v3597
  %v3599 = vmul.f32 %v3588, 1.442695
  %v3600 = vpow.pop %v3599
  %v3601 = vmul.f32 %v3589, 1.442695
  %v3602 = vpow.pop %v3601
  %v3603 = vmul.f32 %v3590, 1.442695
  %v3604 = vpow.pop %v3603
  %v3605 = vmul.f32 %v3591, 1.442695
  %v3606 = vpow.pop %v3605
  %v3607 = vmul.f32 %v3592, 1.442695
  %v3608 = vpow.pop %v3607
  %v3609 = vsel %vm463, %v3594, 0.0
  %3610 = vadd.xlane.f32.xlu0 %v3609
  %v3611 = vpop.xlane.xlu0 %3610
  %v3612 = vsel %vm463, %v3596, 0.0
  %3613 = vadd.xlane.f32.xlu0 %v3612
  %v3614 = vpop.xlane.xlu0 %3613
  %v3615 = vsel %vm463, %v3598, 0.0
  %3616 = vadd.xlane.f32.xlu0 %v3615
  %v3617 = vpop.xlane.xlu0 %3616
  %v3618 = vsel %vm463, %v3600, 0.0
  %3619 = vadd.xlane.f32.xlu0 %v3618
  %v3620 = vpop.xlane.xlu0 %3619
  %v3621 = vsel %vm463, %v3602, 0.0
  %3622 = vadd.xlane.f32.xlu0 %v3621
  %v3623 = vpop.xlane.xlu0 %3622
  %v3624 = vsel %vm463, %v3604, 0.0
  %3625 = vadd.xlane.f32.xlu0 %v3624
  %v3626 = vpop.xlane.xlu0 %3625
  %v3627 = vsel %vm463, %v3606, 0.0
  %3628 = vadd.xlane.f32.xlu0 %v3627
  %v3629 = vpop.xlane.xlu0 %3628
  %v3630 = vsel %vm463, %v3608, 0.0
  %3631 = vadd.xlane.f32.xlu0 %v3630
  %v3632 = vpop.xlane.xlu0 %3631
  %3633 = vrot.lane.b32.xlu0 %v247, 40
  %v3634 = vpop.permute.xlu0 %3633
  %3635 = vrot.lane.b32.xlu0 %v252, 40
  %v3636 = vpop.permute.xlu0 %3635
  %3637 = vrot.lane.b32.xlu0 %v257, 40
  %v3638 = vpop.permute.xlu0 %3637
  %3639 = vrot.lane.b32.xlu0 %v262, 40
  %v3640 = vpop.permute.xlu0 %3639
  %3641 = vrot.lane.b32.xlu0 %v267, 40
  %v3642 = vpop.permute.xlu0 %3641
  %3643 = vrot.lane.b32.xlu0 %v272, 40
  %v3644 = vpop.permute.xlu0 %3643
  %3645 = vrot.lane.b32.xlu0 %v277, 40
  %v3646 = vpop.permute.xlu0 %3645
  %3647 = vrot.lane.b32.xlu0 %v282, 40
  %v3648 = vpop.permute.xlu0 %3647
  %v3658 = vsel %vm463, %v3594, 0
  %v3661 = vsel %vm463, %v3596, 0
  %v3664 = vsel %vm463, %v3598, 0
  %v3667 = vsel %vm463, %v3600, 0
  %v3670 = vsel %vm463, %v3602, 0
  %v3673 = vsel %vm463, %v3604, 0
  %v3676 = vsel %vm463, %v3606, 0
  %v3679 = vsel %vm463, %v3608, 0
  %3681 = vmatprep.subr.mxu0 0.0
  %3682 = vmatpush1.msra.mxu0 %v3634
  %3683 = vmatprep.subr.mxu0 0.0
  %3684 = vmatpush1.msra.mxu0 %v3636
  %3685 = vmatprep.subr.mxu0 0.0
  %3686 = vmatpush1.msra.mxu0 %v3638
  %3687 = vmatprep.subr.mxu0 0.0
  %3688 = vmatpush1.msra.mxu0 %v3640
  %3689 = vmatprep.subr.mxu0 0.0
  %3690 = vmatpush1.msra.mxu0 %v3642
  %3691 = vmatprep.subr.mxu0 0.0
  %3692 = vmatpush1.msra.mxu0 %v3644
  %3693 = vmatprep.subr.mxu0 0.0
  %3694 = vmatpush1.msra.mxu0 %v3646
  %3695 = vmatprep.subr.mxu0 0.0
  %3696 = vmatpush1.msra.mxu0 %v3648
  %3697 = vmatprep.subr.mxu0 0.0
  %3698 = vmatpush1.msra.mxu0 0.0
  %3699 = vmatprep.subr.mxu0 0.0
  %3700 = vmatpush1.msra.mxu0 0.0
  %3701 = vmatprep.subr.mxu0 0.0
  %3702 = vmatpush1.msra.mxu0 0.0
  %3703 = vmatprep.subr.mxu0 0.0
  %3704 = vmatpush1.msra.mxu0 0.0
  %3705 = vmatprep.subr.mxu0 0.0
  %3706 = vmatpush1.msra.mxu0 0.0
  %3707 = vmatprep.subr.mxu0 0.0
  %3708 = vmatpush1.msra.mxu0 0.0
  %3709 = vmatprep.subr.mxu0 0.0
  %3710 = vmatpush1.msra.mxu0 0.0
  %3711 = vmatprep.subr.mxu0 0.0
  %3712 = vmatpush1.msra.mxu0 0.0
  %3713 = vmatprep.subr.mxu0 0.0
  %3714 = vmatpush1.msra.mxu0 0.0
  %3715 = vmatprep.subr.mxu0 0.0
  %3716 = vmatpush1.msra.mxu0 0.0
  %3717 = vmatprep.subr.mxu0 0.0
  %3718 = vmatpush1.msra.mxu0 0.0
  %3719 = vmatprep.subr.mxu0 0.0
  %3720 = vmatpush1.msra.mxu0 0.0
  %3721 = vmatprep.subr.mxu0 0.0
  %3722 = vmatpush1.msra.mxu0 0.0
  %3723 = vmatprep.subr.mxu0 0.0
  %3724 = vmatpush1.msra.mxu0 0.0
  %3725 = vmatprep.subr.mxu0 0.0
  %3726 = vmatpush1.msra.mxu0 0.0
  %3727 = vmatprep.subr.mxu0 0.0
  %3728 = vmatpush1.msra.mxu0 0.0
  %3729 = vmatprep.subr.mxu0 0.0
  %3730 = vmatpush1.msra.mxu0 0.0
  %3731 = vmatprep.subr.mxu0 0.0
  %3732 = vmatpush1.msra.mxu0 0.0
  %3733 = vmatprep.subr.mxu0 0.0
  %3734 = vmatpush1.msra.mxu0 0.0
  %3735 = vmatprep.subr.mxu0 0.0
  %3736 = vmatpush1.msra.mxu0 0.0
  %3737 = vmatprep.subr.mxu0 0.0
  %3738 = vmatpush1.msra.mxu0 0.0
  %3739 = vmatprep.subr.mxu0 0.0
  %3740 = vmatpush1.msra.mxu0 0.0
  %3741 = vmatprep.subr.mxu0 0.0
  %3742 = vmatpush1.msra.mxu0 0.0
  %3743 = vmatprep.subr.mxu0 0.0
  %3744 = vmatpush1.msra.mxu0 0.0
  %3745 = vmatprep.mubr.f32.mxu0 0.0
  %3746 = vmatmul.mubr.f32.gmra.mrb[0].mxu0 %v3658
  %v3747 = vpop.f32.mrb[0].mxu0
  %v3748 = vadd.f32 0.0, %v3747
  %v3749 = vpop.f32.mrb[0].mxu0
  %3750 = vmatprep.mubr.f32.mxu0 0.0
  %3751 = vmatmul.mubr.f32.gmra.mrb[0].mxu0 %v3661
  %v3752 = vpop.f32.mrb[0].mxu0
  %v3753 = vadd.f32 0.0, %v3752
  %v3754 = vpop.f32.mrb[0].mxu0
  %3755 = vmatprep.mubr.f32.mxu0 0.0
  %3756 = vmatmul.mubr.f32.gmra.mrb[0].mxu0 %v3664
  %v3757 = vpop.f32.mrb[0].mxu0
  %v3758 = vadd.f32 0.0, %v3757
  %v3759 = vpop.f32.mrb[0].mxu0
  %3760 = vmatprep.mubr.f32.mxu0 0.0
  %3761 = vmatmul.mubr.f32.gmra.mrb[0].mxu0 %v3667
  %v3762 = vpop.f32.mrb[0].mxu0
  %v3763 = vadd.f32 0.0, %v3762
  %v3764 = vpop.f32.mrb[0].mxu0
  %3765 = vmatprep.mubr.f32.mxu0 0.0
  %3766 = vmatmul.mubr.f32.gmra.mrb[0].mxu0 %v3670
  %v3767 = vpop.f32.mrb[0].mxu0
  %v3768 = vadd.f32 0.0, %v3767
  %v3769 = vpop.f32.mrb[0].mxu0
  %3770 = vmatprep.mubr.f32.mxu0 0.0
  %3771 = vmatmul.mubr.f32.gmra.mrb[0].mxu0 %v3673
  %v3772 = vpop.f32.mrb[0].mxu0
  %v3773 = vadd.f32 0.0, %v3772
  %v3774 = vpop.f32.mrb[0].mxu0
  %3775 = vmatprep.mubr.f32.mxu0 0.0
  %3776 = vmatmul.mubr.f32.gmra.mrb[0].mxu0 %v3676
  %v3777 = vpop.f32.mrb[0].mxu0
  %v3778 = vadd.f32 0.0, %v3777
  %v3779 = vpop.f32.mrb[0].mxu0
  %3780 = vmatprep.mubr.f32.mxu0 0.0
  %3781 = vmatmul.mubr.f32.gmra.mrb[0].mxu0 %v3679
  %v3782 = vpop.f32.mrb[0].mxu0
  %v3783 = vadd.f32 0.0, %v3782
  %v3784 = vpop.f32.mrb[0].mxu0
  %3785 = vdwg.mxu0
  %v3786 = vrcp.pop %v3611
  %v3787 = vrcp.pop %v3614
  %v3788 = vrcp.pop %v3617
  %v3789 = vrcp.pop %v3620
  %v3790 = vrcp.pop %v3623
  %v3791 = vrcp.pop %v3626
  %v3792 = vrcp.pop %v3629
  %v3793 = vrcp.pop %v3632
  %v3794 = vmul.f32 %v3748, %v3786
  %v3795 = vmul.f32 %v3753, %v3787
  %v3796 = vmul.f32 %v3758, %v3788
  %v3797 = vmul.f32 %v3763, %v3789
  %v3798 = vmul.f32 %v3768, %v3790
  %v3799 = vmul.f32 %v3773, %v3791
  %v3800 = vmul.f32 %v3778, %v3792
  %v3801 = vmul.f32 %v3783, %v3793
  %3810 = vrot.lane.b32.xlu0 %v3794, 24
  %v3811 = vpop.permute.xlu0 %3810
  %3812 = vrot.lane.b32.xlu0 %v3795, 24
  %v3813 = vpop.permute.xlu0 %3812
  %3814 = vrot.lane.b32.xlu0 %v3796, 24
  %v3815 = vpop.permute.xlu0 %3814
  %3816 = vrot.lane.b32.xlu0 %v3797, 24
  %v3817 = vpop.permute.xlu0 %3816
  %3818 = vrot.lane.b32.xlu0 %v3798, 24
  %v3819 = vpop.permute.xlu0 %3818
  %3820 = vrot.lane.b32.xlu0 %v3799, 24
  %v3821 = vpop.permute.xlu0 %3820
  %3822 = vrot.lane.b32.xlu0 %v3800, 24
  %v3823 = vpop.permute.xlu0 %3822
  %3824 = vrot.lane.b32.xlu0 %v3801, 24
  %v3825 = vpop.permute.xlu0 %3824
  %3834 = vst.msk [vmem:[#allocation2 + $0x40] sm:$0xff] %vm2057, %v3811
  %3835 = vst.msk [vmem:[#allocation2 + $0x48] sm:$0xff] %vm2057, %v3813
  %3836 = vst.msk [vmem:[#allocation2 + $0x50] sm:$0xff] %vm2057, %v3815
  %3837 = vst.msk [vmem:[#allocation2 + $0x58] sm:$0xff] %vm2057, %v3817
  %3838 = vst.msk [vmem:[#allocation2 + $0x60] sm:$0xff] %vm2057, %v3819
  %3839 = vst.msk [vmem:[#allocation2 + $0x68] sm:$0xff] %vm2057, %v3821
  %3840 = vst.msk [vmem:[#allocation2 + $0x70] sm:$0xff] %vm2057, %v3823
  %3841 = vst.msk [vmem:[#allocation2 + $0x78] sm:$0xff] %vm2057, %v3825
  %v3842 = vld [vmem:[#allocation2] sm:$0xff]
  %v3843 = vld [vmem:[#allocation2 + $0x8] sm:$0xff]
  %v3844 = vld [vmem:[#allocation2 + $0x10] sm:$0xff]
  %v3845 = vld [vmem:[#allocation2 + $0x18] sm:$0xff]
  %v3846 = vld [vmem:[#allocation2 + $0x20] sm:$0xff]
  %v3847 = vld [vmem:[#allocation2 + $0x28] sm:$0xff]
  %v3848 = vld [vmem:[#allocation2 + $0x30] sm:$0xff]
  %v3849 = vld [vmem:[#allocation2 + $0x38] sm:$0xff]
  %v3850 = vld [vmem:[#allocation2 + $0x40] sm:$0xff]
  %v3851 = vld [vmem:[#allocation2 + $0x48] sm:$0xff]
  %v3852 = vld [vmem:[#allocation2 + $0x50] sm:$0xff]
  %v3853 = vld [vmem:[#allocation2 + $0x58] sm:$0xff]
  %v3854 = vld [vmem:[#allocation2 + $0x60] sm:$0xff]
  %v3855 = vld [vmem:[#allocation2 + $0x68] sm:$0xff]
  %v3856 = vld [vmem:[#allocation2 + $0x70] sm:$0xff]
  %v3857 = vld [vmem:[#allocation2 + $0x78] sm:$0xff]
  %v3858 = vld [vmem:[%s3] sm:$0xff]
  %v3859 = vld [vmem:[%s3 + $0x8] sm:$0xff]
  %v3860 = vld [vmem:[%s3 + $0x10] sm:$0xff]
  %v3861 = vld [vmem:[%s3 + $0x18] sm:$0xff]
  %v3862 = vld [vmem:[%s4] sm:$0x1]
  %v3864 = vlaneseq
  %v3865 = vshrl.u32 %v3864, 7
  %v3866 = vsub.s32 0, %v3865
  %v3867 = vrot.slane %v3862, %v3866
  %v3870 = vsel %vm55, %v3842, 0
  %v3873 = vsel %vm55, %v3843, 0
  %v3876 = vsel %vm55, %v3844, 0
  %v3879 = vsel %vm55, %v3845, 0
  %v3882 = vsel %vm55, %v3846, 0
  %v3885 = vsel %vm55, %v3847, 0
  %v3888 = vsel %vm55, %v3848, 0
  %v3891 = vsel %vm55, %v3849, 0
  %v3894 = vsel %vm55, %v3850, 0
  %v3897 = vsel %vm55, %v3851, 0
  %v3900 = vsel %vm55, %v3852, 0
  %v3903 = vsel %vm55, %v3853, 0
  %v3906 = vsel %vm55, %v3854, 0
  %v3909 = vsel %vm55, %v3855, 0
  %v3912 = vsel %vm55, %v3856, 0
  %v3915 = vsel %vm55, %v3857, 0
  %v3918 = vsel %vm55, %v3858, 0
  %v3921 = vsel %vm55, %v3859, 0
  %v3924 = vsel %vm55, %v3860, 0
  %v3927 = vsel %vm55, %v3861, 0
  %3929 = vmatprep.subr.mxu0 0.0
  %3930 = vmatpush1.xpose.msra.mxu0 %v3918
  %3931 = vmatprep.subr.mxu0 0.0
  %3932 = vmatpush1.xpose.msra.mxu0 %v3921
  %3933 = vmatprep.subr.mxu0 0.0
  %3934 = vmatpush1.xpose.msra.mxu0 %v3924
  %3935 = vmatprep.subr.mxu0 0.0
  %3936 = vmatpush1.xpose.msra.mxu0 %v3927
  %3937 = vmatprep.subr.mxu0 0.0
  %3938 = vmatpush1.xpose.msra.mxu0 0.0
  %3939 = vmatprep.subr.mxu0 0.0
  %3940 = vmatpush1.xpose.msra.mxu0 0.0
  %3941 = vmatprep.subr.mxu0 0.0
  %3942 = vmatpush1.xpose.msra.mxu0 0.0
  %3943 = vmatprep.subr.mxu0 0.0
  %3944 = vmatpush1.xpose.msra.mxu0 0.0
  %3945 = vmatprep.subr.mxu0 0.0
  %3946 = vmatpush1.xpose.msra.mxu0 0.0
  %3947 = vmatprep.subr.mxu0 0.0
  %3948 = vmatpush1.xpose.msra.mxu0 0.0
  %3949 = vmatprep.subr.mxu0 0.0
  %3950 = vmatpush1.xpose.msra.mxu0 0.0
  %3951 = vmatprep.subr.mxu0 0.0
  %3952 = vmatpush1.xpose.msra.mxu0 0.0
  %3953 = vmatprep.subr.mxu0 0.0
  %3954 = vmatpush1.xpose.msra.mxu0 0.0
  %3955 = vmatprep.subr.mxu0 0.0
  %3956 = vmatpush1.xpose.msra.mxu0 0.0
  %3957 = vmatprep.subr.mxu0 0.0
  %3958 = vmatpush1.xpose.msra.mxu0 0.0
  %3959 = vmatprep.subr.mxu0 0.0
  %3960 = vmatpush1.xpose.msra.mxu0 0.0
  %3961 = vmatprep.subr.mxu0 0.0
  %3962 = vmatpush1.xpose.msra.mxu0 0.0
  %3963 = vmatprep.subr.mxu0 0.0
  %3964 = vmatpush1.xpose.msra.mxu0 0.0
  %3965 = vmatprep.subr.mxu0 0.0
  %3966 = vmatpush1.xpose.msra.mxu0 0.0
  %3967 = vmatprep.subr.mxu0 0.0
  %3968 = vmatpush1.xpose.msra.mxu0 0.0
  %3969 = vmatprep.subr.mxu0 0.0
  %3970 = vmatpush1.xpose.msra.mxu0 0.0
  %3971 = vmatprep.subr.mxu0 0.0
  %3972 = vmatpush1.xpose.msra.mxu0 0.0
  %3973 = vmatprep.subr.mxu0 0.0
  %3974 = vmatpush1.xpose.msra.mxu0 0.0
  %3975 = vmatprep.subr.mxu0 0.0
  %3976 = vmatpush1.xpose.msra.mxu0 0.0
  %3977 = vmatprep.subr.mxu0 0.0
  %3978 = vmatpush1.xpose.msra.mxu0 0.0
  %3979 = vmatprep.subr.mxu0 0.0
  %3980 = vmatpush1.xpose.msra.mxu0 0.0
  %3981 = vmatprep.subr.mxu0 0.0
  %3982 = vmatpush1.xpose.msra.mxu0 0.0
  %3983 = vmatprep.subr.mxu0 0.0
  %3984 = vmatpush1.xpose.msra.mxu0 0.0
  %3985 = vmatprep.subr.mxu0 0.0
  %3986 = vmatpush1.xpose.msra.mxu0 0.0
  %3987 = vmatprep.subr.mxu0 0.0
  %3988 = vmatpush1.xpose.msra.mxu0 0.0
  %3989 = vmatprep.subr.mxu0 0.0
  %3990 = vmatpush1.xpose.msra.mxu0 0.0
  %3991 = vmatprep.subr.mxu0 0.0
  %3992 = vmatpush1.xpose.msra.mxu0 0.0
  %3993 = vmatprep.mubr.f32.mxu0 0.0
  %3994 = vmatmul.mubr.f32.gmra.mrb[0].mxu0 %v3870
  %v3995 = vpop.f32.mrb[0].mxu0
  %v3996 = vadd.f32 %v3867, %v3995
  %v3997 = vpop.f32.mrb[0].mxu0
  %3998 = vmatprep.mubr.f32.mxu0 0.0
  %3999 = vmatmul.mubr.f32.gmra.mrb[0].mxu0 %v3873
  %v4000 = vpop.f32.mrb[0].mxu0
  %v4001 = vadd.f32 %v3867, %v4000
  %v4002 = vpop.f32.mrb[0].mxu0
  %4003 = vmatprep.mubr.f32.mxu0 0.0
  %4004 = vmatmul.mubr.f32.gmra.mrb[0].mxu0 %v3876
  %v4005 = vpop.f32.mrb[0].mxu0
  %v4006 = vadd.f32 %v3867, %v4005
  %v4007 = vpop.f32.mrb[0].mxu0
  %4008 = vmatprep.mubr.f32.mxu0 0.0
  %4009 = vmatmul.mubr.f32.gmra.mrb[0].mxu0 %v3879
  %v4010 = vpop.f32.mrb[0].mxu0
  %v4011 = vadd.f32 %v3867, %v4010
  %v4012 = vpop.f32.mrb[0].mxu0
  %4013 = vmatprep.mubr.f32.mxu0 0.0
  %4014 = vmatmul.mubr.f32.gmra.mrb[0].mxu0 %v3882
  %v4015 = vpop.f32.mrb[0].mxu0
  %v4016 = vadd.f32 %v3867, %v4015
  %v4017 = vpop.f32.mrb[0].mxu0
  %4018 = vmatprep.mubr.f32.mxu0 0.0
  %4019 = vmatmul.mubr.f32.gmra.mrb[0].mxu0 %v3885
  %v4020 = vpop.f32.mrb[0].mxu0
  %v4021 = vadd.f32 %v3867, %v4020
  %v4022 = vpop.f32.mrb[0].mxu0
  %4023 = vmatprep.mubr.f32.mxu0 0.0
  %4024 = vmatmul.mubr.f32.gmra.mrb[0].mxu0 %v3888
  %v4025 = vpop.f32.mrb[0].mxu0
  %v4026 = vadd.f32 %v3867, %v4025
  %v4027 = vpop.f32.mrb[0].mxu0
  %4028 = vmatprep.mubr.f32.mxu0 0.0
  %4029 = vmatmul.mubr.f32.gmra.mrb[0].mxu0 %v3891
  %v4030 = vpop.f32.mrb[0].mxu0
  %v4031 = vadd.f32 %v3867, %v4030
  %v4032 = vpop.f32.mrb[0].mxu0
  %4033 = vmatprep.mubr.f32.mxu0 0.0
  %4034 = vmatmul.mubr.f32.gmra.mrb[0].mxu0 %v3894
  %v4035 = vpop.f32.mrb[0].mxu0
  %v4036 = vadd.f32 %v3867, %v4035
  %v4037 = vpop.f32.mrb[0].mxu0
  %4038 = vmatprep.mubr.f32.mxu0 0.0
  %4039 = vmatmul.mubr.f32.gmra.mrb[0].mxu0 %v3897
  %v4040 = vpop.f32.mrb[0].mxu0
  %v4041 = vadd.f32 %v3867, %v4040
  %v4042 = vpop.f32.mrb[0].mxu0
  %4043 = vmatprep.mubr.f32.mxu0 0.0
  %4044 = vmatmul.mubr.f32.gmra.mrb[0].mxu0 %v3900
  %v4045 = vpop.f32.mrb[0].mxu0
  %v4046 = vadd.f32 %v3867, %v4045
  %v4047 = vpop.f32.mrb[0].mxu0
  %4048 = vmatprep.mubr.f32.mxu0 0.0
  %4049 = vmatmul.mubr.f32.gmra.mrb[0].mxu0 %v3903
  %v4050 = vpop.f32.mrb[0].mxu0
  %v4051 = vadd.f32 %v3867, %v4050
  %v4052 = vpop.f32.mrb[0].mxu0
  %4053 = vmatprep.mubr.f32.mxu0 0.0
  %4054 = vmatmul.mubr.f32.gmra.mrb[0].mxu0 %v3906
  %v4055 = vpop.f32.mrb[0].mxu0
  %v4056 = vadd.f32 %v3867, %v4055
  %v4057 = vpop.f32.mrb[0].mxu0
  %4058 = vmatprep.mubr.f32.mxu0 0.0
  %4059 = vmatmul.mubr.f32.gmra.mrb[0].mxu0 %v3909
  %v4060 = vpop.f32.mrb[0].mxu0
  %v4061 = vadd.f32 %v3867, %v4060
  %v4062 = vpop.f32.mrb[0].mxu0
  %4063 = vmatprep.mubr.f32.mxu0 0.0
  %4064 = vmatmul.mubr.f32.gmra.mrb[0].mxu0 %v3912
  %v4065 = vpop.f32.mrb[0].mxu0
  %v4066 = vadd.f32 %v3867, %v4065
  %v4067 = vpop.f32.mrb[0].mxu0
  %4068 = vmatprep.mubr.f32.mxu0 0.0
  %4069 = vmatmul.mubr.f32.gmra.mrb[0].mxu0 %v3915
  %v4070 = vpop.f32.mrb[0].mxu0
  %v4071 = vadd.f32 %v3867, %v4070
  %v4072 = vpop.f32.mrb[0].mxu0
  %4073 = vdwg.mxu0
  %4074 = vst.msk [vmem:[%s5] sm:$0xff] %vm55, %v3996
  %4075 = vst.msk [vmem:[%s5 + $0x8] sm:$0xff] %vm55, %v4001
  %4076 = vst.msk [vmem:[%s5 + $0x10] sm:$0xff] %vm55, %v4006
  %4077 = vst.msk [vmem:[%s5 + $0x18] sm:$0xff] %vm55, %v4011
  %4078 = vst.msk [vmem:[%s5 + $0x20] sm:$0xff] %vm55, %v4016
  %4079 = vst.msk [vmem:[%s5 + $0x28] sm:$0xff] %vm55, %v4021
  %4080 = vst.msk [vmem:[%s5 + $0x30] sm:$0xff] %vm55, %v4026
  %4081 = vst.msk [vmem:[%s5 + $0x38] sm:$0xff] %vm55, %v4031
  %4082 = vst.msk [vmem:[%s5 + $0x40] sm:$0xff] %vm55, %v4036
  %4083 = vst.msk [vmem:[%s5 + $0x48] sm:$0xff] %vm55, %v4041
  %4084 = vst.msk [vmem:[%s5 + $0x50] sm:$0xff] %vm55, %v4046
  %4085 = vst.msk [vmem:[%s5 + $0x58] sm:$0xff] %vm55, %v4051
  %4086 = vst.msk [vmem:[%s5 + $0x60] sm:$0xff] %vm55, %v4056
  %4087 = vst.msk [vmem:[%s5 + $0x68] sm:$0xff] %vm55, %v4061
  %4088 = vst.msk [vmem:[%s5 + $0x70] sm:$0xff] %vm55, %v4066
  %4089 = vst.msk [vmem:[%s5 + $0x78] sm:$0xff] %vm55, %v4071
  // Predicated region
  $region22: #{tpu_custom_call.1} parent=0 // pred_check
    _
  $region23: #{tpu_custom_call.1} parent=0 // pred_check_branch
    %4091 = sbr.rel (0) target = $region25
  $region24: #{tpu_custom_call.1} parent=0 // pred_region
    _
  $region25: #{tpu_custom_call.1} parent=0 // pred_fallthru
    _
  // Predicated region
  $region26: #{tpu_custom_call.1} parent=0 // pred_check
    _
  $region27: #{tpu_custom_call.1} parent=0 // pred_check_branch
    %4093 = sbr.rel (0) target = $region29
  $region28: #{tpu_custom_call.1} parent=0 // pred_region
    _
  $region29: #{tpu_custom_call.1} parent=0 // pred_fallthru
    _

// kernel: tpu_custom_call.1
$region0: #{tpu_custom_call.1}
  #allocation0 [shape = 'u32[]', space=smem, size = 0x4, offset = 0x4, fixed_abs, tag = 'smem constant byte address 0x4 - core index']
  #allocation1 [shape = 'u32[144,128]{1,0:T(1,128)}', space=vmem, size = 0x12000, scoped, tag = 'internal scratch']
  #allocation2 [shape = 'f32[128,32]{1,0:T(8,128)}', space=vmem, size = 0x10000, scoped, tag = 'scratch operand']
  %s0 = inlined_call_operand.vmem [shape: f32[128,32], index: 0, kind: input, shape index: {}]
  %s1 = inlined_call_operand.vmem [shape: f32[96,32], index: 1, kind: input, shape index: {}]
  %s2 = inlined_call_operand.vmem [shape: f32[1,96], index: 2, kind: input, shape index: {}]
  %s3 = inlined_call_operand.vmem [shape: f32[32,32], index: 3, kind: input, shape index: {}]
  %s4 = inlined_call_operand.vmem [shape: f32[1,32], index: 4, kind: input, shape index: {}]
  %s5 = inlined_call_operand.vmem [shape: f32[128,32], index: 5, kind: output, shape index: {}]
  %s6 = sld [smem:[#allocation0]]
  $region30: #{tpu_custom_call.1} parent=0
    _
  %s8 = ssub.s32 1, %s6
  %s9 = scalar_select 0, %s8, %s6
  // Predicated region
  $region2: #{tpu_custom_call.1} parent=0 // pred_check
    _
  $region3: #{tpu_custom_call.1} parent=0 // pred_check_branch
    %11 = sbr.rel (0) target = $region5
  $region4: #{tpu_custom_call.1} parent=0 // pred_region
    _
  $region5: #{tpu_custom_call.1} parent=0 // pred_fallthru
    _
  // Predicated region
  $region6: #{tpu_custom_call.1} parent=0 // pred_check
    _
  $region7: #{tpu_custom_call.1} parent=0 // pred_check_branch
    %13 = sbr.rel (0) target = $region9
  $region8: #{tpu_custom_call.1} parent=0 // pred_region
    _
  $region9: #{tpu_custom_call.1} parent=0 // pred_fallthru
    _
  // Predicated region
  $region10: #{tpu_custom_call.1} parent=0 // pred_check
    _
  $region11: #{tpu_custom_call.1} parent=0 // pred_check_branch
    %15 = sbr.rel (0) target = $region13
  $region12: #{tpu_custom_call.1} parent=0 // pred_region
    _
  $region13: #{tpu_custom_call.1} parent=0 // pred_fallthru
    _
  // Predicated region
  $region14: #{tpu_custom_call.1} parent=0 // pred_check
    _
  $region15: #{tpu_custom_call.1} parent=0 // pred_check_branch
    %17 = sbr.rel (0) target = $region17
  $region16: #{tpu_custom_call.1} parent=0 // pred_region
    _
  $region17: #{tpu_custom_call.1} parent=0 // pred_fallthru
    _
  // Predicated region
  $region18: #{tpu_custom_call.1} parent=0 // pred_check
    _
  $region19: #{tpu_custom_call.1} parent=0 // pred_check_branch
    %19 = sbr.rel (0) target = $region21
  $region20: #{tpu_custom_call.1} parent=0 // pred_region
    _
  $region21: #{tpu_custom_call.1} parent=0 // pred_fallthru
    _
  %v20 = vld [vmem:[%s0] sm:$0xff]
  %v21 = vld [vmem:[%s0 + $0x8] sm:$0xff]
  %v22 = vld [vmem:[%s0 + $0x10] sm:$0xff]
  %v23 = vld [vmem:[%s0 + $0x18] sm:$0xff]
  %v24 = vld [vmem:[%s0 + $0x20] sm:$0xff]
  %v25 = vld [vmem:[%s0 + $0x28] sm:$0xff]
  %v26 = vld [vmem:[%s0 + $0x30] sm:$0xff]
  %v27 = vld [vmem:[%s0 + $0x38] sm:$0xff]
  %v28 = vld [vmem:[%s0 + $0x40] sm:$0xff]
  %v29 = vld [vmem:[%s0 + $0x48] sm:$0xff]
  %v30 = vld [vmem:[%s0 + $0x50] sm:$0xff]
  %v31 = vld [vmem:[%s0 + $0x58] sm:$0xff]
  %v32 = vld [vmem:[%s0 + $0x60] sm:$0xff]
  %v33 = vld [vmem:[%s0 + $0x68] sm:$0xff]
  %v34 = vld [vmem:[%s0 + $0x70] sm:$0xff]
  %v35 = vld [vmem:[%s0 + $0x78] sm:$0xff]
  %v36 = vld [vmem:[%s1] sm:$0xff]
  %v37 = vld [vmem:[%s1 + $0x8] sm:$0xff]
  %v38 = vld [vmem:[%s1 + $0x10] sm:$0xff]
  %v39 = vld [vmem:[%s1 + $0x18] sm:$0xff]
  %v40 = vld [vmem:[%s1 + $0x20] sm:$0xff]
  %v41 = vld [vmem:[%s1 + $0x28] sm:$0xff]
  %v42 = vld [vmem:[%s1 + $0x30] sm:$0xff]
  %v43 = vld [vmem:[%s1 + $0x38] sm:$0xff]
  %v44 = vld [vmem:[%s1 + $0x40] sm:$0xff]
  %v45 = vld [vmem:[%s1 + $0x48] sm:$0xff]
  %v46 = vld [vmem:[%s1 + $0x50] sm:$0xff]
  %v47 = vld [vmem:[%s1 + $0x58] sm:$0xff]
  %v48 = vld [vmem:[%s2] sm:$0x1]
  %v50 = vlaneseq
  %v51 = vshrl.u32 %v50, 7
  %v52 = vsub.s32 0, %v51
  %v53 = vrot.slane %v48, %v52
  %vm55 = vcmask 261120
  %v57 = vsel %vm55, %v20, 0
  %v60 = vsel %vm55, %v21, 0
  %v63 = vsel %vm55, %v22, 0
  %v66 = vsel %vm55, %v23, 0
  %v69 = vsel %vm55, %v24, 0
  %v72 = vsel %vm55, %v25, 0
  %v75 = vsel %vm55, %v26, 0
  %v78 = vsel %vm55, %v27, 0
  %v81 = vsel %vm55, %v28, 0
  %v84 = vsel %vm55, %v29, 0
  %v87 = vsel %vm55, %v30, 0
  %v90 = vsel %vm55, %v31, 0
  %v93 = vsel %vm55, %v32, 0
  %v96 = vsel %vm55, %v33, 0
  %v99 = vsel %vm55, %v34, 0
  %v102 = vsel %vm55, %v35, 0
  %v105 = vsel %vm55, %v36, 0
  %v108 = vsel %vm55, %v37, 0
  %v111 = vsel %vm55, %v38, 0
  %v114 = vsel %vm55, %v39, 0
  %v117 = vsel %vm55, %v40, 0
  %v120 = vsel %vm55, %v41, 0
  %v123 = vsel %vm55, %v42, 0
  %v126 = vsel %vm55, %v43, 0
  %v129 = vsel %vm55, %v44, 0
  %v132 = vsel %vm55, %v45, 0
  %v135 = vsel %vm55, %v46, 0
  %v138 = vsel %vm55, %v47, 0
  %140 = vmatprep.subr.mxu0 0.0
  %141 = vmatpush1.xpose.msra.mxu0 %v105
  %142 = vmatprep.subr.mxu0 0.0
  %143 = vmatpush1.xpose.msra.mxu0 %v108
  %144 = vmatprep.subr.mxu0 0.0
  %145 = vmatpush1.xpose.msra.mxu0 %v111
  %146 = vmatprep.subr.mxu0 0.0
  %147 = vmatpush1.xpose.msra.mxu0 %v114
  %148 = vmatprep.subr.mxu0 0.0
  %149 = vmatpush1.xpose.msra.mxu0 %v117
  %150 = vmatprep.subr.mxu0 0.0
  %151 = vmatpush1.xpose.msra.mxu0 %v120
  %152 = vmatprep.subr.mxu0 0.0
  %153 = vmatpush1.xpose.msra.mxu0 %v123
  %154 = vmatprep.subr.mxu0 0.0
  %155 = vmatpush1.xpose.msra.mxu0 %v126
  %156 = vmatprep.subr.mxu0 0.0
  %157 = vmatpush1.xpose.msra.mxu0 %v129
  %158 = vmatprep.subr.mxu0 0.0
  %159 = vmatpush1.xpose.msra.mxu0 %v132
  %160 = vmatprep.subr.mxu0 0.0
  %161 = vmatpush1.xpose.msra.mxu0 %v135
  %162 = vmatprep.subr.mxu0 0.0
  %163 = vmatpush1.xpose.msra.mxu0 %v138
  %164 = vmatprep.subr.mxu0 0.0
  %165 = vmatpush1.xpose.msra.mxu0 0.0
  %166 = vmatprep.subr.mxu0 0.0
  %167 = vmatpush1.xpose.msra.mxu0 0.0
  %168 = vmatprep.subr.mxu0 0.0
  %169 = vmatpush1.xpose.msra.mxu0 0.0
  %170 = vmatprep.subr.mxu0 0.0
  %171 = vmatpush1.xpose.msra.mxu0 0.0
  %172 = vmatprep.subr.mxu0 0.0
  %173 = vmatpush1.xpose.msra.mxu0 0.0
  %174 = vmatprep.subr.mxu0 0.0
  %175 = vmatpush1.xpose.msra.mxu0 0.0
  %176 = vmatprep.subr.mxu0 0.0
  %177 = vmatpush1.xpose.msra.mxu0 0.0
  %178 = vmatprep.subr.mxu0 0.0
  %179 = vmatpush1.xpose.msra.mxu0 0.0
  %180 = vmatprep.subr.mxu0 0.0
  %181 = vmatpush1.xpose.msra.mxu0 0.0
  %182 = vmatprep.subr.mxu0 0.0
  %183 = vmatpush1.xpose.msra.mxu0 0.0
  %184 = vmatprep.subr.mxu0 0.0
  %185 = vmatpush1.xpose.msra.mxu0 0.0
  %186 = vmatprep.subr.mxu0 0.0
  %187 = vmatpush1.xpose.msra.mxu0 0.0
  %188 = vmatprep.subr.mxu0 0.0
  %189 = vmatpush1.xpose.msra.mxu0 0.0
  %190 = vmatprep.subr.mxu0 0.0
  %191 = vmatpush1.xpose.msra.mxu0 0.0
  %192 = vmatprep.subr.mxu0 0.0
  %193 = vmatpush1.xpose.msra.mxu0 0.0
  %194 = vmatprep.subr.mxu0 0.0
  %195 = vmatpush1.xpose.msra.mxu0 0.0
  %196 = vmatprep.subr.mxu0 0.0
  %197 = vmatpush1.xpose.msra.mxu0 0.0
  %198 = vmatprep.subr.mxu0 0.0
  %199 = vmatpush1.xpose.msra.mxu0 0.0
  %200 = vmatprep.subr.mxu0 0.0
  %201 = vmatpush1.xpose.msra.mxu0 0.0
  %202 = vmatprep.subr.mxu0 0.0
  %203 = vmatpush1.xpose.msra.mxu0 0.0
  %204 = vmatprep.mubr.f32.mxu0 0.0
  %205 = vmatmul.mubr.f32.gmra.mrb[0].mxu0 %v57
  %v206 = vpop.f32.mrb[0].mxu0
  %v207 = vadd.f32 %v53, %v206
  %v208 = vpop.f32.mrb[0].mxu0
  %209 = vmatprep.mubr.f32.mxu0 0.0
  %210 = vmatmul.mubr.f32.gmra.mrb[0].mxu0 %v60
  %v211 = vpop.f32.mrb[0].mxu0
  %v212 = vadd.f32 %v53, %v211
  %v213 = vpop.f32.mrb[0].mxu0
  %214 = vmatprep.mubr.f32.mxu0 0.0
  %215 = vmatmul.mubr.f32.gmra.mrb[0].mxu0 %v63
  %v216 = vpop.f32.mrb[0].mxu0
  %v217 = vadd.f32 %v53, %v216
  %v218 = vpop.f32.mrb[0].mxu0
  %219 = vmatprep.mubr.f32.mxu0 0.0
  %220 = vmatmul.mubr.f32.gmra.mrb[0].mxu0 %v66
  %v221 = vpop.f32.mrb[0].mxu0
  %v222 = vadd.f32 %v53, %v221
  %v223 = vpop.f32.mrb[0].mxu0
  %224 = vmatprep.mubr.f32.mxu0 0.0
  %225 = vmatmul.mubr.f32.gmra.mrb[0].mxu0 %v69
  %v226 = vpop.f32.mrb[0].mxu0
  %v227 = vadd.f32 %v53, %v226
  %v228 = vpop.f32.mrb[0].mxu0
  %229 = vmatprep.mubr.f32.mxu0 0.0
  %230 = vmatmul.mubr.f32.gmra.mrb[0].mxu0 %v72
  %v231 = vpop.f32.mrb[0].mxu0
  %v232 = vadd.f32 %v53, %v231
  %v233 = vpop.f32.mrb[0].mxu0
  %234 = vmatprep.mubr.f32.mxu0 0.0
  %235 = vmatmul.mubr.f32.gmra.mrb[0].mxu0 %v75
  %v236 = vpop.f32.mrb[0].mxu0
  %v237 = vadd.f32 %v53, %v236
  %v238 = vpop.f32.mrb[0].mxu0
  %239 = vmatprep.mubr.f32.mxu0 0.0
  %240 = vmatmul.mubr.f32.gmra.mrb[0].mxu0 %v78
  %v241 = vpop.f32.mrb[0].mxu0
  %v242 = vadd.f32 %v53, %v241
  %v243 = vpop.f32.mrb[0].mxu0
  %244 = vmatprep.mubr.f32.mxu0 0.0
  %245 = vmatmul.mubr.f32.gmra.mrb[0].mxu0 %v81
  %v246 = vpop.f32.mrb[0].mxu0
  %v247 = vadd.f32 %v53, %v246
  %v248 = vpop.f32.mrb[0].mxu0
  %249 = vmatprep.mubr.f32.mxu0 0.0
  %250 = vmatmul.mubr.f32.gmra.mrb[0].mxu0 %v84
  %v251 = vpop.f32.mrb[0].mxu0
  %v252 = vadd.f32 %v53, %v251
  %v253 = vpop.f32.mrb[0].mxu0
  %254 = vmatprep.mubr.f32.mxu0 0.0
  %255 = vmatmul.mubr.f32.gmra.mrb[0].mxu0 %v87
  %v256 = vpop.f32.mrb[0].mxu0
  %v257 = vadd.f32 %v53, %v256
  %v258 = vpop.f32.mrb[0].mxu0
  %259 = vmatprep.mubr.f32.mxu0 0.0
  %260 = vmatmul.mubr.f32.gmra.mrb[0].mxu0 %v90
  %v261 = vpop.f32.mrb[0].mxu0
  %v262 = vadd.f32 %v53, %v261
  %v263 = vpop.f32.mrb[0].mxu0
  %264 = vmatprep.mubr.f32.mxu0 0.0
  %265 = vmatmul.mubr.f32.gmra.mrb[0].mxu0 %v93
  %v266 = vpop.f32.mrb[0].mxu0
  %v267 = vadd.f32 %v53, %v266
  %v268 = vpop.f32.mrb[0].mxu0
  %269 = vmatprep.mubr.f32.mxu0 0.0
  %270 = vmatmul.mubr.f32.gmra.mrb[0].mxu0 %v96
  %v271 = vpop.f32.mrb[0].mxu0
  %v272 = vadd.f32 %v53, %v271
  %v273 = vpop.f32.mrb[0].mxu0
  %274 = vmatprep.mubr.f32.mxu0 0.0
  %275 = vmatmul.mubr.f32.gmra.mrb[0].mxu0 %v99
  %v276 = vpop.f32.mrb[0].mxu0
  %v277 = vadd.f32 %v53, %v276
  %v278 = vpop.f32.mrb[0].mxu0
  %279 = vmatprep.mubr.f32.mxu0 0.0
  %280 = vmatmul.mubr.f32.gmra.mrb[0].mxu0 %v102
  %v281 = vpop.f32.mrb[0].mxu0
  %v282 = vadd.f32 %v53, %v281
  %v283 = vpop.f32.mrb[0].mxu0
  %284 = vdwg.mxu0
  %v285 = vmul.f32 %v207, 0.35355338
  %v286 = vmul.f32 %v212, 0.35355338
  %v287 = vmul.f32 %v217, 0.35355338
  %v288 = vmul.f32 %v222, 0.35355338
  %v289 = vmul.f32 %v227, 0.35355338
  %v290 = vmul.f32 %v232, 0.35355338
  %v291 = vmul.f32 %v237, 0.35355338
  %v292 = vmul.f32 %v242, 0.35355338
  %301 = vrot.lane.b32.xlu0 %v207, 96
  %v302 = vpop.permute.xlu0 %301
  %303 = vrot.lane.b32.xlu0 %v212, 96
  %v304 = vpop.permute.xlu0 %303
  %305 = vrot.lane.b32.xlu0 %v217, 96
  %v306 = vpop.permute.xlu0 %305
  %307 = vrot.lane.b32.xlu0 %v222, 96
  %v308 = vpop.permute.xlu0 %307
  %309 = vrot.lane.b32.xlu0 %v227, 96
  %v310 = vpop.permute.xlu0 %309
  %311 = vrot.lane.b32.xlu0 %v232, 96
  %v312 = vpop.permute.xlu0 %311
  %313 = vrot.lane.b32.xlu0 %v237, 96
  %v314 = vpop.permute.xlu0 %313
  %315 = vrot.lane.b32.xlu0 %v242, 96
  %v316 = vpop.permute.xlu0 %315
  %vm317 = vcmask 64512
  %v319 = vsel %vm317, %v285, 0
  %v322 = vsel %vm317, %v286, 0
  %v325 = vsel %vm317, %v287, 0
  %v328 = vsel %vm317, %v288, 0
  %v331 = vsel %vm317, %v289, 0
  %v334 = vsel %vm317, %v290, 0
  %v337 = vsel %vm317, %v291, 0
  %v340 = vsel %vm317, %v292, 0
  %v342 = vsel %vm317, %v302, 0
  %v344 = vsel %vm317, %v304, 0
  %v346 = vsel %vm317, %v306, 0
  %v348 = vsel %vm317, %v308, 0
  %v350 = vsel %vm317, %v310, 0
  %v352 = vsel %vm317, %v312, 0
  %v354 = vsel %vm317, %v314, 0
  %v356 = vsel %vm317, %v316, 0
  %358 = vmatprep.subr.mxu0 0.0
  %359 = vmatpush1.xpose.msra.mxu0 %v342
  %360 = vmatprep.subr.mxu0 0.0
  %361 = vmatpush1.xpose.msra.mxu0 %v344
  %362 = vmatprep.subr.mxu0 0.0
  %363 = vmatpush1.xpose.msra.mxu0 %v346
  %364 = vmatprep.subr.mxu0 0.0
  %365 = vmatpush1.xpose.msra.mxu0 %v348
  %366 = vmatprep.subr.mxu0 0.0
  %367 = vmatpush1.xpose.msra.mxu0 %v350
  %368 = vmatprep.subr.mxu0 0.0
  %369 = vmatpush1.xpose.msra.mxu0 %v352
  %370 = vmatprep.subr.mxu0 0.0
  %371 = vmatpush1.xpose.msra.mxu0 %v354
  %372 = vmatprep.subr.mxu0 0.0
  %373 = vmatpush1.xpose.msra.mxu0 %v356
  %374 = vmatprep.subr.mxu0 0.0
  %375 = vmatpush1.xpose.msra.mxu0 0.0
  %376 = vmatprep.subr.mxu0 0.0
  %377 = vmatpush1.xpose.msra.mxu0 0.0
  %378 = vmatprep.subr.mxu0 0.0
  %379 = vmatpush1.xpose.msra.mxu0 0.0
  %380 = vmatprep.subr.mxu0 0.0
  %381 = vmatpush1.xpose.msra.mxu0 0.0
  %382 = vmatprep.subr.mxu0 0.0
  %383 = vmatpush1.xpose.msra.mxu0 0.0
  %384 = vmatprep.subr.mxu0 0.0
  %385 = vmatpush1.xpose.msra.mxu0 0.0
  %386 = vmatprep.subr.mxu0 0.0
  %387 = vmatpush1.xpose.msra.mxu0 0.0
  %388 = vmatprep.subr.mxu0 0.0
  %389 = vmatpush1.xpose.msra.mxu0 0.0
  %390 = vmatprep.subr.mxu0 0.0
  %391 = vmatpush1.xpose.msra.mxu0 0.0
  %392 = vmatprep.subr.mxu0 0.0
  %393 = vmatpush1.xpose.msra.mxu0 0.0
  %394 = vmatprep.subr.mxu0 0.0
  %395 = vmatpush1.xpose.msra.mxu0 0.0
  %396 = vmatprep.subr.mxu0 0.0
  %397 = vmatpush1.xpose.msra.mxu0 0.0
  %398 = vmatprep.subr.mxu0 0.0
  %399 = vmatpush1.xpose.msra.mxu0 0.0
  %400 = vmatprep.subr.mxu0 0.0
  %401 = vmatpush1.xpose.msra.mxu0 0.0
  %402 = vmatprep.subr.mxu0 0.0
  %403 = vmatpush1.xpose.msra.mxu0 0.0
  %404 = vmatprep.subr.mxu0 0.0
  %405 = vmatpush1.xpose.msra.mxu0 0.0
  %406 = vmatprep.subr.mxu0 0.0
  %407 = vmatpush1.xpose.msra.mxu0 0.0
  %408 = vmatprep.subr.mxu0 0.0
  %409 = vmatpush1.xpose.msra.mxu0 0.0
  %410 = vmatprep.subr.mxu0 0.0
  %411 = vmatpush1.xpose.msra.mxu0 0.0
  %412 = vmatprep.subr.mxu0 0.0
  %413 = vmatpush1.xpose.msra.mxu0 0.0
  %414 = vmatprep.subr.mxu0 0.0
  %415 = vmatpush1.xpose.msra.mxu0 0.0
  %416 = vmatprep.subr.mxu0 0.0
  %417 = vmatpush1.xpose.msra.mxu0 0.0
  %418 = vmatprep.subr.mxu0 0.0
  %419 = vmatpush1.xpose.msra.mxu0 0.0
  %420 = vmatprep.subr.mxu0 0.0
  %421 = vmatpush1.xpose.msra.mxu0 0.0
  %422 = vmatprep.mubr.f32.mxu0 0.0
  %423 = vmatmul.mubr.f32.gmra.mrb[0].mxu0 %v319
  %v424 = vpop.f32.mrb[0].mxu0
  %v425 = vadd.f32 0.0, %v424
  %v426 = vpop.f32.mrb[0].mxu0
  %427 = vmatprep.mubr.f32.mxu0 0.0
  %428 = vmatmul.mubr.f32.gmra.mrb[0].mxu0 %v322
  %v429 = vpop.f32.mrb[0].mxu0
  %v430 = vadd.f32 0.0, %v429
  %v431 = vpop.f32.mrb[0].mxu0
  %432 = vmatprep.mubr.f32.mxu0 0.0
  %433 = vmatmul.mubr.f32.gmra.mrb[0].mxu0 %v325
  %v434 = vpop.f32.mrb[0].mxu0
  %v435 = vadd.f32 0.0, %v434
  %v436 = vpop.f32.mrb[0].mxu0
  %437 = vmatprep.mubr.f32.mxu0 0.0
  %438 = vmatmul.mubr.f32.gmra.mrb[0].mxu0 %v328
  %v439 = vpop.f32.mrb[0].mxu0
  %v440 = vadd.f32 0.0, %v439
  %v441 = vpop.f32.mrb[0].mxu0
  %442 = vmatprep.mubr.f32.mxu0 0.0
  %443 = vmatmul.mubr.f32.gmra.mrb[0].mxu0 %v331
  %v444 = vpop.f32.mrb[0].mxu0
  %v445 = vadd.f32 0.0, %v444
  %v446 = vpop.f32.mrb[0].mxu0
  %447 = vmatprep.mubr.f32.mxu0 0.0
  %448 = vmatmul.mubr.f32.gmra.mrb[0].mxu0 %v334
  %v449 = vpop.f32.mrb[0].mxu0
  %v450 = vadd.f32 0.0, %v449
  %v451 = vpop.f32.mrb[0].mxu0
  %452 = vmatprep.mubr.f32.mxu0 0.0
  %453 = vmatmul.mubr.f32.gmra.mrb[0].mxu0 %v337
  %v454 = vpop.f32.mrb[0].mxu0
  %v455 = vadd.f32 0.0, %v454
  %v456 = vpop.f32.mrb[0].mxu0
  %457 = vmatprep.mubr.f32.mxu0 0.0
  %458 = vmatmul.mubr.f32.gmra.mrb[0].mxu0 %v340
  %v459 = vpop.f32.mrb[0].mxu0
  %v460 = vadd.f32 0.0, %v459
  %v461 = vpop.f32.mrb[0].mxu0
  %462 = vdwg.mxu0
  %vm463 = vcmask 523264
  %v464 = vsel %vm463, %v425, -inf
  %465 = vmax.xlane.f32.xlu0 %v464
  %v466 = vpop.xlane.xlu0 %465
  %v467 = vsel %vm463, %v430, -inf
  %468 = vmax.xlane.f32.xlu0 %v467
  %v469 = vpop.xlane.xlu0 %468
  %v470 = vsel %vm463, %v435, -inf
  %471 = vmax.xlane.f32.xlu0 %v470
  %v472 = vpop.xlane.xlu0 %471
  %v473 = vsel %vm463, %v440, -inf
  %474 = vmax.xlane.f32.xlu0 %v473
  %v475 = vpop.xlane.xlu0 %474
  %v476 = vsel %vm463, %v445, -inf
  %477 = vmax.xlane.f32.xlu0 %v476
  %v478 = vpop.xlane.xlu0 %477
  %v479 = vsel %vm463, %v450, -inf
  %480 = vmax.xlane.f32.xlu0 %v479
  %v481 = vpop.xlane.xlu0 %480
  %v482 = vsel %vm463, %v455, -inf
  %483 = vmax.xlane.f32.xlu0 %v482
  %v484 = vpop.xlane.xlu0 %483
  %v485 = vsel %vm463, %v460, -inf
  %486 = vmax.xlane.f32.xlu0 %v485
  %v487 = vpop.xlane.xlu0 %486
  %v488 = vsub.f32 %v425, %v466
  %v489 = vsub.f32 %v430, %v469
  %v490 = vsub.f32 %v435, %v472
  %v491 = vsub.f32 %v440, %v475
  %v492 = vsub.f32 %v445, %v478
  %v493 = vsub.f32 %v450, %v481
  %v494 = vsub.f32 %v455, %v484
  %v495 = vsub.f32 %v460, %v487
  %v496 = vmul.f32 %v488, 1.442695
  %v497 = vpow.pop %v496
  %v498 = vmul.f32 %v489, 1.442695
  %v499 = vpow.pop %v498
  %v500 = vmul.f32 %v490, 1.442695
  %v501 = vpow.pop %v500
  %v502 = vmul.f32 %v491, 1.442695
  %v503 = vpow.pop %v502
  %v504 = vmul.f32 %v492, 1.442695
  %v505 = vpow.pop %v504
  %v506 = vmul.f32 %v493, 1.442695
  %v507 = vpow.pop %v506
  %v508 = vmul.f32 %v494, 1.442695
  %v509 = vpow.pop %v508
  %v510 = vmul.f32 %v495, 1.442695
  %v511 = vpow.pop %v510
  %v512 = vsel %vm463, %v497, 0.0
  %513 = vadd.xlane.f32.xlu0 %v512
  %v514 = vpop.xlane.xlu0 %513
  %v515 = vsel %vm463, %v499, 0.0
  %516 = vadd.xlane.f32.xlu0 %v515
  %v517 = vpop.xlane.xlu0 %516
  %v518 = vsel %vm463, %v501, 0.0
  %519 = vadd.xlane.f32.xlu0 %v518
  %v520 = vpop.xlane.xlu0 %519
  %v521 = vsel %vm463, %v503, 0.0
  %522 = vadd.xlane.f32.xlu0 %v521
  %v523 = vpop.xlane.xlu0 %522
  %v524 = vsel %vm463, %v505, 0.0
  %525 = vadd.xlane.f32.xlu0 %v524
  %v526 = vpop.xlane.xlu0 %525
  %v527 = vsel %vm463, %v507, 0.0
  %528 = vadd.xlane.f32.xlu0 %v527
  %v529 = vpop.xlane.xlu0 %528
  %v530 = vsel %vm463, %v509, 0.0
  %531 = vadd.xlane.f32.xlu0 %v530
  %v532 = vpop.xlane.xlu0 %531
  %v533 = vsel %vm463, %v511, 0.0
  %534 = vadd.xlane.f32.xlu0 %v533
  %v535 = vpop.xlane.xlu0 %534
  %536 = vrot.lane.b32.xlu0 %v207, 64
  %v537 = vpop.permute.xlu0 %536
  %538 = vrot.lane.b32.xlu0 %v212, 64
  %v539 = vpop.permute.xlu0 %538
  %540 = vrot.lane.b32.xlu0 %v217, 64
  %v541 = vpop.permute.xlu0 %540
  %542 = vrot.lane.b32.xlu0 %v222, 64
  %v543 = vpop.permute.xlu0 %542
  %544 = vrot.lane.b32.xlu0 %v227, 64
  %v545 = vpop.permute.xlu0 %544
  %546 = vrot.lane.b32.xlu0 %v232, 64
  %v547 = vpop.permute.xlu0 %546
  %548 = vrot.lane.b32.xlu0 %v237, 64
  %v549 = vpop.permute.xlu0 %548
  %550 = vrot.lane.b32.xlu0 %v242, 64
  %v551 = vpop.permute.xlu0 %550
  %v561 = vsel %vm463, %v497, 0
  %v564 = vsel %vm463, %v499, 0
  %v567 = vsel %vm463, %v501, 0
  %v570 = vsel %vm463, %v503, 0
  %v573 = vsel %vm463, %v505, 0
  %v576 = vsel %vm463, %v507, 0
  %v579 = vsel %vm463, %v509, 0
  %v582 = vsel %vm463, %v511, 0
  %584 = vmatprep.subr.mxu0 0.0
  %585 = vmatpush1.msra.mxu0 %v537
  %586 = vmatprep.subr.mxu0 0.0
  %587 = vmatpush1.msra.mxu0 %v539
  %588 = vmatprep.subr.mxu0 0.0
  %589 = vmatpush1.msra.mxu0 %v541
  %590 = vmatprep.subr.mxu0 0.0
  %591 = vmatpush1.msra.mxu0 %v543
  %592 = vmatprep.subr.mxu0 0.0
  %593 = vmatpush1.msra.mxu0 %v545
  %594 = vmatprep.subr.mxu0 0.0
  %595 = vmatpush1.msra.mxu0 %v547
  %596 = vmatprep.subr.mxu0 0.0
  %597 = vmatpush1.msra.mxu0 %v549
  %598 = vmatprep.subr.mxu0 0.0
  %599 = vmatpush1.msra.mxu0 %v551
  %600 = vmatprep.subr.mxu0 0.0
  %601 = vmatpush1.msra.mxu0 0.0
  %602 = vmatprep.subr.mxu0 0.0
  %603 = vmatpush1.msra.mxu0 0.0
  %604 = vmatprep.subr.mxu0 0.0
  %605 = vmatpush1.msra.mxu0 0.0
  %606 = vmatprep.subr.mxu0 0.0
  %607 = vmatpush1.msra.mxu0 0.0
  %608 = vmatprep.subr.mxu0 0.0
  %609 = vmatpush1.msra.mxu0 0.0
  %610 = vmatprep.subr.mxu0 0.0
  %611 = vmatpush1.msra.mxu0 0.0
  %612 = vmatprep.subr.mxu0 0.0
  %613 = vmatpush1.msra.mxu0 0.0
  %614 = vmatprep.subr.mxu0 0.0
  %615 = vmatpush1.msra.mxu0 0.0
  %616 = vmatprep.subr.mxu0 0.0
  %617 = vmatpush1.msra.mxu0 0.0
  %618 = vmatprep.subr.mxu0 0.0
  %619 = vmatpush1.msra.mxu0 0.0
  %620 = vmatprep.subr.mxu0 0.0
  %621 = vmatpush1.msra.mxu0 0.0
  %622 = vmatprep.subr.mxu0 0.0
  %623 = vmatpush1.msra.mxu0 0.0
  %624 = vmatprep.subr.mxu0 0.0
  %625 = vmatpush1.msra.mxu0 0.0
  %626 = vmatprep.subr.mxu0 0.0
  %627 = vmatpush1.msra.mxu0 0.0
  %628 = vmatprep.subr.mxu0 0.0
  %629 = vmatpush1.msra.mxu0 0.0
  %630 = vmatprep.subr.mxu0 0.0
  %631 = vmatpush1.msra.mxu0 0.0
  %632 = vmatprep.subr.mxu0 0.0
  %633 = vmatpush1.msra.mxu0 0.0
  %634 = vmatprep.subr.mxu0 0.0
  %635 = vmatpush1.msra.mxu0 0.0
  %636 = vmatprep.subr.mxu0 0.0
  %637 = vmatpush1.msra.mxu0 0.0
  %638 = vmatprep.subr.mxu0 0.0
  %639 = vmatpush1.msra.mxu0 0.0
  %640 = vmatprep.subr.mxu0 0.0
  %641 = vmatpush1.msra.mxu0 0.0
  %642 = vmatprep.subr.mxu0 0.0
  %643 = vmatpush1.msra.mxu0 0.0
  %644 = vmatprep.subr.mxu0 0.0
  %645 = vmatpush1.msra.mxu0 0.0
  %646 = vmatprep.subr.mxu0 0.0
  %647 = vmatpush1.msra.mxu0 0.0
  %648 = vmatprep.mubr.f32.mxu0 0.0
  %649 = vmatmul.mubr.f32.gmra.mrb[0].mxu0 %v561
  %v650 = vpop.f32.mrb[0].mxu0
  %v651 = vadd.f32 0.0, %v650
  %v652 = vpop.f32.mrb[0].mxu0
  %653 = vmatprep.mubr.f32.mxu0 0.0
  %654 = vmatmul.mubr.f32.gmra.mrb[0].mxu0 %v564
  %v655 = vpop.f32.mrb[0].mxu0
  %v656 = vadd.f32 0.0, %v655
  %v657 = vpop.f32.mrb[0].mxu0
  %658 = vmatprep.mubr.f32.mxu0 0.0
  %659 = vmatmul.mubr.f32.gmra.mrb[0].mxu0 %v567
  %v660 = vpop.f32.mrb[0].mxu0
  %v661 = vadd.f32 0.0, %v660
  %v662 = vpop.f32.mrb[0].mxu0
  %663 = vmatprep.mubr.f32.mxu0 0.0
  %664 = vmatmul.mubr.f32.gmra.mrb[0].mxu0 %v570
  %v665 = vpop.f32.mrb[0].mxu0
  %v666 = vadd.f32 0.0, %v665
  %v667 = vpop.f32.mrb[0].mxu0
  %668 = vmatprep.mubr.f32.mxu0 0.0
  %669 = vmatmul.mubr.f32.gmra.mrb[0].mxu0 %v573
  %v670 = vpop.f32.mrb[0].mxu0
  %v671 = vadd.f32 0.0, %v670
  %v672 = vpop.f32.mrb[0].mxu0
  %673 = vmatprep.mubr.f32.mxu0 0.0
  %674 = vmatmul.mubr.f32.gmra.mrb[0].mxu0 %v576
  %v675 = vpop.f32.mrb[0].mxu0
  %v676 = vadd.f32 0.0, %v675
  %v677 = vpop.f32.mrb[0].mxu0
  %678 = vmatprep.mubr.f32.mxu0 0.0
  %679 = vmatmul.mubr.f32.gmra.mrb[0].mxu0 %v579
  %v680 = vpop.f32.mrb[0].mxu0
  %v681 = vadd.f32 0.0, %v680
  %v682 = vpop.f32.mrb[0].mxu0
  %683 = vmatprep.mubr.f32.mxu0 0.0
  %684 = vmatmul.mubr.f32.gmra.mrb[0].mxu0 %v582
  %v685 = vpop.f32.mrb[0].mxu0
  %v686 = vadd.f32 0.0, %v685
  %v687 = vpop.f32.mrb[0].mxu0
  %688 = vdwg.mxu0
  %v689 = vrcp.pop %v514
  %v690 = vrcp.pop %v517
  %v691 = vrcp.pop %v520
  %v692 = vrcp.pop %v523
  %v693 = vrcp.pop %v526
  %v694 = vrcp.pop %v529
  %v695 = vrcp.pop %v532
  %v696 = vrcp.pop %v535
  %v697 = vmul.f32 %v651, %v689
  %v698 = vmul.f32 %v656, %v690
  %v699 = vmul.f32 %v661, %v691
  %v700 = vmul.f32 %v666, %v692
  %v701 = vmul.f32 %v671, %v693
  %v702 = vmul.f32 %v676, %v694
  %v703 = vmul.f32 %v681, %v695
  %v704 = vmul.f32 %v686, %v696
  %705 = vst.msk [vmem:[#allocation2] sm:$0xff] %vm317, %v697
  %706 = vst.msk [vmem:[#allocation2 + $0x8] sm:$0xff] %vm317, %v698
  %707 = vst.msk [vmem:[#allocation2 + $0x10] sm:$0xff] %vm317, %v699
  %708 = vst.msk [vmem:[#allocation2 + $0x18] sm:$0xff] %vm317, %v700
  %709 = vst.msk [vmem:[#allocation2 + $0x20] sm:$0xff] %vm317, %v701
  %710 = vst.msk [vmem:[#allocation2 + $0x28] sm:$0xff] %vm317, %v702
  %711 = vst.msk [vmem:[#allocation2 + $0x30] sm:$0xff] %vm317, %v703
  %712 = vst.msk [vmem:[#allocation2 + $0x38] sm:$0xff] %vm317, %v704
  %713 = vrot.lane.b32.xlu0 %v285, 120
  %v714 = vpop.permute.xlu0 %713
  %715 = vrot.lane.b32.xlu0 %v286, 120
  %v716 = vpop.permute.xlu0 %715
  %717 = vrot.lane.b32.xlu0 %v287, 120
  %v718 = vpop.permute.xlu0 %717
  %719 = vrot.lane.b32.xlu0 %v288, 120
  %v720 = vpop.permute.xlu0 %719
  %721 = vrot.lane.b32.xlu0 %v289, 120
  %v722 = vpop.permute.xlu0 %721
  %723 = vrot.lane.b32.xlu0 %v290, 120
  %v724 = vpop.permute.xlu0 %723
  %725 = vrot.lane.b32.xlu0 %v291, 120
  %v726 = vpop.permute.xlu0 %725
  %727 = vrot.lane.b32.xlu0 %v292, 120
  %v728 = vpop.permute.xlu0 %727
  %729 = vrot.lane.b32.xlu0 %v207, 88
  %v730 = vpop.permute.xlu0 %729
  %731 = vrot.lane.b32.xlu0 %v212, 88
  %v732 = vpop.permute.xlu0 %731
  %733 = vrot.lane.b32.xlu0 %v217, 88
  %v734 = vpop.permute.xlu0 %733
  %735 = vrot.lane.b32.xlu0 %v222, 88
  %v736 = vpop.permute.xlu0 %735
  %737 = vrot.lane.b32.xlu0 %v227, 88
  %v738 = vpop.permute.xlu0 %737
  %739 = vrot.lane.b32.xlu0 %v232, 88
  %v740 = vpop.permute.xlu0 %739
  %741 = vrot.lane.b32.xlu0 %v237, 88
  %v742 = vpop.permute.xlu0 %741
  %743 = vrot.lane.b32.xlu0 %v242, 88
  %v744 = vpop.permute.xlu0 %743
  %v745 = vsel %vm317, %v714, 0
  %v747 = vsel %vm317, %v716, 0
  %v749 = vsel %vm317, %v718, 0
  %v751 = vsel %vm317, %v720, 0
  %v753 = vsel %vm317, %v722, 0
  %v755 = vsel %vm317, %v724, 0
  %v757 = vsel %vm317, %v726, 0
  %v759 = vsel %vm317, %v728, 0
  %v761 = vsel %vm317, %v730, 0
  %v763 = vsel %vm317, %v732, 0
  %v765 = vsel %vm317, %v734, 0
  %v767 = vsel %vm317, %v736, 0
  %v769 = vsel %vm317, %v738, 0
  %v771 = vsel %vm317, %v740, 0
  %v773 = vsel %vm317, %v742, 0
  %v775 = vsel %vm317, %v744, 0
  %777 = vmatprep.subr.mxu0 0.0
  %778 = vmatpush1.xpose.msra.mxu0 %v761
  %779 = vmatprep.subr.mxu0 0.0
  %780 = vmatpush1.xpose.msra.mxu0 %v763
  %781 = vmatprep.subr.mxu0 0.0
  %782 = vmatpush1.xpose.msra.mxu0 %v765
  %783 = vmatprep.subr.mxu0 0.0
  %784 = vmatpush1.xpose.msra.mxu0 %v767
  %785 = vmatprep.subr.mxu0 0.0
  %786 = vmatpush1.xpose.msra.mxu0 %v769
  %787 = vmatprep.subr.mxu0 0.0
  %788 = vmatpush1.xpose.msra.mxu0 %v771
  %789 = vmatprep.subr.mxu0 0.0
  %790 = vmatpush1.xpose.msra.mxu0 %v773
  %791 = vmatprep.subr.mxu0 0.0
  %792 = vmatpush1.xpose.msra.mxu0 %v775
  %793 = vmatprep.subr.mxu0 0.0
  %794 = vmatpush1.xpose.msra.mxu0 0.0
  %795 = vmatprep.subr.mxu0 0.0
  %796 = vmatpush1.xpose.msra.mxu0 0.0
  %797 = vmatprep.subr.mxu0 0.0
  %798 = vmatpush1.xpose.msra.mxu0 0.0
  %799 = vmatprep.subr.mxu0 0.0
  %800 = vmatpush1.xpose.msra.mxu0 0.0
  %801 = vmatprep.subr.mxu0 0.0
  %802 = vmatpush1.xpose.msra.mxu0 0.0
  %803 = vmatprep.subr.mxu0 0.0
  %804 = vmatpush1.xpose.msra.mxu0 0.0
  %805 = vmatprep.subr.mxu0 0.0
  %806 = vmatpush1.xpose.msra.mxu0 0.0
  %807 = vmatprep.subr.mxu0 0.0
  %808 = vmatpush1.xpose.msra.mxu0 0.0
  %809 = vmatprep.subr.mxu0 0.0
  %810 = vmatpush1.xpose.msra.mxu0 0.0
  %811 = vmatprep.subr.mxu0 0.0
  %812 = vmatpush1.xpose.msra.mxu0 0.0
  %813 = vmatprep.subr.mxu0 0.0
  %814 = vmatpush1.xpose.msra.mxu0 0.0
  %815 = vmatprep.subr.mxu0 0.0
  %816 = vmatpush1.xpose.msra.mxu0 0.0
  %817 = vmatprep.subr.mxu0 0.0
  %818 = vmatpush1.xpose.msra.mxu0 0.0
  %819 = vmatprep.subr.mxu0 0.0
  %820 = vmatpush1.xpose.msra.mxu0 0.0
  %821 = vmatprep.subr.mxu0 0.0
  %822 = vmatpush1.xpose.msra.mxu0 0.0
  %823 = vmatprep.subr.mxu0 0.0
  %824 = vmatpush1.xpose.msra.mxu0 0.0
  %825 = vmatprep.subr.mxu0 0.0
  %826 = vmatpush1.xpose.msra.mxu0 0.0
  %827 = vmatprep.subr.mxu0 0.0
  %828 = vmatpush1.xpose.msra.mxu0 0.0
  %829 = vmatprep.subr.mxu0 0.0
  %830 = vmatpush1.xpose.msra.mxu0 0.0
  %831 = vmatprep.subr.mxu0 0.0
  %832 = vmatpush1.xpose.msra.mxu0 0.0
  %833 = vmatprep.subr.mxu0 0.0
  %834 = vmatpush1.xpose.msra.mxu0 0.0
  %835 = vmatprep.subr.mxu0 0.0
  %836 = vmatpush1.xpose.msra.mxu0 0.0
  %837 = vmatprep.subr.mxu0 0.0
  %838 = vmatpush1.xpose.msra.mxu0 0.0
  %839 = vmatprep.subr.mxu0 0.0
  %840 = vmatpush1.xpose.msra.mxu0 0.0
  %841 = vmatprep.mubr.f32.mxu0 0.0
  %842 = vmatmul.mubr.f32.gmra.mrb[0].mxu0 %v745
  %v843 = vpop.f32.mrb[0].mxu0
  %v844 = vadd.f32 0.0, %v843
  %v845 = vpop.f32.mrb[0].mxu0
  %846 = vmatprep.mubr.f32.mxu0 0.0
  %847 = vmatmul.mubr.f32.gmra.mrb[0].mxu0 %v747
  %v848 = vpop.f32.mrb[0].mxu0
  %v849 = vadd.f32 0.0, %v848
  %v850 = vpop.f32.mrb[0].mxu0
  %851 = vmatprep.mubr.f32.mxu0 0.0
  %852 = vmatmul.mubr.f32.gmra.mrb[0].mxu0 %v749
  %v853 = vpop.f32.mrb[0].mxu0
  %v854 = vadd.f32 0.0, %v853
  %v855 = vpop.f32.mrb[0].mxu0
  %856 = vmatprep.mubr.f32.mxu0 0.0
  %857 = vmatmul.mubr.f32.gmra.mrb[0].mxu0 %v751
  %v858 = vpop.f32.mrb[0].mxu0
  %v859 = vadd.f32 0.0, %v858
  %v860 = vpop.f32.mrb[0].mxu0
  %861 = vmatprep.mubr.f32.mxu0 0.0
  %862 = vmatmul.mubr.f32.gmra.mrb[0].mxu0 %v753
  %v863 = vpop.f32.mrb[0].mxu0
  %v864 = vadd.f32 0.0, %v863
  %v865 = vpop.f32.mrb[0].mxu0
  %866 = vmatprep.mubr.f32.mxu0 0.0
  %867 = vmatmul.mubr.f32.gmra.mrb[0].mxu0 %v755
  %v868 = vpop.f32.mrb[0].mxu0
  %v869 = vadd.f32 0.0, %v868
  %v870 = vpop.f32.mrb[0].mxu0
  %871 = vmatprep.mubr.f32.mxu0 0.0
  %872 = vmatmul.mubr.f32.gmra.mrb[0].mxu0 %v757
  %v873 = vpop.f32.mrb[0].mxu0
  %v874 = vadd.f32 0.0, %v873
  %v875 = vpop.f32.mrb[0].mxu0
  %876 = vmatprep.mubr.f32.mxu0 0.0
  %877 = vmatmul.mubr.f32.gmra.mrb[0].mxu0 %v759
  %v878 = vpop.f32.mrb[0].mxu0
  %v879 = vadd.f32 0.0, %v878
  %v880 = vpop.f32.mrb[0].mxu0
  %881 = vdwg.mxu0
  %v882 = vsel %vm463, %v844, -inf
  %883 = vmax.xlane.f32.xlu0 %v882
  %v884 = vpop.xlane.xlu0 %883
  %v885 = vsel %vm463, %v849, -inf
  %886 = vmax.xlane.f32.xlu0 %v885
  %v887 = vpop.xlane.xlu0 %886
  %v888 = vsel %vm463, %v854, -inf
  %889 = vmax.xlane.f32.xlu0 %v888
  %v890 = vpop.xlane.xlu0 %889
  %v891 = vsel %vm463, %v859, -inf
  %892 = vmax.xlane.f32.xlu0 %v891
  %v893 = vpop.xlane.xlu0 %892
  %v894 = vsel %vm463, %v864, -inf
  %895 = vmax.xlane.f32.xlu0 %v894
  %v896 = vpop.xlane.xlu0 %895
  %v897 = vsel %vm463, %v869, -inf
  %898 = vmax.xlane.f32.xlu0 %v897
  %v899 = vpop.xlane.xlu0 %898
  %v900 = vsel %vm463, %v874, -inf
  %901 = vmax.xlane.f32.xlu0 %v900
  %v902 = vpop.xlane.xlu0 %901
  %v903 = vsel %vm463, %v879, -inf
  %904 = vmax.xlane.f32.xlu0 %v903
  %v905 = vpop.xlane.xlu0 %904
  %v906 = vsub.f32 %v844, %v884
  %v907 = vsub.f32 %v849, %v887
  %v908 = vsub.f32 %v854, %v890
  %v909 = vsub.f32 %v859, %v893
  %v910 = vsub.f32 %v864, %v896
  %v911 = vsub.f32 %v869, %v899
  %v912 = vsub.f32 %v874, %v902
  %v913 = vsub.f32 %v879, %v905
  %v914 = vmul.f32 %v906, 1.442695
  %v915 = vpow.pop %v914
  %v916 = vmul.f32 %v907, 1.442695
  %v917 = vpow.pop %v916
  %v918 = vmul.f32 %v908, 1.442695
  %v919 = vpow.pop %v918
  %v920 = vmul.f32 %v909, 1.442695
  %v921 = vpow.pop %v920
  %v922 = vmul.f32 %v910, 1.442695
  %v923 = vpow.pop %v922
  %v924 = vmul.f32 %v911, 1.442695
  %v925 = vpow.pop %v924
  %v926 = vmul.f32 %v912, 1.442695
  %v927 = vpow.pop %v926
  %v928 = vmul.f32 %v913, 1.442695
  %v929 = vpow.pop %v928
  %v930 = vsel %vm463, %v915, 0.0
  %931 = vadd.xlane.f32.xlu0 %v930
  %v932 = vpop.xlane.xlu0 %931
  %v933 = vsel %vm463, %v917, 0.0
  %934 = vadd.xlane.f32.xlu0 %v933
  %v935 = vpop.xlane.xlu0 %934
  %v936 = vsel %vm463, %v919, 0.0
  %937 = vadd.xlane.f32.xlu0 %v936
  %v938 = vpop.xlane.xlu0 %937
  %v939 = vsel %vm463, %v921, 0.0
  %940 = vadd.xlane.f32.xlu0 %v939
  %v941 = vpop.xlane.xlu0 %940
  %v942 = vsel %vm463, %v923, 0.0
  %943 = vadd.xlane.f32.xlu0 %v942
  %v944 = vpop.xlane.xlu0 %943
  %v945 = vsel %vm463, %v925, 0.0
  %946 = vadd.xlane.f32.xlu0 %v945
  %v947 = vpop.xlane.xlu0 %946
  %v948 = vsel %vm463, %v927, 0.0
  %949 = vadd.xlane.f32.xlu0 %v948
  %v950 = vpop.xlane.xlu0 %949
  %v951 = vsel %vm463, %v929, 0.0
  %952 = vadd.xlane.f32.xlu0 %v951
  %v953 = vpop.xlane.xlu0 %952
  %954 = vrot.lane.b32.xlu0 %v207, 56
  %v955 = vpop.permute.xlu0 %954
  %956 = vrot.lane.b32.xlu0 %v212, 56
  %v957 = vpop.permute.xlu0 %956
  %958 = vrot.lane.b32.xlu0 %v217, 56
  %v959 = vpop.permute.xlu0 %958
  %960 = vrot.lane.b32.xlu0 %v222, 56
  %v961 = vpop.permute.xlu0 %960
  %962 = vrot.lane.b32.xlu0 %v227, 56
  %v963 = vpop.permute.xlu0 %962
  %964 = vrot.lane.b32.xlu0 %v232, 56
  %v965 = vpop.permute.xlu0 %964
  %966 = vrot.lane.b32.xlu0 %v237, 56
  %v967 = vpop.permute.xlu0 %966
  %968 = vrot.lane.b32.xlu0 %v242, 56
  %v969 = vpop.permute.xlu0 %968
  %v979 = vsel %vm463, %v915, 0
  %v982 = vsel %vm463, %v917, 0
  %v985 = vsel %vm463, %v919, 0
  %v988 = vsel %vm463, %v921, 0
  %v991 = vsel %vm463, %v923, 0
  %v994 = vsel %vm463, %v925, 0
  %v997 = vsel %vm463, %v927, 0
  %v1000 = vsel %vm463, %v929, 0
  %1002 = vmatprep.subr.mxu0 0.0
  %1003 = vmatpush1.msra.mxu0 %v955
  %1004 = vmatprep.subr.mxu0 0.0
  %1005 = vmatpush1.msra.mxu0 %v957
  %1006 = vmatprep.subr.mxu0 0.0
  %1007 = vmatpush1.msra.mxu0 %v959
  %1008 = vmatprep.subr.mxu0 0.0
  %1009 = vmatpush1.msra.mxu0 %v961
  %1010 = vmatprep.subr.mxu0 0.0
  %1011 = vmatpush1.msra.mxu0 %v963
  %1012 = vmatprep.subr.mxu0 0.0
  %1013 = vmatpush1.msra.mxu0 %v965
  %1014 = vmatprep.subr.mxu0 0.0
  %1015 = vmatpush1.msra.mxu0 %v967
  %1016 = vmatprep.subr.mxu0 0.0
  %1017 = vmatpush1.msra.mxu0 %v969
  %1018 = vmatprep.subr.mxu0 0.0
  %1019 = vmatpush1.msra.mxu0 0.0
  %1020 = vmatprep.subr.mxu0 0.0
  %1021 = vmatpush1.msra.mxu0 0.0
  %1022 = vmatprep.subr.mxu0 0.0
  %1023 = vmatpush1.msra.mxu0 0.0
  %1024 = vmatprep.subr.mxu0 0.0
  %1025 = vmatpush1.msra.mxu0 0.0
  %1026 = vmatprep.subr.mxu0 0.0
  %1027 = vmatpush1.msra.mxu0 0.0
  %1028 = vmatprep.subr.mxu0 0.0
  %1029 = vmatpush1.msra.mxu0 0.0
  %1030 = vmatprep.subr.mxu0 0.0
  %1031 = vmatpush1.msra.mxu0 0.0
  %1032 = vmatprep.subr.mxu0 0.0
  %1033 = vmatpush1.msra.mxu0 0.0
  %1034 = vmatprep.subr.mxu0 0.0
  %1035 = vmatpush1.msra.mxu0 0.0
  %1036 = vmatprep.subr.mxu0 0.0
  %1037 = vmatpush1.msra.mxu0 0.0
  %1038 = vmatprep.subr.mxu0 0.0
  %1039 = vmatpush1.msra.mxu0 0.0
  %1040 = vmatprep.subr.mxu0 0.0
  %1041 = vmatpush1.msra.mxu0 0.0
  %1042 = vmatprep.subr.mxu0 0.0
  %1043 = vmatpush1.msra.mxu0 0.0
  %1044 = vmatprep.subr.mxu0 0.0
  %1045 = vmatpush1.msra.mxu0 0.0
  %1046 = vmatprep.subr.mxu0 0.0
  %1047 = vmatpush1.msra.mxu0 0.0
  %1048 = vmatprep.subr.mxu0 0.0
  %1049 = vmatpush1.msra.mxu0 0.0
  %1050 = vmatprep.subr.mxu0 0.0
  %1051 = vmatpush1.msra.mxu0 0.0
  %1052 = vmatprep.subr.mxu0 0.0
  %1053 = vmatpush1.msra.mxu0 0.0
  %1054 = vmatprep.subr.mxu0 0.0
  %1055 = vmatpush1.msra.mxu0 0.0
  %1056 = vmatprep.subr.mxu0 0.0
  %1057 = vmatpush1.msra.mxu0 0.0
  %1058 = vmatprep.subr.mxu0 0.0
  %1059 = vmatpush1.msra.mxu0 0.0
  %1060 = vmatprep.subr.mxu0 0.0
  %1061 = vmatpush1.msra.mxu0 0.0
  %1062 = vmatprep.subr.mxu0 0.0
  %1063 = vmatpush1.msra.mxu0 0.0
  %1064 = vmatprep.subr.mxu0 0.0
  %1065 = vmatpush1.msra.mxu0 0.0
  %1066 = vmatprep.mubr.f32.mxu0 0.0
  %1067 = vmatmul.mubr.f32.gmra.mrb[0].mxu0 %v979
  %v1068 = vpop.f32.mrb[0].mxu0
  %v1069 = vadd.f32 0.0, %v1068
  %v1070 = vpop.f32.mrb[0].mxu0
  %1071 = vmatprep.mubr.f32.mxu0 0.0
  %1072 = vmatmul.mubr.f32.gmra.mrb[0].mxu0 %v982
  %v1073 = vpop.f32.mrb[0].mxu0
  %v1074 = vadd.f32 0.0, %v1073
  %v1075 = vpop.f32.mrb[0].mxu0
  %1076 = vmatprep.mubr.f32.mxu0 0.0
  %1077 = vmatmul.mubr.f32.gmra.mrb[0].mxu0 %v985
  %v1078 = vpop.f32.mrb[0].mxu0
  %v1079 = vadd.f32 0.0, %v1078
  %v1080 = vpop.f32.mrb[0].mxu0
  %1081 = vmatprep.mubr.f32.mxu0 0.0
  %1082 = vmatmul.mubr.f32.gmra.mrb[0].mxu0 %v988
  %v1083 = vpop.f32.mrb[0].mxu0
  %v1084 = vadd.f32 0.0, %v1083
  %v1085 = vpop.f32.mrb[0].mxu0
  %1086 = vmatprep.mubr.f32.mxu0 0.0
  %1087 = vmatmul.mubr.f32.gmra.mrb[0].mxu0 %v991
  %v1088 = vpop.f32.mrb[0].mxu0
  %v1089 = vadd.f32 0.0, %v1088
  %v1090 = vpop.f32.mrb[0].mxu0
  %1091 = vmatprep.mubr.f32.mxu0 0.0
  %1092 = vmatmul.mubr.f32.gmra.mrb[0].mxu0 %v994
  %v1093 = vpop.f32.mrb[0].mxu0
  %v1094 = vadd.f32 0.0, %v1093
  %v1095 = vpop.f32.mrb[0].mxu0
  %1096 = vmatprep.mubr.f32.mxu0 0.0
  %1097 = vmatmul.mubr.f32.gmra.mrb[0].mxu0 %v997
  %v1098 = vpop.f32.mrb[0].mxu0
  %v1099 = vadd.f32 0.0, %v1098
  %v1100 = vpop.f32.mrb[0].mxu0
  %1101 = vmatprep.mubr.f32.mxu0 0.0
  %1102 = vmatmul.mubr.f32.gmra.mrb[0].mxu0 %v1000
  %v1103 = vpop.f32.mrb[0].mxu0
  %v1104 = vadd.f32 0.0, %v1103
  %v1105 = vpop.f32.mrb[0].mxu0
  %1106 = vdwg.mxu0
  %v1107 = vrcp.pop %v932
  %v1108 = vrcp.pop %v935
  %v1109 = vrcp.pop %v938
  %v1110 = vrcp.pop %v941
  %v1111 = vrcp.pop %v944
  %v1112 = vrcp.pop %v947
  %v1113 = vrcp.pop %v950
  %v1114 = vrcp.pop %v953
  %v1115 = vmul.f32 %v1069, %v1107
  %v1116 = vmul.f32 %v1074, %v1108
  %v1117 = vmul.f32 %v1079, %v1109
  %v1118 = vmul.f32 %v1084, %v1110
  %v1119 = vmul.f32 %v1089, %v1111
  %v1120 = vmul.f32 %v1094, %v1112
  %v1121 = vmul.f32 %v1099, %v1113
  %v1122 = vmul.f32 %v1104, %v1114
  %1131 = vrot.lane.b32.xlu0 %v1115, 8
  %v1132 = vpop.permute.xlu0 %1131
  %1133 = vrot.lane.b32.xlu0 %v1116, 8
  %v1134 = vpop.permute.xlu0 %1133
  %1135 = vrot.lane.b32.xlu0 %v1117, 8
  %v1136 = vpop.permute.xlu0 %1135
  %1137 = vrot.lane.b32.xlu0 %v1118, 8
  %v1138 = vpop.permute.xlu0 %1137
  %1139 = vrot.lane.b32.xlu0 %v1119, 8
  %v1140 = vpop.permute.xlu0 %1139
  %1141 = vrot.lane.b32.xlu0 %v1120, 8
  %v1142 = vpop.permute.xlu0 %1141
  %1143 = vrot.lane.b32.xlu0 %v1121, 8
  %v1144 = vpop.permute.xlu0 %1143
  %1145 = vrot.lane.b32.xlu0 %v1122, 8
  %v1146 = vpop.permute.xlu0 %1145
  %vm1155 = vcmask 130112
  %1156 = vst.msk [vmem:[#allocation2] sm:$0xff] %vm1155, %v1132
  %1157 = vst.msk [vmem:[#allocation2 + $0x8] sm:$0xff] %vm1155, %v1134
  %1158 = vst.msk [vmem:[#allocation2 + $0x10] sm:$0xff] %vm1155, %v1136
  %1159 = vst.msk [vmem:[#allocation2 + $0x18] sm:$0xff] %vm1155, %v1138
  %1160 = vst.msk [vmem:[#allocation2 + $0x20] sm:$0xff] %vm1155, %v1140
  %1161 = vst.msk [vmem:[#allocation2 + $0x28] sm:$0xff] %vm1155, %v1142
  %1162 = vst.msk [vmem:[#allocation2 + $0x30] sm:$0xff] %vm1155, %v1144
  %1163 = vst.msk [vmem:[#allocation2 + $0x38] sm:$0xff] %vm1155, %v1146
  %1164 = vrot.lane.b32.xlu0 %v285, 112
  %v1165 = vpop.permute.xlu0 %1164
  %1166 = vrot.lane.b32.xlu0 %v286, 112
  %v1167 = vpop.permute.xlu0 %1166
  %1168 = vrot.lane.b32.xlu0 %v287, 112
  %v1169 = vpop.permute.xlu0 %1168
  %1170 = vrot.lane.b32.xlu0 %v288, 112
  %v1171 = vpop.permute.xlu0 %1170
  %1172 = vrot.lane.b32.xlu0 %v289, 112
  %v1173 = vpop.permute.xlu0 %1172
  %1174 = vrot.lane.b32.xlu0 %v290, 112
  %v1175 = vpop.permute.xlu0 %1174
  %1176 = vrot.lane.b32.xlu0 %v291, 112
  %v1177 = vpop.permute.xlu0 %1176
  %1178 = vrot.lane.b32.xlu0 %v292, 112
  %v1179 = vpop.permute.xlu0 %1178
  %1180 = vrot.lane.b32.xlu0 %v207, 80
  %v1181 = vpop.permute.xlu0 %1180
  %1182 = vrot.lane.b32.xlu0 %v212, 80
  %v1183 = vpop.permute.xlu0 %1182
  %1184 = vrot.lane.b32.xlu0 %v217, 80
  %v1185 = vpop.permute.xlu0 %1184
  %1186 = vrot.lane.b32.xlu0 %v222, 80
  %v1187 = vpop.permute.xlu0 %1186
  %1188 = vrot.lane.b32.xlu0 %v227, 80
  %v1189 = vpop.permute.xlu0 %1188
  %1190 = vrot.lane.b32.xlu0 %v232, 80
  %v1191 = vpop.permute.xlu0 %1190
  %1192 = vrot.lane.b32.xlu0 %v237, 80
  %v1193 = vpop.permute.xlu0 %1192
  %1194 = vrot.lane.b32.xlu0 %v242, 80
  %v1195 = vpop.permute.xlu0 %1194
  %v1196 = vsel %vm317, %v1165, 0
  %v1198 = vsel %vm317, %v1167, 0
  %v1200 = vsel %vm317, %v1169, 0
  %v1202 = vsel %vm317, %v1171, 0
  %v1204 = vsel %vm317, %v1173, 0
  %v1206 = vsel %vm317, %v1175, 0
  %v1208 = vsel %vm317, %v1177, 0
  %v1210 = vsel %vm317, %v1179, 0
  %v1212 = vsel %vm317, %v1181, 0
  %v1214 = vsel %vm317, %v1183, 0
  %v1216 = vsel %vm317, %v1185, 0
  %v1218 = vsel %vm317, %v1187, 0
  %v1220 = vsel %vm317, %v1189, 0
  %v1222 = vsel %vm317, %v1191, 0
  %v1224 = vsel %vm317, %v1193, 0
  %v1226 = vsel %vm317, %v1195, 0
  %1228 = vmatprep.subr.mxu0 0.0
  %1229 = vmatpush1.xpose.msra.mxu0 %v1212
  %1230 = vmatprep.subr.mxu0 0.0
  %1231 = vmatpush1.xpose.msra.mxu0 %v1214
  %1232 = vmatprep.subr.mxu0 0.0
  %1233 = vmatpush1.xpose.msra.mxu0 %v1216
  %1234 = vmatprep.subr.mxu0 0.0
  %1235 = vmatpush1.xpose.msra.mxu0 %v1218
  %1236 = vmatprep.subr.mxu0 0.0
  %1237 = vmatpush1.xpose.msra.mxu0 %v1220
  %1238 = vmatprep.subr.mxu0 0.0
  %1239 = vmatpush1.xpose.msra.mxu0 %v1222
  %1240 = vmatprep.subr.mxu0 0.0
  %1241 = vmatpush1.xpose.msra.mxu0 %v1224
  %1242 = vmatprep.subr.mxu0 0.0
  %1243 = vmatpush1.xpose.msra.mxu0 %v1226
  %1244 = vmatprep.subr.mxu0 0.0
  %1245 = vmatpush1.xpose.msra.mxu0 0.0
  %1246 = vmatprep.subr.mxu0 0.0
  %1247 = vmatpush1.xpose.msra.mxu0 0.0
  %1248 = vmatprep.subr.mxu0 0.0
  %1249 = vmatpush1.xpose.msra.mxu0 0.0
  %1250 = vmatprep.subr.mxu0 0.0
  %1251 = vmatpush1.xpose.msra.mxu0 0.0
  %1252 = vmatprep.subr.mxu0 0.0
  %1253 = vmatpush1.xpose.msra.mxu0 0.0
  %1254 = vmatprep.subr.mxu0 0.0
  %1255 = vmatpush1.xpose.msra.mxu0 0.0
  %1256 = vmatprep.subr.mxu0 0.0
  %1257 = vmatpush1.xpose.msra.mxu0 0.0
  %1258 = vmatprep.subr.mxu0 0.0
  %1259 = vmatpush1.xpose.msra.mxu0 0.0
  %1260 = vmatprep.subr.mxu0 0.0
  %1261 = vmatpush1.xpose.msra.mxu0 0.0
  %1262 = vmatprep.subr.mxu0 0.0
  %1263 = vmatpush1.xpose.msra.mxu0 0.0
  %1264 = vmatprep.subr.mxu0 0.0
  %1265 = vmatpush1.xpose.msra.mxu0 0.0
  %1266 = vmatprep.subr.mxu0 0.0
  %1267 = vmatpush1.xpose.msra.mxu0 0.0
  %1268 = vmatprep.subr.mxu0 0.0
  %1269 = vmatpush1.xpose.msra.mxu0 0.0
  %1270 = vmatprep.subr.mxu0 0.0
  %1271 = vmatpush1.xpose.msra.mxu0 0.0
  %1272 = vmatprep.subr.mxu0 0.0
  %1273 = vmatpush1.xpose.msra.mxu0 0.0
  %1274 = vmatprep.subr.mxu0 0.0
  %1275 = vmatpush1.xpose.msra.mxu0 0.0
  %1276 = vmatprep.subr.mxu0 0.0
  %1277 = vmatpush1.xpose.msra.mxu0 0.0
  %1278 = vmatprep.subr.mxu0 0.0
  %1279 = vmatpush1.xpose.msra.mxu0 0.0
  %1280 = vmatprep.subr.mxu0 0.0
  %1281 = vmatpush1.xpose.msra.mxu0 0.0
  %1282 = vmatprep.subr.mxu0 0.0
  %1283 = vmatpush1.xpose.msra.mxu0 0.0
  %1284 = vmatprep.subr.mxu0 0.0
  %1285 = vmatpush1.xpose.msra.mxu0 0.0
  %1286 = vmatprep.subr.mxu0 0.0
  %1287 = vmatpush1.xpose.msra.mxu0 0.0
  %1288 = vmatprep.subr.mxu0 0.0
  %1289 = vmatpush1.xpose.msra.mxu0 0.0
  %1290 = vmatprep.subr.mxu0 0.0
  %1291 = vmatpush1.xpose.msra.mxu0 0.0
  %1292 = vmatprep.mubr.f32.mxu0 0.0
  %1293 = vmatmul.mubr.f32.gmra.mrb[0].mxu0 %v1196
  %v1294 = vpop.f32.mrb[0].mxu0
  %v1295 = vadd.f32 0.0, %v1294
  %v1296 = vpop.f32.mrb[0].mxu0
  %1297 = vmatprep.mubr.f32.mxu0 0.0
  %1298 = vmatmul.mubr.f32.gmra.mrb[0].mxu0 %v1198
  %v1299 = vpop.f32.mrb[0].mxu0
  %v1300 = vadd.f32 0.0, %v1299
  %v1301 = vpop.f32.mrb[0].mxu0
  %1302 = vmatprep.mubr.f32.mxu0 0.0
  %1303 = vmatmul.mubr.f32.gmra.mrb[0].mxu0 %v1200
  %v1304 = vpop.f32.mrb[0].mxu0
  %v1305 = vadd.f32 0.0, %v1304
  %v1306 = vpop.f32.mrb[0].mxu0
  %1307 = vmatprep.mubr.f32.mxu0 0.0
  %1308 = vmatmul.mubr.f32.gmra.mrb[0].mxu0 %v1202
  %v1309 = vpop.f32.mrb[0].mxu0
  %v1310 = vadd.f32 0.0, %v1309
  %v1311 = vpop.f32.mrb[0].mxu0
  %1312 = vmatprep.mubr.f32.mxu0 0.0
  %1313 = vmatmul.mubr.f32.gmra.mrb[0].mxu0 %v1204
  %v1314 = vpop.f32.mrb[0].mxu0
  %v1315 = vadd.f32 0.0, %v1314
  %v1316 = vpop.f32.mrb[0].mxu0
  %1317 = vmatprep.mubr.f32.mxu0 0.0
  %1318 = vmatmul.mubr.f32.gmra.mrb[0].mxu0 %v1206
  %v1319 = vpop.f32.mrb[0].mxu0
  %v1320 = vadd.f32 0.0, %v1319
  %v1321 = vpop.f32.mrb[0].mxu0
  %1322 = vmatprep.mubr.f32.mxu0 0.0
  %1323 = vmatmul.mubr.f32.gmra.mrb[0].mxu0 %v1208
  %v1324 = vpop.f32.mrb[0].mxu0
  %v1325 = vadd.f32 0.0, %v1324
  %v1326 = vpop.f32.mrb[0].mxu0
  %1327 = vmatprep.mubr.f32.mxu0 0.0
  %1328 = vmatmul.mubr.f32.gmra.mrb[0].mxu0 %v1210
  %v1329 = vpop.f32.mrb[0].mxu0
  %v1330 = vadd.f32 0.0, %v1329
  %v1331 = vpop.f32.mrb[0].mxu0
  %1332 = vdwg.mxu0
  %v1333 = vsel %vm463, %v1295, -inf
  %1334 = vmax.xlane.f32.xlu0 %v1333
  %v1335 = vpop.xlane.xlu0 %1334
  %v1336 = vsel %vm463, %v1300, -inf
  %1337 = vmax.xlane.f32.xlu0 %v1336
  %v1338 = vpop.xlane.xlu0 %1337
  %v1339 = vsel %vm463, %v1305, -inf
  %1340 = vmax.xlane.f32.xlu0 %v1339
  %v1341 = vpop.xlane.xlu0 %1340
  %v1342 = vsel %vm463, %v1310, -inf
  %1343 = vmax.xlane.f32.xlu0 %v1342
  %v1344 = vpop.xlane.xlu0 %1343
  %v1345 = vsel %vm463, %v1315, -inf
  %1346 = vmax.xlane.f32.xlu0 %v1345
  %v1347 = vpop.xlane.xlu0 %1346
  %v1348 = vsel %vm463, %v1320, -inf
  %1349 = vmax.xlane.f32.xlu0 %v1348
  %v1350 = vpop.xlane.xlu0 %1349
  %v1351 = vsel %vm463, %v1325, -inf
  %1352 = vmax.xlane.f32.xlu0 %v1351
  %v1353 = vpop.xlane.xlu0 %1352
  %v1354 = vsel %vm463, %v1330, -inf
  %1355 = vmax.xlane.f32.xlu0 %v1354
  %v1356 = vpop.xlane.xlu0 %1355
  %v1357 = vsub.f32 %v1295, %v1335
  %v1358 = vsub.f32 %v1300, %v1338
  %v1359 = vsub.f32 %v1305, %v1341
  %v1360 = vsub.f32 %v1310, %v1344
  %v1361 = vsub.f32 %v1315, %v1347
  %v1362 = vsub.f32 %v1320, %v1350
  %v1363 = vsub.f32 %v1325, %v1353
  %v1364 = vsub.f32 %v1330, %v1356
  %v1365 = vmul.f32 %v1357, 1.442695
  %v1366 = vpow.pop %v1365
  %v1367 = vmul.f32 %v1358, 1.442695
  %v1368 = vpow.pop %v1367
  %v1369 = vmul.f32 %v1359, 1.442695
  %v1370 = vpow.pop %v1369
  %v1371 = vmul.f32 %v1360, 1.442695
  %v1372 = vpow.pop %v1371
  %v1373 = vmul.f32 %v1361, 1.442695
  %v1374 = vpow.pop %v1373
  %v1375 = vmul.f32 %v1362, 1.442695
  %v1376 = vpow.pop %v1375
  %v1377 = vmul.f32 %v1363, 1.442695
  %v1378 = vpow.pop %v1377
  %v1379 = vmul.f32 %v1364, 1.442695
  %v1380 = vpow.pop %v1379
  %v1381 = vsel %vm463, %v1366, 0.0
  %1382 = vadd.xlane.f32.xlu0 %v1381
  %v1383 = vpop.xlane.xlu0 %1382
  %v1384 = vsel %vm463, %v1368, 0.0
  %1385 = vadd.xlane.f32.xlu0 %v1384
  %v1386 = vpop.xlane.xlu0 %1385
  %v1387 = vsel %vm463, %v1370, 0.0
  %1388 = vadd.xlane.f32.xlu0 %v1387
  %v1389 = vpop.xlane.xlu0 %1388
  %v1390 = vsel %vm463, %v1372, 0.0
  %1391 = vadd.xlane.f32.xlu0 %v1390
  %v1392 = vpop.xlane.xlu0 %1391
  %v1393 = vsel %vm463, %v1374, 0.0
  %1394 = vadd.xlane.f32.xlu0 %v1393
  %v1395 = vpop.xlane.xlu0 %1394
  %v1396 = vsel %vm463, %v1376, 0.0
  %1397 = vadd.xlane.f32.xlu0 %v1396
  %v1398 = vpop.xlane.xlu0 %1397
  %v1399 = vsel %vm463, %v1378, 0.0
  %1400 = vadd.xlane.f32.xlu0 %v1399
  %v1401 = vpop.xlane.xlu0 %1400
  %v1402 = vsel %vm463, %v1380, 0.0
  %1403 = vadd.xlane.f32.xlu0 %v1402
  %v1404 = vpop.xlane.xlu0 %1403
  %1405 = vrot.lane.b32.xlu0 %v207, 48
  %v1406 = vpop.permute.xlu0 %1405
  %1407 = vrot.lane.b32.xlu0 %v212, 48
  %v1408 = vpop.permute.xlu0 %1407
  %1409 = vrot.lane.b32.xlu0 %v217, 48
  %v1410 = vpop.permute.xlu0 %1409
  %1411 = vrot.lane.b32.xlu0 %v222, 48
  %v1412 = vpop.permute.xlu0 %1411
  %1413 = vrot.lane.b32.xlu0 %v227, 48
  %v1414 = vpop.permute.xlu0 %1413
  %1415 = vrot.lane.b32.xlu0 %v232, 48
  %v1416 = vpop.permute.xlu0 %1415
  %1417 = vrot.lane.b32.xlu0 %v237, 48
  %v1418 = vpop.permute.xlu0 %1417
  %1419 = vrot.lane.b32.xlu0 %v242, 48
  %v1420 = vpop.permute.xlu0 %1419
  %v1430 = vsel %vm463, %v1366, 0
  %v1433 = vsel %vm463, %v1368, 0
  %v1436 = vsel %vm463, %v1370, 0
  %v1439 = vsel %vm463, %v1372, 0
  %v1442 = vsel %vm463, %v1374, 0
  %v1445 = vsel %vm463, %v1376, 0
  %v1448 = vsel %vm463, %v1378, 0
  %v1451 = vsel %vm463, %v1380, 0
  %1453 = vmatprep.subr.mxu0 0.0
  %1454 = vmatpush1.msra.mxu0 %v1406
  %1455 = vmatprep.subr.mxu0 0.0
  %1456 = vmatpush1.msra.mxu0 %v1408
  %1457 = vmatprep.subr.mxu0 0.0
  %1458 = vmatpush1.msra.mxu0 %v1410
  %1459 = vmatprep.subr.mxu0 0.0
  %1460 = vmatpush1.msra.mxu0 %v1412
  %1461 = vmatprep.subr.mxu0 0.0
  %1462 = vmatpush1.msra.mxu0 %v1414
  %1463 = vmatprep.subr.mxu0 0.0
  %1464 = vmatpush1.msra.mxu0 %v1416
  %1465 = vmatprep.subr.mxu0 0.0
  %1466 = vmatpush1.msra.mxu0 %v1418
  %1467 = vmatprep.subr.mxu0 0.0
  %1468 = vmatpush1.msra.mxu0 %v1420
  %1469 = vmatprep.subr.mxu0 0.0
  %1470 = vmatpush1.msra.mxu0 0.0
  %1471 = vmatprep.subr.mxu0 0.0
  %1472 = vmatpush1.msra.mxu0 0.0
  %1473 = vmatprep.subr.mxu0 0.0
  %1474 = vmatpush1.msra.mxu0 0.0
  %1475 = vmatprep.subr.mxu0 0.0
  %1476 = vmatpush1.msra.mxu0 0.0
  %1477 = vmatprep.subr.mxu0 0.0
  %1478 = vmatpush1.msra.mxu0 0.0
  %1479 = vmatprep.subr.mxu0 0.0
  %1480 = vmatpush1.msra.mxu0 0.0
  %1481 = vmatprep.subr.mxu0 0.0
  %1482 = vmatpush1.msra.mxu0 0.0
  %1483 = vmatprep.subr.mxu0 0.0
  %1484 = vmatpush1.msra.mxu0 0.0
  %1485 = vmatprep.subr.mxu0 0.0
  %1486 = vmatpush1.msra.mxu0 0.0
  %1487 = vmatprep.subr.mxu0 0.0
  %1488 = vmatpush1.msra.mxu0 0.0
  %1489 = vmatprep.subr.mxu0 0.0
  %1490 = vmatpush1.msra.mxu0 0.0
  %1491 = vmatprep.subr.mxu0 0.0
  %1492 = vmatpush1.msra.mxu0 0.0
  %1493 = vmatprep.subr.mxu0 0.0
  %1494 = vmatpush1.msra.mxu0 0.0
  %1495 = vmatprep.subr.mxu0 0.0
  %1496 = vmatpush1.msra.mxu0 0.0
  %1497 = vmatprep.subr.mxu0 0.0
  %1498 = vmatpush1.msra.mxu0 0.0
  %1499 = vmatprep.subr.mxu0 0.0
  %1500 = vmatpush1.msra.mxu0 0.0
  %1501 = vmatprep.subr.mxu0 0.0
  %1502 = vmatpush1.msra.mxu0 0.0
  %1503 = vmatprep.subr.mxu0 0.0
  %1504 = vmatpush1.msra.mxu0 0.0
  %1505 = vmatprep.subr.mxu0 0.0
  %1506 = vmatpush1.msra.mxu0 0.0
  %1507 = vmatprep.subr.mxu0 0.0
  %1508 = vmatpush1.msra.mxu0 0.0
  %1509 = vmatprep.subr.mxu0 0.0
  %1510 = vmatpush1.msra.mxu0 0.0
  %1511 = vmatprep.subr.mxu0 0.0
  %1512 = vmatpush1.msra.mxu0 0.0
  %1513 = vmatprep.subr.mxu0 0.0
  %1514 = vmatpush1.msra.mxu0 0.0
  %1515 = vmatprep.subr.mxu0 0.0
  %1516 = vmatpush1.msra.mxu0 0.0
  %1517 = vmatprep.mubr.f32.mxu0 0.0
  %1518 = vmatmul.mubr.f32.gmra.mrb[0].mxu0 %v1430
  %v1519 = vpop.f32.mrb[0].mxu0
  %v1520 = vadd.f32 0.0, %v1519
  %v1521 = vpop.f32.mrb[0].mxu0
  %1522 = vmatprep.mubr.f32.mxu0 0.0
  %1523 = vmatmul.mubr.f32.gmra.mrb[0].mxu0 %v1433
  %v1524 = vpop.f32.mrb[0].mxu0
  %v1525 = vadd.f32 0.0, %v1524
  %v1526 = vpop.f32.mrb[0].mxu0
  %1527 = vmatprep.mubr.f32.mxu0 0.0
  %1528 = vmatmul.mubr.f32.gmra.mrb[0].mxu0 %v1436
  %v1529 = vpop.f32.mrb[0].mxu0
  %v1530 = vadd.f32 0.0, %v1529
  %v1531 = vpop.f32.mrb[0].mxu0
  %1532 = vmatprep.mubr.f32.mxu0 0.0
  %1533 = vmatmul.mubr.f32.gmra.mrb[0].mxu0 %v1439
  %v1534 = vpop.f32.mrb[0].mxu0
  %v1535 = vadd.f32 0.0, %v1534
  %v1536 = vpop.f32.mrb[0].mxu0
  %1537 = vmatprep.mubr.f32.mxu0 0.0
  %1538 = vmatmul.mubr.f32.gmra.mrb[0].mxu0 %v1442
  %v1539 = vpop.f32.mrb[0].mxu0
  %v1540 = vadd.f32 0.0, %v1539
  %v1541 = vpop.f32.mrb[0].mxu0
  %1542 = vmatprep.mubr.f32.mxu0 0.0
  %1543 = vmatmul.mubr.f32.gmra.mrb[0].mxu0 %v1445
  %v1544 = vpop.f32.mrb[0].mxu0
  %v1545 = vadd.f32 0.0, %v1544
  %v1546 = vpop.f32.mrb[0].mxu0
  %1547 = vmatprep.mubr.f32.mxu0 0.0
  %1548 = vmatmul.mubr.f32.gmra.mrb[0].mxu0 %v1448
  %v1549 = vpop.f32.mrb[0].mxu0
  %v1550 = vadd.f32 0.0, %v1549
  %v1551 = vpop.f32.mrb[0].mxu0
  %1552 = vmatprep.mubr.f32.mxu0 0.0
  %1553 = vmatmul.mubr.f32.gmra.mrb[0].mxu0 %v1451
  %v1554 = vpop.f32.mrb[0].mxu0
  %v1555 = vadd.f32 0.0, %v1554
  %v1556 = vpop.f32.mrb[0].mxu0
  %1557 = vdwg.mxu0
  %v1558 = vrcp.pop %v1383
  %v1559 = vrcp.pop %v1386
  %v1560 = vrcp.pop %v1389
  %v1561 = vrcp.pop %v1392
  %v1562 = vrcp.pop %v1395
  %v1563 = vrcp.pop %v1398
  %v1564 = vrcp.pop %v1401
  %v1565 = vrcp.pop %v1404
  %v1566 = vmul.f32 %v1520, %v1558
  %v1567 = vmul.f32 %v1525, %v1559
  %v1568 = vmul.f32 %v1530, %v1560
  %v1569 = vmul.f32 %v1535, %v1561
  %v1570 = vmul.f32 %v1540, %v1562
  %v1571 = vmul.f32 %v1545, %v1563
  %v1572 = vmul.f32 %v1550, %v1564
  %v1573 = vmul.f32 %v1555, %v1565
  %1582 = vrot.lane.b32.xlu0 %v1566, 16
  %v1583 = vpop.permute.xlu0 %1582
  %1584 = vrot.lane.b32.xlu0 %v1567, 16
  %v1585 = vpop.permute.xlu0 %1584
  %1586 = vrot.lane.b32.xlu0 %v1568, 16
  %v1587 = vpop.permute.xlu0 %1586
  %1588 = vrot.lane.b32.xlu0 %v1569, 16
  %v1589 = vpop.permute.xlu0 %1588
  %1590 = vrot.lane.b32.xlu0 %v1570, 16
  %v1591 = vpop.permute.xlu0 %1590
  %1592 = vrot.lane.b32.xlu0 %v1571, 16
  %v1593 = vpop.permute.xlu0 %1592
  %1594 = vrot.lane.b32.xlu0 %v1572, 16
  %v1595 = vpop.permute.xlu0 %1594
  %1596 = vrot.lane.b32.xlu0 %v1573, 16
  %v1597 = vpop.permute.xlu0 %1596
  %vm1606 = vcmask 195712
  %1607 = vst.msk [vmem:[#allocation2] sm:$0xff] %vm1606, %v1583
  %1608 = vst.msk [vmem:[#allocation2 + $0x8] sm:$0xff] %vm1606, %v1585
  %1609 = vst.msk [vmem:[#allocation2 + $0x10] sm:$0xff] %vm1606, %v1587
  %1610 = vst.msk [vmem:[#allocation2 + $0x18] sm:$0xff] %vm1606, %v1589
  %1611 = vst.msk [vmem:[#allocation2 + $0x20] sm:$0xff] %vm1606, %v1591
  %1612 = vst.msk [vmem:[#allocation2 + $0x28] sm:$0xff] %vm1606, %v1593
  %1613 = vst.msk [vmem:[#allocation2 + $0x30] sm:$0xff] %vm1606, %v1595
  %1614 = vst.msk [vmem:[#allocation2 + $0x38] sm:$0xff] %vm1606, %v1597
  %1615 = vrot.lane.b32.xlu0 %v285, 104
  %v1616 = vpop.permute.xlu0 %1615
  %1617 = vrot.lane.b32.xlu0 %v286, 104
  %v1618 = vpop.permute.xlu0 %1617
  %1619 = vrot.lane.b32.xlu0 %v287, 104
  %v1620 = vpop.permute.xlu0 %1619
  %1621 = vrot.lane.b32.xlu0 %v288, 104
  %v1622 = vpop.permute.xlu0 %1621
  %1623 = vrot.lane.b32.xlu0 %v289, 104
  %v1624 = vpop.permute.xlu0 %1623
  %1625 = vrot.lane.b32.xlu0 %v290, 104
  %v1626 = vpop.permute.xlu0 %1625
  %1627 = vrot.lane.b32.xlu0 %v291, 104
  %v1628 = vpop.permute.xlu0 %1627
  %1629 = vrot.lane.b32.xlu0 %v292, 104
  %v1630 = vpop.permute.xlu0 %1629
  %1631 = vrot.lane.b32.xlu0 %v207, 72
  %v1632 = vpop.permute.xlu0 %1631
  %1633 = vrot.lane.b32.xlu0 %v212, 72
  %v1634 = vpop.permute.xlu0 %1633
  %1635 = vrot.lane.b32.xlu0 %v217, 72
  %v1636 = vpop.permute.xlu0 %1635
  %1637 = vrot.lane.b32.xlu0 %v222, 72
  %v1638 = vpop.permute.xlu0 %1637
  %1639 = vrot.lane.b32.xlu0 %v227, 72
  %v1640 = vpop.permute.xlu0 %1639
  %1641 = vrot.lane.b32.xlu0 %v232, 72
  %v1642 = vpop.permute.xlu0 %1641
  %1643 = vrot.lane.b32.xlu0 %v237, 72
  %v1644 = vpop.permute.xlu0 %1643
  %1645 = vrot.lane.b32.xlu0 %v242, 72
  %v1646 = vpop.permute.xlu0 %1645
  %v1647 = vsel %vm317, %v1616, 0
  %v1649 = vsel %vm317, %v1618, 0
  %v1651 = vsel %vm317, %v1620, 0
  %v1653 = vsel %vm317, %v1622, 0
  %v1655 = vsel %vm317, %v1624, 0
  %v1657 = vsel %vm317, %v1626, 0
  %v1659 = vsel %vm317, %v1628, 0
  %v1661 = vsel %vm317, %v1630, 0
  %v1663 = vsel %vm317, %v1632, 0
  %v1665 = vsel %vm317, %v1634, 0
  %v1667 = vsel %vm317, %v1636, 0
  %v1669 = vsel %vm317, %v1638, 0
  %v1671 = vsel %vm317, %v1640, 0
  %v1673 = vsel %vm317, %v1642, 0
  %v1675 = vsel %vm317, %v1644, 0
  %v1677 = vsel %vm317, %v1646, 0
  %1679 = vmatprep.subr.mxu0 0.0
  %1680 = vmatpush1.xpose.msra.mxu0 %v1663
  %1681 = vmatprep.subr.mxu0 0.0
  %1682 = vmatpush1.xpose.msra.mxu0 %v1665
  %1683 = vmatprep.subr.mxu0 0.0
  %1684 = vmatpush1.xpose.msra.mxu0 %v1667
  %1685 = vmatprep.subr.mxu0 0.0
  %1686 = vmatpush1.xpose.msra.mxu0 %v1669
  %1687 = vmatprep.subr.mxu0 0.0
  %1688 = vmatpush1.xpose.msra.mxu0 %v1671
  %1689 = vmatprep.subr.mxu0 0.0
  %1690 = vmatpush1.xpose.msra.mxu0 %v1673
  %1691 = vmatprep.subr.mxu0 0.0
  %1692 = vmatpush1.xpose.msra.mxu0 %v1675
  %1693 = vmatprep.subr.mxu0 0.0
  %1694 = vmatpush1.xpose.msra.mxu0 %v1677
  %1695 = vmatprep.subr.mxu0 0.0
  %1696 = vmatpush1.xpose.msra.mxu0 0.0
  %1697 = vmatprep.subr.mxu0 0.0
  %1698 = vmatpush1.xpose.msra.mxu0 0.0
  %1699 = vmatprep.subr.mxu0 0.0
  %1700 = vmatpush1.xpose.msra.mxu0 0.0
  %1701 = vmatprep.subr.mxu0 0.0
  %1702 = vmatpush1.xpose.msra.mxu0 0.0
  %1703 = vmatprep.subr.mxu0 0.0
  %1704 = vmatpush1.xpose.msra.mxu0 0.0
  %1705 = vmatprep.subr.mxu0 0.0
  %1706 = vmatpush1.xpose.msra.mxu0 0.0
  %1707 = vmatprep.subr.mxu0 0.0
  %1708 = vmatpush1.xpose.msra.mxu0 0.0
  %1709 = vmatprep.subr.mxu0 0.0
  %1710 = vmatpush1.xpose.msra.mxu0 0.0
  %1711 = vmatprep.subr.mxu0 0.0
  %1712 = vmatpush1.xpose.msra.mxu0 0.0
  %1713 = vmatprep.subr.mxu0 0.0
  %1714 = vmatpush1.xpose.msra.mxu0 0.0
  %1715 = vmatprep.subr.mxu0 0.0
  %1716 = vmatpush1.xpose.msra.mxu0 0.0
  %1717 = vmatprep.subr.mxu0 0.0
  %1718 = vmatpush1.xpose.msra.mxu0 0.0
  %1719 = vmatprep.subr.mxu0 0.0
  %1720 = vmatpush1.xpose.msra.mxu0 0.0
  %1721 = vmatprep.subr.mxu0 0.0
  %1722 = vmatpush1.xpose.msra.mxu0 0.0
  %1723 = vmatprep.subr.mxu0 0.0
  %1724 = vmatpush1.xpose.msra.mxu0 0.0
  %1725 = vmatprep.subr.mxu0 0.0
  %1726 = vmatpush1.xpose.msra.mxu0 0.0
  %1727 = vmatprep.subr.mxu0 0.0
  %1728 = vmatpush1.xpose.msra.mxu0 0.0
  %1729 = vmatprep.subr.mxu0 0.0
  %1730 = vmatpush1.xpose.msra.mxu0 0.0
  %1731 = vmatprep.subr.mxu0 0.0
  %1732 = vmatpush1.xpose.msra.mxu0 0.0
  %1733 = vmatprep.subr.mxu0 0.0
  %1734 = vmatpush1.xpose.msra.mxu0 0.0
  %1735 = vmatprep.subr.mxu0 0.0
  %1736 = vmatpush1.xpose.msra.mxu0 0.0
  %1737 = vmatprep.subr.mxu0 0.0
  %1738 = vmatpush1.xpose.msra.mxu0 0.0
  %1739 = vmatprep.subr.mxu0 0.0
  %1740 = vmatpush1.xpose.msra.mxu0 0.0
  %1741 = vmatprep.subr.mxu0 0.0
  %1742 = vmatpush1.xpose.msra.mxu0 0.0
  %1743 = vmatprep.mubr.f32.mxu0 0.0
  %1744 = vmatmul.mubr.f32.gmra.mrb[0].mxu0 %v1647
  %v1745 = vpop.f32.mrb[0].mxu0
  %v1746 = vadd.f32 0.0, %v1745
  %v1747 = vpop.f32.mrb[0].mxu0
  %1748 = vmatprep.mubr.f32.mxu0 0.0
  %1749 = vmatmul.mubr.f32.gmra.mrb[0].mxu0 %v1649
  %v1750 = vpop.f32.mrb[0].mxu0
  %v1751 = vadd.f32 0.0, %v1750
  %v1752 = vpop.f32.mrb[0].mxu0
  %1753 = vmatprep.mubr.f32.mxu0 0.0
  %1754 = vmatmul.mubr.f32.gmra.mrb[0].mxu0 %v1651
  %v1755 = vpop.f32.mrb[0].mxu0
  %v1756 = vadd.f32 0.0, %v1755
  %v1757 = vpop.f32.mrb[0].mxu0
  %1758 = vmatprep.mubr.f32.mxu0 0.0
  %1759 = vmatmul.mubr.f32.gmra.mrb[0].mxu0 %v1653
  %v1760 = vpop.f32.mrb[0].mxu0
  %v1761 = vadd.f32 0.0, %v1760
  %v1762 = vpop.f32.mrb[0].mxu0
  %1763 = vmatprep.mubr.f32.mxu0 0.0
  %1764 = vmatmul.mubr.f32.gmra.mrb[0].mxu0 %v1655
  %v1765 = vpop.f32.mrb[0].mxu0
  %v1766 = vadd.f32 0.0, %v1765
  %v1767 = vpop.f32.mrb[0].mxu0
  %1768 = vmatprep.mubr.f32.mxu0 0.0
  %1769 = vmatmul.mubr.f32.gmra.mrb[0].mxu0 %v1657
  %v1770 = vpop.f32.mrb[0].mxu0
  %v1771 = vadd.f32 0.0, %v1770
  %v1772 = vpop.f32.mrb[0].mxu0
  %1773 = vmatprep.mubr.f32.mxu0 0.0
  %1774 = vmatmul.mubr.f32.gmra.mrb[0].mxu0 %v1659
  %v1775 = vpop.f32.mrb[0].mxu0
  %v1776 = vadd.f32 0.0, %v1775
  %v1777 = vpop.f32.mrb[0].mxu0
  %1778 = vmatprep.mubr.f32.mxu0 0.0
  %1779 = vmatmul.mubr.f32.gmra.mrb[0].mxu0 %v1661
  %v1780 = vpop.f32.mrb[0].mxu0
  %v1781 = vadd.f32 0.0, %v1780
  %v1782 = vpop.f32.mrb[0].mxu0
  %1783 = vdwg.mxu0
  %v1784 = vsel %vm463, %v1746, -inf
  %1785 = vmax.xlane.f32.xlu0 %v1784
  %v1786 = vpop.xlane.xlu0 %1785
  %v1787 = vsel %vm463, %v1751, -inf
  %1788 = vmax.xlane.f32.xlu0 %v1787
  %v1789 = vpop.xlane.xlu0 %1788
  %v1790 = vsel %vm463, %v1756, -inf
  %1791 = vmax.xlane.f32.xlu0 %v1790
  %v1792 = vpop.xlane.xlu0 %1791
  %v1793 = vsel %vm463, %v1761, -inf
  %1794 = vmax.xlane.f32.xlu0 %v1793
  %v1795 = vpop.xlane.xlu0 %1794
  %v1796 = vsel %vm463, %v1766, -inf
  %1797 = vmax.xlane.f32.xlu0 %v1796
  %v1798 = vpop.xlane.xlu0 %1797
  %v1799 = vsel %vm463, %v1771, -inf
  %1800 = vmax.xlane.f32.xlu0 %v1799
  %v1801 = vpop.xlane.xlu0 %1800
  %v1802 = vsel %vm463, %v1776, -inf
  %1803 = vmax.xlane.f32.xlu0 %v1802
  %v1804 = vpop.xlane.xlu0 %1803
  %v1805 = vsel %vm463, %v1781, -inf
  %1806 = vmax.xlane.f32.xlu0 %v1805
  %v1807 = vpop.xlane.xlu0 %1806
  %v1808 = vsub.f32 %v1746, %v1786
  %v1809 = vsub.f32 %v1751, %v1789
  %v1810 = vsub.f32 %v1756, %v1792
  %v1811 = vsub.f32 %v1761, %v1795
  %v1812 = vsub.f32 %v1766, %v1798
  %v1813 = vsub.f32 %v1771, %v1801
  %v1814 = vsub.f32 %v1776, %v1804
  %v1815 = vsub.f32 %v1781, %v1807
  %v1816 = vmul.f32 %v1808, 1.442695
  %v1817 = vpow.pop %v1816
  %v1818 = vmul.f32 %v1809, 1.442695
  %v1819 = vpow.pop %v1818
  %v1820 = vmul.f32 %v1810, 1.442695
  %v1821 = vpow.pop %v1820
  %v1822 = vmul.f32 %v1811, 1.442695
  %v1823 = vpow.pop %v1822
  %v1824 = vmul.f32 %v1812, 1.442695
  %v1825 = vpow.pop %v1824
  %v1826 = vmul.f32 %v1813, 1.442695
  %v1827 = vpow.pop %v1826
  %v1828 = vmul.f32 %v1814, 1.442695
  %v1829 = vpow.pop %v1828
  %v1830 = vmul.f32 %v1815, 1.442695
  %v1831 = vpow.pop %v1830
  %v1832 = vsel %vm463, %v1817, 0.0
  %1833 = vadd.xlane.f32.xlu0 %v1832
  %v1834 = vpop.xlane.xlu0 %1833
  %v1835 = vsel %vm463, %v1819, 0.0
  %1836 = vadd.xlane.f32.xlu0 %v1835
  %v1837 = vpop.xlane.xlu0 %1836
  %v1838 = vsel %vm463, %v1821, 0.0
  %1839 = vadd.xlane.f32.xlu0 %v1838
  %v1840 = vpop.xlane.xlu0 %1839
  %v1841 = vsel %vm463, %v1823, 0.0
  %1842 = vadd.xlane.f32.xlu0 %v1841
  %v1843 = vpop.xlane.xlu0 %1842
  %v1844 = vsel %vm463, %v1825, 0.0
  %1845 = vadd.xlane.f32.xlu0 %v1844
  %v1846 = vpop.xlane.xlu0 %1845
  %v1847 = vsel %vm463, %v1827, 0.0
  %1848 = vadd.xlane.f32.xlu0 %v1847
  %v1849 = vpop.xlane.xlu0 %1848
  %v1850 = vsel %vm463, %v1829, 0.0
  %1851 = vadd.xlane.f32.xlu0 %v1850
  %v1852 = vpop.xlane.xlu0 %1851
  %v1853 = vsel %vm463, %v1831, 0.0
  %1854 = vadd.xlane.f32.xlu0 %v1853
  %v1855 = vpop.xlane.xlu0 %1854
  %1856 = vrot.lane.b32.xlu0 %v207, 40
  %v1857 = vpop.permute.xlu0 %1856
  %1858 = vrot.lane.b32.xlu0 %v212, 40
  %v1859 = vpop.permute.xlu0 %1858
  %1860 = vrot.lane.b32.xlu0 %v217, 40
  %v1861 = vpop.permute.xlu0 %1860
  %1862 = vrot.lane.b32.xlu0 %v222, 40
  %v1863 = vpop.permute.xlu0 %1862
  %1864 = vrot.lane.b32.xlu0 %v227, 40
  %v1865 = vpop.permute.xlu0 %1864
  %1866 = vrot.lane.b32.xlu0 %v232, 40
  %v1867 = vpop.permute.xlu0 %1866
  %1868 = vrot.lane.b32.xlu0 %v237, 40
  %v1869 = vpop.permute.xlu0 %1868
  %1870 = vrot.lane.b32.xlu0 %v242, 40
  %v1871 = vpop.permute.xlu0 %1870
  %v1881 = vsel %vm463, %v1817, 0
  %v1884 = vsel %vm463, %v1819, 0
  %v1887 = vsel %vm463, %v1821, 0
  %v1890 = vsel %vm463, %v1823, 0
  %v1893 = vsel %vm463, %v1825, 0
  %v1896 = vsel %vm463, %v1827, 0
  %v1899 = vsel %vm463, %v1829, 0
  %v1902 = vsel %vm463, %v1831, 0
  %1904 = vmatprep.subr.mxu0 0.0
  %1905 = vmatpush1.msra.mxu0 %v1857
  %1906 = vmatprep.subr.mxu0 0.0
  %1907 = vmatpush1.msra.mxu0 %v1859
  %1908 = vmatprep.subr.mxu0 0.0
  %1909 = vmatpush1.msra.mxu0 %v1861
  %1910 = vmatprep.subr.mxu0 0.0
  %1911 = vmatpush1.msra.mxu0 %v1863
  %1912 = vmatprep.subr.mxu0 0.0
  %1913 = vmatpush1.msra.mxu0 %v1865
  %1914 = vmatprep.subr.mxu0 0.0
  %1915 = vmatpush1.msra.mxu0 %v1867
  %1916 = vmatprep.subr.mxu0 0.0
  %1917 = vmatpush1.msra.mxu0 %v1869
  %1918 = vmatprep.subr.mxu0 0.0
  %1919 = vmatpush1.msra.mxu0 %v1871
  %1920 = vmatprep.subr.mxu0 0.0
  %1921 = vmatpush1.msra.mxu0 0.0
  %1922 = vmatprep.subr.mxu0 0.0
  %1923 = vmatpush1.msra.mxu0 0.0
  %1924 = vmatprep.subr.mxu0 0.0
  %1925 = vmatpush1.msra.mxu0 0.0
  %1926 = vmatprep.subr.mxu0 0.0
  %1927 = vmatpush1.msra.mxu0 0.0
  %1928 = vmatprep.subr.mxu0 0.0
  %1929 = vmatpush1.msra.mxu0 0.0
  %1930 = vmatprep.subr.mxu0 0.0
  %1931 = vmatpush1.msra.mxu0 0.0
  %1932 = vmatprep.subr.mxu0 0.0
  %1933 = vmatpush1.msra.mxu0 0.0
  %1934 = vmatprep.subr.mxu0 0.0
  %1935 = vmatpush1.msra.mxu0 0.0
  %1936 = vmatprep.subr.mxu0 0.0
  %1937 = vmatpush1.msra.mxu0 0.0
  %1938 = vmatprep.subr.mxu0 0.0
  %1939 = vmatpush1.msra.mxu0 0.0
  %1940 = vmatprep.subr.mxu0 0.0
  %1941 = vmatpush1.msra.mxu0 0.0
  %1942 = vmatprep.subr.mxu0 0.0
  %1943 = vmatpush1.msra.mxu0 0.0
  %1944 = vmatprep.subr.mxu0 0.0
  %1945 = vmatpush1.msra.mxu0 0.0
  %1946 = vmatprep.subr.mxu0 0.0
  %1947 = vmatpush1.msra.mxu0 0.0
  %1948 = vmatprep.subr.mxu0 0.0
  %1949 = vmatpush1.msra.mxu0 0.0
  %1950 = vmatprep.subr.mxu0 0.0
  %1951 = vmatpush1.msra.mxu0 0.0
  %1952 = vmatprep.subr.mxu0 0.0
  %1953 = vmatpush1.msra.mxu0 0.0
  %1954 = vmatprep.subr.mxu0 0.0
  %1955 = vmatpush1.msra.mxu0 0.0
  %1956 = vmatprep.subr.mxu0 0.0
  %1957 = vmatpush1.msra.mxu0 0.0
  %1958 = vmatprep.subr.mxu0 0.0
  %1959 = vmatpush1.msra.mxu0 0.0
  %1960 = vmatprep.subr.mxu0 0.0
  %1961 = vmatpush1.msra.mxu0 0.0
  %1962 = vmatprep.subr.mxu0 0.0
  %1963 = vmatpush1.msra.mxu0 0.0
  %1964 = vmatprep.subr.mxu0 0.0
  %1965 = vmatpush1.msra.mxu0 0.0
  %1966 = vmatprep.subr.mxu0 0.0
  %1967 = vmatpush1.msra.mxu0 0.0
  %1968 = vmatprep.mubr.f32.mxu0 0.0
  %1969 = vmatmul.mubr.f32.gmra.mrb[0].mxu0 %v1881
  %v1970 = vpop.f32.mrb[0].mxu0
  %v1971 = vadd.f32 0.0, %v1970
  %v1972 = vpop.f32.mrb[0].mxu0
  %1973 = vmatprep.mubr.f32.mxu0 0.0
  %1974 = vmatmul.mubr.f32.gmra.mrb[0].mxu0 %v1884
  %v1975 = vpop.f32.mrb[0].mxu0
  %v1976 = vadd.f32 0.0, %v1975
  %v1977 = vpop.f32.mrb[0].mxu0
  %1978 = vmatprep.mubr.f32.mxu0 0.0
  %1979 = vmatmul.mubr.f32.gmra.mrb[0].mxu0 %v1887
  %v1980 = vpop.f32.mrb[0].mxu0
  %v1981 = vadd.f32 0.0, %v1980
  %v1982 = vpop.f32.mrb[0].mxu0
  %1983 = vmatprep.mubr.f32.mxu0 0.0
  %1984 = vmatmul.mubr.f32.gmra.mrb[0].mxu0 %v1890
  %v1985 = vpop.f32.mrb[0].mxu0
  %v1986 = vadd.f32 0.0, %v1985
  %v1987 = vpop.f32.mrb[0].mxu0
  %1988 = vmatprep.mubr.f32.mxu0 0.0
  %1989 = vmatmul.mubr.f32.gmra.mrb[0].mxu0 %v1893
  %v1990 = vpop.f32.mrb[0].mxu0
  %v1991 = vadd.f32 0.0, %v1990
  %v1992 = vpop.f32.mrb[0].mxu0
  %1993 = vmatprep.mubr.f32.mxu0 0.0
  %1994 = vmatmul.mubr.f32.gmra.mrb[0].mxu0 %v1896
  %v1995 = vpop.f32.mrb[0].mxu0
  %v1996 = vadd.f32 0.0, %v1995
  %v1997 = vpop.f32.mrb[0].mxu0
  %1998 = vmatprep.mubr.f32.mxu0 0.0
  %1999 = vmatmul.mubr.f32.gmra.mrb[0].mxu0 %v1899
  %v2000 = vpop.f32.mrb[0].mxu0
  %v2001 = vadd.f32 0.0, %v2000
  %v2002 = vpop.f32.mrb[0].mxu0
  %2003 = vmatprep.mubr.f32.mxu0 0.0
  %2004 = vmatmul.mubr.f32.gmra.mrb[0].mxu0 %v1902
  %v2005 = vpop.f32.mrb[0].mxu0
  %v2006 = vadd.f32 0.0, %v2005
  %v2007 = vpop.f32.mrb[0].mxu0
  %2008 = vdwg.mxu0
  %v2009 = vrcp.pop %v1834
  %v2010 = vrcp.pop %v1837
  %v2011 = vrcp.pop %v1840
  %v2012 = vrcp.pop %v1843
  %v2013 = vrcp.pop %v1846
  %v2014 = vrcp.pop %v1849
  %v2015 = vrcp.pop %v1852
  %v2016 = vrcp.pop %v1855
  %v2017 = vmul.f32 %v1971, %v2009
  %v2018 = vmul.f32 %v1976, %v2010
  %v2019 = vmul.f32 %v1981, %v2011
  %v2020 = vmul.f32 %v1986, %v2012
  %v2021 = vmul.f32 %v1991, %v2013
  %v2022 = vmul.f32 %v1996, %v2014
  %v2023 = vmul.f32 %v2001, %v2015
  %v2024 = vmul.f32 %v2006, %v2016
  %2033 = vrot.lane.b32.xlu0 %v2017, 24
  %v2034 = vpop.permute.xlu0 %2033
  %2035 = vrot.lane.b32.xlu0 %v2018, 24
  %v2036 = vpop.permute.xlu0 %2035
  %2037 = vrot.lane.b32.xlu0 %v2019, 24
  %v2038 = vpop.permute.xlu0 %2037
  %2039 = vrot.lane.b32.xlu0 %v2020, 24
  %v2040 = vpop.permute.xlu0 %2039
  %2041 = vrot.lane.b32.xlu0 %v2021, 24
  %v2042 = vpop.permute.xlu0 %2041
  %2043 = vrot.lane.b32.xlu0 %v2022, 24
  %v2044 = vpop.permute.xlu0 %2043
  %2045 = vrot.lane.b32.xlu0 %v2023, 24
  %v2046 = vpop.permute.xlu0 %2045
  %2047 = vrot.lane.b32.xlu0 %v2024, 24
  %v2048 = vpop.permute.xlu0 %2047
  %vm2057 = vcmask 261312
  %2058 = vst.msk [vmem:[#allocation2] sm:$0xff] %vm2057, %v2034
  %2059 = vst.msk [vmem:[#allocation2 + $0x8] sm:$0xff] %vm2057, %v2036
  %2060 = vst.msk [vmem:[#allocation2 + $0x10] sm:$0xff] %vm2057, %v2038
  %2061 = vst.msk [vmem:[#allocation2 + $0x18] sm:$0xff] %vm2057, %v2040
  %2062 = vst.msk [vmem:[#allocation2 + $0x20] sm:$0xff] %vm2057, %v2042
  %2063 = vst.msk [vmem:[#allocation2 + $0x28] sm:$0xff] %vm2057, %v2044
  %2064 = vst.msk [vmem:[#allocation2 + $0x30] sm:$0xff] %vm2057, %v2046
  %2065 = vst.msk [vmem:[#allocation2 + $0x38] sm:$0xff] %vm2057, %v2048
  %v2066 = vmul.f32 %v247, 0.35355338
  %v2067 = vmul.f32 %v252, 0.35355338
  %v2068 = vmul.f32 %v257, 0.35355338
  %v2069 = vmul.f32 %v262, 0.35355338
  %v2070 = vmul.f32 %v267, 0.35355338
  %v2071 = vmul.f32 %v272, 0.35355338
  %v2072 = vmul.f32 %v277, 0.35355338
  %v2073 = vmul.f32 %v282, 0.35355338
  %2082 = vrot.lane.b32.xlu0 %v247, 96
  %v2083 = vpop.permute.xlu0 %2082
  %2084 = vrot.lane.b32.xlu0 %v252, 96
  %v2085 = vpop.permute.xlu0 %2084
  %2086 = vrot.lane.b32.xlu0 %v257, 96
  %v2087 = vpop.permute.xlu0 %2086
  %2088 = vrot.lane.b32.xlu0 %v262, 96
  %v2089 = vpop.permute.xlu0 %2088
  %2090 = vrot.lane.b32.xlu0 %v267, 96
  %v2091 = vpop.permute.xlu0 %2090
  %2092 = vrot.lane.b32.xlu0 %v272, 96
  %v2093 = vpop.permute.xlu0 %2092
  %2094 = vrot.lane.b32.xlu0 %v277, 96
  %v2095 = vpop.permute.xlu0 %2094
  %2096 = vrot.lane.b32.xlu0 %v282, 96
  %v2097 = vpop.permute.xlu0 %2096
  %v2099 = vsel %vm317, %v2066, 0
  %v2102 = vsel %vm317, %v2067, 0
  %v2105 = vsel %vm317, %v2068, 0
  %v2108 = vsel %vm317, %v2069, 0
  %v2111 = vsel %vm317, %v2070, 0
  %v2114 = vsel %vm317, %v2071, 0
  %v2117 = vsel %vm317, %v2072, 0
  %v2120 = vsel %vm317, %v2073, 0
  %v2122 = vsel %vm317, %v2083, 0
  %v2124 = vsel %vm317, %v2085, 0
  %v2126 = vsel %vm317, %v2087, 0
  %v2128 = vsel %vm317, %v2089, 0
  %v2130 = vsel %vm317, %v2091, 0
  %v2132 = vsel %vm317, %v2093, 0
  %v2134 = vsel %vm317, %v2095, 0
  %v2136 = vsel %vm317, %v2097, 0
  %2138 = vmatprep.subr.mxu0 0.0
  %2139 = vmatpush1.xpose.msra.mxu0 %v2122
  %2140 = vmatprep.subr.mxu0 0.0
  %2141 = vmatpush1.xpose.msra.mxu0 %v2124
  %2142 = vmatprep.subr.mxu0 0.0
  %2143 = vmatpush1.xpose.msra.mxu0 %v2126
  %2144 = vmatprep.subr.mxu0 0.0
  %2145 = vmatpush1.xpose.msra.mxu0 %v2128
  %2146 = vmatprep.subr.mxu0 0.0
  %2147 = vmatpush1.xpose.msra.mxu0 %v2130
  %2148 = vmatprep.subr.mxu0 0.0
  %2149 = vmatpush1.xpose.msra.mxu0 %v2132
  %2150 = vmatprep.subr.mxu0 0.0
  %2151 = vmatpush1.xpose.msra.mxu0 %v2134
  %2152 = vmatprep.subr.mxu0 0.0
  %2153 = vmatpush1.xpose.msra.mxu0 %v2136
  %2154 = vmatprep.subr.mxu0 0.0
  %2155 = vmatpush1.xpose.msra.mxu0 0.0
  %2156 = vmatprep.subr.mxu0 0.0
  %2157 = vmatpush1.xpose.msra.mxu0 0.0
  %2158 = vmatprep.subr.mxu0 0.0
  %2159 = vmatpush1.xpose.msra.mxu0 0.0
  %2160 = vmatprep.subr.mxu0 0.0
  %2161 = vmatpush1.xpose.msra.mxu0 0.0
  %2162 = vmatprep.subr.mxu0 0.0
  %2163 = vmatpush1.xpose.msra.mxu0 0.0
  %2164 = vmatprep.subr.mxu0 0.0
  %2165 = vmatpush1.xpose.msra.mxu0 0.0
  %2166 = vmatprep.subr.mxu0 0.0
  %2167 = vmatpush1.xpose.msra.mxu0 0.0
  %2168 = vmatprep.subr.mxu0 0.0
  %2169 = vmatpush1.xpose.msra.mxu0 0.0
  %2170 = vmatprep.subr.mxu0 0.0
  %2171 = vmatpush1.xpose.msra.mxu0 0.0
  %2172 = vmatprep.subr.mxu0 0.0
  %2173 = vmatpush1.xpose.msra.mxu0 0.0
  %2174 = vmatprep.subr.mxu0 0.0
  %2175 = vmatpush1.xpose.msra.mxu0 0.0
  %2176 = vmatprep.subr.mxu0 0.0
  %2177 = vmatpush1.xpose.msra.mxu0 0.0
  %2178 = vmatprep.subr.mxu0 0.0
  %2179 = vmatpush1.xpose.msra.mxu0 0.0
  %2180 = vmatprep.subr.mxu0 0.0
  %2181 = vmatpush1.xpose.msra.mxu0 0.0
  %2182 = vmatprep.subr.mxu0 0.0
  %2183 = vmatpush1.xpose.msra.mxu0 0.0
  %2184 = vmatprep.subr.mxu0 0.0
  %2185 = vmatpush1.xpose.msra.mxu0 0.0
  %2186 = vmatprep.subr.mxu0 0.0
  %2187 = vmatpush1.xpose.msra.mxu0 0.0
  %2188 = vmatprep.subr.mxu0 0.0
  %2189 = vmatpush1.xpose.msra.mxu0 0.0
  %2190 = vmatprep.subr.mxu0 0.0
  %2191 = vmatpush1.xpose.msra.mxu0 0.0
  %2192 = vmatprep.subr.mxu0 0.0
  %2193 = vmatpush1.xpose.msra.mxu0 0.0
  %2194 = vmatprep.subr.mxu0 0.0
  %2195 = vmatpush1.xpose.msra.mxu0 0.0
  %2196 = vmatprep.subr.mxu0 0.0
  %2197 = vmatpush1.xpose.msra.mxu0 0.0
  %2198 = vmatprep.subr.mxu0 0.0
  %2199 = vmatpush1.xpose.msra.mxu0 0.0
  %2200 = vmatprep.subr.mxu0 0.0
  %2201 = vmatpush1.xpose.msra.mxu0 0.0
  %2202 = vmatprep.mubr.f32.mxu0 0.0
  %2203 = vmatmul.mubr.f32.gmra.mrb[0].mxu0 %v2099
  %v2204 = vpop.f32.mrb[0].mxu0
  %v2205 = vadd.f32 0.0, %v2204
  %v2206 = vpop.f32.mrb[0].mxu0
  %2207 = vmatprep.mubr.f32.mxu0 0.0
  %2208 = vmatmul.mubr.f32.gmra.mrb[0].mxu0 %v2102
  %v2209 = vpop.f32.mrb[0].mxu0
  %v2210 = vadd.f32 0.0, %v2209
  %v2211 = vpop.f32.mrb[0].mxu0
  %2212 = vmatprep.mubr.f32.mxu0 0.0
  %2213 = vmatmul.mubr.f32.gmra.mrb[0].mxu0 %v2105
  %v2214 = vpop.f32.mrb[0].mxu0
  %v2215 = vadd.f32 0.0, %v2214
  %v2216 = vpop.f32.mrb[0].mxu0
  %2217 = vmatprep.mubr.f32.mxu0 0.0
  %2218 = vmatmul.mubr.f32.gmra.mrb[0].mxu0 %v2108
  %v2219 = vpop.f32.mrb[0].mxu0
  %v2220 = vadd.f32 0.0, %v2219
  %v2221 = vpop.f32.mrb[0].mxu0
  %2222 = vmatprep.mubr.f32.mxu0 0.0
  %2223 = vmatmul.mubr.f32.gmra.mrb[0].mxu0 %v2111
  %v2224 = vpop.f32.mrb[0].mxu0
  %v2225 = vadd.f32 0.0, %v2224
  %v2226 = vpop.f32.mrb[0].mxu0
  %2227 = vmatprep.mubr.f32.mxu0 0.0
  %2228 = vmatmul.mubr.f32.gmra.mrb[0].mxu0 %v2114
  %v2229 = vpop.f32.mrb[0].mxu0
  %v2230 = vadd.f32 0.0, %v2229
  %v2231 = vpop.f32.mrb[0].mxu0
  %2232 = vmatprep.mubr.f32.mxu0 0.0
  %2233 = vmatmul.mubr.f32.gmra.mrb[0].mxu0 %v2117
  %v2234 = vpop.f32.mrb[0].mxu0
  %v2235 = vadd.f32 0.0, %v2234
  %v2236 = vpop.f32.mrb[0].mxu0
  %2237 = vmatprep.mubr.f32.mxu0 0.0
  %2238 = vmatmul.mubr.f32.gmra.mrb[0].mxu0 %v2120
  %v2239 = vpop.f32.mrb[0].mxu0
  %v2240 = vadd.f32 0.0, %v2239
  %v2241 = vpop.f32.mrb[0].mxu0
  %2242 = vdwg.mxu0
  %v2243 = vsel %vm463, %v2205, -inf
  %2244 = vmax.xlane.f32.xlu0 %v2243
  %v2245 = vpop.xlane.xlu0 %2244
  %v2246 = vsel %vm463, %v2210, -inf
  %2247 = vmax.xlane.f32.xlu0 %v2246
  %v2248 = vpop.xlane.xlu0 %2247
  %v2249 = vsel %vm463, %v2215, -inf
  %2250 = vmax.xlane.f32.xlu0 %v2249
  %v2251 = vpop.xlane.xlu0 %2250
  %v2252 = vsel %vm463, %v2220, -inf
  %2253 = vmax.xlane.f32.xlu0 %v2252
  %v2254 = vpop.xlane.xlu0 %2253
  %v2255 = vsel %vm463, %v2225, -inf
  %2256 = vmax.xlane.f32.xlu0 %v2255
  %v2257 = vpop.xlane.xlu0 %2256
  %v2258 = vsel %vm463, %v2230, -inf
  %2259 = vmax.xlane.f32.xlu0 %v2258
  %v2260 = vpop.xlane.xlu0 %2259
  %v2261 = vsel %vm463, %v2235, -inf
  %2262 = vmax.xlane.f32.xlu0 %v2261
  %v2263 = vpop.xlane.xlu0 %2262
  %v2264 = vsel %vm463, %v2240, -inf
  %2265 = vmax.xlane.f32.xlu0 %v2264
  %v2266 = vpop.xlane.xlu0 %2265
  %v2267 = vsub.f32 %v2205, %v2245
  %v2268 = vsub.f32 %v2210, %v2248
  %v2269 = vsub.f32 %v2215, %v2251
  %v2270 = vsub.f32 %v2220, %v2254
  %v2271 = vsub.f32 %v2225, %v2257
  %v2272 = vsub.f32 %v2230, %v2260
  %v2273 = vsub.f32 %v2235, %v2263
  %v2274 = vsub.f32 %v2240, %v2266
  %v2275 = vmul.f32 %v2267, 1.442695
  %v2276 = vpow.pop %v2275
  %v2277 = vmul.f32 %v2268, 1.442695
  %v2278 = vpow.pop %v2277
  %v2279 = vmul.f32 %v2269, 1.442695
  %v2280 = vpow.pop %v2279
  %v2281 = vmul.f32 %v2270, 1.442695
  %v2282 = vpow.pop %v2281
  %v2283 = vmul.f32 %v2271, 1.442695
  %v2284 = vpow.pop %v2283
  %v2285 = vmul.f32 %v2272, 1.442695
  %v2286 = vpow.pop %v2285
  %v2287 = vmul.f32 %v2273, 1.442695
  %v2288 = vpow.pop %v2287
  %v2289 = vmul.f32 %v2274, 1.442695
  %v2290 = vpow.pop %v2289
  %v2291 = vsel %vm463, %v2276, 0.0
  %2292 = vadd.xlane.f32.xlu0 %v2291
  %v2293 = vpop.xlane.xlu0 %2292
  %v2294 = vsel %vm463, %v2278, 0.0
  %2295 = vadd.xlane.f32.xlu0 %v2294
  %v2296 = vpop.xlane.xlu0 %2295
  %v2297 = vsel %vm463, %v2280, 0.0
  %2298 = vadd.xlane.f32.xlu0 %v2297
  %v2299 = vpop.xlane.xlu0 %2298
  %v2300 = vsel %vm463, %v2282, 0.0
  %2301 = vadd.xlane.f32.xlu0 %v2300
  %v2302 = vpop.xlane.xlu0 %2301
  %v2303 = vsel %vm463, %v2284, 0.0
  %2304 = vadd.xlane.f32.xlu0 %v2303
  %v2305 = vpop.xlane.xlu0 %2304
  %v2306 = vsel %vm463, %v2286, 0.0
  %2307 = vadd.xlane.f32.xlu0 %v2306
  %v2308 = vpop.xlane.xlu0 %2307
  %v2309 = vsel %vm463, %v2288, 0.0
  %2310 = vadd.xlane.f32.xlu0 %v2309
  %v2311 = vpop.xlane.xlu0 %2310
  %v2312 = vsel %vm463, %v2290, 0.0
  %2313 = vadd.xlane.f32.xlu0 %v2312
  %v2314 = vpop.xlane.xlu0 %2313
  %2315 = vrot.lane.b32.xlu0 %v247, 64
  %v2316 = vpop.permute.xlu0 %2315
  %2317 = vrot.lane.b32.xlu0 %v252, 64
  %v2318 = vpop.permute.xlu0 %2317
  %2319 = vrot.lane.b32.xlu0 %v257, 64
  %v2320 = vpop.permute.xlu0 %2319
  %2321 = vrot.lane.b32.xlu0 %v262, 64
  %v2322 = vpop.permute.xlu0 %2321
  %2323 = vrot.lane.b32.xlu0 %v267, 64
  %v2324 = vpop.permute.xlu0 %2323
  %2325 = vrot.lane.b32.xlu0 %v272, 64
  %v2326 = vpop.permute.xlu0 %2325
  %2327 = vrot.lane.b32.xlu0 %v277, 64
  %v2328 = vpop.permute.xlu0 %2327
  %2329 = vrot.lane.b32.xlu0 %v282, 64
  %v2330 = vpop.permute.xlu0 %2329
  %v2340 = vsel %vm463, %v2276, 0
  %v2343 = vsel %vm463, %v2278, 0
  %v2346 = vsel %vm463, %v2280, 0
  %v2349 = vsel %vm463, %v2282, 0
  %v2352 = vsel %vm463, %v2284, 0
  %v2355 = vsel %vm463, %v2286, 0
  %v2358 = vsel %vm463, %v2288, 0
  %v2361 = vsel %vm463, %v2290, 0
  %2363 = vmatprep.subr.mxu0 0.0
  %2364 = vmatpush1.msra.mxu0 %v2316
  %2365 = vmatprep.subr.mxu0 0.0
  %2366 = vmatpush1.msra.mxu0 %v2318
  %2367 = vmatprep.subr.mxu0 0.0
  %2368 = vmatpush1.msra.mxu0 %v2320
  %2369 = vmatprep.subr.mxu0 0.0
  %2370 = vmatpush1.msra.mxu0 %v2322
  %2371 = vmatprep.subr.mxu0 0.0
  %2372 = vmatpush1.msra.mxu0 %v2324
  %2373 = vmatprep.subr.mxu0 0.0
  %2374 = vmatpush1.msra.mxu0 %v2326
  %2375 = vmatprep.subr.mxu0 0.0
  %2376 = vmatpush1.msra.mxu0 %v2328
  %2377 = vmatprep.subr.mxu0 0.0
  %2378 = vmatpush1.msra.mxu0 %v2330
  %2379 = vmatprep.subr.mxu0 0.0
  %2380 = vmatpush1.msra.mxu0 0.0
  %2381 = vmatprep.subr.mxu0 0.0
  %2382 = vmatpush1.msra.mxu0 0.0
  %2383 = vmatprep.subr.mxu0 0.0
  %2384 = vmatpush1.msra.mxu0 0.0
  %2385 = vmatprep.subr.mxu0 0.0
  %2386 = vmatpush1.msra.mxu0 0.0
  %2387 = vmatprep.subr.mxu0 0.0
  %2388 = vmatpush1.msra.mxu0 0.0
  %2389 = vmatprep.subr.mxu0 0.0
  %2390 = vmatpush1.msra.mxu0 0.0
  %2391 = vmatprep.subr.mxu0 0.0
  %2392 = vmatpush1.msra.mxu0 0.0
  %2393 = vmatprep.subr.mxu0 0.0
  %2394 = vmatpush1.msra.mxu0 0.0
  %2395 = vmatprep.subr.mxu0 0.0
  %2396 = vmatpush1.msra.mxu0 0.0
  %2397 = vmatprep.subr.mxu0 0.0
  %2398 = vmatpush1.msra.mxu0 0.0
  %2399 = vmatprep.subr.mxu0 0.0
  %2400 = vmatpush1.msra.mxu0 0.0
  %2401 = vmatprep.subr.mxu0 0.0
  %2402 = vmatpush1.msra.mxu0 0.0
  %2403 = vmatprep.subr.mxu0 0.0
  %2404 = vmatpush1.msra.mxu0 0.0
  %2405 = vmatprep.subr.mxu0 0.0
  %2406 = vmatpush1.msra.mxu0 0.0
  %2407 = vmatprep.subr.mxu0 0.0
  %2408 = vmatpush1.msra.mxu0 0.0
  %2409 = vmatprep.subr.mxu0 0.0
  %2410 = vmatpush1.msra.mxu0 0.0
  %2411 = vmatprep.subr.mxu0 0.0
  %2412 = vmatpush1.msra.mxu0 0.0
  %2413 = vmatprep.subr.mxu0 0.0
  %2414 = vmatpush1.msra.mxu0 0.0
  %2415 = vmatprep.subr.mxu0 0.0
  %2416 = vmatpush1.msra.mxu0 0.0
  %2417 = vmatprep.subr.mxu0 0.0
  %2418 = vmatpush1.msra.mxu0 0.0
  %2419 = vmatprep.subr.mxu0 0.0
  %2420 = vmatpush1.msra.mxu0 0.0
  %2421 = vmatprep.subr.mxu0 0.0
  %2422 = vmatpush1.msra.mxu0 0.0
  %2423 = vmatprep.subr.mxu0 0.0
  %2424 = vmatpush1.msra.mxu0 0.0
  %2425 = vmatprep.subr.mxu0 0.0
  %2426 = vmatpush1.msra.mxu0 0.0
  %2427 = vmatprep.mubr.f32.mxu0 0.0
  %2428 = vmatmul.mubr.f32.gmra.mrb[0].mxu0 %v2340
  %v2429 = vpop.f32.mrb[0].mxu0
  %v2430 = vadd.f32 0.0, %v2429
  %v2431 = vpop.f32.mrb[0].mxu0
  %2432 = vmatprep.mubr.f32.mxu0 0.0
  %2433 = vmatmul.mubr.f32.gmra.mrb[0].mxu0 %v2343
  %v2434 = vpop.f32.mrb[0].mxu0
  %v2435 = vadd.f32 0.0, %v2434
  %v2436 = vpop.f32.mrb[0].mxu0
  %2437 = vmatprep.mubr.f32.mxu0 0.0
  %2438 = vmatmul.mubr.f32.gmra.mrb[0].mxu0 %v2346
  %v2439 = vpop.f32.mrb[0].mxu0
  %v2440 = vadd.f32 0.0, %v2439
  %v2441 = vpop.f32.mrb[0].mxu0
  %2442 = vmatprep.mubr.f32.mxu0 0.0
  %2443 = vmatmul.mubr.f32.gmra.mrb[0].mxu0 %v2349
  %v2444 = vpop.f32.mrb[0].mxu0
  %v2445 = vadd.f32 0.0, %v2444
  %v2446 = vpop.f32.mrb[0].mxu0
  %2447 = vmatprep.mubr.f32.mxu0 0.0
  %2448 = vmatmul.mubr.f32.gmra.mrb[0].mxu0 %v2352
  %v2449 = vpop.f32.mrb[0].mxu0
  %v2450 = vadd.f32 0.0, %v2449
  %v2451 = vpop.f32.mrb[0].mxu0
  %2452 = vmatprep.mubr.f32.mxu0 0.0
  %2453 = vmatmul.mubr.f32.gmra.mrb[0].mxu0 %v2355
  %v2454 = vpop.f32.mrb[0].mxu0
  %v2455 = vadd.f32 0.0, %v2454
  %v2456 = vpop.f32.mrb[0].mxu0
  %2457 = vmatprep.mubr.f32.mxu0 0.0
  %2458 = vmatmul.mubr.f32.gmra.mrb[0].mxu0 %v2358
  %v2459 = vpop.f32.mrb[0].mxu0
  %v2460 = vadd.f32 0.0, %v2459
  %v2461 = vpop.f32.mrb[0].mxu0
  %2462 = vmatprep.mubr.f32.mxu0 0.0
  %2463 = vmatmul.mubr.f32.gmra.mrb[0].mxu0 %v2361
  %v2464 = vpop.f32.mrb[0].mxu0
  %v2465 = vadd.f32 0.0, %v2464
  %v2466 = vpop.f32.mrb[0].mxu0
  %2467 = vdwg.mxu0
  %v2468 = vrcp.pop %v2293
  %v2469 = vrcp.pop %v2296
  %v2470 = vrcp.pop %v2299
  %v2471 = vrcp.pop %v2302
  %v2472 = vrcp.pop %v2305
  %v2473 = vrcp.pop %v2308
  %v2474 = vrcp.pop %v2311
  %v2475 = vrcp.pop %v2314
  %v2476 = vmul.f32 %v2430, %v2468
  %v2477 = vmul.f32 %v2435, %v2469
  %v2478 = vmul.f32 %v2440, %v2470
  %v2479 = vmul.f32 %v2445, %v2471
  %v2480 = vmul.f32 %v2450, %v2472
  %v2481 = vmul.f32 %v2455, %v2473
  %v2482 = vmul.f32 %v2460, %v2474
  %v2483 = vmul.f32 %v2465, %v2475
  %2484 = vst.msk [vmem:[#allocation2 + $0x40] sm:$0xff] %vm317, %v2476
  %2485 = vst.msk [vmem:[#allocation2 + $0x48] sm:$0xff] %vm317, %v2477
  %2486 = vst.msk [vmem:[#allocation2 + $0x50] sm:$0xff] %vm317, %v2478
  %2487 = vst.msk [vmem:[#allocation2 + $0x58] sm:$0xff] %vm317, %v2479
  %2488 = vst.msk [vmem:[#allocation2 + $0x60] sm:$0xff] %vm317, %v2480
  %2489 = vst.msk [vmem:[#allocation2 + $0x68] sm:$0xff] %vm317, %v2481
  %2490 = vst.msk [vmem:[#allocation2 + $0x70] sm:$0xff] %vm317, %v2482
  %2491 = vst.msk [vmem:[#allocation2 + $0x78] sm:$0xff] %vm317, %v2483
  %2492 = vrot.lane.b32.xlu0 %v2066, 120
  %v2493 = vpop.permute.xlu0 %2492
  %2494 = vrot.lane.b32.xlu0 %v2067, 120
  %v2495 = vpop.permute.xlu0 %2494
  %2496 = vrot.lane.b32.xlu0 %v2068, 120
  %v2497 = vpop.permute.xlu0 %2496
  %2498 = vrot.lane.b32.xlu0 %v2069, 120
  %v2499 = vpop.permute.xlu0 %2498
  %2500 = vrot.lane.b32.xlu0 %v2070, 120
  %v2501 = vpop.permute.xlu0 %2500
  %2502 = vrot.lane.b32.xlu0 %v2071, 120
  %v2503 = vpop.permute.xlu0 %2502
  %2504 = vrot.lane.b32.xlu0 %v2072, 120
  %v2505 = vpop.permute.xlu0 %2504
  %2506 = vrot.lane.b32.xlu0 %v2073, 120
  %v2507 = vpop.permute.xlu0 %2506
  %2508 = vrot.lane.b32.xlu0 %v247, 88
  %v2509 = vpop.permute.xlu0 %2508
  %2510 = vrot.lane.b32.xlu0 %v252, 88
  %v2511 = vpop.permute.xlu0 %2510
  %2512 = vrot.lane.b32.xlu0 %v257, 88
  %v2513 = vpop.permute.xlu0 %2512
  %2514 = vrot.lane.b32.xlu0 %v262, 88
  %v2515 = vpop.permute.xlu0 %2514
  %2516 = vrot.lane.b32.xlu0 %v267, 88
  %v2517 = vpop.permute.xlu0 %2516
  %2518 = vrot.lane.b32.xlu0 %v272, 88
  %v2519 = vpop.permute.xlu0 %2518
  %2520 = vrot.lane.b32.xlu0 %v277, 88
  %v2521 = vpop.permute.xlu0 %2520
  %2522 = vrot.lane.b32.xlu0 %v282, 88
  %v2523 = vpop.permute.xlu0 %2522
  %v2524 = vsel %vm317, %v2493, 0
  %v2526 = vsel %vm317, %v2495, 0
  %v2528 = vsel %vm317, %v2497, 0
  %v2530 = vsel %vm317, %v2499, 0
  %v2532 = vsel %vm317, %v2501, 0
  %v2534 = vsel %vm317, %v2503, 0
  %v2536 = vsel %vm317, %v2505, 0
  %v2538 = vsel %vm317, %v2507, 0
  %v2540 = vsel %vm317, %v2509, 0
  %v2542 = vsel %vm317, %v2511, 0
  %v2544 = vsel %vm317, %v2513, 0
  %v2546 = vsel %vm317, %v2515, 0
  %v2548 = vsel %vm317, %v2517, 0
  %v2550 = vsel %vm317, %v2519, 0
  %v2552 = vsel %vm317, %v2521, 0
  %v2554 = vsel %vm317, %v2523, 0
  %2556 = vmatprep.subr.mxu0 0.0
  %2557 = vmatpush1.xpose.msra.mxu0 %v2540
  %2558 = vmatprep.subr.mxu0 0.0
  %2559 = vmatpush1.xpose.msra.mxu0 %v2542
  %2560 = vmatprep.subr.mxu0 0.0
  %2561 = vmatpush1.xpose.msra.mxu0 %v2544
  %2562 = vmatprep.subr.mxu0 0.0
  %2563 = vmatpush1.xpose.msra.mxu0 %v2546
  %2564 = vmatprep.subr.mxu0 0.0
  %2565 = vmatpush1.xpose.msra.mxu0 %v2548
  %2566 = vmatprep.subr.mxu0 0.0
  %2567 = vmatpush1.xpose.msra.mxu0 %v2550
  %2568 = vmatprep.subr.mxu0 0.0
  %2569 = vmatpush1.xpose.msra.mxu0 %v2552
  %2570 = vmatprep.subr.mxu0 0.0
  %2571 = vmatpush1.xpose.msra.mxu0 %v2554
  %2572 = vmatprep.subr.mxu0 0.0
  %2573 = vmatpush1.xpose.msra.mxu0 0.0
  %2574 = vmatprep.subr.mxu0 0.0
  %2575 = vmatpush1.xpose.msra.mxu0 0.0
  %2576 = vmatprep.subr.mxu0 0.0
  %2577 = vmatpush1.xpose.msra.mxu0 0.0
  %2578 = vmatprep.subr.mxu0 0.0
  %2579 = vmatpush1.xpose.msra.mxu0 0.0
  %2580 = vmatprep.subr.mxu0 0.0
  %2581 = vmatpush1.xpose.msra.mxu0 0.0
  %2582 = vmatprep.subr.mxu0 0.0
  %2583 = vmatpush1.xpose.msra.mxu0 0.0
  %2584 = vmatprep.subr.mxu0 0.0
  %2585 = vmatpush1.xpose.msra.mxu0 0.0
  %2586 = vmatprep.subr.mxu0 0.0
  %2587 = vmatpush1.xpose.msra.mxu0 0.0
  %2588 = vmatprep.subr.mxu0 0.0
  %2589 = vmatpush1.xpose.msra.mxu0 0.0
  %2590 = vmatprep.subr.mxu0 0.0
  %2591 = vmatpush1.xpose.msra.mxu0 0.0
  %2592 = vmatprep.subr.mxu0 0.0
  %2593 = vmatpush1.xpose.msra.mxu0 0.0
  %2594 = vmatprep.subr.mxu0 0.0
  %2595 = vmatpush1.xpose.msra.mxu0 0.0
  %2596 = vmatprep.subr.mxu0 0.0
  %2597 = vmatpush1.xpose.msra.mxu0 0.0
  %2598 = vmatprep.subr.mxu0 0.0
  %2599 = vmatpush1.xpose.msra.mxu0 0.0
  %2600 = vmatprep.subr.mxu0 0.0
  %2601 = vmatpush1.xpose.msra.mxu0 0.0
  %2602 = vmatprep.subr.mxu0 0.0
  %2603 = vmatpush1.xpose.msra.mxu0 0.0
  %2604 = vmatprep.subr.mxu0 0.0
  %2605 = vmatpush1.xpose.msra.mxu0 0.0
  %2606 = vmatprep.subr.mxu0 0.0
  %2607 = vmatpush1.xpose.msra.mxu0 0.0
  %2608 = vmatprep.subr.mxu0 0.0
  %2609 = vmatpush1.xpose.msra.mxu0 0.0
  %2610 = vmatprep.subr.mxu0 0.0
  %2611 = vmatpush1.xpose.msra.mxu0 0.0
  %2612 = vmatprep.subr.mxu0 0.0
  %2613 = vmatpush1.xpose.msra.mxu0 0.0
  %2614 = vmatprep.subr.mxu0 0.0
  %2615 = vmatpush1.xpose.msra.mxu0 0.0
  %2616 = vmatprep.subr.mxu0 0.0
  %2617 = vmatpush1.xpose.msra.mxu0 0.0
  %2618 = vmatprep.subr.mxu0 0.0
  %2619 = vmatpush1.xpose.msra.mxu0 0.0
  %2620 = vmatprep.mubr.f32.mxu0 0.0
  %2621 = vmatmul.mubr.f32.gmra.mrb[0].mxu0 %v2524
  %v2622 = vpop.f32.mrb[0].mxu0
  %v2623 = vadd.f32 0.0, %v2622
  %v2624 = vpop.f32.mrb[0].mxu0
  %2625 = vmatprep.mubr.f32.mxu0 0.0
  %2626 = vmatmul.mubr.f32.gmra.mrb[0].mxu0 %v2526
  %v2627 = vpop.f32.mrb[0].mxu0
  %v2628 = vadd.f32 0.0, %v2627
  %v2629 = vpop.f32.mrb[0].mxu0
  %2630 = vmatprep.mubr.f32.mxu0 0.0
  %2631 = vmatmul.mubr.f32.gmra.mrb[0].mxu0 %v2528
  %v2632 = vpop.f32.mrb[0].mxu0
  %v2633 = vadd.f32 0.0, %v2632
  %v2634 = vpop.f32.mrb[0].mxu0
  %2635 = vmatprep.mubr.f32.mxu0 0.0
  %2636 = vmatmul.mubr.f32.gmra.mrb[0].mxu0 %v2530
  %v2637 = vpop.f32.mrb[0].mxu0
  %v2638 = vadd.f32 0.0, %v2637
  %v2639 = vpop.f32.mrb[0].mxu0
  %2640 = vmatprep.mubr.f32.mxu0 0.0
  %2641 = vmatmul.mubr.f32.gmra.mrb[0].mxu0 %v2532
  %v2642 = vpop.f32.mrb[0].mxu0
  %v2643 = vadd.f32 0.0, %v2642
  %v2644 = vpop.f32.mrb[0].mxu0
  %2645 = vmatprep.mubr.f32.mxu0 0.0
  %2646 = vmatmul.mubr.f32.gmra.mrb[0].mxu0 %v2534
  %v2647 = vpop.f32.mrb[0].mxu0
  %v2648 = vadd.f32 0.0, %v2647
  %v2649 = vpop.f32.mrb[0].mxu0
  %2650 = vmatprep.mubr.f32.mxu0 0.0
  %2651 = vmatmul.mubr.f32.gmra.mrb[0].mxu0 %v2536
  %v2652 = vpop.f32.mrb[0].mxu0
  %v2653 = vadd.f32 0.0, %v2652
  %v2654 = vpop.f32.mrb[0].mxu0
  %2655 = vmatprep.mubr.f32.mxu0 0.0
  %2656 = vmatmul.mubr.f32.gmra.mrb[0].mxu0 %v2538
  %v2657 = vpop.f32.mrb[0].mxu0
  %v2658 = vadd.f32 0.0, %v2657
  %v2659 = vpop.f32.mrb[0].mxu0
  %2660 = vdwg.mxu0
  %v2661 = vsel %vm463, %v2623, -inf
  %2662 = vmax.xlane.f32.xlu0 %v2661
  %v2663 = vpop.xlane.xlu0 %2662
  %v2664 = vsel %vm463, %v2628, -inf
  %2665 = vmax.xlane.f32.xlu0 %v2664
  %v2666 = vpop.xlane.xlu0 %2665
  %v2667 = vsel %vm463, %v2633, -inf
  %2668 = vmax.xlane.f32.xlu0 %v2667
  %v2669 = vpop.xlane.xlu0 %2668
  %v2670 = vsel %vm463, %v2638, -inf
  %2671 = vmax.xlane.f32.xlu0 %v2670
  %v2672 = vpop.xlane.xlu0 %2671
  %v2673 = vsel %vm463, %v2643, -inf
  %2674 = vmax.xlane.f32.xlu0 %v2673
  %v2675 = vpop.xlane.xlu0 %2674
  %v2676 = vsel %vm463, %v2648, -inf
  %2677 = vmax.xlane.f32.xlu0 %v2676
  %v2678 = vpop.xlane.xlu0 %2677
  %v2679 = vsel %vm463, %v2653, -inf
  %2680 = vmax.xlane.f32.xlu0 %v2679
  %v2681 = vpop.xlane.xlu0 %2680
  %v2682 = vsel %vm463, %v2658, -inf
  %2683 = vmax.xlane.f32.xlu0 %v2682
  %v2684 = vpop.xlane.xlu0 %2683
  %v2685 = vsub.f32 %v2623, %v2663
  %v2686 = vsub.f32 %v2628, %v2666
  %v2687 = vsub.f32 %v2633, %v2669
  %v2688 = vsub.f32 %v2638, %v2672
  %v2689 = vsub.f32 %v2643, %v2675
  %v2690 = vsub.f32 %v2648, %v2678
  %v2691 = vsub.f32 %v2653, %v2681
  %v2692 = vsub.f32 %v2658, %v2684
  %v2693 = vmul.f32 %v2685, 1.442695
  %v2694 = vpow.pop %v2693
  %v2695 = vmul.f32 %v2686, 1.442695
  %v2696 = vpow.pop %v2695
  %v2697 = vmul.f32 %v2687, 1.442695
  %v2698 = vpow.pop %v2697
  %v2699 = vmul.f32 %v2688, 1.442695
  %v2700 = vpow.pop %v2699
  %v2701 = vmul.f32 %v2689, 1.442695
  %v2702 = vpow.pop %v2701
  %v2703 = vmul.f32 %v2690, 1.442695
  %v2704 = vpow.pop %v2703
  %v2705 = vmul.f32 %v2691, 1.442695
  %v2706 = vpow.pop %v2705
  %v2707 = vmul.f32 %v2692, 1.442695
  %v2708 = vpow.pop %v2707
  %v2709 = vsel %vm463, %v2694, 0.0
  %2710 = vadd.xlane.f32.xlu0 %v2709
  %v2711 = vpop.xlane.xlu0 %2710
  %v2712 = vsel %vm463, %v2696, 0.0
  %2713 = vadd.xlane.f32.xlu0 %v2712
  %v2714 = vpop.xlane.xlu0 %2713
  %v2715 = vsel %vm463, %v2698, 0.0
  %2716 = vadd.xlane.f32.xlu0 %v2715
  %v2717 = vpop.xlane.xlu0 %2716
  %v2718 = vsel %vm463, %v2700, 0.0
  %2719 = vadd.xlane.f32.xlu0 %v2718
  %v2720 = vpop.xlane.xlu0 %2719
  %v2721 = vsel %vm463, %v2702, 0.0
  %2722 = vadd.xlane.f32.xlu0 %v2721
  %v2723 = vpop.xlane.xlu0 %2722
  %v2724 = vsel %vm463, %v2704, 0.0
  %2725 = vadd.xlane.f32.xlu0 %v2724
  %v2726 = vpop.xlane.xlu0 %2725
  %v2727 = vsel %vm463, %v2706, 0.0
  %2728 = vadd.xlane.f32.xlu0 %v2727
  %v2729 = vpop.xlane.xlu0 %2728
  %v2730 = vsel %vm463, %v2708, 0.0
  %2731 = vadd.xlane.f32.xlu0 %v2730
  %v2732 = vpop.xlane.xlu0 %2731
  %2733 = vrot.lane.b32.xlu0 %v247, 56
  %v2734 = vpop.permute.xlu0 %2733
  %2735 = vrot.lane.b32.xlu0 %v252, 56
  %v2736 = vpop.permute.xlu0 %2735
  %2737 = vrot.lane.b32.xlu0 %v257, 56
  %v2738 = vpop.permute.xlu0 %2737
  %2739 = vrot.lane.b32.xlu0 %v262, 56
  %v2740 = vpop.permute.xlu0 %2739
  %2741 = vrot.lane.b32.xlu0 %v267, 56
  %v2742 = vpop.permute.xlu0 %2741
  %2743 = vrot.lane.b32.xlu0 %v272, 56
  %v2744 = vpop.permute.xlu0 %2743
  %2745 = vrot.lane.b32.xlu0 %v277, 56
  %v2746 = vpop.permute.xlu0 %2745
  %2747 = vrot.lane.b32.xlu0 %v282, 56
  %v2748 = vpop.permute.xlu0 %2747
  %v2758 = vsel %vm463, %v2694, 0
  %v2761 = vsel %vm463, %v2696, 0
  %v2764 = vsel %vm463, %v2698, 0
  %v2767 = vsel %vm463, %v2700, 0
  %v2770 = vsel %vm463, %v2702, 0
  %v2773 = vsel %vm463, %v2704, 0
  %v2776 = vsel %vm463, %v2706, 0
  %v2779 = vsel %vm463, %v2708, 0
  %2781 = vmatprep.subr.mxu0 0.0
  %2782 = vmatpush1.msra.mxu0 %v2734
  %2783 = vmatprep.subr.mxu0 0.0
  %2784 = vmatpush1.msra.mxu0 %v2736
  %2785 = vmatprep.subr.mxu0 0.0
  %2786 = vmatpush1.msra.mxu0 %v2738
  %2787 = vmatprep.subr.mxu0 0.0
  %2788 = vmatpush1.msra.mxu0 %v2740
  %2789 = vmatprep.subr.mxu0 0.0
  %2790 = vmatpush1.msra.mxu0 %v2742
  %2791 = vmatprep.subr.mxu0 0.0
  %2792 = vmatpush1.msra.mxu0 %v2744
  %2793 = vmatprep.subr.mxu0 0.0
  %2794 = vmatpush1.msra.mxu0 %v2746
  %2795 = vmatprep.subr.mxu0 0.0
  %2796 = vmatpush1.msra.mxu0 %v2748
  %2797 = vmatprep.subr.mxu0 0.0
  %2798 = vmatpush1.msra.mxu0 0.0
  %2799 = vmatprep.subr.mxu0 0.0
  %2800 = vmatpush1.msra.mxu0 0.0
  %2801 = vmatprep.subr.mxu0 0.0
  %2802 = vmatpush1.msra.mxu0 0.0
  %2803 = vmatprep.subr.mxu0 0.0
  %2804 = vmatpush1.msra.mxu0 0.0
  %2805 = vmatprep.subr.mxu0 0.0
  %2806 = vmatpush1.msra.mxu0 0.0
  %2807 = vmatprep.subr.mxu0 0.0
  %2808 = vmatpush1.msra.mxu0 0.0
  %2809 = vmatprep.subr.mxu0 0.0
  %2810 = vmatpush1.msra.mxu0 0.0
  %2811 = vmatprep.subr.mxu0 0.0
  %2812 = vmatpush1.msra.mxu0 0.0
  %2813 = vmatprep.subr.mxu0 0.0
  %2814 = vmatpush1.msra.mxu0 0.0
  %2815 = vmatprep.subr.mxu0 0.0
  %2816 = vmatpush1.msra.mxu0 0.0
  %2817 = vmatprep.subr.mxu0 0.0
  %2818 = vmatpush1.msra.mxu0 0.0
  %2819 = vmatprep.subr.mxu0 0.0
  %2820 = vmatpush1.msra.mxu0 0.0
  %2821 = vmatprep.subr.mxu0 0.0
  %2822 = vmatpush1.msra.mxu0 0.0
  %2823 = vmatprep.subr.mxu0 0.0
  %2824 = vmatpush1.msra.mxu0 0.0
  %2825 = vmatprep.subr.mxu0 0.0
  %2826 = vmatpush1.msra.mxu0 0.0
  %2827 = vmatprep.subr.mxu0 0.0
  %2828 = vmatpush1.msra.mxu0 0.0
  %2829 = vmatprep.subr.mxu0 0.0
  %2830 = vmatpush1.msra.mxu0 0.0
  %2831 = vmatprep.subr.mxu0 0.0
  %2832 = vmatpush1.msra.mxu0 0.0
  %2833 = vmatprep.subr.mxu0 0.0
  %2834 = vmatpush1.msra.mxu0 0.0
  %2835 = vmatprep.subr.mxu0 0.0
  %2836 = vmatpush1.msra.mxu0 0.0
  %2837 = vmatprep.subr.mxu0 0.0
  %2838 = vmatpush1.msra.mxu0 0.0
  %2839 = vmatprep.subr.mxu0 0.0
  %2840 = vmatpush1.msra.mxu0 0.0
  %2841 = vmatprep.subr.mxu0 0.0
  %2842 = vmatpush1.msra.mxu0 0.0
  %2843 = vmatprep.subr.mxu0 0.0
  %2844 = vmatpush1.msra.mxu0 0.0
  %2845 = vmatprep.mubr.f32.mxu0 0.0
  %2846 = vmatmul.mubr.f32.gmra.mrb[0].mxu0 %v2758
  %v2847 = vpop.f32.mrb[0].mxu0
  %v2848 = vadd.f32 0.0, %v2847
  %v2849 = vpop.f32.mrb[0].mxu0
  %2850 = vmatprep.mubr.f32.mxu0 0.0
  %2851 = vmatmul.mubr.f32.gmra.mrb[0].mxu0 %v2761
  %v2852 = vpop.f32.mrb[0].mxu0
  %v2853 = vadd.f32 0.0, %v2852
  %v2854 = vpop.f32.mrb[0].mxu0
  %2855 = vmatprep.mubr.f32.mxu0 0.0
  %2856 = vmatmul.mubr.f32.gmra.mrb[0].mxu0 %v2764
  %v2857 = vpop.f32.mrb[0].mxu0
  %v2858 = vadd.f32 0.0, %v2857
  %v2859 = vpop.f32.mrb[0].mxu0
  %2860 = vmatprep.mubr.f32.mxu0 0.0
  %2861 = vmatmul.mubr.f32.gmra.mrb[0].mxu0 %v2767
  %v2862 = vpop.f32.mrb[0].mxu0
  %v2863 = vadd.f32 0.0, %v2862
  %v2864 = vpop.f32.mrb[0].mxu0
  %2865 = vmatprep.mubr.f32.mxu0 0.0
  %2866 = vmatmul.mubr.f32.gmra.mrb[0].mxu0 %v2770
  %v2867 = vpop.f32.mrb[0].mxu0
  %v2868 = vadd.f32 0.0, %v2867
  %v2869 = vpop.f32.mrb[0].mxu0
  %2870 = vmatprep.mubr.f32.mxu0 0.0
  %2871 = vmatmul.mubr.f32.gmra.mrb[0].mxu0 %v2773
  %v2872 = vpop.f32.mrb[0].mxu0
  %v2873 = vadd.f32 0.0, %v2872
  %v2874 = vpop.f32.mrb[0].mxu0
  %2875 = vmatprep.mubr.f32.mxu0 0.0
  %2876 = vmatmul.mubr.f32.gmra.mrb[0].mxu0 %v2776
  %v2877 = vpop.f32.mrb[0].mxu0
  %v2878 = vadd.f32 0.0, %v2877
  %v2879 = vpop.f32.mrb[0].mxu0
  %2880 = vmatprep.mubr.f32.mxu0 0.0
  %2881 = vmatmul.mubr.f32.gmra.mrb[0].mxu0 %v2779
  %v2882 = vpop.f32.mrb[0].mxu0
  %v2883 = vadd.f32 0.0, %v2882
  %v2884 = vpop.f32.mrb[0].mxu0
  %2885 = vdwg.mxu0
  %v2886 = vrcp.pop %v2711
  %v2887 = vrcp.pop %v2714
  %v2888 = vrcp.pop %v2717
  %v2889 = vrcp.pop %v2720
  %v2890 = vrcp.pop %v2723
  %v2891 = vrcp.pop %v2726
  %v2892 = vrcp.pop %v2729
  %v2893 = vrcp.pop %v2732
  %v2894 = vmul.f32 %v2848, %v2886
  %v2895 = vmul.f32 %v2853, %v2887
  %v2896 = vmul.f32 %v2858, %v2888
  %v2897 = vmul.f32 %v2863, %v2889
  %v2898 = vmul.f32 %v2868, %v2890
  %v2899 = vmul.f32 %v2873, %v2891
  %v2900 = vmul.f32 %v2878, %v2892
  %v2901 = vmul.f32 %v2883, %v2893
  %2910 = vrot.lane.b32.xlu0 %v2894, 8
  %v2911 = vpop.permute.xlu0 %2910
  %2912 = vrot.lane.b32.xlu0 %v2895, 8
  %v2913 = vpop.permute.xlu0 %2912
  %2914 = vrot.lane.b32.xlu0 %v2896, 8
  %v2915 = vpop.permute.xlu0 %2914
  %2916 = vrot.lane.b32.xlu0 %v2897, 8
  %v2917 = vpop.permute.xlu0 %2916
  %2918 = vrot.lane.b32.xlu0 %v2898, 8
  %v2919 = vpop.permute.xlu0 %2918
  %2920 = vrot.lane.b32.xlu0 %v2899, 8
  %v2921 = vpop.permute.xlu0 %2920
  %2922 = vrot.lane.b32.xlu0 %v2900, 8
  %v2923 = vpop.permute.xlu0 %2922
  %2924 = vrot.lane.b32.xlu0 %v2901, 8
  %v2925 = vpop.permute.xlu0 %2924
  %2934 = vst.msk [vmem:[#allocation2 + $0x40] sm:$0xff] %vm1155, %v2911
  %2935 = vst.msk [vmem:[#allocation2 + $0x48] sm:$0xff] %vm1155, %v2913
  %2936 = vst.msk [vmem:[#allocation2 + $0x50] sm:$0xff] %vm1155, %v2915
  %2937 = vst.msk [vmem:[#allocation2 + $0x58] sm:$0xff] %vm1155, %v2917
  %2938 = vst.msk [vmem:[#allocation2 + $0x60] sm:$0xff] %vm1155, %v2919
  %2939 = vst.msk [vmem:[#allocation2 + $0x68] sm:$0xff] %vm1155, %v2921
  %2940 = vst.msk [vmem:[#allocation2 + $0x70] sm:$0xff] %vm1155, %v2923
  %2941 = vst.msk [vmem:[#allocation2 + $0x78] sm:$0xff] %vm1155, %v2925
  %2942 = vrot.lane.b32.xlu0 %v2066, 112
  %v2943 = vpop.permute.xlu0 %2942
  %2944 = vrot.lane.b32.xlu0 %v2067, 112
  %v2945 = vpop.permute.xlu0 %2944
  %2946 = vrot.lane.b32.xlu0 %v2068, 112
  %v2947 = vpop.permute.xlu0 %2946
  %2948 = vrot.lane.b32.xlu0 %v2069, 112
  %v2949 = vpop.permute.xlu0 %2948
  %2950 = vrot.lane.b32.xlu0 %v2070, 112
  %v2951 = vpop.permute.xlu0 %2950
  %2952 = vrot.lane.b32.xlu0 %v2071, 112
  %v2953 = vpop.permute.xlu0 %2952
  %2954 = vrot.lane.b32.xlu0 %v2072, 112
  %v2955 = vpop.permute.xlu0 %2954
  %2956 = vrot.lane.b32.xlu0 %v2073, 112
  %v2957 = vpop.permute.xlu0 %2956
  %2958 = vrot.lane.b32.xlu0 %v247, 80
  %v2959 = vpop.permute.xlu0 %2958
  %2960 = vrot.lane.b32.xlu0 %v252, 80
  %v2961 = vpop.permute.xlu0 %2960
  %2962 = vrot.lane.b32.xlu0 %v257, 80
  %v2963 = vpop.permute.xlu0 %2962
  %2964 = vrot.lane.b32.xlu0 %v262, 80
  %v2965 = vpop.permute.xlu0 %2964
  %2966 = vrot.lane.b32.xlu0 %v267, 80
  %v2967 = vpop.permute.xlu0 %2966
  %2968 = vrot.lane.b32.xlu0 %v272, 80
  %v2969 = vpop.permute.xlu0 %2968
  %2970 = vrot.lane.b32.xlu0 %v277, 80
  %v2971 = vpop.permute.xlu0 %2970
  %2972 = vrot.lane.b32.xlu0 %v282, 80
  %v2973 = vpop.permute.xlu0 %2972
  %v2974 = vsel %vm317, %v2943, 0
  %v2976 = vsel %vm317, %v2945, 0
  %v2978 = vsel %vm317, %v2947, 0
  %v2980 = vsel %vm317, %v2949, 0
  %v2982 = vsel %vm317, %v2951, 0
  %v2984 = vsel %vm317, %v2953, 0
  %v2986 = vsel %vm317, %v2955, 0
  %v2988 = vsel %vm317, %v2957, 0
  %v2990 = vsel %vm317, %v2959, 0
  %v2992 = vsel %vm317, %v2961, 0
  %v2994 = vsel %vm317, %v2963, 0
  %v2996 = vsel %vm317, %v2965, 0
  %v2998 = vsel %vm317, %v2967, 0
  %v3000 = vsel %vm317, %v2969, 0
  %v3002 = vsel %vm317, %v2971, 0
  %v3004 = vsel %vm317, %v2973, 0
  %3006 = vmatprep.subr.mxu0 0.0
  %3007 = vmatpush1.xpose.msra.mxu0 %v2990
  %3008 = vmatprep.subr.mxu0 0.0
  %3009 = vmatpush1.xpose.msra.mxu0 %v2992
  %3010 = vmatprep.subr.mxu0 0.0
  %3011 = vmatpush1.xpose.msra.mxu0 %v2994
  %3012 = vmatprep.subr.mxu0 0.0
  %3013 = vmatpush1.xpose.msra.mxu0 %v2996
  %3014 = vmatprep.subr.mxu0 0.0
  %3015 = vmatpush1.xpose.msra.mxu0 %v2998
  %3016 = vmatprep.subr.mxu0 0.0
  %3017 = vmatpush1.xpose.msra.mxu0 %v3000
  %3018 = vmatprep.subr.mxu0 0.0
  %3019 = vmatpush1.xpose.msra.mxu0 %v3002
  %3020 = vmatprep.subr.mxu0 0.0
  %3021 = vmatpush1.xpose.msra.mxu0 %v3004
  %3022 = vmatprep.subr.mxu0 0.0
  %3023 = vmatpush1.xpose.msra.mxu0 0.0
  %3024 = vmatprep.subr.mxu0 0.0
  %3025 = vmatpush1.xpose.msra.mxu0 0.0
  %3026 = vmatprep.subr.mxu0 0.0
  %3027 = vmatpush1.xpose.msra.mxu0 0.0
  %3028 = vmatprep.subr.mxu0 0.0
  %3029 = vmatpush1.xpose.msra.mxu0 0.0
  %3030 = vmatprep.subr.mxu0 0.0
  %3031 = vmatpush1.xpose.msra.mxu0 0.0
  %3032 = vmatprep.subr.mxu0 0.0
  %3033 = vmatpush1.xpose.msra.mxu0 0.0
  %3034 = vmatprep.subr.mxu0 0.0
  %3035 = vmatpush1.xpose.msra.mxu0 0.0
  %3036 = vmatprep.subr.mxu0 0.0
  %3037 = vmatpush1.xpose.msra.mxu0 0.0
  %3038 = vmatprep.subr.mxu0 0.0
  %3039 = vmatpush1.xpose.msra.mxu0 0.0
  %3040 = vmatprep.subr.mxu0 0.0
  %3041 = vmatpush1.xpose.msra.mxu0 0.0
  %3042 = vmatprep.subr.mxu0 0.0
  %3043 = vmatpush1.xpose.msra.mxu0 0.0
  %3044 = vmatprep.subr.mxu0 0.0
  %3045 = vmatpush1.xpose.msra.mxu0 0.0
  %3046 = vmatprep.subr.mxu0 0.0
  %3047 = vmatpush1.xpose.msra.mxu0 0.0
  %3048 = vmatprep.subr.mxu0 0.0
  %3049 = vmatpush1.xpose.msra.mxu0 0.0
  %3050 = vmatprep.subr.mxu0 0.0
  %3051 = vmatpush1.xpose.msra.mxu0 0.0
  %3052 = vmatprep.subr.mxu0 0.0
  %3053 = vmatpush1.xpose.msra.mxu0 0.0
  %3054 = vmatprep.subr.mxu0 0.0
  %3055 = vmatpush1.xpose.msra.mxu0 0.0
  %3056 = vmatprep.subr.mxu0 0.0
  %3057 = vmatpush1.xpose.msra.mxu0 0.0
  %3058 = vmatprep.subr.mxu0 0.0
  %3059 = vmatpush1.xpose.msra.mxu0 0.0
  %3060 = vmatprep.subr.mxu0 0.0
  %3061 = vmatpush1.xpose.msra.mxu0 0.0
  %3062 = vmatprep.subr.mxu0 0.0
  %3063 = vmatpush1.xpose.msra.mxu0 0.0
  %3064 = vmatprep.subr.mxu0 0.0
  %3065 = vmatpush1.xpose.msra.mxu0 0.0
  %3066 = vmatprep.subr.mxu0 0.0
  %3067 = vmatpush1.xpose.msra.mxu0 0.0
  %3068 = vmatprep.subr.mxu0 0.0
  %3069 = vmatpush1.xpose.msra.mxu0 0.0
  %3070 = vmatprep.mubr.f32.mxu0 0.0
  %3071 = vmatmul.mubr.f32.gmra.mrb[0].mxu0 %v2974
  %v3072 = vpop.f32.mrb[0].mxu0
  %v3073 = vadd.f32 0.0, %v3072
  %v3074 = vpop.f32.mrb[0].mxu0
  %3075 = vmatprep.mubr.f32.mxu0 0.0
  %3076 = vmatmul.mubr.f32.gmra.mrb[0].mxu0 %v2976
  %v3077 = vpop.f32.mrb[0].mxu0
  %v3078 = vadd.f32 0.0, %v3077
  %v3079 = vpop.f32.mrb[0].mxu0
  %3080 = vmatprep.mubr.f32.mxu0 0.0
  %3081 = vmatmul.mubr.f32.gmra.mrb[0].mxu0 %v2978
  %v3082 = vpop.f32.mrb[0].mxu0
  %v3083 = vadd.f32 0.0, %v3082
  %v3084 = vpop.f32.mrb[0].mxu0
  %3085 = vmatprep.mubr.f32.mxu0 0.0
  %3086 = vmatmul.mubr.f32.gmra.mrb[0].mxu0 %v2980
  %v3087 = vpop.f32.mrb[0].mxu0
  %v3088 = vadd.f32 0.0, %v3087
  %v3089 = vpop.f32.mrb[0].mxu0
  %3090 = vmatprep.mubr.f32.mxu0 0.0
  %3091 = vmatmul.mubr.f32.gmra.mrb[0].mxu0 %v2982
  %v3092 = vpop.f32.mrb[0].mxu0
  %v3093 = vadd.f32 0.0, %v3092
  %v3094 = vpop.f32.mrb[0].mxu0
  %3095 = vmatprep.mubr.f32.mxu0 0.0
  %3096 = vmatmul.mubr.f32.gmra.mrb[0].mxu0 %v2984
  %v3097 = vpop.f32.mrb[0].mxu0
  %v3098 = vadd.f32 0.0, %v3097
  %v3099 = vpop.f32.mrb[0].mxu0
  %3100 = vmatprep.mubr.f32.mxu0 0.0
  %3101 = vmatmul.mubr.f32.gmra.mrb[0].mxu0 %v2986
  %v3102 = vpop.f32.mrb[0].mxu0
  %v3103 = vadd.f32 0.0, %v3102
  %v3104 = vpop.f32.mrb[0].mxu0
  %3105 = vmatprep.mubr.f32.mxu0 0.0
  %3106 = vmatmul.mubr.f32.gmra.mrb[0].mxu0 %v2988
  %v3107 = vpop.f32.mrb[0].mxu0
  %v3108 = vadd.f32 0.0, %v3107
  %v3109 = vpop.f32.mrb[0].mxu0
  %3110 = vdwg.mxu0
  %v3111 = vsel %vm463, %v3073, -inf
  %3112 = vmax.xlane.f32.xlu0 %v3111
  %v3113 = vpop.xlane.xlu0 %3112
  %v3114 = vsel %vm463, %v3078, -inf
  %3115 = vmax.xlane.f32.xlu0 %v3114
  %v3116 = vpop.xlane.xlu0 %3115
  %v3117 = vsel %vm463, %v3083, -inf
  %3118 = vmax.xlane.f32.xlu0 %v3117
  %v3119 = vpop.xlane.xlu0 %3118
  %v3120 = vsel %vm463, %v3088, -inf
  %3121 = vmax.xlane.f32.xlu0 %v3120
  %v3122 = vpop.xlane.xlu0 %3121
  %v3123 = vsel %vm463, %v3093, -inf
  %3124 = vmax.xlane.f32.xlu0 %v3123
  %v3125 = vpop.xlane.xlu0 %3124
  %v3126 = vsel %vm463, %v3098, -inf
  %3127 = vmax.xlane.f32.xlu0 %v3126
  %v3128 = vpop.xlane.xlu0 %3127
  %v3129 = vsel %vm463, %v3103, -inf
  %3130 = vmax.xlane.f32.xlu0 %v3129
  %v3131 = vpop.xlane.xlu0 %3130
  %v3132 = vsel %vm463, %v3108, -inf
  %3133 = vmax.xlane.f32.xlu0 %v3132
  %v3134 = vpop.xlane.xlu0 %3133
  %v3135 = vsub.f32 %v3073, %v3113
  %v3136 = vsub.f32 %v3078, %v3116
  %v3137 = vsub.f32 %v3083, %v3119
  %v3138 = vsub.f32 %v3088, %v3122
  %v3139 = vsub.f32 %v3093, %v3125
  %v3140 = vsub.f32 %v3098, %v3128
  %v3141 = vsub.f32 %v3103, %v3131
  %v3142 = vsub.f32 %v3108, %v3134
  %v3143 = vmul.f32 %v3135, 1.442695
  %v3144 = vpow.pop %v3143
  %v3145 = vmul.f32 %v3136, 1.442695
  %v3146 = vpow.pop %v3145
  %v3147 = vmul.f32 %v3137, 1.442695
  %v3148 = vpow.pop %v3147
  %v3149 = vmul.f32 %v3138, 1.442695
  %v3150 = vpow.pop %v3149
  %v3151 = vmul.f32 %v3139, 1.442695
  %v3152 = vpow.pop %v3151
  %v3153 = vmul.f32 %v3140, 1.442695
  %v3154 = vpow.pop %v3153
  %v3155 = vmul.f32 %v3141, 1.442695
  %v3156 = vpow.pop %v3155
  %v3157 = vmul.f32 %v3142, 1.442695
  %v3158 = vpow.pop %v3157
  %v3159 = vsel %vm463, %v3144, 0.0
  %3160 = vadd.xlane.f32.xlu0 %v3159
  %v3161 = vpop.xlane.xlu0 %3160
  %v3162 = vsel %vm463, %v3146, 0.0
  %3163 = vadd.xlane.f32.xlu0 %v3162
  %v3164 = vpop.xlane.xlu0 %3163
  %v3165 = vsel %vm463, %v3148, 0.0
  %3166 = vadd.xlane.f32.xlu0 %v3165
  %v3167 = vpop.xlane.xlu0 %3166
  %v3168 = vsel %vm463, %v3150, 0.0
  %3169 = vadd.xlane.f32.xlu0 %v3168
  %v3170 = vpop.xlane.xlu0 %3169
  %v3171 = vsel %vm463, %v3152, 0.0
  %3172 = vadd.xlane.f32.xlu0 %v3171
  %v3173 = vpop.xlane.xlu0 %3172
  %v3174 = vsel %vm463, %v3154, 0.0
  %3175 = vadd.xlane.f32.xlu0 %v3174
  %v3176 = vpop.xlane.xlu0 %3175
  %v3177 = vsel %vm463, %v3156, 0.0
  %3178 = vadd.xlane.f32.xlu0 %v3177
  %v3179 = vpop.xlane.xlu0 %3178
  %v3180 = vsel %vm463, %v3158, 0.0
  %3181 = vadd.xlane.f32.xlu0 %v3180
  %v3182 = vpop.xlane.xlu0 %3181
  %3183 = vrot.lane.b32.xlu0 %v247, 48
  %v3184 = vpop.permute.xlu0 %3183
  %3185 = vrot.lane.b32.xlu0 %v252, 48
  %v3186 = vpop.permute.xlu0 %3185
  %3187 = vrot.lane.b32.xlu0 %v257, 48
  %v3188 = vpop.permute.xlu0 %3187
  %3189 = vrot.lane.b32.xlu0 %v262, 48
  %v3190 = vpop.permute.xlu0 %3189
  %3191 = vrot.lane.b32.xlu0 %v267, 48
  %v3192 = vpop.permute.xlu0 %3191
  %3193 = vrot.lane.b32.xlu0 %v272, 48
  %v3194 = vpop.permute.xlu0 %3193
  %3195 = vrot.lane.b32.xlu0 %v277, 48
  %v3196 = vpop.permute.xlu0 %3195
  %3197 = vrot.lane.b32.xlu0 %v282, 48
  %v3198 = vpop.permute.xlu0 %3197
  %v3208 = vsel %vm463, %v3144, 0
  %v3211 = vsel %vm463, %v3146, 0
  %v3214 = vsel %vm463, %v3148, 0
  %v3217 = vsel %vm463, %v3150, 0
  %v3220 = vsel %vm463, %v3152, 0
  %v3223 = vsel %vm463, %v3154, 0
  %v3226 = vsel %vm463, %v3156, 0
  %v3229 = vsel %vm463, %v3158, 0
  %3231 = vmatprep.subr.mxu0 0.0
  %3232 = vmatpush1.msra.mxu0 %v3184
  %3233 = vmatprep.subr.mxu0 0.0
  %3234 = vmatpush1.msra.mxu0 %v3186
  %3235 = vmatprep.subr.mxu0 0.0
  %3236 = vmatpush1.msra.mxu0 %v3188
  %3237 = vmatprep.subr.mxu0 0.0
  %3238 = vmatpush1.msra.mxu0 %v3190
  %3239 = vmatprep.subr.mxu0 0.0
  %3240 = vmatpush1.msra.mxu0 %v3192
  %3241 = vmatprep.subr.mxu0 0.0
  %3242 = vmatpush1.msra.mxu0 %v3194
  %3243 = vmatprep.subr.mxu0 0.0
  %3244 = vmatpush1.msra.mxu0 %v3196
  %3245 = vmatprep.subr.mxu0 0.0
  %3246 = vmatpush1.msra.mxu0 %v3198
  %3247 = vmatprep.subr.mxu0 0.0
  %3248 = vmatpush1.msra.mxu0 0.0
  %3249 = vmatprep.subr.mxu0 0.0
  %3250 = vmatpush1.msra.mxu0 0.0
  %3251 = vmatprep.subr.mxu0 0.0
  %3252 = vmatpush1.msra.mxu0 0.0
  %3253 = vmatprep.subr.mxu0 0.0
  %3254 = vmatpush1.msra.mxu0 0.0
  %3255 = vmatprep.subr.mxu0 0.0
  %3256 = vmatpush1.msra.mxu0 0.0
  %3257 = vmatprep.subr.mxu0 0.0
  %3258 = vmatpush1.msra.mxu0 0.0
  %3259 = vmatprep.subr.mxu0 0.0
  %3260 = vmatpush1.msra.mxu0 0.0
  %3261 = vmatprep.subr.mxu0 0.0
  %3262 = vmatpush1.msra.mxu0 0.0
  %3263 = vmatprep.subr.mxu0 0.0
  %3264 = vmatpush1.msra.mxu0 0.0
  %3265 = vmatprep.subr.mxu0 0.0
  %3266 = vmatpush1.msra.mxu0 0.0
  %3267 = vmatprep.subr.mxu0 0.0
  %3268 = vmatpush1.msra.mxu0 0.0
  %3269 = vmatprep.subr.mxu0 0.0
  %3270 = vmatpush1.msra.mxu0 0.0
  %3271 = vmatprep.subr.mxu0 0.0
  %3272 = vmatpush1.msra.mxu0 0.0
  %3273 = vmatprep.subr.mxu0 0.0
  %3274 = vmatpush1.msra.mxu0 0.0
  %3275 = vmatprep.subr.mxu0 0.0
  %3276 = vmatpush1.msra.mxu0 0.0
  %3277 = vmatprep.subr.mxu0 0.0
  %3278 = vmatpush1.msra.mxu0 0.0
  %3279 = vmatprep.subr.mxu0 0.0
  %3280 = vmatpush1.msra.mxu0 0.0
  %3281 = vmatprep.subr.mxu0 0.0
  %3282 = vmatpush1.msra.mxu0 0.0
  %3283 = vmatprep.subr.mxu0 0.0
  %3284 = vmatpush1.msra.mxu0 0.0
  %3285 = vmatprep.subr.mxu0 0.0
  %3286 = vmatpush1.msra.mxu0 0.0
  %3287 = vmatprep.subr.mxu0 0.0
  %3288 = vmatpush1.msra.mxu0 0.0
  %3289 = vmatprep.subr.mxu0 0.0
  %3290 = vmatpush1.msra.mxu0 0.0
  %3291 = vmatprep.subr.mxu0 0.0
  %3292 = vmatpush1.msra.mxu0 0.0
  %3293 = vmatprep.subr.mxu0 0.0
  %3294 = vmatpush1.msra.mxu0 0.0
  %3295 = vmatprep.mubr.f32.mxu0 0.0
  %3296 = vmatmul.mubr.f32.gmra.mrb[0].mxu0 %v3208
  %v3297 = vpop.f32.mrb[0].mxu0
  %v3298 = vadd.f32 0.0, %v3297
  %v3299 = vpop.f32.mrb[0].mxu0
  %3300 = vmatprep.mubr.f32.mxu0 0.0
  %3301 = vmatmul.mubr.f32.gmra.mrb[0].mxu0 %v3211
  %v3302 = vpop.f32.mrb[0].mxu0
  %v3303 = vadd.f32 0.0, %v3302
  %v3304 = vpop.f32.mrb[0].mxu0
  %3305 = vmatprep.mubr.f32.mxu0 0.0
  %3306 = vmatmul.mubr.f32.gmra.mrb[0].mxu0 %v3214
  %v3307 = vpop.f32.mrb[0].mxu0
  %v3308 = vadd.f32 0.0, %v3307
  %v3309 = vpop.f32.mrb[0].mxu0
  %3310 = vmatprep.mubr.f32.mxu0 0.0
  %3311 = vmatmul.mubr.f32.gmra.mrb[0].mxu0 %v3217
  %v3312 = vpop.f32.mrb[0].mxu0
  %v3313 = vadd.f32 0.0, %v3312
  %v3314 = vpop.f32.mrb[0].mxu0
  %3315 = vmatprep.mubr.f32.mxu0 0.0
  %3316 = vmatmul.mubr.f32.gmra.mrb[0].mxu0 %v3220
  %v3317 = vpop.f32.mrb[0].mxu0
  %v3318 = vadd.f32 0.0, %v3317
  %v3319 = vpop.f32.mrb[0].mxu0
  %3320 = vmatprep.mubr.f32.mxu0 0.0
  %3321 = vmatmul.mubr.f32.gmra.mrb[0].mxu0 %v3223
  %v3322 = vpop.f32.mrb[0].mxu0
  %v3323 = vadd.f32 0.0, %v3322
  %v3324 = vpop.f32.mrb[0].mxu0
  %3325 = vmatprep.mubr.f32.mxu0 0.0
  %3326 = vmatmul.mubr.f32.gmra.mrb[0].mxu0 %v3226
  %v3327 = vpop.f32.mrb[0].mxu0
  %v3328 = vadd.f32 0.0, %v3327
  %v3329 = vpop.f32.mrb[0].mxu0
  %3330 = vmatprep.mubr.f32.mxu0 0.0
  %3331 = vmatmul.mubr.f32.gmra.mrb[0].mxu0 %v3229
  %v3332 = vpop.f32.mrb[0].mxu0
  %v3333 = vadd.f32 0.0, %v3332
  %v3334 = vpop.f32.mrb[0].mxu0
  %3335 = vdwg.mxu0
  %v3336 = vrcp.pop %v3161
  %v3337 = vrcp.pop %v3164
  %v3338 = vrcp.pop %v3167
  %v3339 = vrcp.pop %v3170
  %v3340 = vrcp.pop %v3173
  %v3341 = vrcp.pop %v3176
  %v3342 = vrcp.pop %v3179
  %v3343 = vrcp.pop %v3182
  %v3344 = vmul.f32 %v3298, %v3336
  %v3345 = vmul.f32 %v3303, %v3337
  %v3346 = vmul.f32 %v3308, %v3338
  %v3347 = vmul.f32 %v3313, %v3339
  %v3348 = vmul.f32 %v3318, %v3340
  %v3349 = vmul.f32 %v3323, %v3341
  %v3350 = vmul.f32 %v3328, %v3342
  %v3351 = vmul.f32 %v3333, %v3343
  %3360 = vrot.lane.b32.xlu0 %v3344, 16
  %v3361 = vpop.permute.xlu0 %3360
  %3362 = vrot.lane.b32.xlu0 %v3345, 16
  %v3363 = vpop.permute.xlu0 %3362
  %3364 = vrot.lane.b32.xlu0 %v3346, 16
  %v3365 = vpop.permute.xlu0 %3364
  %3366 = vrot.lane.b32.xlu0 %v3347, 16
  %v3367 = vpop.permute.xlu0 %3366
  %3368 = vrot.lane.b32.xlu0 %v3348, 16
  %v3369 = vpop.permute.xlu0 %3368
  %3370 = vrot.lane.b32.xlu0 %v3349, 16
  %v3371 = vpop.permute.xlu0 %3370
  %3372 = vrot.lane.b32.xlu0 %v3350, 16
  %v3373 = vpop.permute.xlu0 %3372
  %3374 = vrot.lane.b32.xlu0 %v3351, 16
  %v3375 = vpop.permute.xlu0 %3374
  %3384 = vst.msk [vmem:[#allocation2 + $0x40] sm:$0xff] %vm1606, %v3361
  %3385 = vst.msk [vmem:[#allocation2 + $0x48] sm:$0xff] %vm1606, %v3363
  %3386 = vst.msk [vmem:[#allocation2 + $0x50] sm:$0xff] %vm1606, %v3365
  %3387 = vst.msk [vmem:[#allocation2 + $0x58] sm:$0xff] %vm1606, %v3367
  %3388 = vst.msk [vmem:[#allocation2 + $0x60] sm:$0xff] %vm1606, %v3369
  %3389 = vst.msk [vmem:[#allocation2 + $0x68] sm:$0xff] %vm1606, %v3371
  %3390 = vst.msk [vmem:[#allocation2 + $0x70] sm:$0xff] %vm1606, %v3373
  %3391 = vst.msk [vmem:[#allocation2 + $0x78] sm:$0xff] %vm1606, %v3375
  %3392 = vrot.lane.b32.xlu0 %v2066, 104
  %v3393 = vpop.permute.xlu0 %3392
  %3394 = vrot.lane.b32.xlu0 %v2067, 104
  %v3395 = vpop.permute.xlu0 %3394
  %3396 = vrot.lane.b32.xlu0 %v2068, 104
  %v3397 = vpop.permute.xlu0 %3396
  %3398 = vrot.lane.b32.xlu0 %v2069, 104
  %v3399 = vpop.permute.xlu0 %3398
  %3400 = vrot.lane.b32.xlu0 %v2070, 104
  %v3401 = vpop.permute.xlu0 %3400
  %3402 = vrot.lane.b32.xlu0 %v2071, 104
  %v3403 = vpop.permute.xlu0 %3402
  %3404 = vrot.lane.b32.xlu0 %v2072, 104
  %v3405 = vpop.permute.xlu0 %3404
  %3406 = vrot.lane.b32.xlu0 %v2073, 104
  %v3407 = vpop.permute.xlu0 %3406
  %3408 = vrot.lane.b32.xlu0 %v247, 72
  %v3409 = vpop.permute.xlu0 %3408
  %3410 = vrot.lane.b32.xlu0 %v252, 72
  %v3411 = vpop.permute.xlu0 %3410
  %3412 = vrot.lane.b32.xlu0 %v257, 72
  %v3413 = vpop.permute.xlu0 %3412
  %3414 = vrot.lane.b32.xlu0 %v262, 72
  %v3415 = vpop.permute.xlu0 %3414
  %3416 = vrot.lane.b32.xlu0 %v267, 72
  %v3417 = vpop.permute.xlu0 %3416
  %3418 = vrot.lane.b32.xlu0 %v272, 72
  %v3419 = vpop.permute.xlu0 %3418
  %3420 = vrot.lane.b32.xlu0 %v277, 72
  %v3421 = vpop.permute.xlu0 %3420
  %3422 = vrot.lane.b32.xlu0 %v282, 72
  %v3423 = vpop.permute.xlu0 %3422
  %v3424 = vsel %vm317, %v3393, 0
  %v3426 = vsel %vm317, %v3395, 0
  %v3428 = vsel %vm317, %v3397, 0
  %v3430 = vsel %vm317, %v3399, 0
  %v3432 = vsel %vm317, %v3401, 0
  %v3434 = vsel %vm317, %v3403, 0
  %v3436 = vsel %vm317, %v3405, 0
  %v3438 = vsel %vm317, %v3407, 0
  %v3440 = vsel %vm317, %v3409, 0
  %v3442 = vsel %vm317, %v3411, 0
  %v3444 = vsel %vm317, %v3413, 0
  %v3446 = vsel %vm317, %v3415, 0
  %v3448 = vsel %vm317, %v3417, 0
  %v3450 = vsel %vm317, %v3419, 0
  %v3452 = vsel %vm317, %v3421, 0
  %v3454 = vsel %vm317, %v3423, 0
  %3456 = vmatprep.subr.mxu0 0.0
  %3457 = vmatpush1.xpose.msra.mxu0 %v3440
  %3458 = vmatprep.subr.mxu0 0.0
  %3459 = vmatpush1.xpose.msra.mxu0 %v3442
  %3460 = vmatprep.subr.mxu0 0.0
  %3461 = vmatpush1.xpose.msra.mxu0 %v3444
  %3462 = vmatprep.subr.mxu0 0.0
  %3463 = vmatpush1.xpose.msra.mxu0 %v3446
  %3464 = vmatprep.subr.mxu0 0.0
  %3465 = vmatpush1.xpose.msra.mxu0 %v3448
  %3466 = vmatprep.subr.mxu0 0.0
  %3467 = vmatpush1.xpose.msra.mxu0 %v3450
  %3468 = vmatprep.subr.mxu0 0.0
  %3469 = vmatpush1.xpose.msra.mxu0 %v3452
  %3470 = vmatprep.subr.mxu0 0.0
  %3471 = vmatpush1.xpose.msra.mxu0 %v3454
  %3472 = vmatprep.subr.mxu0 0.0
  %3473 = vmatpush1.xpose.msra.mxu0 0.0
  %3474 = vmatprep.subr.mxu0 0.0
  %3475 = vmatpush1.xpose.msra.mxu0 0.0
  %3476 = vmatprep.subr.mxu0 0.0
  %3477 = vmatpush1.xpose.msra.mxu0 0.0
  %3478 = vmatprep.subr.mxu0 0.0
  %3479 = vmatpush1.xpose.msra.mxu0 0.0
  %3480 = vmatprep.subr.mxu0 0.0
  %3481 = vmatpush1.xpose.msra.mxu0 0.0
  %3482 = vmatprep.subr.mxu0 0.0
  %3483 = vmatpush1.xpose.msra.mxu0 0.0
  %3484 = vmatprep.subr.mxu0 0.0
  %3485 = vmatpush1.xpose.msra.mxu0 0.0
  %3486 = vmatprep.subr.mxu0 0.0
  %3487 = vmatpush1.xpose.msra.mxu0 0.0
  %3488 = vmatprep.subr.mxu0 0.0
  %3489 = vmatpush1.xpose.msra.mxu0 0.0
  %3490 = vmatprep.subr.mxu0 0.0
  %3491 = vmatpush1.xpose.msra.mxu0 0.0
  %3492 = vmatprep.subr.mxu0 0.0
  %3493 = vmatpush1.xpose.msra.mxu0 0.0
  %3494 = vmatprep.subr.mxu0 0.0
  %3495 = vmatpush1.xpose.msra.mxu0 0.0
  %3496 = vmatprep.subr.mxu0 0.0
  %3497 = vmatpush1.xpose.msra.mxu0 0.0
  %3498 = vmatprep.subr.mxu0 0.0
  %3499 = vmatpush1.xpose.msra.mxu0 0.0
  %3500 = vmatprep.subr.mxu0 0.0
  %3501 = vmatpush1.xpose.msra.mxu0 0.0
  %3502 = vmatprep.subr.mxu0 0.0
  %3503 = vmatpush1.xpose.msra.mxu0 0.0
  %3504 = vmatprep.subr.mxu0 0.0
  %3505 = vmatpush1.xpose.msra.mxu0 0.0
  %3506 = vmatprep.subr.mxu0 0.0
  %3507 = vmatpush1.xpose.msra.mxu0 0.0
  %3508 = vmatprep.subr.mxu0 0.0
  %3509 = vmatpush1.xpose.msra.mxu0 0.0
  %3510 = vmatprep.subr.mxu0 0.0
  %3511 = vmatpush1.xpose.msra.mxu0 0.0
  %3512 = vmatprep.subr.mxu0 0.0
  %3513 = vmatpush1.xpose.msra.mxu0 0.0
  %3514 = vmatprep.subr.mxu0 0.0
  %3515 = vmatpush1.xpose.msra.mxu0 0.0
  %3516 = vmatprep.subr.mxu0 0.0
  %3517 = vmatpush1.xpose.msra.mxu0 0.0
  %3518 = vmatprep.subr.mxu0 0.0
  %3519 = vmatpush1.xpose.msra.mxu0 0.0
  %3520 = vmatprep.mubr.f32.mxu0 0.0
  %3521 = vmatmul.mubr.f32.gmra.mrb[0].mxu0 %v3424
  %v3522 = vpop.f32.mrb[0].mxu0
  %v3523 = vadd.f32 0.0, %v3522
  %v3524 = vpop.f32.mrb[0].mxu0
  %3525 = vmatprep.mubr.f32.mxu0 0.0
  %3526 = vmatmul.mubr.f32.gmra.mrb[0].mxu0 %v3426
  %v3527 = vpop.f32.mrb[0].mxu0
  %v3528 = vadd.f32 0.0, %v3527
  %v3529 = vpop.f32.mrb[0].mxu0
  %3530 = vmatprep.mubr.f32.mxu0 0.0
  %3531 = vmatmul.mubr.f32.gmra.mrb[0].mxu0 %v3428
  %v3532 = vpop.f32.mrb[0].mxu0
  %v3533 = vadd.f32 0.0, %v3532
  %v3534 = vpop.f32.mrb[0].mxu0
  %3535 = vmatprep.mubr.f32.mxu0 0.0
  %3536 = vmatmul.mubr.f32.gmra.mrb[0].mxu0 %v3430
  %v3537 = vpop.f32.mrb[0].mxu0
  %v3538 = vadd.f32 0.0, %v3537
  %v3539 = vpop.f32.mrb[0].mxu0
  %3540 = vmatprep.mubr.f32.mxu0 0.0
  %3541 = vmatmul.mubr.f32.gmra.mrb[0].mxu0 %v3432
  %v3542 = vpop.f32.mrb[0].mxu0
  %v3543 = vadd.f32 0.0, %v3542
  %v3544 = vpop.f32.mrb[0].mxu0
  %3545 = vmatprep.mubr.f32.mxu0 0.0
  %3546 = vmatmul.mubr.f32.gmra.mrb[0].mxu0 %v3434
  %v3547 = vpop.f32.mrb[0].mxu0
  %v3548 = vadd.f32 0.0, %v3547
  %v3549 = vpop.f32.mrb[0].mxu0
  %3550 = vmatprep.mubr.f32.mxu0 0.0
  %3551 = vmatmul.mubr.f32.gmra.mrb[0].mxu0 %v3436
  %v3552 = vpop.f32.mrb[0].mxu0
  %v3553 = vadd.f32 0.0, %v3552
  %v3554 = vpop.f32.mrb[0].mxu0
  %3555 = vmatprep.mubr.f32.mxu0 0.0
  %3556 = vmatmul.mubr.f32.gmra.mrb[0].mxu0 %v3438
  %v3557 = vpop.f32.mrb[0].mxu0
  %v3558 = vadd.f32 0.0, %v3557
  %v3559 = vpop.f32.mrb[0].mxu0
  %3560 = vdwg.mxu0
  %v3561 = vsel %vm463, %v3523, -inf
  %3562 = vmax.xlane.f32.xlu0 %v3561
  %v3563 = vpop.xlane.xlu0 %3562
  %v3564 = vsel %vm463, %v3528, -inf
  %3565 = vmax.xlane.f32.xlu0 %v3564
  %v3566 = vpop.xlane.xlu0 %3565
  %v3567 = vsel %vm463, %v3533, -inf
  %3568 = vmax.xlane.f32.xlu0 %v3567
  %v3569 = vpop.xlane.xlu0 %3568
  %v3570 = vsel %vm463, %v3538, -inf
  %3571 = vmax.xlane.f32.xlu0 %v3570
  %v3572 = vpop.xlane.xlu0 %3571
  %v3573 = vsel %vm463, %v3543, -inf
  %3574 = vmax.xlane.f32.xlu0 %v3573
  %v3575 = vpop.xlane.xlu0 %3574
  %v3576 = vsel %vm463, %v3548, -inf
  %3577 = vmax.xlane.f32.xlu0 %v3576
  %v3578 = vpop.xlane.xlu0 %3577
  %v3579 = vsel %vm463, %v3553, -inf
  %3580 = vmax.xlane.f32.xlu0 %v3579
  %v3581 = vpop.xlane.xlu0 %3580
  %v3582 = vsel %vm463, %v3558, -inf
  %3583 = vmax.xlane.f32.xlu0 %v3582
  %v3584 = vpop.xlane.xlu0 %3583
  %v3585 = vsub.f32 %v3523, %v3563
  %v3586 = vsub.f32 %v3528, %v3566
  %v3587 = vsub.f32 %v3533, %v3569
  %v3588 = vsub.f32 %v3538, %v3572
  %v3589 = vsub.f32 %v3543, %v3575
  %v3590 = vsub.f32 %v3548, %v3578
  %v3591 = vsub.f32 %v3553, %v3581
  %v3592 = vsub.f32 %v3558, %v3584
  %v3593 = vmul.f32 %v3585, 1.442695
  %v3594 = vpow.pop %v3593
  %v3595 = vmul.f32 %v3586, 1.442695
  %v3596 = vpow.pop %v3595
  %v3597 = vmul.f32 %v3587, 1.442695
  %v3598 = vpow.pop %v3597
  %v3599 = vmul.f32 %v3588, 1.442695
  %v3600 = vpow.pop %v3599
  %v3601 = vmul.f32 %v3589, 1.442695
  %v3602 = vpow.pop %v3601
  %v3603 = vmul.f32 %v3590, 1.442695
  %v3604 = vpow.pop %v3603
  %v3605 = vmul.f32 %v3591, 1.442695
  %v3606 = vpow.pop %v3605
  %v3607 = vmul.f32 %v3592, 1.442695
  %v3608 = vpow.pop %v3607
  %v3609 = vsel %vm463, %v3594, 0.0
  %3610 = vadd.xlane.f32.xlu0 %v3609
  %v3611 = vpop.xlane.xlu0 %3610
  %v3612 = vsel %vm463, %v3596, 0.0
  %3613 = vadd.xlane.f32.xlu0 %v3612
  %v3614 = vpop.xlane.xlu0 %3613
  %v3615 = vsel %vm463, %v3598, 0.0
  %3616 = vadd.xlane.f32.xlu0 %v3615
  %v3617 = vpop.xlane.xlu0 %3616
  %v3618 = vsel %vm463, %v3600, 0.0
  %3619 = vadd.xlane.f32.xlu0 %v3618
  %v3620 = vpop.xlane.xlu0 %3619
  %v3621 = vsel %vm463, %v3602, 0.0
  %3622 = vadd.xlane.f32.xlu0 %v3621
  %v3623 = vpop.xlane.xlu0 %3622
  %v3624 = vsel %vm463, %v3604, 0.0
  %3625 = vadd.xlane.f32.xlu0 %v3624
  %v3626 = vpop.xlane.xlu0 %3625
  %v3627 = vsel %vm463, %v3606, 0.0
  %3628 = vadd.xlane.f32.xlu0 %v3627
  %v3629 = vpop.xlane.xlu0 %3628
  %v3630 = vsel %vm463, %v3608, 0.0
  %3631 = vadd.xlane.f32.xlu0 %v3630
  %v3632 = vpop.xlane.xlu0 %3631
  %3633 = vrot.lane.b32.xlu0 %v247, 40
  %v3634 = vpop.permute.xlu0 %3633
  %3635 = vrot.lane.b32.xlu0 %v252, 40
  %v3636 = vpop.permute.xlu0 %3635
  %3637 = vrot.lane.b32.xlu0 %v257, 40
  %v3638 = vpop.permute.xlu0 %3637
  %3639 = vrot.lane.b32.xlu0 %v262, 40
  %v3640 = vpop.permute.xlu0 %3639
  %3641 = vrot.lane.b32.xlu0 %v267, 40
  %v3642 = vpop.permute.xlu0 %3641
  %3643 = vrot.lane.b32.xlu0 %v272, 40
  %v3644 = vpop.permute.xlu0 %3643
  %3645 = vrot.lane.b32.xlu0 %v277, 40
  %v3646 = vpop.permute.xlu0 %3645
  %3647 = vrot.lane.b32.xlu0 %v282, 40
  %v3648 = vpop.permute.xlu0 %3647
  %v3658 = vsel %vm463, %v3594, 0
  %v3661 = vsel %vm463, %v3596, 0
  %v3664 = vsel %vm463, %v3598, 0
  %v3667 = vsel %vm463, %v3600, 0
  %v3670 = vsel %vm463, %v3602, 0
  %v3673 = vsel %vm463, %v3604, 0
  %v3676 = vsel %vm463, %v3606, 0
  %v3679 = vsel %vm463, %v3608, 0
  %3681 = vmatprep.subr.mxu0 0.0
  %3682 = vmatpush1.msra.mxu0 %v3634
  %3683 = vmatprep.subr.mxu0 0.0
  %3684 = vmatpush1.msra.mxu0 %v3636
  %3685 = vmatprep.subr.mxu0 0.0
  %3686 = vmatpush1.msra.mxu0 %v3638
  %3687 = vmatprep.subr.mxu0 0.0
  %3688 = vmatpush1.msra.mxu0 %v3640
  %3689 = vmatprep.subr.mxu0 0.0
  %3690 = vmatpush1.msra.mxu0 %v3642
  %3691 = vmatprep.subr.mxu0 0.0
  %3692 = vmatpush1.msra.mxu0 %v3644
  %3693 = vmatprep.subr.mxu0 0.0
  %3694 = vmatpush1.msra.mxu0 %v3646
  %3695 = vmatprep.subr.mxu0 0.0
  %3696 = vmatpush1.msra.mxu0 %v3648
  %3697 = vmatprep.subr.mxu0 0.0
  %3698 = vmatpush1.msra.mxu0 0.0
  %3699 = vmatprep.subr.mxu0 0.0
  %3700 = vmatpush1.msra.mxu0 0.0
  %3701 = vmatprep.subr.mxu0 0.0
  %3702 = vmatpush1.msra.mxu0 0.0
  %3703 = vmatprep.subr.mxu0 0.0
  %3704 = vmatpush1.msra.mxu0 0.0
  %3705 = vmatprep.subr.mxu0 0.0
  %3706 = vmatpush1.msra.mxu0 0.0
  %3707 = vmatprep.subr.mxu0 0.0
  %3708 = vmatpush1.msra.mxu0 0.0
  %3709 = vmatprep.subr.mxu0 0.0
  %3710 = vmatpush1.msra.mxu0 0.0
  %3711 = vmatprep.subr.mxu0 0.0
  %3712 = vmatpush1.msra.mxu0 0.0
  %3713 = vmatprep.subr.mxu0 0.0
  %3714 = vmatpush1.msra.mxu0 0.0
  %3715 = vmatprep.subr.mxu0 0.0
  %3716 = vmatpush1.msra.mxu0 0.0
  %3717 = vmatprep.subr.mxu0 0.0
  %3718 = vmatpush1.msra.mxu0 0.0
  %3719 = vmatprep.subr.mxu0 0.0
  %3720 = vmatpush1.msra.mxu0 0.0
  %3721 = vmatprep.subr.mxu0 0.0
  %3722 = vmatpush1.msra.mxu0 0.0
  %3723 = vmatprep.subr.mxu0 0.0
  %3724 = vmatpush1.msra.mxu0 0.0
  %3725 = vmatprep.subr.mxu0 0.0
  %3726 = vmatpush1.msra.mxu0 0.0
  %3727 = vmatprep.subr.mxu0 0.0
  %3728 = vmatpush1.msra.mxu0 0.0
  %3729 = vmatprep.subr.mxu0 0.0
  %3730 = vmatpush1.msra.mxu0 0.0
  %3731 = vmatprep.subr.mxu0 0.0
  %3732 = vmatpush1.msra.mxu0 0.0
  %3733 = vmatprep.subr.mxu0 0.0
  %3734 = vmatpush1.msra.mxu0 0.0
  %3735 = vmatprep.subr.mxu0 0.0
  %3736 = vmatpush1.msra.mxu0 0.0
  %3737 = vmatprep.subr.mxu0 0.0
  %3738 = vmatpush1.msra.mxu0 0.0
  %3739 = vmatprep.subr.mxu0 0.0
  %3740 = vmatpush1.msra.mxu0 0.0
  %3741 = vmatprep.subr.mxu0 0.0
  %3742 = vmatpush1.msra.mxu0 0.0
  %3743 = vmatprep.subr.mxu0 0.0
  %3744 = vmatpush1.msra.mxu0 0.0
  %3745 = vmatprep.mubr.f32.mxu0 0.0
  %3746 = vmatmul.mubr.f32.gmra.mrb[0].mxu0 %v3658
  %v3747 = vpop.f32.mrb[0].mxu0
  %v3748 = vadd.f32 0.0, %v3747
  %v3749 = vpop.f32.mrb[0].mxu0
  %3750 = vmatprep.mubr.f32.mxu0 0.0
  %3751 = vmatmul.mubr.f32.gmra.mrb[0].mxu0 %v3661
  %v3752 = vpop.f32.mrb[0].mxu0
  %v3753 = vadd.f32 0.0, %v3752
  %v3754 = vpop.f32.mrb[0].mxu0
  %3755 = vmatprep.mubr.f32.mxu0 0.0
  %3756 = vmatmul.mubr.f32.gmra.mrb[0].mxu0 %v3664
  %v3757 = vpop.f32.mrb[0].mxu0
  %v3758 = vadd.f32 0.0, %v3757
  %v3759 = vpop.f32.mrb[0].mxu0
  %3760 = vmatprep.mubr.f32.mxu0 0.0
  %3761 = vmatmul.mubr.f32.gmra.mrb[0].mxu0 %v3667
  %v3762 = vpop.f32.mrb[0].mxu0
  %v3763 = vadd.f32 0.0, %v3762
  %v3764 = vpop.f32.mrb[0].mxu0
  %3765 = vmatprep.mubr.f32.mxu0 0.0
  %3766 = vmatmul.mubr.f32.gmra.mrb[0].mxu0 %v3670
  %v3767 = vpop.f32.mrb[0].mxu0
  %v3768 = vadd.f32 0.0, %v3767
  %v3769 = vpop.f32.mrb[0].mxu0
  %3770 = vmatprep.mubr.f32.mxu0 0.0
  %3771 = vmatmul.mubr.f32.gmra.mrb[0].mxu0 %v3673
  %v3772 = vpop.f32.mrb[0].mxu0
  %v3773 = vadd.f32 0.0, %v3772
  %v3774 = vpop.f32.mrb[0].mxu0
  %3775 = vmatprep.mubr.f32.mxu0 0.0
  %3776 = vmatmul.mubr.f32.gmra.mrb[0].mxu0 %v3676
  %v3777 = vpop.f32.mrb[0].mxu0
  %v3778 = vadd.f32 0.0, %v3777
  %v3779 = vpop.f32.mrb[0].mxu0
  %3780 = vmatprep.mubr.f32.mxu0 0.0
  %3781 = vmatmul.mubr.f32.gmra.mrb[0].mxu0 %v3679
  %v3782 = vpop.f32.mrb[0].mxu0
  %v3783 = vadd.f32 0.0, %v3782
  %v3784 = vpop.f32.mrb[0].mxu0
  %3785 = vdwg.mxu0
  %v3786 = vrcp.pop %v3611
  %v3787 = vrcp.pop %v3614
  %v3788 = vrcp.pop %v3617
  %v3789 = vrcp.pop %v3620
  %v3790 = vrcp.pop %v3623
  %v3791 = vrcp.pop %v3626
  %v3792 = vrcp.pop %v3629
  %v3793 = vrcp.pop %v3632
  %v3794 = vmul.f32 %v3748, %v3786
  %v3795 = vmul.f32 %v3753, %v3787
  %v3796 = vmul.f32 %v3758, %v3788
  %v3797 = vmul.f32 %v3763, %v3789
  %v3798 = vmul.f32 %v3768, %v3790
  %v3799 = vmul.f32 %v3773, %v3791
  %v3800 = vmul.f32 %v3778, %v3792
  %v3801 = vmul.f32 %v3783, %v3793
  %3810 = vrot.lane.b32.xlu0 %v3794, 24
  %v3811 = vpop.permute.xlu0 %3810
  %3812 = vrot.lane.b32.xlu0 %v3795, 24
  %v3813 = vpop.permute.xlu0 %3812
  %3814 = vrot.lane.b32.xlu0 %v3796, 24
  %v3815 = vpop.permute.xlu0 %3814
  %3816 = vrot.lane.b32.xlu0 %v3797, 24
  %v3817 = vpop.permute.xlu0 %3816
  %3818 = vrot.lane.b32.xlu0 %v3798, 24
  %v3819 = vpop.permute.xlu0 %3818
  %3820 = vrot.lane.b32.xlu0 %v3799, 24
  %v3821 = vpop.permute.xlu0 %3820
  %3822 = vrot.lane.b32.xlu0 %v3800, 24
  %v3823 = vpop.permute.xlu0 %3822
  %3824 = vrot.lane.b32.xlu0 %v3801, 24
  %v3825 = vpop.permute.xlu0 %3824
  %3834 = vst.msk [vmem:[#allocation2 + $0x40] sm:$0xff] %vm2057, %v3811
  %3835 = vst.msk [vmem:[#allocation2 + $0x48] sm:$0xff] %vm2057, %v3813
  %3836 = vst.msk [vmem:[#allocation2 + $0x50] sm:$0xff] %vm2057, %v3815
  %3837 = vst.msk [vmem:[#allocation2 + $0x58] sm:$0xff] %vm2057, %v3817
  %3838 = vst.msk [vmem:[#allocation2 + $0x60] sm:$0xff] %vm2057, %v3819
  %3839 = vst.msk [vmem:[#allocation2 + $0x68] sm:$0xff] %vm2057, %v3821
  %3840 = vst.msk [vmem:[#allocation2 + $0x70] sm:$0xff] %vm2057, %v3823
  %3841 = vst.msk [vmem:[#allocation2 + $0x78] sm:$0xff] %vm2057, %v3825
  %v3842 = vld [vmem:[#allocation2] sm:$0xff]
  %v3843 = vld [vmem:[#allocation2 + $0x8] sm:$0xff]
  %v3844 = vld [vmem:[#allocation2 + $0x10] sm:$0xff]
  %v3845 = vld [vmem:[#allocation2 + $0x18] sm:$0xff]
  %v3846 = vld [vmem:[#allocation2 + $0x20] sm:$0xff]
  %v3847 = vld [vmem:[#allocation2 + $0x28] sm:$0xff]
  %v3848 = vld [vmem:[#allocation2 + $0x30] sm:$0xff]
  %v3849 = vld [vmem:[#allocation2 + $0x38] sm:$0xff]
  %v3850 = vld [vmem:[#allocation2 + $0x40] sm:$0xff]
  %v3851 = vld [vmem:[#allocation2 + $0x48] sm:$0xff]
  %v3852 = vld [vmem:[#allocation2 + $0x50] sm:$0xff]
  %v3853 = vld [vmem:[#allocation2 + $0x58] sm:$0xff]
  %v3854 = vld [vmem:[#allocation2 + $0x60] sm:$0xff]
  %v3855 = vld [vmem:[#allocation2 + $0x68] sm:$0xff]
  %v3856 = vld [vmem:[#allocation2 + $0x70] sm:$0xff]
  %v3857 = vld [vmem:[#allocation2 + $0x78] sm:$0xff]
  %v3858 = vld [vmem:[%s3] sm:$0xff]
  %v3859 = vld [vmem:[%s3 + $0x8] sm:$0xff]
  %v3860 = vld [vmem:[%s3 + $0x10] sm:$0xff]
  %v3861 = vld [vmem:[%s3 + $0x18] sm:$0xff]
  %v3862 = vld [vmem:[%s4] sm:$0x1]
  %v3864 = vlaneseq
  %v3865 = vshrl.u32 %v3864, 7
  %v3866 = vsub.s32 0, %v3865
  %v3867 = vrot.slane %v3862, %v3866
  %v3870 = vsel %vm55, %v3842, 0
  %v3873 = vsel %vm55, %v3843, 0
  %v3876 = vsel %vm55, %v3844, 0
  %v3879 = vsel %vm55, %v3845, 0
  %v3882 = vsel %vm55, %v3846, 0
  %v3885 = vsel %vm55, %v3847, 0
  %v3888 = vsel %vm55, %v3848, 0
  %v3891 = vsel %vm55, %v3849, 0
  %v3894 = vsel %vm55, %v3850, 0
  %v3897 = vsel %vm55, %v3851, 0
  %v3900 = vsel %vm55, %v3852, 0
  %v3903 = vsel %vm55, %v3853, 0
  %v3906 = vsel %vm55, %v3854, 0
  %v3909 = vsel %vm55, %v3855, 0
  %v3912 = vsel %vm55, %v3856, 0
  %v3915 = vsel %vm55, %v3857, 0
  %v3918 = vsel %vm55, %v3858, 0
  %v3921 = vsel %vm55, %v3859, 0
  %v3924 = vsel %vm55, %v3860, 0
  %v3927 = vsel %vm55, %v3861, 0
  %3929 = vmatprep.subr.mxu0 0.0
  %3930 = vmatpush1.xpose.msra.mxu0 %v3918
  %3931 = vmatprep.subr.mxu0 0.0
  %3932 = vmatpush1.xpose.msra.mxu0 %v3921
  %3933 = vmatprep.subr.mxu0 0.0
  %3934 = vmatpush1.xpose.msra.mxu0 %v3924
  %3935 = vmatprep.subr.mxu0 0.0
  %3936 = vmatpush1.xpose.msra.mxu0 %v3927
  %3937 = vmatprep.subr.mxu0 0.0
  %3938 = vmatpush1.xpose.msra.mxu0 0.0
  %3939 = vmatprep.subr.mxu0 0.0
  %3940 = vmatpush1.xpose.msra.mxu0 0.0
  %3941 = vmatprep.subr.mxu0 0.0
  %3942 = vmatpush1.xpose.msra.mxu0 0.0
  %3943 = vmatprep.subr.mxu0 0.0
  %3944 = vmatpush1.xpose.msra.mxu0 0.0
  %3945 = vmatprep.subr.mxu0 0.0
  %3946 = vmatpush1.xpose.msra.mxu0 0.0
  %3947 = vmatprep.subr.mxu0 0.0
  %3948 = vmatpush1.xpose.msra.mxu0 0.0
  %3949 = vmatprep.subr.mxu0 0.0
  %3950 = vmatpush1.xpose.msra.mxu0 0.0
  %3951 = vmatprep.subr.mxu0 0.0
  %3952 = vmatpush1.xpose.msra.mxu0 0.0
  %3953 = vmatprep.subr.mxu0 0.0
  %3954 = vmatpush1.xpose.msra.mxu0 0.0
  %3955 = vmatprep.subr.mxu0 0.0
  %3956 = vmatpush1.xpose.msra.mxu0 0.0
  %3957 = vmatprep.subr.mxu0 0.0
  %3958 = vmatpush1.xpose.msra.mxu0 0.0
  %3959 = vmatprep.subr.mxu0 0.0
  %3960 = vmatpush1.xpose.msra.mxu0 0.0
  %3961 = vmatprep.subr.mxu0 0.0
  %3962 = vmatpush1.xpose.msra.mxu0 0.0
  %3963 = vmatprep.subr.mxu0 0.0
  %3964 = vmatpush1.xpose.msra.mxu0 0.0
  %3965 = vmatprep.subr.mxu0 0.0
  %3966 = vmatpush1.xpose.msra.mxu0 0.0
  %3967 = vmatprep.subr.mxu0 0.0
  %3968 = vmatpush1.xpose.msra.mxu0 0.0
  %3969 = vmatprep.subr.mxu0 0.0
  %3970 = vmatpush1.xpose.msra.mxu0 0.0
  %3971 = vmatprep.subr.mxu0 0.0
  %3972 = vmatpush1.xpose.msra.mxu0 0.0
  %3973 = vmatprep.subr.mxu0 0.0
  %3974 = vmatpush1.xpose.msra.mxu0 0.0
  %3975 = vmatprep.subr.mxu0 0.0
  %3976 = vmatpush1.xpose.msra.mxu0 0.0
  %3977 = vmatprep.subr.mxu0 0.0
  %3978 = vmatpush1.xpose.msra.mxu0 0.0
  %3979 = vmatprep.subr.mxu0 0.0
  %3980 = vmatpush1.xpose.msra.mxu0 0.0
  %3981 = vmatprep.subr.mxu0 0.0
  %3982 = vmatpush1.xpose.msra.mxu0 0.0
  %3983 = vmatprep.subr.mxu0 0.0
  %3984 = vmatpush1.xpose.msra.mxu0 0.0
  %3985 = vmatprep.subr.mxu0 0.0
  %3986 = vmatpush1.xpose.msra.mxu0 0.0
  %3987 = vmatprep.subr.mxu0 0.0
  %3988 = vmatpush1.xpose.msra.mxu0 0.0
  %3989 = vmatprep.subr.mxu0 0.0
  %3990 = vmatpush1.xpose.msra.mxu0 0.0
  %3991 = vmatprep.subr.mxu0 0.0
  %3992 = vmatpush1.xpose.msra.mxu0 0.0
  %3993 = vmatprep.mubr.f32.mxu0 0.0
  %3994 = vmatmul.mubr.f32.gmra.mrb[0].mxu0 %v3870
  %v3995 = vpop.f32.mrb[0].mxu0
  %v3996 = vadd.f32 %v3867, %v3995
  %v3997 = vpop.f32.mrb[0].mxu0
  %3998 = vmatprep.mubr.f32.mxu0 0.0
  %3999 = vmatmul.mubr.f32.gmra.mrb[0].mxu0 %v3873
  %v4000 = vpop.f32.mrb[0].mxu0
  %v4001 = vadd.f32 %v3867, %v4000
  %v4002 = vpop.f32.mrb[0].mxu0
  %4003 = vmatprep.mubr.f32.mxu0 0.0
  %4004 = vmatmul.mubr.f32.gmra.mrb[0].mxu0 %v3876
  %v4005 = vpop.f32.mrb[0].mxu0
  %v4006 = vadd.f32 %v3867, %v4005
  %v4007 = vpop.f32.mrb[0].mxu0
  %4008 = vmatprep.mubr.f32.mxu0 0.0
  %4009 = vmatmul.mubr.f32.gmra.mrb[0].mxu0 %v3879
  %v4010 = vpop.f32.mrb[0].mxu0
  %v4011 = vadd.f32 %v3867, %v4010
  %v4012 = vpop.f32.mrb[0].mxu0
  %4013 = vmatprep.mubr.f32.mxu0 0.0
  %4014 = vmatmul.mubr.f32.gmra.mrb[0].mxu0 %v3882
  %v4015 = vpop.f32.mrb[0].mxu0
  %v4016 = vadd.f32 %v3867, %v4015
  %v4017 = vpop.f32.mrb[0].mxu0
  %4018 = vmatprep.mubr.f32.mxu0 0.0
  %4019 = vmatmul.mubr.f32.gmra.mrb[0].mxu0 %v3885
  %v4020 = vpop.f32.mrb[0].mxu0
  %v4021 = vadd.f32 %v3867, %v4020
  %v4022 = vpop.f32.mrb[0].mxu0
  %4023 = vmatprep.mubr.f32.mxu0 0.0
  %4024 = vmatmul.mubr.f32.gmra.mrb[0].mxu0 %v3888
  %v4025 = vpop.f32.mrb[0].mxu0
  %v4026 = vadd.f32 %v3867, %v4025
  %v4027 = vpop.f32.mrb[0].mxu0
  %4028 = vmatprep.mubr.f32.mxu0 0.0
  %4029 = vmatmul.mubr.f32.gmra.mrb[0].mxu0 %v3891
  %v4030 = vpop.f32.mrb[0].mxu0
  %v4031 = vadd.f32 %v3867, %v4030
  %v4032 = vpop.f32.mrb[0].mxu0
  %4033 = vmatprep.mubr.f32.mxu0 0.0
  %4034 = vmatmul.mubr.f32.gmra.mrb[0].mxu0 %v3894
  %v4035 = vpop.f32.mrb[0].mxu0
  %v4036 = vadd.f32 %v3867, %v4035
  %v4037 = vpop.f32.mrb[0].mxu0
  %4038 = vmatprep.mubr.f32.mxu0 0.0
  %4039 = vmatmul.mubr.f32.gmra.mrb[0].mxu0 %v3897
  %v4040 = vpop.f32.mrb[0].mxu0
  %v4041 = vadd.f32 %v3867, %v4040
  %v4042 = vpop.f32.mrb[0].mxu0
  %4043 = vmatprep.mubr.f32.mxu0 0.0
  %4044 = vmatmul.mubr.f32.gmra.mrb[0].mxu0 %v3900
  %v4045 = vpop.f32.mrb[0].mxu0
  %v4046 = vadd.f32 %v3867, %v4045
  %v4047 = vpop.f32.mrb[0].mxu0
  %4048 = vmatprep.mubr.f32.mxu0 0.0
  %4049 = vmatmul.mubr.f32.gmra.mrb[0].mxu0 %v3903
  %v4050 = vpop.f32.mrb[0].mxu0
  %v4051 = vadd.f32 %v3867, %v4050
  %v4052 = vpop.f32.mrb[0].mxu0
  %4053 = vmatprep.mubr.f32.mxu0 0.0
  %4054 = vmatmul.mubr.f32.gmra.mrb[0].mxu0 %v3906
  %v4055 = vpop.f32.mrb[0].mxu0
  %v4056 = vadd.f32 %v3867, %v4055
  %v4057 = vpop.f32.mrb[0].mxu0
  %4058 = vmatprep.mubr.f32.mxu0 0.0
  %4059 = vmatmul.mubr.f32.gmra.mrb[0].mxu0 %v3909
  %v4060 = vpop.f32.mrb[0].mxu0
  %v4061 = vadd.f32 %v3867, %v4060
  %v4062 = vpop.f32.mrb[0].mxu0
  %4063 = vmatprep.mubr.f32.mxu0 0.0
  %4064 = vmatmul.mubr.f32.gmra.mrb[0].mxu0 %v3912
  %v4065 = vpop.f32.mrb[0].mxu0
  %v4066 = vadd.f32 %v3867, %v4065
  %v4067 = vpop.f32.mrb[0].mxu0
  %4068 = vmatprep.mubr.f32.mxu0 0.0
  %4069 = vmatmul.mubr.f32.gmra.mrb[0].mxu0 %v3915
  %v4070 = vpop.f32.mrb[0].mxu0
  %v4071 = vadd.f32 %v3867, %v4070
  %v4072 = vpop.f32.mrb[0].mxu0
  %4073 = vdwg.mxu0
  %4074 = vst.msk [vmem:[%s5] sm:$0xff] %vm55, %v3996
  %4075 = vst.msk [vmem:[%s5 + $0x8] sm:$0xff] %vm55, %v4001
  %4076 = vst.msk [vmem:[%s5 + $0x10] sm:$0xff] %vm55, %v4006
  %4077 = vst.msk [vmem:[%s5 + $0x18] sm:$0xff] %vm55, %v4011
  %4078 = vst.msk [vmem:[%s5 + $0x20] sm:$0xff] %vm55, %v4016
  %4079 = vst.msk [vmem:[%s5 + $0x28] sm:$0xff] %vm55, %v4021
  %4080 = vst.msk [vmem:[%s5 + $0x30] sm:$0xff] %vm55, %v4026
  %4081 = vst.msk [vmem:[%s5 + $0x38] sm:$0xff] %vm55, %v4031
  %4082 = vst.msk [vmem:[%s5 + $0x40] sm:$0xff] %vm55, %v4036
  %4083 = vst.msk [vmem:[%s5 + $0x48] sm:$0xff] %vm55, %v4041
  %4084 = vst.msk [vmem:[%s5 + $0x50] sm:$0xff] %vm55, %v4046
  %4085 = vst.msk [vmem:[%s5 + $0x58] sm:$0xff] %vm55, %v4051
  %4086 = vst.msk [vmem:[%s5 + $0x60] sm:$0xff] %vm55, %v4056
  %4087 = vst.msk [vmem:[%s5 + $0x68] sm:$0xff] %vm55, %v4061
  %4088 = vst.msk [vmem:[%s5 + $0x70] sm:$0xff] %vm55, %v4066
  %4089 = vst.msk [vmem:[%s5 + $0x78] sm:$0xff] %vm55, %v4071
  // Predicated region
  $region22: #{tpu_custom_call.1} parent=0 // pred_check
    _
  $region23: #{tpu_custom_call.1} parent=0 // pred_check_branch
    %4091 = sbr.rel (0) target = $region25
  $region24: #{tpu_custom_call.1} parent=0 // pred_region
    _
  $region25: #{tpu_custom_call.1} parent=0 // pred_fallthru
    _
  // Predicated region
  $region26: #{tpu_custom_call.1} parent=0 // pred_check
    _
  $region27: #{tpu_custom_call.1} parent=0 // pred_check_branch
    %4093 = sbr.rel (0) target = $region29
  $region28: #{tpu_custom_call.1} parent=0 // pred_region
    _
  $region29: #{tpu_custom_call.1} parent=0 // pred_fallthru
    _

</llo_original>
